<compile_context>
chip_gen: v5e
topology: v5e:2x2
jax: 0.10.0
libtpu: 0.0.40
codegen_flags: <defaults>
</compile_context>

<pallas_src>
import numpy as np
import jax
import jax.numpy as jnp
from jax.experimental import pallas as pl
from jax.experimental.pallas import tpu as pltpu

# ---------------- synthetic (small) EfficientDet-like config ----------------
MIN_LEVEL = 3
MAX_LEVEL = 7                                   # 5 levels, matches `for level in range(5)`
NUM_SCALES = 3
ASPECT_RATIOS = ((1.0, 1.0), (1.4, 0.7), (0.7, 1.4))
ANCHOR_SCALE = 4.0
IMAGE_SIZE = 128
NUM_CLASSES = 8                                 # power of two (lane-class index via bitwise-and)
A_PER_LOC = NUM_SCALES * len(ASPECT_RATIOS)     # 9 anchors / location
BATCH = 2
MAX_GT = 4
C_IN = 3
C_FEAT = 16

# DetectionLoss defaults (effdet)
ALPHA = 0.25
GAMMA = 1.5
DELTA = 0.1
BOX_LOSS_WEIGHT = 50.0
MATCH_THRESHOLD = 0.5
MAX_DETECTION_POINTS = 5000

CLS_OUT = A_PER_LOC * NUM_CLASSES               # 72  (per pixel: anchor-major, class-minor)
BOX_OUT = A_PER_LOC * 4                         # 36  (per pixel: anchor-major, coord-minor)

# lane-dense padded sizes
C_IN_PAD = 8                                    # pad C_in 3 -> 8 (full sublane group)
FEAT_PAD = 128                                  # pad feature width 16 -> 128
HEAD_LANES = 128                                # pad head outputs 72/36 -> 128 lanes

assert NUM_CLASSES & (NUM_CLASSES - 1) == 0, "NUM_CLASSES must be a power of two"

_VMEM = pl.BlockSpec(memory_space=pltpu.MemorySpace.VMEM)
_SMEM = pl.BlockSpec(memory_space=pltpu.MemorySpace.SMEM)


# ============================= anchors (host-side) ===========================
def generate_anchor_boxes():
    """effdet Anchors: per level, per (scale, aspect), boxes in yxyx pixel coords."""
    boxes_all = []
    for level in range(MIN_LEVEL, MAX_LEVEL + 1):
        stride = 2 ** level
        boxes_level = []
        for octave in range(NUM_SCALES):
            for aspect in ASPECT_RATIOS:
                octave_scale = octave / float(NUM_SCALES)
                base = ANCHOR_SCALE * stride * (2.0 ** octave_scale)
                ax2 = base * aspect[0] / 2.0
                ay2 = base * aspect[1] / 2.0
                x = np.arange(stride / 2.0, IMAGE_SIZE, stride)
                y = np.arange(stride / 2.0, IMAGE_SIZE, stride)
                xv, yv = np.meshgrid(x, y)
                xv = xv.reshape(-1)
                yv = yv.reshape(-1)
                boxes = np.vstack((yv - ay2, xv - ax2, yv + ay2, xv + ax2))
                boxes = np.swapaxes(boxes, 0, 1)          # (HW, 4)
                boxes_level.append(np.expand_dims(boxes, 1))
        boxes_level = np.concatenate(boxes_level, axis=1)  # (HW, 9, 4)
        boxes_all.append(boxes_level.reshape(-1, 4))
    return jnp.asarray(np.concatenate(boxes_all, axis=0), dtype=jnp.float32)


ANCHORS = generate_anchor_boxes()                       # (A_total, 4) yxyx, order = (level, loc, anchor)
A_TOTAL = ANCHORS.shape[0]                              # 3069
A_PAD = ((A_TOTAL + 127) // 128) * 128                  # 3072 (lane multiple)
N_LOC = A_TOTAL // A_PER_LOC                            # 341 pyramid locations per image
ANCHORS_T_PAD = jnp.zeros((4, A_PAD), jnp.float32).at[:, :A_TOTAL].set(ANCHORS.T)


# ============================= Pallas kernels ================================
def _head_kernel(pix_ref, wp_ref, bp_ref, wc_ref, bc_ref, wb_ref, bb_ref, cls_ref, box_ref):
    """Fused: feat = relu(pix @ Wp + bp); cls = feat @ Wc + bc; box = feat @ Wb + bb.
    All operands lane-dense; `feat` stays in VMEM/vregs (no HBM round-trip)."""
    feat = jnp.dot(pix_ref[...], wp_ref[...], preferred_element_type=jnp.float32) + bp_ref[...]
    feat = jnp.maximum(feat, 0.0)
    cls_ref[...] = jnp.dot(feat, wc_ref[...], preferred_element_type=jnp.float32) + bc_ref[...]
    box_ref[...] = jnp.dot(feat, wb_ref[...], preferred_element_type=jnp.float32) + bb_ref[...]


def pallas_fused_heads(pix_pad, wp, bp, wc, bc, wb, bb):
    n = pix_pad.shape[0]
    flops = 2 * n * C_IN_PAD * FEAT_PAD + 2 * 2 * n * FEAT_PAD * HEAD_LANES
    bytes_accessed = 4 * (n * C_IN_PAD + C_IN_PAD * FEAT_PAD + FEAT_PAD
                          + 2 * (FEAT_PAD * HEAD_LANES + HEAD_LANES)
                          + 2 * n * HEAD_LANES)
    return pl.pallas_call(
        _head_kernel,
        out_shape=(jax.ShapeDtypeStruct((n, HEAD_LANES), jnp.float32),
                   jax.ShapeDtypeStruct((n, HEAD_LANES), jnp.float32)),
        in_specs=[_VMEM] * 7,
        out_specs=(_VMEM, _VMEM),
        cost_estimate=pl.CostEstimate(flops=flops, transcendentals=0,
                                      bytes_accessed=bytes_accessed),
    )(pix_pad, wp, bp, wc, bc, wb, bb)


def _iou_kernel(gt_ref, an_ref, o_ref):
    # gt_ref: (B*M, 4) yxyx ; an_ref: (4, A_pad) yxyx (anchors transposed, zero-padded)
    # o_ref:  (B*M, A_pad) — fully packed (8 sublanes x 128-lane multiples)
    gt = gt_ref[...]
    an = an_ref[...]
    gy1 = gt[:, 0:1]; gx1 = gt[:, 1:2]; gy2 = gt[:, 2:3]; gx2 = gt[:, 3:4]      # (B*M, 1)
    ay1 = an[0:1, :]; ax1 = an[1:2, :]; ay2 = an[2:3, :]; ax2 = an[3:4, :]      # (1, A_pad)
    iy1 = jnp.maximum(gy1, ay1); ix1 = jnp.maximum(gx1, ax1)
    iy2 = jnp.minimum(gy2, ay2); ix2 = jnp.minimum(gx2, ax2)
    ih = jnp.maximum(iy2 - iy1, 0.0)
    iw = jnp.maximum(ix2 - ix1, 0.0)
    inter = ih * iw
    area_g = (gy2 - gy1) * (gx2 - gx1)
    area_a = (ay2 - ay1) * (ax2 - ax1)
    union = area_g + area_a - inter
    o_ref[...] = inter / jnp.maximum(union, 1e-8)


def pallas_iou(gt_rows, anchors_t_pad):
    r = gt_rows.shape[0]
    a = anchors_t_pad.shape[1]
    flops = 16 * r * a
    bytes_accessed = 4 * (r * 4 + 4 * a + r * a)
    # TODO(synk): add an anchor-axis grid (blocks of 1024 lanes, dimension_semantics="parallel")
    # before scaling A_TOTAL / BATCH, so this survives v7x's 64 MiB VMEM and its 2 TensorCores.
    return pl.pallas_call(
        _iou_kernel,
        out_shape=jax.ShapeDtypeStruct((r, a), jnp.float32),
        in_specs=[_VMEM, _VMEM],
        out_specs=_VMEM,
        cost_estimate=pl.CostEstimate(flops=flops, transcendentals=0,
                                      bytes_accessed=bytes_accessed),
    )(gt_rows.astype(jnp.float32), anchors_t_pad)


def _loss_kernel(cls_ref, tgt_ref, box_ref, btgt_ref, npos_ref, loss_ref, cl_ref, bl_ref):
    # cls_ref:  (N_pad, 128) f32 class logits, lane = anchor*8 + class (lanes >= 72 padded)
    # tgt_ref:  (N_pad, 128) int32 class target per lane (-2 ignore, -1 background, >=0 class id)
    # box_ref:  (N_pad, 128) f32 box regression outputs, lane = anchor*4 + coord (lanes >= 36 padded)
    # btgt_ref: (N_pad, 128) f32 box regression targets (padded lanes/rows are exactly 0)
    # npos_ref: (1, 1) SMEM  f32 num_positives_sum (already +1.0)
    x = cls_ref[...]
    tgt = tgt_ref[...]
    npos = npos_ref[0, 0]

    lane_cls = jax.lax.broadcasted_iota(jnp.int32, x.shape, 1) & (NUM_CLASSES - 1)   # lane % K
    valid = tgt >= 0
    onehot = (lane_cls == tgt) & valid
    y = onehot.astype(jnp.float32)

    # shared stable softplus: sp = log1p(exp(-|x|))  (3 EUP ops/elem total, overflow-safe)
    sp = jnp.log1p(jnp.exp(-jnp.abs(x)))
    bce = jnp.maximum(x, 0.0) - x * y + sp                 # BCE-with-logits, stable form
    softplus_neg_x = jnp.maximum(-x, 0.0) + sp             # softplus(-x), stable
    modulator = jnp.exp(-GAMMA * (y * x + softplus_neg_x))
    foc = modulator * bce
    weighted = jnp.where(onehot, ALPHA * foc, (1.0 - ALPHA) * foc)
    not_ignored = (tgt != -2).astype(jnp.float32)
    cls_loss = jnp.sum(weighted * not_ignored) / npos      # divide once, after the reduction

    # huber box loss, masked by (box_target != 0), normalized by 4 * num_positives
    bo = box_ref[...]
    bt = btgt_ref[...]
    abs_err = jnp.abs(bt - bo)
    quad = jnp.minimum(abs_err, DELTA)
    lin = abs_err - quad
    hub = 0.5 * quad * quad + DELTA * lin
    mask = (bt != 0.0).astype(jnp.float32)
    box_loss = jnp.sum(hub * mask) / (npos * 4.0)

    loss_ref[0, 0] = cls_loss + BOX_LOSS_WEIGHT * box_loss
    cl_ref[0, 0] = cls_loss
    bl_ref[0, 0] = box_loss


def pallas_detection_loss(cls_head, tgt_exp, box_head, btgt_exp, npos_sum):
    n = cls_head.shape[0]
    e = n * HEAD_LANES
    flops = 45 * e
    trans = 3 * e
    bytes_accessed = 4 * (4 * e + 1 + 3)
    out_shape = tuple(jax.ShapeDtypeStruct((1, 1), jnp.float32) for _ in range(3))
    loss, cl, bl = pl.pallas_call(
        _loss_kernel,
        out_shape=out_shape,
        in_specs=[_VMEM, _VMEM, _VMEM, _VMEM, _SMEM],
        out_specs=(_SMEM, _SMEM, _SMEM),
        cost_estimate=pl.CostEstimate(flops=flops, transcendentals=trans,
                                      bytes_accessed=bytes_accessed),
    )(cls_head.astype(jnp.float32), tgt_exp.astype(jnp.int32),
      box_head.astype(jnp.float32), btgt_exp.astype(jnp.float32),
      npos_sum.reshape(1, 1).astype(jnp.float32))
    return loss[0, 0], cl[0, 0], bl[0, 0]


# ============================= plain-JAX glue ================================
def _encode_boxes(matched_gt, anchors):
    """FasterRcnn box coder (no scale factors), boxes in yxyx."""
    eps = 1e-8
    ay = (anchors[:, 0] + anchors[:, 2]) * 0.5
    ax = (anchors[:, 1] + anchors[:, 3]) * 0.5
    ah = anchors[:, 2] - anchors[:, 0] + eps
    aw = anchors[:, 3] - anchors[:, 1] + eps
    gy = (matched_gt[:, 0] + matched_gt[:, 2]) * 0.5
    gx = (matched_gt[:, 1] + matched_gt[:, 3]) * 0.5
    gh = matched_gt[:, 2] - matched_gt[:, 0] + eps
    gw = matched_gt[:, 3] - matched_gt[:, 1] + eps
    ty = (gy - ay) / ah
    tx = (gx - ax) / aw
    th = jnp.log(gh / ah)
    tw = jnp.log(gw / aw)
    return jnp.stack([ty, tx, th, tw], axis=-1)


def _label_anchors_single(iou, gt_boxes, gt_classes, anchors):
    """Argmax matcher (threshold 0.5, with GT force-matching) + box encoding for one image."""
    m = iou.shape[0]
    best_iou = jnp.max(iou, axis=0)                 # (A,)
    best_gt = jnp.argmax(iou, axis=0)               # (A,)
    matched = best_iou >= MATCH_THRESHOLD
    gt_best_anchor = jnp.argmax(iou, axis=1)        # (M,)
    matched = matched.at[gt_best_anchor].set(True)
    best_gt = best_gt.at[gt_best_anchor].set(jnp.arange(m))
    cls_t = jnp.where(matched, gt_classes[best_gt], jnp.int32(-1)).astype(jnp.int32)
    matched_boxes = gt_boxes[best_gt]               # (A, 4)
    enc = _encode_boxes(matched_boxes, anchors)
    box_t = jnp.where(matched[:, None], enc, 0.0)
    num_pos = jnp.sum(matched.astype(jnp.float32))
    return cls_t, box_t, num_pos


def _post_process(cls_all, box_all):
    """Top-k post-processing (eval path); cls_all (B, A, K), box_all (B, A, 4)."""
    batch = cls_all.shape[0]
    _, topk_idx = jax.lax.top_k(cls_all.reshape(batch, -1), MAX_DETECTION_POINTS)
    indices_all = topk_idx // NUM_CLASSES
    classes_all = topk_idx % NUM_CLASSES
    box_topk = jnp.take_along_axis(box_all, indices_all[:, :, None], axis=1)
    cls_topk = jnp.take_along_axis(cls_all, indices_all[:, :, None], axis=1)
    cls_topk = jnp.take_along_axis(cls_topk, classes_all[:, :, None], axis=2)
    return cls_topk, box_topk, indices_all, classes_all


# ============================= DetBenchTrain.forward =========================
def det_bench_train_forward(params, x_nchw, target, training=True):
    b = x_nchw.shape[0]
    m = target['bbox'].shape[1]
    n_pix = b * N_LOC
    n_pad = ((n_pix + 7) // 8) * 8

    x = jnp.transpose(x_nchw, (0, 2, 3, 1)).astype(jnp.float32)   # NCHW -> NHWC

    # --- synthetic backbone: avg-pool pyramid, flattened BATCH-MAJOR (b, level, y, x) so the
    #     head rows line up 1:1 with the (level, location, anchor) anchor ordering ---
    per_level = []
    for level in range(MIN_LEVEL, MAX_LEVEL + 1):
        s = 2 ** level
        hl = IMAGE_SIZE // s
        f = x.reshape(b, hl, s, hl, s, C_IN).mean(axis=(2, 4))    # (B, hl, hl, C_IN)
        per_level.append(f.reshape(b, hl * hl, C_IN))
    pix = jnp.concatenate(per_level, axis=1).reshape(n_pix, C_IN)            # (682, 3)
    pix_pad = jnp.pad(pix, ((0, n_pad - n_pix), (0, C_IN_PAD - C_IN)))       # (688, 8)

    # --- zero-pad head params to lane-dense shapes (numerically identical to unpadded heads) ---
    wp = jnp.zeros((C_IN_PAD, FEAT_PAD), jnp.float32).at[:C_IN, :C_FEAT].set(params['w_proj'])
    bp = jnp.zeros((1, FEAT_PAD), jnp.float32).at[0, :C_FEAT].set(params['b_proj'])
    wc = jnp.zeros((FEAT_PAD, HEAD_LANES), jnp.float32).at[:C_FEAT, :CLS_OUT].set(params['w_cls'])
    bc = jnp.zeros((1, HEAD_LANES), jnp.float32).at[0, :CLS_OUT].set(params['b_cls'])
    wb = jnp.zeros((FEAT_PAD, HEAD_LANES), jnp.float32).at[:C_FEAT, :BOX_OUT].set(params['w_box'])
    bb = jnp.zeros((1, HEAD_LANES), jnp.float32).at[0, :BOX_OUT].set(params['b_box'])

    # --- fused head kernel: one pallas_call, lane-dense outputs ---
    cls_head, box_head = pallas_fused_heads(pix_pad, wp, bp, wc, bc, wb, bb)  # (688,128) x2

    # --- anchor labeling (IoU in Pallas on a packed (B*M, A_pad) tile; matching in JAX) ---
    gt_rows = target['bbox'].reshape(b * m, 4)
    iou_pad = pallas_iou(gt_rows, ANCHORS_T_PAD)                              # (B*M, A_PAD)
    iou = iou_pad.reshape(b, m, A_PAD)[:, :, :A_TOTAL]
    cls_t, box_t, num_pos = jax.vmap(
        _label_anchors_single, in_axes=(0, 0, 0, None))(
            iou, target['bbox'], target['cls'], ANCHORS)
    num_positives_sum = jnp.sum(num_pos) + 1.0

    # --- loss targets in the head-output row layout: (B*N_LOC, 9*{8 classes | 4 coords}) ---
    tgt_rows = jnp.repeat(cls_t.reshape(n_pix, A_PER_LOC), NUM_CLASSES, axis=1)   # (682, 72)
    tgt_exp = jnp.pad(tgt_rows, ((0, n_pad - n_pix), (0, HEAD_LANES - CLS_OUT)),
                      constant_values=-2)                                          # pads ignored
    btgt_rows = box_t.reshape(n_pix, BOX_OUT)                                      # (682, 36)
    btgt_exp = jnp.pad(btgt_rows, ((0, n_pad - n_pix), (0, HEAD_LANES - BOX_OUT)))  # pads masked (==0)

    # --- detection loss (Pallas kernel: focal + huber + reductions to scalars) ---
    loss, class_loss, box_loss = pallas_detection_loss(
        cls_head, tgt_exp, box_head, btgt_exp, num_positives_sum)

    output = dict(loss=loss, class_loss=class_loss, box_loss=box_loss)

    if not training:
        cls_all = cls_head[:n_pix, :CLS_OUT].reshape(b, A_TOTAL, NUM_CLASSES)
        box_all = box_head[:n_pix, :BOX_OUT].reshape(b, A_TOTAL, 4)
        output['detections_topk'] = _post_process(cls_all, box_all)
        # TODO(synk): generate_detections / per-image NMS (_batch_detection) is not provided in the
        # reference snippet; box decode + NMS is omitted.
    return output


# ==================================== main ===================================
if __name__ == "__main__":
    key = jax.random.PRNGKey(0)
    kx, kc_box, ks_box, kcls = jax.random.split(key, 4)

    # input image batch (NCHW, as PyTorch conv inputs)
    x = jax.random.normal(kx, (BATCH, C_IN, IMAGE_SIZE, IMAGE_SIZE), jnp.float32)

    # synthetic ground-truth targets (yxyx pixel boxes, 0-based class ids)
    centers = jax.random.uniform(kc_box, (BATCH, MAX_GT, 2), minval=16.0, maxval=IMAGE_SIZE - 16.0)
    sizes = jax.random.uniform(ks_box, (BATCH, MAX_GT, 2), minval=12.0, maxval=56.0)
    y1x1 = jnp.clip(centers - sizes / 2.0, 0.0, IMAGE_SIZE)
    y2x2 = jnp.clip(centers + sizes / 2.0, 0.0, IMAGE_SIZE)
    bbox = jnp.concatenate([y1x1, y2x2], axis=-1)
    gt_cls = jax.random.randint(kcls, (BATCH, MAX_GT), 0, NUM_CLASSES).astype(jnp.int32)
    target = dict(
        bbox=bbox.astype(jnp.float32),
        cls=gt_cls,
        img_scale=jnp.ones((BATCH,), jnp.float32),
        img_size=jnp.full((BATCH, 2), float(IMAGE_SIZE), jnp.float32),
    )

    # deterministic head parameters (natural, unpadded shapes)
    params = dict(
        w_proj=0.3 * jax.random.normal(jax.random.PRNGKey(1), (C_IN, C_FEAT), jnp.float32),
        b_proj=jnp.zeros((C_FEAT,), jnp.float32),
        w_cls=0.05 * jax.random.normal(jax.random.PRNGKey(2), (C_FEAT, CLS_OUT), jnp.float32),
        b_cls=jnp.full((CLS_OUT,), -4.595, jnp.float32),
        w_box=0.05 * jax.random.normal(jax.random.PRNGKey(3), (C_FEAT, BOX_OUT), jnp.float32),
        b_box=jnp.zeros((BOX_OUT,), jnp.float32),
    )

    fwd = jax.jit(det_bench_train_forward, static_argnames=('training',))

    out_train = fwd(params, x, target, training=True)
    jax.block_until_ready(out_train)

    out_eval = fwd(params, x, target, training=False)
    jax.block_until_ready(out_eval)

    print("KERNEL_OK")
</pallas_src>

<mosaic_0001>
module attributes {stable_mosaic.version = 11 : i64} {
  func.func @_head_kernel(%arg0: memref<688x8xf32, #tpu.memory_space<vmem>>, %arg1: memref<8x128xf32, #tpu.memory_space<vmem>>, %arg2: memref<1x128xf32, #tpu.memory_space<vmem>>, %arg3: memref<128x128xf32, #tpu.memory_space<vmem>>, %arg4: memref<1x128xf32, #tpu.memory_space<vmem>>, %arg5: memref<128x128xf32, #tpu.memory_space<vmem>>, %arg6: memref<1x128xf32, #tpu.memory_space<vmem>>, %arg7: memref<688x128xf32, #tpu.memory_space<vmem>>, %arg8: memref<688x128xf32, #tpu.memory_space<vmem>>) attributes {dimension_semantics = [], scalar_prefetch = 0 : i64, scratch_operands = 0 : i64, tpu.core_type = #tpu.core_type<tc>} {
    %c0 = arith.constant 0 : index
    %c0_0 = arith.constant 0 : index
    %0 = vector.load %arg0[%c0, %c0_0] : memref<688x8xf32, #tpu.memory_space<vmem>>, vector<688x8xf32>
    %c0_1 = arith.constant 0 : index
    %c0_2 = arith.constant 0 : index
    %1 = vector.load %arg1[%c0_1, %c0_2] : memref<8x128xf32, #tpu.memory_space<vmem>>, vector<8x128xf32>
    %cst = arith.constant dense<0.000000e+00> : vector<688x128xf32>
    %2 = tpu.matmul %0, %1, %cst {dimension_numbers = #tpu.dot_dimension_numbers<[1], [0], [0], [1], [0, 0, 1, 1], [], []>} : vector<688x8xf32>, vector<8x128xf32>, vector<688x128xf32> -> vector<688x128xf32>
    %c0_3 = arith.constant 0 : index
    %c0_4 = arith.constant 0 : index
    %3 = vector.load %arg2[%c0_3, %c0_4] : memref<1x128xf32, #tpu.memory_space<vmem>>, vector<1x128xf32>
    %4 = vector.broadcast %3 : vector<1x128xf32> to vector<688x128xf32>
    %5 = arith.addf %2, %4 : vector<688x128xf32>
    %cst_5 = arith.constant 0.000000e+00 : f32
    %6 = vector.broadcast %cst_5 : f32 to vector<688x128xf32>
    %7 = arith.maximumf %5, %6 : vector<688x128xf32>
    %c0_6 = arith.constant 0 : index
    %c0_7 = arith.constant 0 : index
    %8 = vector.load %arg3[%c0_6, %c0_7] : memref<128x128xf32, #tpu.memory_space<vmem>>, vector<128x128xf32>
    %cst_8 = arith.constant dense<0.000000e+00> : vector<688x128xf32>
    %9 = tpu.matmul %7, %8, %cst_8 {dimension_numbers = #tpu.dot_dimension_numbers<[1], [0], [0], [1], [0, 0, 1, 1], [], []>} : vector<688x128xf32>, vector<128x128xf32>, vector<688x128xf32> -> vector<688x128xf32>
    %c0_9 = arith.constant 0 : index
    %c0_10 = arith.constant 0 : index
    %10 = vector.load %arg4[%c0_9, %c0_10] : memref<1x128xf32, #tpu.memory_space<vmem>>, vector<1x128xf32>
    %11 = vector.broadcast %10 : vector<1x128xf32> to vector<688x128xf32>
    %12 = arith.addf %9, %11 : vector<688x128xf32>
    %c0_11 = arith.constant 0 : index
    %c0_12 = arith.constant 0 : index
    %13 = vector.load %arg7[%c0_11, %c0_12] : memref<688x128xf32, #tpu.memory_space<vmem>>, vector<688x128xf32>
    tpu.vector_store %arg7[%c0_11, %c0_12], %12 {strides = array<i32>} : memref<688x128xf32, #tpu.memory_space<vmem>>, vector<688x128xf32>,
    %c0_13 = arith.constant 0 : index
    %c0_14 = arith.constant 0 : index
    %14 = vector.load %arg5[%c0_13, %c0_14] : memref<128x128xf32, #tpu.memory_space<vmem>>, vector<128x128xf32>
    %cst_15 = arith.constant dense<0.000000e+00> : vector<688x128xf32>
    %15 = tpu.matmul %7, %14, %cst_15 {dimension_numbers = #tpu.dot_dimension_numbers<[1], [0], [0], [1], [0, 0, 1, 1], [], []>} : vector<688x128xf32>, vector<128x128xf32>, vector<688x128xf32> -> vector<688x128xf32>
    %c0_16 = arith.constant 0 : index
    %c0_17 = arith.constant 0 : index
    %16 = vector.load %arg6[%c0_16, %c0_17] : memref<1x128xf32, #tpu.memory_space<vmem>>, vector<1x128xf32>
    %17 = vector.broadcast %16 : vector<1x128xf32> to vector<688x128xf32>
    %18 = arith.addf %15, %17 : vector<688x128xf32>
    %c0_18 = arith.constant 0 : index
    %c0_19 = arith.constant 0 : index
    %19 = vector.load %arg8[%c0_18, %c0_19] : memref<688x128xf32, #tpu.memory_space<vmem>>, vector<688x128xf32>
    tpu.vector_store %arg8[%c0_18, %c0_19], %18 {strides = array<i32>} : memref<688x128xf32, #tpu.memory_space<vmem>>, vector<688x128xf32>,
    return
  }
}

module attributes {stable_mosaic.version = 11 : i64} {
  func.func @_iou_kernel(%arg0: memref<8x4xf32, #tpu.memory_space<vmem>>, %arg1: memref<4x3072xf32, #tpu.memory_space<vmem>>, %arg2: memref<8x3072xf32, #tpu.memory_space<vmem>>) attributes {dimension_semantics = [], scalar_prefetch = 0 : i64, scratch_operands = 0 : i64, tpu.core_type = #tpu.core_type<tc>} {
    %c0 = arith.constant 0 : index
    %c0_0 = arith.constant 0 : index
    %0 = vector.load %arg0[%c0, %c0_0] : memref<8x4xf32, #tpu.memory_space<vmem>>, vector<8x4xf32>
    %c0_1 = arith.constant 0 : index
    %c0_2 = arith.constant 0 : index
    %1 = vector.load %arg1[%c0_1, %c0_2] : memref<4x3072xf32, #tpu.memory_space<vmem>>, vector<4x3072xf32>
    %2 = vector.extract_strided_slice %0 {offsets = [0, 0], sizes = [8, 1], strides = [1, 1]} : vector<8x4xf32> to vector<8x1xf32>
    %3 = vector.extract_strided_slice %0 {offsets = [0, 1], sizes = [8, 1], strides = [1, 1]} : vector<8x4xf32> to vector<8x1xf32>
    %4 = vector.extract_strided_slice %0 {offsets = [0, 2], sizes = [8, 1], strides = [1, 1]} : vector<8x4xf32> to vector<8x1xf32>
    %5 = vector.extract_strided_slice %0 {offsets = [0, 3], sizes = [8, 1], strides = [1, 1]} : vector<8x4xf32> to vector<8x1xf32>
    %6 = vector.extract_strided_slice %1 {offsets = [0, 0], sizes = [1, 3072], strides = [1, 1]} : vector<4x3072xf32> to vector<1x3072xf32>
    %7 = vector.extract_strided_slice %1 {offsets = [1, 0], sizes = [1, 3072], strides = [1, 1]} : vector<4x3072xf32> to vector<1x3072xf32>
    %8 = vector.extract_strided_slice %1 {offsets = [2, 0], sizes = [1, 3072], strides = [1, 1]} : vector<4x3072xf32> to vector<1x3072xf32>
    %9 = vector.extract_strided_slice %1 {offsets = [3, 0], sizes = [1, 3072], strides = [1, 1]} : vector<4x3072xf32> to vector<1x3072xf32>
    %10 = vector.broadcast %2 : vector<8x1xf32> to vector<8x3072xf32>
    %11 = vector.broadcast %6 : vector<1x3072xf32> to vector<8x3072xf32>
    %12 = arith.maximumf %10, %11 : vector<8x3072xf32>
    %13 = vector.broadcast %3 : vector<8x1xf32> to vector<8x3072xf32>
    %14 = vector.broadcast %7 : vector<1x3072xf32> to vector<8x3072xf32>
    %15 = arith.maximumf %13, %14 : vector<8x3072xf32>
    %16 = vector.broadcast %4 : vector<8x1xf32> to vector<8x3072xf32>
    %17 = vector.broadcast %8 : vector<1x3072xf32> to vector<8x3072xf32>
    %18 = arith.minimumf %16, %17 : vector<8x3072xf32>
    %19 = vector.broadcast %5 : vector<8x1xf32> to vector<8x3072xf32>
    %20 = vector.broadcast %9 : vector<1x3072xf32> to vector<8x3072xf32>
    %21 = arith.minimumf %19, %20 : vector<8x3072xf32>
    %22 = arith.subf %18, %12 : vector<8x3072xf32>
    %cst = arith.constant 0.000000e+00 : f32
    %23 = vector.broadcast %cst : f32 to vector<8x3072xf32>
    %24 = arith.maximumf %22, %23 : vector<8x3072xf32>
    %25 = arith.subf %21, %15 : vector<8x3072xf32>
    %cst_3 = arith.constant 0.000000e+00 : f32
    %26 = vector.broadcast %cst_3 : f32 to vector<8x3072xf32>
    %27 = arith.maximumf %25, %26 : vector<8x3072xf32>
    %28 = arith.mulf %24, %27 : vector<8x3072xf32>
    %29 = arith.subf %4, %2 : vector<8x1xf32>
    %30 = arith.subf %5, %3 : vector<8x1xf32>
    %31 = arith.mulf %29, %30 : vector<8x1xf32>
    %32 = arith.subf %8, %6 : vector<1x3072xf32>
    %33 = arith.subf %9, %7 : vector<1x3072xf32>
    %34 = arith.mulf %32, %33 : vector<1x3072xf32>
    %35 = vector.broadcast %31 : vector<8x1xf32> to vector<8x3072xf32>
    %36 = vector.broadcast %34 : vector<1x3072xf32> to vector<8x3072xf32>
    %37 = arith.addf %35, %36 : vector<8x3072xf32>
    %38 = arith.subf %37, %28 : vector<8x3072xf32>
    %cst_4 = arith.constant 9.99999993E-9 : f32
    %39 = vector.broadcast %cst_4 : f32 to vector<8x3072xf32>
    %40 = arith.maximumf %38, %39 : vector<8x3072xf32>
    %41 = arith.divf %28, %40 : vector<8x3072xf32>
    %c0_5 = arith.constant 0 : index
    %c0_6 = arith.constant 0 : index
    %42 = vector.load %arg2[%c0_5, %c0_6] : memref<8x3072xf32, #tpu.memory_space<vmem>>, vector<8x3072xf32>
    tpu.vector_store %arg2[%c0_5, %c0_6], %41 {strides = array<i32>} : memref<8x3072xf32, #tpu.memory_space<vmem>>, vector<8x3072xf32>,
    return
  }
}

module attributes {stable_mosaic.version = 11 : i64} {
  func.func @_loss_kernel(%arg0: memref<688x128xf32, #tpu.memory_space<vmem>>, %arg1: memref<688x128xi32, #tpu.memory_space<vmem>>, %arg2: memref<688x128xf32, #tpu.memory_space<vmem>>, %arg3: memref<688x128xf32, #tpu.memory_space<vmem>>, %arg4: memref<1x1xf32, #tpu.memory_space<smem>>, %arg5: memref<1x1xf32, #tpu.memory_space<smem>>, %arg6: memref<1x1xf32, #tpu.memory_space<smem>>, %arg7: memref<1x1xf32, #tpu.memory_space<smem>>) attributes {dimension_semantics = [], scalar_prefetch = 0 : i64, scratch_operands = 0 : i64, tpu.core_type = #tpu.core_type<tc>} {
    %c0 = arith.constant 0 : index
    %c0_0 = arith.constant 0 : index
    %0 = vector.load %arg0[%c0, %c0_0] : memref<688x128xf32, #tpu.memory_space<vmem>>, vector<688x128xf32>
    %c0_1 = arith.constant 0 : index
    %c0_2 = arith.constant 0 : index
    %1 = vector.load %arg1[%c0_1, %c0_2] : memref<688x128xi32, #tpu.memory_space<vmem>>, vector<688x128xi32>
    %c0_3 = arith.constant 0 : index
    %c0_4 = arith.constant 0 : index
    %2 = memref.load %arg4[%c0_3, %c0_4] : memref<1x1xf32, #tpu.memory_space<smem>>
    %3 = tpu.iota {dimensions = array<i32: 1>} : vector<688x128xi32>
    %c7_i32 = arith.constant 7 : i32
    %4 = vector.broadcast %c7_i32 : i32 to vector<688x128xi32>
    %5 = arith.andi %3, %4 : vector<688x128xi32>
    %c0_i32 = arith.constant 0 : i32
    %6 = vector.broadcast %c0_i32 : i32 to vector<688x128xi32>
    %7 = arith.cmpi sge, %1, %6 : vector<688x128xi32>
    %8 = arith.cmpi eq, %5, %1 : vector<688x128xi32>
    %9 = arith.andi %8, %7 : vector<688x128xi1>
    %10 = arith.extui %9 : vector<688x128xi1> to vector<688x128xi32>
    %11 = arith.sitofp %10 : vector<688x128xi32> to vector<688x128xf32>
    %12 = math.absf %0 : vector<688x128xf32>
    %cst = arith.constant 0.000000e+00 : f32
    %13 = vector.broadcast %cst : f32 to vector<688x128xf32>
    %14 = arith.subf %13, %12 : vector<688x128xf32>
    %15 = math.exp %14 : vector<688x128xf32>
    %16 = math.log1p %15 : vector<688x128xf32>
    %cst_5 = arith.constant 0.000000e+00 : f32
    %17 = vector.broadcast %cst_5 : f32 to vector<688x128xf32>
    %18 = arith.maximumf %0, %17 : vector<688x128xf32>
    %19 = arith.mulf %0, %11 : vector<688x128xf32>
    %20 = arith.subf %18, %19 : vector<688x128xf32>
    %21 = arith.addf %20, %16 : vector<688x128xf32>
    %cst_6 = arith.constant 0.000000e+00 : f32
    %22 = vector.broadcast %cst_6 : f32 to vector<688x128xf32>
    %23 = arith.subf %22, %0 : vector<688x128xf32>
    %cst_7 = arith.constant 0.000000e+00 : f32
    %24 = vector.broadcast %cst_7 : f32 to vector<688x128xf32>
    %25 = arith.maximumf %23, %24 : vector<688x128xf32>
    %26 = arith.addf %25, %16 : vector<688x128xf32>
    %27 = arith.mulf %11, %0 : vector<688x128xf32>
    %28 = arith.addf %27, %26 : vector<688x128xf32>
    %cst_8 = arith.constant -1.500000e+00 : f32
    %29 = vector.broadcast %cst_8 : f32 to vector<688x128xf32>
    %30 = arith.mulf %29, %28 : vector<688x128xf32>
    %31 = math.exp %30 : vector<688x128xf32>
    %32 = arith.mulf %31, %21 : vector<688x128xf32>
    %cst_9 = arith.constant 2.500000e-01 : f32
    %33 = vector.broadcast %cst_9 : f32 to vector<688x128xf32>
    %34 = arith.mulf %33, %32 : vector<688x128xf32>
    %cst_10 = arith.constant 7.500000e-01 : f32
    %35 = vector.broadcast %cst_10 : f32 to vector<688x128xf32>
    %36 = arith.mulf %35, %32 : vector<688x128xf32>
    %37 = arith.select %9, %34, %36 : vector<688x128xi1>, vector<688x128xf32>
    %c-2_i32 = arith.constant -2 : i32
    %38 = vector.broadcast %c-2_i32 : i32 to vector<688x128xi32>
    %39 = arith.cmpi ne, %1, %38 : vector<688x128xi32>
    %40 = arith.extui %39 : vector<688x128xi1> to vector<688x128xi32>
    %41 = arith.sitofp %40 : vector<688x128xi32> to vector<688x128xf32>
    %42 = arith.mulf %37, %41 : vector<688x128xf32>
    %43 = vector.shape_cast %42 : vector<688x128xf32> to vector<1x688x128xf32>
    %cst_11 = arith.constant dense<0.000000e+00> : vector<1xf32>
    %44 = vector.multi_reduction <add>, %43, %cst_11 [1, 2] : vector<1x688x128xf32> to vector<1xf32>
    %45 = vector.shape_cast %44 : vector<1xf32> to vector<1x1x1xf32>
    %46 = vector.extract %45[0, 0, 0] : f32 from vector<1x1x1xf32>
    %47 = arith.divf %46, %2 : f32
    %c0_12 = arith.constant 0 : index
    %c0_13 = arith.constant 0 : index
    %48 = vector.load %arg2[%c0_12, %c0_13] : memref<688x128xf32, #tpu.memory_space<vmem>>, vector<688x128xf32>
    %c0_14 = arith.constant 0 : index
    %c0_15 = arith.constant 0 : index
    %49 = vector.load %arg3[%c0_14, %c0_15] : memref<688x128xf32, #tpu.memory_space<vmem>>, vector<688x128xf32>
    %50 = arith.subf %49, %48 : vector<688x128xf32>
    %51 = math.absf %50 : vector<688x128xf32>
    %cst_16 = arith.constant 1.000000e-01 : f32
    %52 = vector.broadcast %cst_16 : f32 to vector<688x128xf32>
    %53 = arith.minimumf %51, %52 : vector<688x128xf32>
    %54 = arith.subf %51, %53 : vector<688x128xf32>
    %cst_17 = arith.constant 5.000000e-01 : f32
    %55 = vector.broadcast %cst_17 : f32 to vector<688x128xf32>
    %56 = arith.mulf %55, %53 : vector<688x128xf32>
    %57 = arith.mulf %56, %53 : vector<688x128xf32>
    %cst_18 = arith.constant 1.000000e-01 : f32
    %58 = vector.broadcast %cst_18 : f32 to vector<688x128xf32>
    %59 = arith.mulf %58, %54 : vector<688x128xf32>
    %60 = arith.addf %57, %59 : vector<688x128xf32>
    %cst_19 = arith.constant 0.000000e+00 : f32
    %61 = vector.broadcast %cst_19 : f32 to vector<688x128xf32>
    %62 = arith.cmpf one, %49, %61 : vector<688x128xf32>
    %63 = arith.extui %62 : vector<688x128xi1> to vector<688x128xi32>
    %64 = arith.sitofp %63 : vector<688x128xi32> to vector<688x128xf32>
    %65 = arith.mulf %60, %64 : vector<688x128xf32>
    %66 = vector.shape_cast %65 : vector<688x128xf32> to vector<1x688x128xf32>
    %cst_20 = arith.constant dense<0.000000e+00> : vector<1xf32>
    %67 = vector.multi_reduction <add>, %66, %cst_20 [1, 2] : vector<1x688x128xf32> to vector<1xf32>
    %68 = vector.shape_cast %67 : vector<1xf32> to vector<1x1x1xf32>
    %69 = vector.extract %68[0, 0, 0] : f32 from vector<1x1x1xf32>
    %cst_21 = arith.constant 4.000000e+00 : f32
    %70 = arith.mulf %2, %cst_21 : f32
    %71 = arith.divf %69, %70 : f32
    %cst_22 = arith.constant 5.000000e+01 : f32
    %72 = arith.mulf %cst_22, %71 : f32
    %73 = arith.addf %47, %72 : f32
    %c0_23 = arith.constant 0 : index
    %c0_24 = arith.constant 0 : index
    %74 = memref.load %arg5[%c0_23, %c0_24] : memref<1x1xf32, #tpu.memory_space<smem>>
    memref.store %73, %arg5[%c0_23, %c0_24] : memref<1x1xf32, #tpu.memory_space<smem>>
    %c0_25 = arith.constant 0 : index
    %c0_26 = arith.constant 0 : index
    %75 = memref.load %arg6[%c0_25, %c0_26] : memref<1x1xf32, #tpu.memory_space<smem>>
    memref.store %47, %arg6[%c0_25, %c0_26] : memref<1x1xf32, #tpu.memory_space<smem>>
    %c0_27 = arith.constant 0 : index
    %c0_28 = arith.constant 0 : index
    %76 = memref.load %arg7[%c0_27, %c0_28] : memref<1x1xf32, #tpu.memory_space<smem>>
    memref.store %71, %arg7[%c0_27, %c0_28] : memref<1x1xf32, #tpu.memory_space<smem>>
    return
  }
}

</mosaic_0001>

<llo_original>
// kernel: det_bench_train_forward.4
$region0: #{det_bench_train_forward.4}
  #allocation0 [shape = 'u32[]', space=smem, size = 0x4, offset = 0x4, fixed_abs, tag = 'smem constant byte address 0x4 - core index']
  #allocation1 [shape = 'u32[72,128]{1,0:T(1,128)}', space=vmem, size = 0x9000, scoped, tag = 'internal scratch']
  %s0 = inlined_call_operand.vmem [shape: f32[8,4], index: 0, kind: input, shape index: {}]
  %s1 = inlined_call_operand.vmem [shape: f32[4,3072], index: 1, kind: input, shape index: {}]
  %s2 = inlined_call_operand.vmem [shape: f32[8,3072], index: 2, kind: output, shape index: {}]
  %s3 = sld [smem:[#allocation0]]
  $region18: #{det_bench_train_forward.4} parent=0
    _
  %s5 = ssub.s32 1, %s3
  %s6 = scalar_select 0, %s5, %s3
  // Predicated region
  $region2: #{det_bench_train_forward.4} parent=0 // pred_check
    _
  $region3: #{det_bench_train_forward.4} parent=0 // pred_check_branch
    %8 = sbr.rel (0) target = $region5
  $region4: #{det_bench_train_forward.4} parent=0 // pred_region
    _
  $region5: #{det_bench_train_forward.4} parent=0 // pred_fallthru
    _
  // Predicated region
  $region6: #{det_bench_train_forward.4} parent=0 // pred_check
    _
  $region7: #{det_bench_train_forward.4} parent=0 // pred_check_branch
    %10 = sbr.rel (0) target = $region9
  $region8: #{det_bench_train_forward.4} parent=0 // pred_region
    _
  $region9: #{det_bench_train_forward.4} parent=0 // pred_fallthru
    _
  %v11 = vld [vmem:[%s0] sm:$0xff]
  %v12 = vld [vmem:[%s1] sm:$0xff]
  %v13 = vld [vmem:[%s1 + $0x8] sm:$0xff]
  %v14 = vld [vmem:[%s1 + $0x10] sm:$0xff]
  %v15 = vld [vmem:[%s1 + $0x18] sm:$0xff]
  %v16 = vld [vmem:[%s1 + $0x20] sm:$0xff]
  %v17 = vld [vmem:[%s1 + $0x28] sm:$0xff]
  %v18 = vld [vmem:[%s1 + $0x30] sm:$0xff]
  %v19 = vld [vmem:[%s1 + $0x38] sm:$0xff]
  %v20 = vld [vmem:[%s1 + $0x40] sm:$0xff]
  %v21 = vld [vmem:[%s1 + $0x48] sm:$0xff]
  %v22 = vld [vmem:[%s1 + $0x50] sm:$0xff]
  %v23 = vld [vmem:[%s1 + $0x58] sm:$0xff]
  %25 = vset.pattern.permute.xlu0 0
  %26 = vperm.xlu0 %25, %v11
  %v27 = vpop.permute.xlu0 %26
  %v41 = vperm.slane %v12, 0
  %v42 = vperm.slane %v12, 4
  %v43 = vperm.slane %v13, 0
  %v44 = vperm.slane %v13, 4
  %v45 = vperm.slane %v14, 0
  %v46 = vperm.slane %v14, 4
  %v47 = vperm.slane %v15, 0
  %v48 = vperm.slane %v15, 4
  %v49 = vperm.slane %v16, 0
  %v50 = vperm.slane %v16, 4
  %v51 = vperm.slane %v17, 0
  %v52 = vperm.slane %v17, 4
  %v53 = vperm.slane %v18, 0
  %v54 = vperm.slane %v18, 4
  %v55 = vperm.slane %v19, 0
  %v56 = vperm.slane %v19, 4
  %v57 = vperm.slane %v20, 0
  %v58 = vperm.slane %v20, 4
  %v59 = vperm.slane %v21, 0
  %v60 = vperm.slane %v21, 4
  %v61 = vperm.slane %v22, 0
  %v62 = vperm.slane %v22, 4
  %v63 = vperm.slane %v23, 0
  %v64 = vperm.slane %v23, 4
  %v89 = vperm.slane %v41, 0
  %v90 = vperm.slane %v42, 0
  %v91 = vperm.slane %v43, 0
  %v92 = vperm.slane %v44, 0
  %v93 = vperm.slane %v45, 0
  %v94 = vperm.slane %v46, 0
  %v95 = vperm.slane %v47, 0
  %v96 = vperm.slane %v48, 0
  %v97 = vperm.slane %v49, 0
  %v98 = vperm.slane %v50, 0
  %v99 = vperm.slane %v51, 0
  %v100 = vperm.slane %v52, 0
  %v101 = vperm.slane %v53, 0
  %v102 = vperm.slane %v54, 0
  %v103 = vperm.slane %v55, 0
  %v104 = vperm.slane %v56, 0
  %v105 = vperm.slane %v57, 0
  %v106 = vperm.slane %v58, 0
  %v107 = vperm.slane %v59, 0
  %v108 = vperm.slane %v60, 0
  %v109 = vperm.slane %v61, 0
  %v110 = vperm.slane %v62, 0
  %v111 = vperm.slane %v63, 0
  %v112 = vperm.slane %v64, 0
  %v113 = vmax.f32 %v27, %v89
  %v114 = vmax.f32 %v27, %v90
  %v115 = vmax.f32 %v27, %v91
  %v116 = vmax.f32 %v27, %v92
  %v117 = vmax.f32 %v27, %v93
  %v118 = vmax.f32 %v27, %v94
  %v119 = vmax.f32 %v27, %v95
  %v120 = vmax.f32 %v27, %v96
  %v121 = vmax.f32 %v27, %v97
  %v122 = vmax.f32 %v27, %v98
  %v123 = vmax.f32 %v27, %v99
  %v124 = vmax.f32 %v27, %v100
  %v125 = vmax.f32 %v27, %v101
  %v126 = vmax.f32 %v27, %v102
  %v127 = vmax.f32 %v27, %v103
  %v128 = vmax.f32 %v27, %v104
  %v129 = vmax.f32 %v27, %v105
  %v130 = vmax.f32 %v27, %v106
  %v131 = vmax.f32 %v27, %v107
  %v132 = vmax.f32 %v27, %v108
  %v133 = vmax.f32 %v27, %v109
  %v134 = vmax.f32 %v27, %v110
  %v135 = vmax.f32 %v27, %v111
  %v136 = vmax.f32 %v27, %v112
  %137 = vset.pattern.permute.xlu0 1
  %138 = vperm.xlu0 %137, %v11
  %v139 = vpop.permute.xlu0 %138
  %v141 = vperm.slane %v12, 1
  %v142 = vperm.slane %v12, 5
  %v143 = vperm.slane %v13, 1
  %v144 = vperm.slane %v13, 5
  %v145 = vperm.slane %v14, 1
  %v146 = vperm.slane %v14, 5
  %v147 = vperm.slane %v15, 1
  %v148 = vperm.slane %v15, 5
  %v149 = vperm.slane %v16, 1
  %v150 = vperm.slane %v16, 5
  %v151 = vperm.slane %v17, 1
  %v152 = vperm.slane %v17, 5
  %v153 = vperm.slane %v18, 1
  %v154 = vperm.slane %v18, 5
  %v155 = vperm.slane %v19, 1
  %v156 = vperm.slane %v19, 5
  %v157 = vperm.slane %v20, 1
  %v158 = vperm.slane %v20, 5
  %v159 = vperm.slane %v21, 1
  %v160 = vperm.slane %v21, 5
  %v161 = vperm.slane %v22, 1
  %v162 = vperm.slane %v22, 5
  %v163 = vperm.slane %v23, 1
  %v164 = vperm.slane %v23, 5
  %v189 = vperm.slane %v141, 1
  %v190 = vperm.slane %v142, 1
  %v191 = vperm.slane %v143, 1
  %v192 = vperm.slane %v144, 1
  %v193 = vperm.slane %v145, 1
  %v194 = vperm.slane %v146, 1
  %v195 = vperm.slane %v147, 1
  %v196 = vperm.slane %v148, 1
  %v197 = vperm.slane %v149, 1
  %v198 = vperm.slane %v150, 1
  %v199 = vperm.slane %v151, 1
  %v200 = vperm.slane %v152, 1
  %v201 = vperm.slane %v153, 1
  %v202 = vperm.slane %v154, 1
  %v203 = vperm.slane %v155, 1
  %v204 = vperm.slane %v156, 1
  %v205 = vperm.slane %v157, 1
  %v206 = vperm.slane %v158, 1
  %v207 = vperm.slane %v159, 1
  %v208 = vperm.slane %v160, 1
  %v209 = vperm.slane %v161, 1
  %v210 = vperm.slane %v162, 1
  %v211 = vperm.slane %v163, 1
  %v212 = vperm.slane %v164, 1
  %v213 = vmax.f32 %v139, %v189
  %v214 = vmax.f32 %v139, %v190
  %v215 = vmax.f32 %v139, %v191
  %v216 = vmax.f32 %v139, %v192
  %v217 = vmax.f32 %v139, %v193
  %v218 = vmax.f32 %v139, %v194
  %v219 = vmax.f32 %v139, %v195
  %v220 = vmax.f32 %v139, %v196
  %v221 = vmax.f32 %v139, %v197
  %v222 = vmax.f32 %v139, %v198
  %v223 = vmax.f32 %v139, %v199
  %v224 = vmax.f32 %v139, %v200
  %v225 = vmax.f32 %v139, %v201
  %v226 = vmax.f32 %v139, %v202
  %v227 = vmax.f32 %v139, %v203
  %v228 = vmax.f32 %v139, %v204
  %v229 = vmax.f32 %v139, %v205
  %v230 = vmax.f32 %v139, %v206
  %v231 = vmax.f32 %v139, %v207
  %v232 = vmax.f32 %v139, %v208
  %v233 = vmax.f32 %v139, %v209
  %v234 = vmax.f32 %v139, %v210
  %v235 = vmax.f32 %v139, %v211
  %v236 = vmax.f32 %v139, %v212
  %237 = vset.pattern.permute.xlu0 2
  %238 = vperm.xlu0 %237, %v11
  %v239 = vpop.permute.xlu0 %238
  %v241 = vperm.slane %v12, 2
  %v242 = vperm.slane %v12, 6
  %v243 = vperm.slane %v13, 2
  %v244 = vperm.slane %v13, 6
  %v245 = vperm.slane %v14, 2
  %v246 = vperm.slane %v14, 6
  %v247 = vperm.slane %v15, 2
  %v248 = vperm.slane %v15, 6
  %v249 = vperm.slane %v16, 2
  %v250 = vperm.slane %v16, 6
  %v251 = vperm.slane %v17, 2
  %v252 = vperm.slane %v17, 6
  %v253 = vperm.slane %v18, 2
  %v254 = vperm.slane %v18, 6
  %v255 = vperm.slane %v19, 2
  %v256 = vperm.slane %v19, 6
  %v257 = vperm.slane %v20, 2
  %v258 = vperm.slane %v20, 6
  %v259 = vperm.slane %v21, 2
  %v260 = vperm.slane %v21, 6
  %v261 = vperm.slane %v22, 2
  %v262 = vperm.slane %v22, 6
  %v263 = vperm.slane %v23, 2
  %v264 = vperm.slane %v23, 6
  %v289 = vperm.slane %v241, 2
  %v290 = vperm.slane %v242, 2
  %v291 = vperm.slane %v243, 2
  %v292 = vperm.slane %v244, 2
  %v293 = vperm.slane %v245, 2
  %v294 = vperm.slane %v246, 2
  %v295 = vperm.slane %v247, 2
  %v296 = vperm.slane %v248, 2
  %v297 = vperm.slane %v249, 2
  %v298 = vperm.slane %v250, 2
  %v299 = vperm.slane %v251, 2
  %v300 = vperm.slane %v252, 2
  %v301 = vperm.slane %v253, 2
  %v302 = vperm.slane %v254, 2
  %v303 = vperm.slane %v255, 2
  %v304 = vperm.slane %v256, 2
  %v305 = vperm.slane %v257, 2
  %v306 = vperm.slane %v258, 2
  %v307 = vperm.slane %v259, 2
  %v308 = vperm.slane %v260, 2
  %v309 = vperm.slane %v261, 2
  %v310 = vperm.slane %v262, 2
  %v311 = vperm.slane %v263, 2
  %v312 = vperm.slane %v264, 2
  %v313 = vmin.f32 %v239, %v289
  %v314 = vmin.f32 %v239, %v290
  %v315 = vmin.f32 %v239, %v291
  %v316 = vmin.f32 %v239, %v292
  %v317 = vmin.f32 %v239, %v293
  %v318 = vmin.f32 %v239, %v294
  %v319 = vmin.f32 %v239, %v295
  %v320 = vmin.f32 %v239, %v296
  %v321 = vmin.f32 %v239, %v297
  %v322 = vmin.f32 %v239, %v298
  %v323 = vmin.f32 %v239, %v299
  %v324 = vmin.f32 %v239, %v300
  %v325 = vmin.f32 %v239, %v301
  %v326 = vmin.f32 %v239, %v302
  %v327 = vmin.f32 %v239, %v303
  %v328 = vmin.f32 %v239, %v304
  %v329 = vmin.f32 %v239, %v305
  %v330 = vmin.f32 %v239, %v306
  %v331 = vmin.f32 %v239, %v307
  %v332 = vmin.f32 %v239, %v308
  %v333 = vmin.f32 %v239, %v309
  %v334 = vmin.f32 %v239, %v310
  %v335 = vmin.f32 %v239, %v311
  %v336 = vmin.f32 %v239, %v312
  %337 = vset.pattern.permute.xlu0 3
  %338 = vperm.xlu0 %337, %v11
  %v339 = vpop.permute.xlu0 %338
  %v341 = vperm.slane %v12, 3
  %v342 = vperm.slane %v12, 7
  %v343 = vperm.slane %v13, 3
  %v344 = vperm.slane %v13, 7
  %v345 = vperm.slane %v14, 3
  %v346 = vperm.slane %v14, 7
  %v347 = vperm.slane %v15, 3
  %v348 = vperm.slane %v15, 7
  %v349 = vperm.slane %v16, 3
  %v350 = vperm.slane %v16, 7
  %v351 = vperm.slane %v17, 3
  %v352 = vperm.slane %v17, 7
  %v353 = vperm.slane %v18, 3
  %v354 = vperm.slane %v18, 7
  %v355 = vperm.slane %v19, 3
  %v356 = vperm.slane %v19, 7
  %v357 = vperm.slane %v20, 3
  %v358 = vperm.slane %v20, 7
  %v359 = vperm.slane %v21, 3
  %v360 = vperm.slane %v21, 7
  %v361 = vperm.slane %v22, 3
  %v362 = vperm.slane %v22, 7
  %v363 = vperm.slane %v23, 3
  %v364 = vperm.slane %v23, 7
  %v389 = vperm.slane %v341, 3
  %v390 = vperm.slane %v342, 3
  %v391 = vperm.slane %v343, 3
  %v392 = vperm.slane %v344, 3
  %v393 = vperm.slane %v345, 3
  %v394 = vperm.slane %v346, 3
  %v395 = vperm.slane %v347, 3
  %v396 = vperm.slane %v348, 3
  %v397 = vperm.slane %v349, 3
  %v398 = vperm.slane %v350, 3
  %v399 = vperm.slane %v351, 3
  %v400 = vperm.slane %v352, 3
  %v401 = vperm.slane %v353, 3
  %v402 = vperm.slane %v354, 3
  %v403 = vperm.slane %v355, 3
  %v404 = vperm.slane %v356, 3
  %v405 = vperm.slane %v357, 3
  %v406 = vperm.slane %v358, 3
  %v407 = vperm.slane %v359, 3
  %v408 = vperm.slane %v360, 3
  %v409 = vperm.slane %v361, 3
  %v410 = vperm.slane %v362, 3
  %v411 = vperm.slane %v363, 3
  %v412 = vperm.slane %v364, 3
  %v413 = vmin.f32 %v339, %v389
  %v414 = vmin.f32 %v339, %v390
  %v415 = vmin.f32 %v339, %v391
  %v416 = vmin.f32 %v339, %v392
  %v417 = vmin.f32 %v339, %v393
  %v418 = vmin.f32 %v339, %v394
  %v419 = vmin.f32 %v339, %v395
  %v420 = vmin.f32 %v339, %v396
  %v421 = vmin.f32 %v339, %v397
  %v422 = vmin.f32 %v339, %v398
  %v423 = vmin.f32 %v339, %v399
  %v424 = vmin.f32 %v339, %v400
  %v425 = vmin.f32 %v339, %v401
  %v426 = vmin.f32 %v339, %v402
  %v427 = vmin.f32 %v339, %v403
  %v428 = vmin.f32 %v339, %v404
  %v429 = vmin.f32 %v339, %v405
  %v430 = vmin.f32 %v339, %v406
  %v431 = vmin.f32 %v339, %v407
  %v432 = vmin.f32 %v339, %v408
  %v433 = vmin.f32 %v339, %v409
  %v434 = vmin.f32 %v339, %v410
  %v435 = vmin.f32 %v339, %v411
  %v436 = vmin.f32 %v339, %v412
  %v437 = vsub.f32 %v313, %v113
  %v438 = vsub.f32 %v314, %v114
  %v439 = vsub.f32 %v315, %v115
  %v440 = vsub.f32 %v316, %v116
  %v441 = vsub.f32 %v317, %v117
  %v442 = vsub.f32 %v318, %v118
  %v443 = vsub.f32 %v319, %v119
  %v444 = vsub.f32 %v320, %v120
  %v445 = vsub.f32 %v321, %v121
  %v446 = vsub.f32 %v322, %v122
  %v447 = vsub.f32 %v323, %v123
  %v448 = vsub.f32 %v324, %v124
  %v449 = vsub.f32 %v325, %v125
  %v450 = vsub.f32 %v326, %v126
  %v451 = vsub.f32 %v327, %v127
  %v452 = vsub.f32 %v328, %v128
  %v453 = vsub.f32 %v329, %v129
  %v454 = vsub.f32 %v330, %v130
  %v455 = vsub.f32 %v331, %v131
  %v456 = vsub.f32 %v332, %v132
  %v457 = vsub.f32 %v333, %v133
  %v458 = vsub.f32 %v334, %v134
  %v459 = vsub.f32 %v335, %v135
  %v460 = vsub.f32 %v336, %v136
  %v461 = vmax.f32 %v437, 0.0
  %v462 = vmax.f32 %v438, 0.0
  %v463 = vmax.f32 %v439, 0.0
  %v464 = vmax.f32 %v440, 0.0
  %v465 = vmax.f32 %v441, 0.0
  %v466 = vmax.f32 %v442, 0.0
  %v467 = vmax.f32 %v443, 0.0
  %v468 = vmax.f32 %v444, 0.0
  %v469 = vmax.f32 %v445, 0.0
  %v470 = vmax.f32 %v446, 0.0
  %v471 = vmax.f32 %v447, 0.0
  %v472 = vmax.f32 %v448, 0.0
  %v473 = vmax.f32 %v449, 0.0
  %v474 = vmax.f32 %v450, 0.0
  %v475 = vmax.f32 %v451, 0.0
  %v476 = vmax.f32 %v452, 0.0
  %v477 = vmax.f32 %v453, 0.0
  %v478 = vmax.f32 %v454, 0.0
  %v479 = vmax.f32 %v455, 0.0
  %v480 = vmax.f32 %v456, 0.0
  %v481 = vmax.f32 %v457, 0.0
  %v482 = vmax.f32 %v458, 0.0
  %v483 = vmax.f32 %v459, 0.0
  %v484 = vmax.f32 %v460, 0.0
  %v485 = vsub.f32 %v413, %v213
  %v486 = vsub.f32 %v414, %v214
  %v487 = vsub.f32 %v415, %v215
  %v488 = vsub.f32 %v416, %v216
  %v489 = vsub.f32 %v417, %v217
  %v490 = vsub.f32 %v418, %v218
  %v491 = vsub.f32 %v419, %v219
  %v492 = vsub.f32 %v420, %v220
  %v493 = vsub.f32 %v421, %v221
  %v494 = vsub.f32 %v422, %v222
  %v495 = vsub.f32 %v423, %v223
  %v496 = vsub.f32 %v424, %v224
  %v497 = vsub.f32 %v425, %v225
  %v498 = vsub.f32 %v426, %v226
  %v499 = vsub.f32 %v427, %v227
  %v500 = vsub.f32 %v428, %v228
  %v501 = vsub.f32 %v429, %v229
  %v502 = vsub.f32 %v430, %v230
  %v503 = vsub.f32 %v431, %v231
  %v504 = vsub.f32 %v432, %v232
  %v505 = vsub.f32 %v433, %v233
  %v506 = vsub.f32 %v434, %v234
  %v507 = vsub.f32 %v435, %v235
  %v508 = vsub.f32 %v436, %v236
  %v509 = vmax.f32 %v485, 0.0
  %v510 = vmax.f32 %v486, 0.0
  %v511 = vmax.f32 %v487, 0.0
  %v512 = vmax.f32 %v488, 0.0
  %v513 = vmax.f32 %v489, 0.0
  %v514 = vmax.f32 %v490, 0.0
  %v515 = vmax.f32 %v491, 0.0
  %v516 = vmax.f32 %v492, 0.0
  %v517 = vmax.f32 %v493, 0.0
  %v518 = vmax.f32 %v494, 0.0
  %v519 = vmax.f32 %v495, 0.0
  %v520 = vmax.f32 %v496, 0.0
  %v521 = vmax.f32 %v497, 0.0
  %v522 = vmax.f32 %v498, 0.0
  %v523 = vmax.f32 %v499, 0.0
  %v524 = vmax.f32 %v500, 0.0
  %v525 = vmax.f32 %v501, 0.0
  %v526 = vmax.f32 %v502, 0.0
  %v527 = vmax.f32 %v503, 0.0
  %v528 = vmax.f32 %v504, 0.0
  %v529 = vmax.f32 %v505, 0.0
  %v530 = vmax.f32 %v506, 0.0
  %v531 = vmax.f32 %v507, 0.0
  %v532 = vmax.f32 %v508, 0.0
  %v533 = vmul.f32 %v461, %v509
  %v534 = vmul.f32 %v462, %v510
  %v535 = vmul.f32 %v463, %v511
  %v536 = vmul.f32 %v464, %v512
  %v537 = vmul.f32 %v465, %v513
  %v538 = vmul.f32 %v466, %v514
  %v539 = vmul.f32 %v467, %v515
  %v540 = vmul.f32 %v468, %v516
  %v541 = vmul.f32 %v469, %v517
  %v542 = vmul.f32 %v470, %v518
  %v543 = vmul.f32 %v471, %v519
  %v544 = vmul.f32 %v472, %v520
  %v545 = vmul.f32 %v473, %v521
  %v546 = vmul.f32 %v474, %v522
  %v547 = vmul.f32 %v475, %v523
  %v548 = vmul.f32 %v476, %v524
  %v549 = vmul.f32 %v477, %v525
  %v550 = vmul.f32 %v478, %v526
  %v551 = vmul.f32 %v479, %v527
  %v552 = vmul.f32 %v480, %v528
  %v553 = vmul.f32 %v481, %v529
  %v554 = vmul.f32 %v482, %v530
  %v555 = vmul.f32 %v483, %v531
  %v556 = vmul.f32 %v484, %v532
  %557 = vrot.lane.b32.xlu0 %v11, 2
  %v558 = vpop.permute.xlu0 %557
  %v560 = vsub.f32 %v11, %v558
  %562 = vrot.lane.b32.xlu0 %v560, 127
  %v563 = vpop.permute.xlu0 %562
  %v565 = vmul.f32 %v560, %v563
  %v566 = vrot.slane %v12, 6
  %v567 = vrot.slane %v13, 6
  %v568 = vrot.slane %v14, 6
  %v569 = vrot.slane %v15, 6
  %v570 = vrot.slane %v16, 6
  %v571 = vrot.slane %v17, 6
  %v572 = vrot.slane %v18, 6
  %v573 = vrot.slane %v19, 6
  %v574 = vrot.slane %v20, 6
  %v575 = vrot.slane %v21, 6
  %v576 = vrot.slane %v22, 6
  %v577 = vrot.slane %v23, 6
  %v590 = vsub.f32 %v12, %v566
  %v591 = vsub.f32 %v13, %v567
  %v592 = vsub.f32 %v14, %v568
  %v593 = vsub.f32 %v15, %v569
  %v594 = vsub.f32 %v16, %v570
  %v595 = vsub.f32 %v17, %v571
  %v596 = vsub.f32 %v18, %v572
  %v597 = vsub.f32 %v19, %v573
  %v598 = vsub.f32 %v20, %v574
  %v599 = vsub.f32 %v21, %v575
  %v600 = vsub.f32 %v22, %v576
  %v601 = vsub.f32 %v23, %v577
  %v614 = vrot.slane %v590, 5
  %v615 = vrot.slane %v614, 4
  %v616 = vrot.slane %v591, 5
  %v617 = vrot.slane %v616, 4
  %v618 = vrot.slane %v592, 5
  %v619 = vrot.slane %v618, 4
  %v620 = vrot.slane %v593, 5
  %v621 = vrot.slane %v620, 4
  %v622 = vrot.slane %v594, 5
  %v623 = vrot.slane %v622, 4
  %v624 = vrot.slane %v595, 5
  %v625 = vrot.slane %v624, 4
  %v626 = vrot.slane %v596, 5
  %v627 = vrot.slane %v626, 4
  %v628 = vrot.slane %v597, 5
  %v629 = vrot.slane %v628, 4
  %v630 = vrot.slane %v598, 5
  %v631 = vrot.slane %v630, 4
  %v632 = vrot.slane %v599, 5
  %v633 = vrot.slane %v632, 4
  %v634 = vrot.slane %v600, 5
  %v635 = vrot.slane %v634, 4
  %v636 = vrot.slane %v601, 5
  %v637 = vrot.slane %v636, 4
  %v650 = vmul.f32 %v590, %v615
  %v651 = vmul.f32 %v591, %v617
  %v652 = vmul.f32 %v592, %v619
  %v653 = vmul.f32 %v593, %v621
  %v654 = vmul.f32 %v594, %v623
  %v655 = vmul.f32 %v595, %v625
  %v656 = vmul.f32 %v596, %v627
  %v657 = vmul.f32 %v597, %v629
  %v658 = vmul.f32 %v598, %v631
  %v659 = vmul.f32 %v599, %v633
  %v660 = vmul.f32 %v600, %v635
  %v661 = vmul.f32 %v601, %v637
  %663 = vset.pattern.permute.xlu0 2
  %664 = vperm.xlu0 %663, %v565
  %v665 = vpop.permute.xlu0 %664
  %v679 = vperm.slane %v650, 2
  %v680 = vperm.slane %v650, 6
  %v681 = vperm.slane %v651, 2
  %v682 = vperm.slane %v651, 6
  %v683 = vperm.slane %v652, 2
  %v684 = vperm.slane %v652, 6
  %v685 = vperm.slane %v653, 2
  %v686 = vperm.slane %v653, 6
  %v687 = vperm.slane %v654, 2
  %v688 = vperm.slane %v654, 6
  %v689 = vperm.slane %v655, 2
  %v690 = vperm.slane %v655, 6
  %v691 = vperm.slane %v656, 2
  %v692 = vperm.slane %v656, 6
  %v693 = vperm.slane %v657, 2
  %v694 = vperm.slane %v657, 6
  %v695 = vperm.slane %v658, 2
  %v696 = vperm.slane %v658, 6
  %v697 = vperm.slane %v659, 2
  %v698 = vperm.slane %v659, 6
  %v699 = vperm.slane %v660, 2
  %v700 = vperm.slane %v660, 6
  %v701 = vperm.slane %v661, 2
  %v702 = vperm.slane %v661, 6
  %v727 = vperm.slane %v679, 2
  %v728 = vperm.slane %v680, 2
  %v729 = vperm.slane %v681, 2
  %v730 = vperm.slane %v682, 2
  %v731 = vperm.slane %v683, 2
  %v732 = vperm.slane %v684, 2
  %v733 = vperm.slane %v685, 2
  %v734 = vperm.slane %v686, 2
  %v735 = vperm.slane %v687, 2
  %v736 = vperm.slane %v688, 2
  %v737 = vperm.slane %v689, 2
  %v738 = vperm.slane %v690, 2
  %v739 = vperm.slane %v691, 2
  %v740 = vperm.slane %v692, 2
  %v741 = vperm.slane %v693, 2
  %v742 = vperm.slane %v694, 2
  %v743 = vperm.slane %v695, 2
  %v744 = vperm.slane %v696, 2
  %v745 = vperm.slane %v697, 2
  %v746 = vperm.slane %v698, 2
  %v747 = vperm.slane %v699, 2
  %v748 = vperm.slane %v700, 2
  %v749 = vperm.slane %v701, 2
  %v750 = vperm.slane %v702, 2
  %v751 = vadd.f32 %v665, %v727
  %v752 = vadd.f32 %v665, %v728
  %v753 = vadd.f32 %v665, %v729
  %v754 = vadd.f32 %v665, %v730
  %v755 = vadd.f32 %v665, %v731
  %v756 = vadd.f32 %v665, %v732
  %v757 = vadd.f32 %v665, %v733
  %v758 = vadd.f32 %v665, %v734
  %v759 = vadd.f32 %v665, %v735
  %v760 = vadd.f32 %v665, %v736
  %v761 = vadd.f32 %v665, %v737
  %v762 = vadd.f32 %v665, %v738
  %v763 = vadd.f32 %v665, %v739
  %v764 = vadd.f32 %v665, %v740
  %v765 = vadd.f32 %v665, %v741
  %v766 = vadd.f32 %v665, %v742
  %v767 = vadd.f32 %v665, %v743
  %v768 = vadd.f32 %v665, %v744
  %v769 = vadd.f32 %v665, %v745
  %v770 = vadd.f32 %v665, %v746
  %v771 = vadd.f32 %v665, %v747
  %v772 = vadd.f32 %v665, %v748
  %v773 = vadd.f32 %v665, %v749
  %v774 = vadd.f32 %v665, %v750
  %v775 = vsub.f32 %v751, %v533
  %v776 = vsub.f32 %v752, %v534
  %v777 = vsub.f32 %v753, %v535
  %v778 = vsub.f32 %v754, %v536
  %v779 = vsub.f32 %v755, %v537
  %v780 = vsub.f32 %v756, %v538
  %v781 = vsub.f32 %v757, %v539
  %v782 = vsub.f32 %v758, %v540
  %v783 = vsub.f32 %v759, %v541
  %v784 = vsub.f32 %v760, %v542
  %v785 = vsub.f32 %v761, %v543
  %v786 = vsub.f32 %v762, %v544
  %v787 = vsub.f32 %v763, %v545
  %v788 = vsub.f32 %v764, %v546
  %v789 = vsub.f32 %v765, %v547
  %v790 = vsub.f32 %v766, %v548
  %v791 = vsub.f32 %v767, %v549
  %v792 = vsub.f32 %v768, %v550
  %v793 = vsub.f32 %v769, %v551
  %v794 = vsub.f32 %v770, %v552
  %v795 = vsub.f32 %v771, %v553
  %v796 = vsub.f32 %v772, %v554
  %v797 = vsub.f32 %v773, %v555
  %v798 = vsub.f32 %v774, %v556
  %v799 = vmax.f32 %v775, 1e-08
  %v800 = vmax.f32 %v776, 1e-08
  %v801 = vmax.f32 %v777, 1e-08
  %v802 = vmax.f32 %v778, 1e-08
  %v803 = vmax.f32 %v779, 1e-08
  %v804 = vmax.f32 %v780, 1e-08
  %v805 = vmax.f32 %v781, 1e-08
  %v806 = vmax.f32 %v782, 1e-08
  %v807 = vmax.f32 %v783, 1e-08
  %v808 = vmax.f32 %v784, 1e-08
  %v809 = vmax.f32 %v785, 1e-08
  %v810 = vmax.f32 %v786, 1e-08
  %v811 = vmax.f32 %v787, 1e-08
  %v812 = vmax.f32 %v788, 1e-08
  %v813 = vmax.f32 %v789, 1e-08
  %v814 = vmax.f32 %v790, 1e-08
  %v815 = vmax.f32 %v791, 1e-08
  %v816 = vmax.f32 %v792, 1e-08
  %v817 = vmax.f32 %v793, 1e-08
  %v818 = vmax.f32 %v794, 1e-08
  %v819 = vmax.f32 %v795, 1e-08
  %v820 = vmax.f32 %v796, 1e-08
  %v821 = vmax.f32 %v797, 1e-08
  %v822 = vmax.f32 %v798, 1e-08
  %v823 = vrcp.pop %v799
  %v824 = vmul.f32 %v799, %v823
  %v825 = vsub.f32 1.0, %v824
  %v826 = vmul.f32 %v823, %v825
  %v827 = vadd.f32 %v823, %v826
  %vm828 = vweird.f32 %v799
  %vm829 = vweird.f32 %v823
  %vm830 = vmor %vm828, %vm829
  %v831 = vsel %vm830, %v823, %v827
  %v832 = vand.u32 2147483647, %v799
  %vm833 = vcmp.eq.f32.partialorder %v832, 8.507059e+37
  %v834 = vand.u32 %v799, 2147483648
  %v835 = vor.u32 1.1754944e-38, %v834
  %v836 = vsel %vm833, %v835, %v831
  %v837 = vmul.f32 %v533, %v836
  %v838 = vrcp.pop %v800
  %v839 = vmul.f32 %v800, %v838
  %v840 = vsub.f32 1.0, %v839
  %v841 = vmul.f32 %v838, %v840
  %v842 = vadd.f32 %v838, %v841
  %vm843 = vweird.f32 %v800
  %vm844 = vweird.f32 %v838
  %vm845 = vmor %vm843, %vm844
  %v846 = vsel %vm845, %v838, %v842
  %v847 = vand.u32 2147483647, %v800
  %vm848 = vcmp.eq.f32.partialorder %v847, 8.507059e+37
  %v849 = vand.u32 %v800, 2147483648
  %v850 = vor.u32 1.1754944e-38, %v849
  %v851 = vsel %vm848, %v850, %v846
  %v852 = vmul.f32 %v534, %v851
  %v853 = vrcp.pop %v801
  %v854 = vmul.f32 %v801, %v853
  %v855 = vsub.f32 1.0, %v854
  %v856 = vmul.f32 %v853, %v855
  %v857 = vadd.f32 %v853, %v856
  %vm858 = vweird.f32 %v801
  %vm859 = vweird.f32 %v853
  %vm860 = vmor %vm858, %vm859
  %v861 = vsel %vm860, %v853, %v857
  %v862 = vand.u32 2147483647, %v801
  %vm863 = vcmp.eq.f32.partialorder %v862, 8.507059e+37
  %v864 = vand.u32 %v801, 2147483648
  %v865 = vor.u32 1.1754944e-38, %v864
  %v866 = vsel %vm863, %v865, %v861
  %v867 = vmul.f32 %v535, %v866
  %v868 = vrcp.pop %v802
  %v869 = vmul.f32 %v802, %v868
  %v870 = vsub.f32 1.0, %v869
  %v871 = vmul.f32 %v868, %v870
  %v872 = vadd.f32 %v868, %v871
  %vm873 = vweird.f32 %v802
  %vm874 = vweird.f32 %v868
  %vm875 = vmor %vm873, %vm874
  %v876 = vsel %vm875, %v868, %v872
  %v877 = vand.u32 2147483647, %v802
  %vm878 = vcmp.eq.f32.partialorder %v877, 8.507059e+37
  %v879 = vand.u32 %v802, 2147483648
  %v880 = vor.u32 1.1754944e-38, %v879
  %v881 = vsel %vm878, %v880, %v876
  %v882 = vmul.f32 %v536, %v881
  %v883 = vrcp.pop %v803
  %v884 = vmul.f32 %v803, %v883
  %v885 = vsub.f32 1.0, %v884
  %v886 = vmul.f32 %v883, %v885
  %v887 = vadd.f32 %v883, %v886
  %vm888 = vweird.f32 %v803
  %vm889 = vweird.f32 %v883
  %vm890 = vmor %vm888, %vm889
  %v891 = vsel %vm890, %v883, %v887
  %v892 = vand.u32 2147483647, %v803
  %vm893 = vcmp.eq.f32.partialorder %v892, 8.507059e+37
  %v894 = vand.u32 %v803, 2147483648
  %v895 = vor.u32 1.1754944e-38, %v894
  %v896 = vsel %vm893, %v895, %v891
  %v897 = vmul.f32 %v537, %v896
  %v898 = vrcp.pop %v804
  %v899 = vmul.f32 %v804, %v898
  %v900 = vsub.f32 1.0, %v899
  %v901 = vmul.f32 %v898, %v900
  %v902 = vadd.f32 %v898, %v901
  %vm903 = vweird.f32 %v804
  %vm904 = vweird.f32 %v898
  %vm905 = vmor %vm903, %vm904
  %v906 = vsel %vm905, %v898, %v902
  %v907 = vand.u32 2147483647, %v804
  %vm908 = vcmp.eq.f32.partialorder %v907, 8.507059e+37
  %v909 = vand.u32 %v804, 2147483648
  %v910 = vor.u32 1.1754944e-38, %v909
  %v911 = vsel %vm908, %v910, %v906
  %v912 = vmul.f32 %v538, %v911
  %v913 = vrcp.pop %v805
  %v914 = vmul.f32 %v805, %v913
  %v915 = vsub.f32 1.0, %v914
  %v916 = vmul.f32 %v913, %v915
  %v917 = vadd.f32 %v913, %v916
  %vm918 = vweird.f32 %v805
  %vm919 = vweird.f32 %v913
  %vm920 = vmor %vm918, %vm919
  %v921 = vsel %vm920, %v913, %v917
  %v922 = vand.u32 2147483647, %v805
  %vm923 = vcmp.eq.f32.partialorder %v922, 8.507059e+37
  %v924 = vand.u32 %v805, 2147483648
  %v925 = vor.u32 1.1754944e-38, %v924
  %v926 = vsel %vm923, %v925, %v921
  %v927 = vmul.f32 %v539, %v926
  %v928 = vrcp.pop %v806
  %v929 = vmul.f32 %v806, %v928
  %v930 = vsub.f32 1.0, %v929
  %v931 = vmul.f32 %v928, %v930
  %v932 = vadd.f32 %v928, %v931
  %vm933 = vweird.f32 %v806
  %vm934 = vweird.f32 %v928
  %vm935 = vmor %vm933, %vm934
  %v936 = vsel %vm935, %v928, %v932
  %v937 = vand.u32 2147483647, %v806
  %vm938 = vcmp.eq.f32.partialorder %v937, 8.507059e+37
  %v939 = vand.u32 %v806, 2147483648
  %v940 = vor.u32 1.1754944e-38, %v939
  %v941 = vsel %vm938, %v940, %v936
  %v942 = vmul.f32 %v540, %v941
  %v943 = vrcp.pop %v807
  %v944 = vmul.f32 %v807, %v943
  %v945 = vsub.f32 1.0, %v944
  %v946 = vmul.f32 %v943, %v945
  %v947 = vadd.f32 %v943, %v946
  %vm948 = vweird.f32 %v807
  %vm949 = vweird.f32 %v943
  %vm950 = vmor %vm948, %vm949
  %v951 = vsel %vm950, %v943, %v947
  %v952 = vand.u32 2147483647, %v807
  %vm953 = vcmp.eq.f32.partialorder %v952, 8.507059e+37
  %v954 = vand.u32 %v807, 2147483648
  %v955 = vor.u32 1.1754944e-38, %v954
  %v956 = vsel %vm953, %v955, %v951
  %v957 = vmul.f32 %v541, %v956
  %v958 = vrcp.pop %v808
  %v959 = vmul.f32 %v808, %v958
  %v960 = vsub.f32 1.0, %v959
  %v961 = vmul.f32 %v958, %v960
  %v962 = vadd.f32 %v958, %v961
  %vm963 = vweird.f32 %v808
  %vm964 = vweird.f32 %v958
  %vm965 = vmor %vm963, %vm964
  %v966 = vsel %vm965, %v958, %v962
  %v967 = vand.u32 2147483647, %v808
  %vm968 = vcmp.eq.f32.partialorder %v967, 8.507059e+37
  %v969 = vand.u32 %v808, 2147483648
  %v970 = vor.u32 1.1754944e-38, %v969
  %v971 = vsel %vm968, %v970, %v966
  %v972 = vmul.f32 %v542, %v971
  %v973 = vrcp.pop %v809
  %v974 = vmul.f32 %v809, %v973
  %v975 = vsub.f32 1.0, %v974
  %v976 = vmul.f32 %v973, %v975
  %v977 = vadd.f32 %v973, %v976
  %vm978 = vweird.f32 %v809
  %vm979 = vweird.f32 %v973
  %vm980 = vmor %vm978, %vm979
  %v981 = vsel %vm980, %v973, %v977
  %v982 = vand.u32 2147483647, %v809
  %vm983 = vcmp.eq.f32.partialorder %v982, 8.507059e+37
  %v984 = vand.u32 %v809, 2147483648
  %v985 = vor.u32 1.1754944e-38, %v984
  %v986 = vsel %vm983, %v985, %v981
  %v987 = vmul.f32 %v543, %v986
  %v988 = vrcp.pop %v810
  %v989 = vmul.f32 %v810, %v988
  %v990 = vsub.f32 1.0, %v989
  %v991 = vmul.f32 %v988, %v990
  %v992 = vadd.f32 %v988, %v991
  %vm993 = vweird.f32 %v810
  %vm994 = vweird.f32 %v988
  %vm995 = vmor %vm993, %vm994
  %v996 = vsel %vm995, %v988, %v992
  %v997 = vand.u32 2147483647, %v810
  %vm998 = vcmp.eq.f32.partialorder %v997, 8.507059e+37
  %v999 = vand.u32 %v810, 2147483648
  %v1000 = vor.u32 1.1754944e-38, %v999
  %v1001 = vsel %vm998, %v1000, %v996
  %v1002 = vmul.f32 %v544, %v1001
  %v1003 = vrcp.pop %v811
  %v1004 = vmul.f32 %v811, %v1003
  %v1005 = vsub.f32 1.0, %v1004
  %v1006 = vmul.f32 %v1003, %v1005
  %v1007 = vadd.f32 %v1003, %v1006
  %vm1008 = vweird.f32 %v811
  %vm1009 = vweird.f32 %v1003
  %vm1010 = vmor %vm1008, %vm1009
  %v1011 = vsel %vm1010, %v1003, %v1007
  %v1012 = vand.u32 2147483647, %v811
  %vm1013 = vcmp.eq.f32.partialorder %v1012, 8.507059e+37
  %v1014 = vand.u32 %v811, 2147483648
  %v1015 = vor.u32 1.1754944e-38, %v1014
  %v1016 = vsel %vm1013, %v1015, %v1011
  %v1017 = vmul.f32 %v545, %v1016
  %v1018 = vrcp.pop %v812
  %v1019 = vmul.f32 %v812, %v1018
  %v1020 = vsub.f32 1.0, %v1019
  %v1021 = vmul.f32 %v1018, %v1020
  %v1022 = vadd.f32 %v1018, %v1021
  %vm1023 = vweird.f32 %v812
  %vm1024 = vweird.f32 %v1018
  %vm1025 = vmor %vm1023, %vm1024
  %v1026 = vsel %vm1025, %v1018, %v1022
  %v1027 = vand.u32 2147483647, %v812
  %vm1028 = vcmp.eq.f32.partialorder %v1027, 8.507059e+37
  %v1029 = vand.u32 %v812, 2147483648
  %v1030 = vor.u32 1.1754944e-38, %v1029
  %v1031 = vsel %vm1028, %v1030, %v1026
  %v1032 = vmul.f32 %v546, %v1031
  %v1033 = vrcp.pop %v813
  %v1034 = vmul.f32 %v813, %v1033
  %v1035 = vsub.f32 1.0, %v1034
  %v1036 = vmul.f32 %v1033, %v1035
  %v1037 = vadd.f32 %v1033, %v1036
  %vm1038 = vweird.f32 %v813
  %vm1039 = vweird.f32 %v1033
  %vm1040 = vmor %vm1038, %vm1039
  %v1041 = vsel %vm1040, %v1033, %v1037
  %v1042 = vand.u32 2147483647, %v813
  %vm1043 = vcmp.eq.f32.partialorder %v1042, 8.507059e+37
  %v1044 = vand.u32 %v813, 2147483648
  %v1045 = vor.u32 1.1754944e-38, %v1044
  %v1046 = vsel %vm1043, %v1045, %v1041
  %v1047 = vmul.f32 %v547, %v1046
  %v1048 = vrcp.pop %v814
  %v1049 = vmul.f32 %v814, %v1048
  %v1050 = vsub.f32 1.0, %v1049
  %v1051 = vmul.f32 %v1048, %v1050
  %v1052 = vadd.f32 %v1048, %v1051
  %vm1053 = vweird.f32 %v814
  %vm1054 = vweird.f32 %v1048
  %vm1055 = vmor %vm1053, %vm1054
  %v1056 = vsel %vm1055, %v1048, %v1052
  %v1057 = vand.u32 2147483647, %v814
  %vm1058 = vcmp.eq.f32.partialorder %v1057, 8.507059e+37
  %v1059 = vand.u32 %v814, 2147483648
  %v1060 = vor.u32 1.1754944e-38, %v1059
  %v1061 = vsel %vm1058, %v1060, %v1056
  %v1062 = vmul.f32 %v548, %v1061
  %v1063 = vrcp.pop %v815
  %v1064 = vmul.f32 %v815, %v1063
  %v1065 = vsub.f32 1.0, %v1064
  %v1066 = vmul.f32 %v1063, %v1065
  %v1067 = vadd.f32 %v1063, %v1066
  %vm1068 = vweird.f32 %v815
  %vm1069 = vweird.f32 %v1063
  %vm1070 = vmor %vm1068, %vm1069
  %v1071 = vsel %vm1070, %v1063, %v1067
  %v1072 = vand.u32 2147483647, %v815
  %vm1073 = vcmp.eq.f32.partialorder %v1072, 8.507059e+37
  %v1074 = vand.u32 %v815, 2147483648
  %v1075 = vor.u32 1.1754944e-38, %v1074
  %v1076 = vsel %vm1073, %v1075, %v1071
  %v1077 = vmul.f32 %v549, %v1076
  %v1078 = vrcp.pop %v816
  %v1079 = vmul.f32 %v816, %v1078
  %v1080 = vsub.f32 1.0, %v1079
  %v1081 = vmul.f32 %v1078, %v1080
  %v1082 = vadd.f32 %v1078, %v1081
  %vm1083 = vweird.f32 %v816
  %vm1084 = vweird.f32 %v1078
  %vm1085 = vmor %vm1083, %vm1084
  %v1086 = vsel %vm1085, %v1078, %v1082
  %v1087 = vand.u32 2147483647, %v816
  %vm1088 = vcmp.eq.f32.partialorder %v1087, 8.507059e+37
  %v1089 = vand.u32 %v816, 2147483648
  %v1090 = vor.u32 1.1754944e-38, %v1089
  %v1091 = vsel %vm1088, %v1090, %v1086
  %v1092 = vmul.f32 %v550, %v1091
  %v1093 = vrcp.pop %v817
  %v1094 = vmul.f32 %v817, %v1093
  %v1095 = vsub.f32 1.0, %v1094
  %v1096 = vmul.f32 %v1093, %v1095
  %v1097 = vadd.f32 %v1093, %v1096
  %vm1098 = vweird.f32 %v817
  %vm1099 = vweird.f32 %v1093
  %vm1100 = vmor %vm1098, %vm1099
  %v1101 = vsel %vm1100, %v1093, %v1097
  %v1102 = vand.u32 2147483647, %v817
  %vm1103 = vcmp.eq.f32.partialorder %v1102, 8.507059e+37
  %v1104 = vand.u32 %v817, 2147483648
  %v1105 = vor.u32 1.1754944e-38, %v1104
  %v1106 = vsel %vm1103, %v1105, %v1101
  %v1107 = vmul.f32 %v551, %v1106
  %v1108 = vrcp.pop %v818
  %v1109 = vmul.f32 %v818, %v1108
  %v1110 = vsub.f32 1.0, %v1109
  %v1111 = vmul.f32 %v1108, %v1110
  %v1112 = vadd.f32 %v1108, %v1111
  %vm1113 = vweird.f32 %v818
  %vm1114 = vweird.f32 %v1108
  %vm1115 = vmor %vm1113, %vm1114
  %v1116 = vsel %vm1115, %v1108, %v1112
  %v1117 = vand.u32 2147483647, %v818
  %vm1118 = vcmp.eq.f32.partialorder %v1117, 8.507059e+37
  %v1119 = vand.u32 %v818, 2147483648
  %v1120 = vor.u32 1.1754944e-38, %v1119
  %v1121 = vsel %vm1118, %v1120, %v1116
  %v1122 = vmul.f32 %v552, %v1121
  %v1123 = vrcp.pop %v819
  %v1124 = vmul.f32 %v819, %v1123
  %v1125 = vsub.f32 1.0, %v1124
  %v1126 = vmul.f32 %v1123, %v1125
  %v1127 = vadd.f32 %v1123, %v1126
  %vm1128 = vweird.f32 %v819
  %vm1129 = vweird.f32 %v1123
  %vm1130 = vmor %vm1128, %vm1129
  %v1131 = vsel %vm1130, %v1123, %v1127
  %v1132 = vand.u32 2147483647, %v819
  %vm1133 = vcmp.eq.f32.partialorder %v1132, 8.507059e+37
  %v1134 = vand.u32 %v819, 2147483648
  %v1135 = vor.u32 1.1754944e-38, %v1134
  %v1136 = vsel %vm1133, %v1135, %v1131
  %v1137 = vmul.f32 %v553, %v1136
  %v1138 = vrcp.pop %v820
  %v1139 = vmul.f32 %v820, %v1138
  %v1140 = vsub.f32 1.0, %v1139
  %v1141 = vmul.f32 %v1138, %v1140
  %v1142 = vadd.f32 %v1138, %v1141
  %vm1143 = vweird.f32 %v820
  %vm1144 = vweird.f32 %v1138
  %vm1145 = vmor %vm1143, %vm1144
  %v1146 = vsel %vm1145, %v1138, %v1142
  %v1147 = vand.u32 2147483647, %v820
  %vm1148 = vcmp.eq.f32.partialorder %v1147, 8.507059e+37
  %v1149 = vand.u32 %v820, 2147483648
  %v1150 = vor.u32 1.1754944e-38, %v1149
  %v1151 = vsel %vm1148, %v1150, %v1146
  %v1152 = vmul.f32 %v554, %v1151
  %v1153 = vrcp.pop %v821
  %v1154 = vmul.f32 %v821, %v1153
  %v1155 = vsub.f32 1.0, %v1154
  %v1156 = vmul.f32 %v1153, %v1155
  %v1157 = vadd.f32 %v1153, %v1156
  %vm1158 = vweird.f32 %v821
  %vm1159 = vweird.f32 %v1153
  %vm1160 = vmor %vm1158, %vm1159
  %v1161 = vsel %vm1160, %v1153, %v1157
  %v1162 = vand.u32 2147483647, %v821
  %vm1163 = vcmp.eq.f32.partialorder %v1162, 8.507059e+37
  %v1164 = vand.u32 %v821, 2147483648
  %v1165 = vor.u32 1.1754944e-38, %v1164
  %v1166 = vsel %vm1163, %v1165, %v1161
  %v1167 = vmul.f32 %v555, %v1166
  %v1168 = vrcp.pop %v822
  %v1169 = vmul.f32 %v822, %v1168
  %v1170 = vsub.f32 1.0, %v1169
  %v1171 = vmul.f32 %v1168, %v1170
  %v1172 = vadd.f32 %v1168, %v1171
  %vm1173 = vweird.f32 %v822
  %vm1174 = vweird.f32 %v1168
  %vm1175 = vmor %vm1173, %vm1174
  %v1176 = vsel %vm1175, %v1168, %v1172
  %v1177 = vand.u32 2147483647, %v822
  %vm1178 = vcmp.eq.f32.partialorder %v1177, 8.507059e+37
  %v1179 = vand.u32 %v822, 2147483648
  %v1180 = vor.u32 1.1754944e-38, %v1179
  %v1181 = vsel %vm1178, %v1180, %v1176
  %v1182 = vmul.f32 %v556, %v1181
  %1183 = vst [vmem:[%s2] sm:$0xff] %v837
  %1184 = vst [vmem:[%s2 + $0x8] sm:$0xff] %v852
  %1185 = vst [vmem:[%s2 + $0x10] sm:$0xff] %v867
  %1186 = vst [vmem:[%s2 + $0x18] sm:$0xff] %v882
  %1187 = vst [vmem:[%s2 + $0x20] sm:$0xff] %v897
  %1188 = vst [vmem:[%s2 + $0x28] sm:$0xff] %v912
  %1189 = vst [vmem:[%s2 + $0x30] sm:$0xff] %v927
  %1190 = vst [vmem:[%s2 + $0x38] sm:$0xff] %v942
  %1191 = vst [vmem:[%s2 + $0x40] sm:$0xff] %v957
  %1192 = vst [vmem:[%s2 + $0x48] sm:$0xff] %v972
  %1193 = vst [vmem:[%s2 + $0x50] sm:$0xff] %v987
  %1194 = vst [vmem:[%s2 + $0x58] sm:$0xff] %v1002
  %1195 = vst [vmem:[%s2 + $0x60] sm:$0xff] %v1017
  %1196 = vst [vmem:[%s2 + $0x68] sm:$0xff] %v1032
  %1197 = vst [vmem:[%s2 + $0x70] sm:$0xff] %v1047
  %1198 = vst [vmem:[%s2 + $0x78] sm:$0xff] %v1062
  %1199 = vst [vmem:[%s2 + $0x80] sm:$0xff] %v1077
  %1200 = vst [vmem:[%s2 + $0x88] sm:$0xff] %v1092
  %1201 = vst [vmem:[%s2 + $0x90] sm:$0xff] %v1107
  %1202 = vst [vmem:[%s2 + $0x98] sm:$0xff] %v1122
  %1203 = vst [vmem:[%s2 + $0xa0] sm:$0xff] %v1137
  %1204 = vst [vmem:[%s2 + $0xa8] sm:$0xff] %v1152
  %1205 = vst [vmem:[%s2 + $0xb0] sm:$0xff] %v1167
  %1206 = vst [vmem:[%s2 + $0xb8] sm:$0xff] %v1182
  // Predicated region
  $region10: #{det_bench_train_forward.4} parent=0 // pred_check
    _
  $region11: #{det_bench_train_forward.4} parent=0 // pred_check_branch
    %1208 = sbr.rel (0) target = $region13
  $region12: #{det_bench_train_forward.4} parent=0 // pred_region
    _
  $region13: #{det_bench_train_forward.4} parent=0 // pred_fallthru
    _
  // Predicated region
  $region14: #{det_bench_train_forward.4} parent=0 // pred_check
    _
  $region15: #{det_bench_train_forward.4} parent=0 // pred_check_branch
    %1210 = sbr.rel (0) target = $region17
  $region16: #{det_bench_train_forward.4} parent=0 // pred_region
    _
  $region17: #{det_bench_train_forward.4} parent=0 // pred_fallthru
    _

// kernel: det_bench_train_forward.3
$region0: #{det_bench_train_forward.3}
  #allocation0 [shape = 'u32[]', space=smem, size = 0x4, offset = 0x4, fixed_abs, tag = 'smem constant byte address 0x4 - core index']
  #allocation1 [shape = 'u32[72,128]{1,0:T(1,128)}', space=vmem, size = 0x9000, scoped, tag = 'internal scratch']
  %s0 = inlined_call_operand.vmem [shape: f32[688,8], index: 0, kind: input, shape index: {}]
  %s1 = inlined_call_operand.vmem [shape: f32[8,128], index: 1, kind: input, shape index: {}]
  %s2 = inlined_call_operand.vmem [shape: f32[1,128], index: 2, kind: input, shape index: {}]
  %s3 = inlined_call_operand.vmem [shape: f32[128,128], index: 3, kind: input, shape index: {}]
  %s4 = inlined_call_operand.vmem [shape: f32[1,128], index: 4, kind: input, shape index: {}]
  %s5 = inlined_call_operand.vmem [shape: f32[128,128], index: 5, kind: input, shape index: {}]
  %s6 = inlined_call_operand.vmem [shape: f32[1,128], index: 6, kind: input, shape index: {}]
  %s7 = inlined_call_operand.vmem [shape: f32[688,128], index: 7, kind: output, shape index: {0}]
  %s8 = inlined_call_operand.vmem [shape: f32[688,128], index: 8, kind: output, shape index: {1}]
  %9 = xla_tuple %s7, %s8
  %s10 = sld [smem:[#allocation0]]
  $region46: #{det_bench_train_forward.3} parent=0
    _
  %s12 = ssub.s32 1, %s10
  %s13 = scalar_select 0, %s12, %s10
  // Predicated region
  $region2: #{det_bench_train_forward.3} parent=0 // pred_check
    _
  $region3: #{det_bench_train_forward.3} parent=0 // pred_check_branch
    %15 = sbr.rel (0) target = $region5
  $region4: #{det_bench_train_forward.3} parent=0 // pred_region
    _
  $region5: #{det_bench_train_forward.3} parent=0 // pred_fallthru
    _
  // Predicated region
  $region6: #{det_bench_train_forward.3} parent=0 // pred_check
    _
  $region7: #{det_bench_train_forward.3} parent=0 // pred_check_branch
    %17 = sbr.rel (0) target = $region9
  $region8: #{det_bench_train_forward.3} parent=0 // pred_region
    _
  $region9: #{det_bench_train_forward.3} parent=0 // pred_fallthru
    _
  // Predicated region
  $region10: #{det_bench_train_forward.3} parent=0 // pred_check
    _
  $region11: #{det_bench_train_forward.3} parent=0 // pred_check_branch
    %19 = sbr.rel (0) target = $region13
  $region12: #{det_bench_train_forward.3} parent=0 // pred_region
    _
  $region13: #{det_bench_train_forward.3} parent=0 // pred_fallthru
    _
  // Predicated region
  $region14: #{det_bench_train_forward.3} parent=0 // pred_check
    _
  $region15: #{det_bench_train_forward.3} parent=0 // pred_check_branch
    %21 = sbr.rel (0) target = $region17
  $region16: #{det_bench_train_forward.3} parent=0 // pred_region
    _
  $region17: #{det_bench_train_forward.3} parent=0 // pred_fallthru
    _
  // Predicated region
  $region18: #{det_bench_train_forward.3} parent=0 // pred_check
    _
  $region19: #{det_bench_train_forward.3} parent=0 // pred_check_branch
    %23 = sbr.rel (0) target = $region21
  $region20: #{det_bench_train_forward.3} parent=0 // pred_region
    _
  $region21: #{det_bench_train_forward.3} parent=0 // pred_fallthru
    _
  // Predicated region
  $region22: #{det_bench_train_forward.3} parent=0 // pred_check
    _
  $region23: #{det_bench_train_forward.3} parent=0 // pred_check_branch
    %25 = sbr.rel (0) target = $region25
  $region24: #{det_bench_train_forward.3} parent=0 // pred_region
    _
  $region25: #{det_bench_train_forward.3} parent=0 // pred_fallthru
    _
  // Predicated region
  $region26: #{det_bench_train_forward.3} parent=0 // pred_check
    _
  $region27: #{det_bench_train_forward.3} parent=0 // pred_check_branch
    %27 = sbr.rel (0) target = $region29
  $region28: #{det_bench_train_forward.3} parent=0 // pred_region
    _
  $region29: #{det_bench_train_forward.3} parent=0 // pred_fallthru
    _
  %v28 = vld [vmem:[%s0] sm:$0xff]
  %v29 = vld [vmem:[%s0 + $0x8] sm:$0xff]
  %v30 = vld [vmem:[%s0 + $0x10] sm:$0xff]
  %v31 = vld [vmem:[%s0 + $0x18] sm:$0xff]
  %v32 = vld [vmem:[%s0 + $0x20] sm:$0xff]
  %v33 = vld [vmem:[%s0 + $0x28] sm:$0xff]
  %v34 = vld [vmem:[%s0 + $0x30] sm:$0xff]
  %v35 = vld [vmem:[%s0 + $0x38] sm:$0xff]
  %v36 = vld [vmem:[%s0 + $0x40] sm:$0xff]
  %v37 = vld [vmem:[%s0 + $0x48] sm:$0xff]
  %v38 = vld [vmem:[%s0 + $0x50] sm:$0xff]
  %v39 = vld [vmem:[%s0 + $0x58] sm:$0xff]
  %v40 = vld [vmem:[%s0 + $0x60] sm:$0xff]
  %v41 = vld [vmem:[%s0 + $0x68] sm:$0xff]
  %v42 = vld [vmem:[%s0 + $0x70] sm:$0xff]
  %v43 = vld [vmem:[%s0 + $0x78] sm:$0xff]
  %v44 = vld [vmem:[%s0 + $0x80] sm:$0xff]
  %v45 = vld [vmem:[%s0 + $0x88] sm:$0xff]
  %v46 = vld [vmem:[%s0 + $0x90] sm:$0xff]
  %v47 = vld [vmem:[%s0 + $0x98] sm:$0xff]
  %v48 = vld [vmem:[%s0 + $0xa0] sm:$0xff]
  %v49 = vld [vmem:[%s0 + $0xa8] sm:$0xff]
  %v50 = vld [vmem:[%s0 + $0xb0] sm:$0xff]
  %v51 = vld [vmem:[%s0 + $0xb8] sm:$0xff]
  %v52 = vld [vmem:[%s0 + $0xc0] sm:$0xff]
  %v53 = vld [vmem:[%s0 + $0xc8] sm:$0xff]
  %v54 = vld [vmem:[%s0 + $0xd0] sm:$0xff]
  %v55 = vld [vmem:[%s0 + $0xd8] sm:$0xff]
  %v56 = vld [vmem:[%s0 + $0xe0] sm:$0xff]
  %v57 = vld [vmem:[%s0 + $0xe8] sm:$0xff]
  %v58 = vld [vmem:[%s0 + $0xf0] sm:$0xff]
  %v59 = vld [vmem:[%s0 + $0xf8] sm:$0xff]
  %v60 = vld [vmem:[%s0 + $0x100] sm:$0xff]
  %v61 = vld [vmem:[%s0 + $0x108] sm:$0xff]
  %v62 = vld [vmem:[%s0 + $0x110] sm:$0xff]
  %v63 = vld [vmem:[%s0 + $0x118] sm:$0xff]
  %v64 = vld [vmem:[%s0 + $0x120] sm:$0xff]
  %v65 = vld [vmem:[%s0 + $0x128] sm:$0xff]
  %v66 = vld [vmem:[%s0 + $0x130] sm:$0xff]
  %v67 = vld [vmem:[%s0 + $0x138] sm:$0xff]
  %v68 = vld [vmem:[%s0 + $0x140] sm:$0xff]
  %v69 = vld [vmem:[%s0 + $0x148] sm:$0xff]
  %v70 = vld [vmem:[%s0 + $0x150] sm:$0xff]
  %v71 = vld [vmem:[%s0 + $0x158] sm:$0xff]
  %v72 = vld [vmem:[%s0 + $0x160] sm:$0xff]
  %v73 = vld [vmem:[%s0 + $0x168] sm:$0xff]
  %v74 = vld [vmem:[%s0 + $0x170] sm:$0xff]
  %v75 = vld [vmem:[%s0 + $0x178] sm:$0xff]
  %v76 = vld [vmem:[%s0 + $0x180] sm:$0xff]
  %v77 = vld [vmem:[%s0 + $0x188] sm:$0xff]
  %v78 = vld [vmem:[%s0 + $0x190] sm:$0xff]
  %v79 = vld [vmem:[%s0 + $0x198] sm:$0xff]
  %v80 = vld [vmem:[%s0 + $0x1a0] sm:$0xff]
  %v81 = vld [vmem:[%s0 + $0x1a8] sm:$0xff]
  %v82 = vld [vmem:[%s0 + $0x1b0] sm:$0xff]
  %v83 = vld [vmem:[%s0 + $0x1b8] sm:$0xff]
  %v84 = vld [vmem:[%s0 + $0x1c0] sm:$0xff]
  %v85 = vld [vmem:[%s0 + $0x1c8] sm:$0xff]
  %v86 = vld [vmem:[%s0 + $0x1d0] sm:$0xff]
  %v87 = vld [vmem:[%s0 + $0x1d8] sm:$0xff]
  %v88 = vld [vmem:[%s0 + $0x1e0] sm:$0xff]
  %v89 = vld [vmem:[%s0 + $0x1e8] sm:$0xff]
  %v90 = vld [vmem:[%s0 + $0x1f0] sm:$0xff]
  %v91 = vld [vmem:[%s0 + $0x1f8] sm:$0xff]
  %v92 = vld [vmem:[%s0 + $0x200] sm:$0xff]
  %v93 = vld [vmem:[%s0 + $0x208] sm:$0xff]
  %v94 = vld [vmem:[%s0 + $0x210] sm:$0xff]
  %v95 = vld [vmem:[%s0 + $0x218] sm:$0xff]
  %v96 = vld [vmem:[%s0 + $0x220] sm:$0xff]
  %v97 = vld [vmem:[%s0 + $0x228] sm:$0xff]
  %v98 = vld [vmem:[%s0 + $0x230] sm:$0xff]
  %v99 = vld [vmem:[%s0 + $0x238] sm:$0xff]
  %v100 = vld [vmem:[%s0 + $0x240] sm:$0xff]
  %v101 = vld [vmem:[%s0 + $0x248] sm:$0xff]
  %v102 = vld [vmem:[%s0 + $0x250] sm:$0xff]
  %v103 = vld [vmem:[%s0 + $0x258] sm:$0xff]
  %v104 = vld [vmem:[%s0 + $0x260] sm:$0xff]
  %v105 = vld [vmem:[%s0 + $0x268] sm:$0xff]
  %v106 = vld [vmem:[%s0 + $0x270] sm:$0xff]
  %v107 = vld [vmem:[%s0 + $0x278] sm:$0xff]
  %v108 = vld [vmem:[%s0 + $0x280] sm:$0xff]
  %v109 = vld [vmem:[%s0 + $0x288] sm:$0xff]
  %v110 = vld [vmem:[%s0 + $0x290] sm:$0xff]
  %v111 = vld [vmem:[%s0 + $0x298] sm:$0xff]
  %v112 = vld [vmem:[%s0 + $0x2a0] sm:$0xff]
  %v113 = vld [vmem:[%s0 + $0x2a8] sm:$0xff]
  %v114 = vld [vmem:[%s1] sm:$0xff]
  %v115 = vld [vmem:[%s2] sm:$0x1]
  %v117 = vperm.slane %v115, 0
  %vm119 = vcmask 64512
  %v121 = vsel %vm119, %v28, 0
  %v124 = vsel %vm119, %v29, 0
  %v127 = vsel %vm119, %v30, 0
  %v130 = vsel %vm119, %v31, 0
  %v133 = vsel %vm119, %v32, 0
  %v136 = vsel %vm119, %v33, 0
  %v139 = vsel %vm119, %v34, 0
  %v142 = vsel %vm119, %v35, 0
  %v145 = vsel %vm119, %v36, 0
  %v148 = vsel %vm119, %v37, 0
  %v151 = vsel %vm119, %v38, 0
  %v154 = vsel %vm119, %v39, 0
  %v157 = vsel %vm119, %v40, 0
  %v160 = vsel %vm119, %v41, 0
  %v163 = vsel %vm119, %v42, 0
  %v166 = vsel %vm119, %v43, 0
  %v169 = vsel %vm119, %v44, 0
  %v172 = vsel %vm119, %v45, 0
  %v175 = vsel %vm119, %v46, 0
  %v178 = vsel %vm119, %v47, 0
  %v181 = vsel %vm119, %v48, 0
  %v184 = vsel %vm119, %v49, 0
  %v187 = vsel %vm119, %v50, 0
  %v190 = vsel %vm119, %v51, 0
  %v193 = vsel %vm119, %v52, 0
  %v196 = vsel %vm119, %v53, 0
  %v199 = vsel %vm119, %v54, 0
  %v202 = vsel %vm119, %v55, 0
  %v205 = vsel %vm119, %v56, 0
  %v208 = vsel %vm119, %v57, 0
  %v211 = vsel %vm119, %v58, 0
  %v214 = vsel %vm119, %v59, 0
  %v217 = vsel %vm119, %v60, 0
  %v220 = vsel %vm119, %v61, 0
  %v223 = vsel %vm119, %v62, 0
  %v226 = vsel %vm119, %v63, 0
  %v229 = vsel %vm119, %v64, 0
  %v232 = vsel %vm119, %v65, 0
  %v235 = vsel %vm119, %v66, 0
  %v238 = vsel %vm119, %v67, 0
  %v241 = vsel %vm119, %v68, 0
  %v244 = vsel %vm119, %v69, 0
  %v247 = vsel %vm119, %v70, 0
  %v250 = vsel %vm119, %v71, 0
  %v253 = vsel %vm119, %v72, 0
  %v256 = vsel %vm119, %v73, 0
  %v259 = vsel %vm119, %v74, 0
  %v262 = vsel %vm119, %v75, 0
  %v265 = vsel %vm119, %v76, 0
  %v268 = vsel %vm119, %v77, 0
  %v271 = vsel %vm119, %v78, 0
  %v274 = vsel %vm119, %v79, 0
  %v277 = vsel %vm119, %v80, 0
  %v280 = vsel %vm119, %v81, 0
  %v283 = vsel %vm119, %v82, 0
  %v286 = vsel %vm119, %v83, 0
  %v289 = vsel %vm119, %v84, 0
  %v292 = vsel %vm119, %v85, 0
  %v295 = vsel %vm119, %v86, 0
  %v298 = vsel %vm119, %v87, 0
  %v301 = vsel %vm119, %v88, 0
  %v304 = vsel %vm119, %v89, 0
  %v307 = vsel %vm119, %v90, 0
  %v310 = vsel %vm119, %v91, 0
  %v313 = vsel %vm119, %v92, 0
  %v316 = vsel %vm119, %v93, 0
  %v319 = vsel %vm119, %v94, 0
  %v322 = vsel %vm119, %v95, 0
  %v325 = vsel %vm119, %v96, 0
  %v328 = vsel %vm119, %v97, 0
  %v331 = vsel %vm119, %v98, 0
  %v334 = vsel %vm119, %v99, 0
  %v337 = vsel %vm119, %v100, 0
  %v340 = vsel %vm119, %v101, 0
  %v343 = vsel %vm119, %v102, 0
  %v346 = vsel %vm119, %v103, 0
  %v349 = vsel %vm119, %v104, 0
  %v352 = vsel %vm119, %v105, 0
  %v355 = vsel %vm119, %v106, 0
  %v358 = vsel %vm119, %v107, 0
  %v361 = vsel %vm119, %v108, 0
  %v364 = vsel %vm119, %v109, 0
  %v367 = vsel %vm119, %v110, 0
  %v370 = vsel %vm119, %v111, 0
  %v373 = vsel %vm119, %v112, 0
  %v376 = vsel %vm119, %v113, 0
  %378 = vmatpush.msra.mxu0 0.0
  %379 = vmatpush.msra.mxu0 0.0
  %380 = vmatpush.msra.mxu0 0.0
  %381 = vmatpush.msra.mxu0 0.0
  %382 = vmatpush.msra.mxu0 0.0
  %383 = vmatpush.msra.mxu0 0.0
  %384 = vmatpush.msra.mxu0 0.0
  %385 = vmatpush.msra.mxu0 0.0
  %386 = vmatpush.msra.mxu0 0.0
  %387 = vmatpush.msra.mxu0 0.0
  %388 = vmatpush.msra.mxu0 0.0
  %389 = vmatpush.msra.mxu0 0.0
  %390 = vmatpush.msra.mxu0 0.0
  %391 = vmatpush.msra.mxu0 0.0
  %392 = vmatpush.msra.mxu0 0.0
  %393 = vmatpush.msra.mxu0 %v114
  %394 = vmatmul.f32.gmra.mxu0 %v121
  %v395 = vpop.f32.mrf.mxu0
  %v396 = vadd.f32 %v117, %v395
  %397 = vmatmul.f32.gmra.mxu0 %v124
  %v398 = vpop.f32.mrf.mxu0
  %v399 = vadd.f32 %v117, %v398
  %400 = vmatmul.f32.gmra.mxu0 %v127
  %v401 = vpop.f32.mrf.mxu0
  %v402 = vadd.f32 %v117, %v401
  %403 = vmatmul.f32.gmra.mxu0 %v130
  %v404 = vpop.f32.mrf.mxu0
  %v405 = vadd.f32 %v117, %v404
  %406 = vmatmul.f32.gmra.mxu0 %v133
  %v407 = vpop.f32.mrf.mxu0
  %v408 = vadd.f32 %v117, %v407
  %409 = vmatmul.f32.gmra.mxu0 %v136
  %v410 = vpop.f32.mrf.mxu0
  %v411 = vadd.f32 %v117, %v410
  %412 = vmatmul.f32.gmra.mxu0 %v139
  %v413 = vpop.f32.mrf.mxu0
  %v414 = vadd.f32 %v117, %v413
  %415 = vmatmul.f32.gmra.mxu0 %v142
  %v416 = vpop.f32.mrf.mxu0
  %v417 = vadd.f32 %v117, %v416
  %418 = vmatmul.f32.gmra.mxu0 %v145
  %v419 = vpop.f32.mrf.mxu0
  %v420 = vadd.f32 %v117, %v419
  %421 = vmatmul.f32.gmra.mxu0 %v148
  %v422 = vpop.f32.mrf.mxu0
  %v423 = vadd.f32 %v117, %v422
  %424 = vmatmul.f32.gmra.mxu0 %v151
  %v425 = vpop.f32.mrf.mxu0
  %v426 = vadd.f32 %v117, %v425
  %427 = vmatmul.f32.gmra.mxu0 %v154
  %v428 = vpop.f32.mrf.mxu0
  %v429 = vadd.f32 %v117, %v428
  %430 = vmatmul.f32.gmra.mxu0 %v157
  %v431 = vpop.f32.mrf.mxu0
  %v432 = vadd.f32 %v117, %v431
  %433 = vmatmul.f32.gmra.mxu0 %v160
  %v434 = vpop.f32.mrf.mxu0
  %v435 = vadd.f32 %v117, %v434
  %436 = vmatmul.f32.gmra.mxu0 %v163
  %v437 = vpop.f32.mrf.mxu0
  %v438 = vadd.f32 %v117, %v437
  %439 = vmatmul.f32.gmra.mxu0 %v166
  %v440 = vpop.f32.mrf.mxu0
  %v441 = vadd.f32 %v117, %v440
  %442 = vmatmul.f32.gmra.mxu0 %v169
  %v443 = vpop.f32.mrf.mxu0
  %v444 = vadd.f32 %v117, %v443
  %445 = vmatmul.f32.gmra.mxu0 %v172
  %v446 = vpop.f32.mrf.mxu0
  %v447 = vadd.f32 %v117, %v446
  %448 = vmatmul.f32.gmra.mxu0 %v175
  %v449 = vpop.f32.mrf.mxu0
  %v450 = vadd.f32 %v117, %v449
  %451 = vmatmul.f32.gmra.mxu0 %v178
  %v452 = vpop.f32.mrf.mxu0
  %v453 = vadd.f32 %v117, %v452
  %454 = vmatmul.f32.gmra.mxu0 %v181
  %v455 = vpop.f32.mrf.mxu0
  %v456 = vadd.f32 %v117, %v455
  %457 = vmatmul.f32.gmra.mxu0 %v184
  %v458 = vpop.f32.mrf.mxu0
  %v459 = vadd.f32 %v117, %v458
  %460 = vmatmul.f32.gmra.mxu0 %v187
  %v461 = vpop.f32.mrf.mxu0
  %v462 = vadd.f32 %v117, %v461
  %463 = vmatmul.f32.gmra.mxu0 %v190
  %v464 = vpop.f32.mrf.mxu0
  %v465 = vadd.f32 %v117, %v464
  %466 = vmatmul.f32.gmra.mxu0 %v193
  %v467 = vpop.f32.mrf.mxu0
  %v468 = vadd.f32 %v117, %v467
  %469 = vmatmul.f32.gmra.mxu0 %v196
  %v470 = vpop.f32.mrf.mxu0
  %v471 = vadd.f32 %v117, %v470
  %472 = vmatmul.f32.gmra.mxu0 %v199
  %v473 = vpop.f32.mrf.mxu0
  %v474 = vadd.f32 %v117, %v473
  %475 = vmatmul.f32.gmra.mxu0 %v202
  %v476 = vpop.f32.mrf.mxu0
  %v477 = vadd.f32 %v117, %v476
  %478 = vmatmul.f32.gmra.mxu0 %v205
  %v479 = vpop.f32.mrf.mxu0
  %v480 = vadd.f32 %v117, %v479
  %481 = vmatmul.f32.gmra.mxu0 %v208
  %v482 = vpop.f32.mrf.mxu0
  %v483 = vadd.f32 %v117, %v482
  %484 = vmatmul.f32.gmra.mxu0 %v211
  %v485 = vpop.f32.mrf.mxu0
  %v486 = vadd.f32 %v117, %v485
  %487 = vmatmul.f32.gmra.mxu0 %v214
  %v488 = vpop.f32.mrf.mxu0
  %v489 = vadd.f32 %v117, %v488
  %490 = vmatmul.f32.gmra.mxu0 %v217
  %v491 = vpop.f32.mrf.mxu0
  %v492 = vadd.f32 %v117, %v491
  %493 = vmatmul.f32.gmra.mxu0 %v220
  %v494 = vpop.f32.mrf.mxu0
  %v495 = vadd.f32 %v117, %v494
  %496 = vmatmul.f32.gmra.mxu0 %v223
  %v497 = vpop.f32.mrf.mxu0
  %v498 = vadd.f32 %v117, %v497
  %499 = vmatmul.f32.gmra.mxu0 %v226
  %v500 = vpop.f32.mrf.mxu0
  %v501 = vadd.f32 %v117, %v500
  %502 = vmatmul.f32.gmra.mxu0 %v229
  %v503 = vpop.f32.mrf.mxu0
  %v504 = vadd.f32 %v117, %v503
  %505 = vmatmul.f32.gmra.mxu0 %v232
  %v506 = vpop.f32.mrf.mxu0
  %v507 = vadd.f32 %v117, %v506
  %508 = vmatmul.f32.gmra.mxu0 %v235
  %v509 = vpop.f32.mrf.mxu0
  %v510 = vadd.f32 %v117, %v509
  %511 = vmatmul.f32.gmra.mxu0 %v238
  %v512 = vpop.f32.mrf.mxu0
  %v513 = vadd.f32 %v117, %v512
  %514 = vmatmul.f32.gmra.mxu0 %v241
  %v515 = vpop.f32.mrf.mxu0
  %v516 = vadd.f32 %v117, %v515
  %517 = vmatmul.f32.gmra.mxu0 %v244
  %v518 = vpop.f32.mrf.mxu0
  %v519 = vadd.f32 %v117, %v518
  %520 = vmatmul.f32.gmra.mxu0 %v247
  %v521 = vpop.f32.mrf.mxu0
  %v522 = vadd.f32 %v117, %v521
  %523 = vmatmul.f32.gmra.mxu0 %v250
  %v524 = vpop.f32.mrf.mxu0
  %v525 = vadd.f32 %v117, %v524
  %526 = vmatmul.f32.gmra.mxu0 %v253
  %v527 = vpop.f32.mrf.mxu0
  %v528 = vadd.f32 %v117, %v527
  %529 = vmatmul.f32.gmra.mxu0 %v256
  %v530 = vpop.f32.mrf.mxu0
  %v531 = vadd.f32 %v117, %v530
  %532 = vmatmul.f32.gmra.mxu0 %v259
  %v533 = vpop.f32.mrf.mxu0
  %v534 = vadd.f32 %v117, %v533
  %535 = vmatmul.f32.gmra.mxu0 %v262
  %v536 = vpop.f32.mrf.mxu0
  %v537 = vadd.f32 %v117, %v536
  %538 = vmatmul.f32.gmra.mxu0 %v265
  %v539 = vpop.f32.mrf.mxu0
  %v540 = vadd.f32 %v117, %v539
  %541 = vmatmul.f32.gmra.mxu0 %v268
  %v542 = vpop.f32.mrf.mxu0
  %v543 = vadd.f32 %v117, %v542
  %544 = vmatmul.f32.gmra.mxu0 %v271
  %v545 = vpop.f32.mrf.mxu0
  %v546 = vadd.f32 %v117, %v545
  %547 = vmatmul.f32.gmra.mxu0 %v274
  %v548 = vpop.f32.mrf.mxu0
  %v549 = vadd.f32 %v117, %v548
  %550 = vmatmul.f32.gmra.mxu0 %v277
  %v551 = vpop.f32.mrf.mxu0
  %v552 = vadd.f32 %v117, %v551
  %553 = vmatmul.f32.gmra.mxu0 %v280
  %v554 = vpop.f32.mrf.mxu0
  %v555 = vadd.f32 %v117, %v554
  %556 = vmatmul.f32.gmra.mxu0 %v283
  %v557 = vpop.f32.mrf.mxu0
  %v558 = vadd.f32 %v117, %v557
  %559 = vmatmul.f32.gmra.mxu0 %v286
  %v560 = vpop.f32.mrf.mxu0
  %v561 = vadd.f32 %v117, %v560
  %562 = vmatmul.f32.gmra.mxu0 %v289
  %v563 = vpop.f32.mrf.mxu0
  %v564 = vadd.f32 %v117, %v563
  %565 = vmatmul.f32.gmra.mxu0 %v292
  %v566 = vpop.f32.mrf.mxu0
  %v567 = vadd.f32 %v117, %v566
  %568 = vmatmul.f32.gmra.mxu0 %v295
  %v569 = vpop.f32.mrf.mxu0
  %v570 = vadd.f32 %v117, %v569
  %571 = vmatmul.f32.gmra.mxu0 %v298
  %v572 = vpop.f32.mrf.mxu0
  %v573 = vadd.f32 %v117, %v572
  %574 = vmatmul.f32.gmra.mxu0 %v301
  %v575 = vpop.f32.mrf.mxu0
  %v576 = vadd.f32 %v117, %v575
  %577 = vmatmul.f32.gmra.mxu0 %v304
  %v578 = vpop.f32.mrf.mxu0
  %v579 = vadd.f32 %v117, %v578
  %580 = vmatmul.f32.gmra.mxu0 %v307
  %v581 = vpop.f32.mrf.mxu0
  %v582 = vadd.f32 %v117, %v581
  %583 = vmatmul.f32.gmra.mxu0 %v310
  %v584 = vpop.f32.mrf.mxu0
  %v585 = vadd.f32 %v117, %v584
  %586 = vmatmul.f32.gmra.mxu0 %v313
  %v587 = vpop.f32.mrf.mxu0
  %v588 = vadd.f32 %v117, %v587
  %589 = vmatmul.f32.gmra.mxu0 %v316
  %v590 = vpop.f32.mrf.mxu0
  %v591 = vadd.f32 %v117, %v590
  %592 = vmatmul.f32.gmra.mxu0 %v319
  %v593 = vpop.f32.mrf.mxu0
  %v594 = vadd.f32 %v117, %v593
  %595 = vmatmul.f32.gmra.mxu0 %v322
  %v596 = vpop.f32.mrf.mxu0
  %v597 = vadd.f32 %v117, %v596
  %598 = vmatmul.f32.gmra.mxu0 %v325
  %v599 = vpop.f32.mrf.mxu0
  %v600 = vadd.f32 %v117, %v599
  %601 = vmatmul.f32.gmra.mxu0 %v328
  %v602 = vpop.f32.mrf.mxu0
  %v603 = vadd.f32 %v117, %v602
  %604 = vmatmul.f32.gmra.mxu0 %v331
  %v605 = vpop.f32.mrf.mxu0
  %v606 = vadd.f32 %v117, %v605
  %607 = vmatmul.f32.gmra.mxu0 %v334
  %v608 = vpop.f32.mrf.mxu0
  %v609 = vadd.f32 %v117, %v608
  %610 = vmatmul.f32.gmra.mxu0 %v337
  %v611 = vpop.f32.mrf.mxu0
  %v612 = vadd.f32 %v117, %v611
  %613 = vmatmul.f32.gmra.mxu0 %v340
  %v614 = vpop.f32.mrf.mxu0
  %v615 = vadd.f32 %v117, %v614
  %616 = vmatmul.f32.gmra.mxu0 %v343
  %v617 = vpop.f32.mrf.mxu0
  %v618 = vadd.f32 %v117, %v617
  %619 = vmatmul.f32.gmra.mxu0 %v346
  %v620 = vpop.f32.mrf.mxu0
  %v621 = vadd.f32 %v117, %v620
  %622 = vmatmul.f32.gmra.mxu0 %v349
  %v623 = vpop.f32.mrf.mxu0
  %v624 = vadd.f32 %v117, %v623
  %625 = vmatmul.f32.gmra.mxu0 %v352
  %v626 = vpop.f32.mrf.mxu0
  %v627 = vadd.f32 %v117, %v626
  %628 = vmatmul.f32.gmra.mxu0 %v355
  %v629 = vpop.f32.mrf.mxu0
  %v630 = vadd.f32 %v117, %v629
  %631 = vmatmul.f32.gmra.mxu0 %v358
  %v632 = vpop.f32.mrf.mxu0
  %v633 = vadd.f32 %v117, %v632
  %634 = vmatmul.f32.gmra.mxu0 %v361
  %v635 = vpop.f32.mrf.mxu0
  %v636 = vadd.f32 %v117, %v635
  %637 = vmatmul.f32.gmra.mxu0 %v364
  %v638 = vpop.f32.mrf.mxu0
  %v639 = vadd.f32 %v117, %v638
  %640 = vmatmul.f32.gmra.mxu0 %v367
  %v641 = vpop.f32.mrf.mxu0
  %v642 = vadd.f32 %v117, %v641
  %643 = vmatmul.f32.gmra.mxu0 %v370
  %v644 = vpop.f32.mrf.mxu0
  %v645 = vadd.f32 %v117, %v644
  %646 = vmatmul.f32.gmra.mxu0 %v373
  %v647 = vpop.f32.mrf.mxu0
  %v648 = vadd.f32 %v117, %v647
  %649 = vmatmul.f32.gmra.mxu0 %v376
  %v650 = vpop.f32.mrf.mxu0
  %v651 = vadd.f32 %v117, %v650
  %652 = vdwg.mxu0
  %v653 = vmax.f32 %v396, 0.0
  %v654 = vmax.f32 %v399, 0.0
  %v655 = vmax.f32 %v402, 0.0
  %v656 = vmax.f32 %v405, 0.0
  %v657 = vmax.f32 %v408, 0.0
  %v658 = vmax.f32 %v411, 0.0
  %v659 = vmax.f32 %v414, 0.0
  %v660 = vmax.f32 %v417, 0.0
  %v661 = vmax.f32 %v420, 0.0
  %v662 = vmax.f32 %v423, 0.0
  %v663 = vmax.f32 %v426, 0.0
  %v664 = vmax.f32 %v429, 0.0
  %v665 = vmax.f32 %v432, 0.0
  %v666 = vmax.f32 %v435, 0.0
  %v667 = vmax.f32 %v438, 0.0
  %v668 = vmax.f32 %v441, 0.0
  %v669 = vmax.f32 %v444, 0.0
  %v670 = vmax.f32 %v447, 0.0
  %v671 = vmax.f32 %v450, 0.0
  %v672 = vmax.f32 %v453, 0.0
  %v673 = vmax.f32 %v456, 0.0
  %v674 = vmax.f32 %v459, 0.0
  %v675 = vmax.f32 %v462, 0.0
  %v676 = vmax.f32 %v465, 0.0
  %v677 = vmax.f32 %v468, 0.0
  %v678 = vmax.f32 %v471, 0.0
  %v679 = vmax.f32 %v474, 0.0
  %v680 = vmax.f32 %v477, 0.0
  %v681 = vmax.f32 %v480, 0.0
  %v682 = vmax.f32 %v483, 0.0
  %v683 = vmax.f32 %v486, 0.0
  %v684 = vmax.f32 %v489, 0.0
  %v685 = vmax.f32 %v492, 0.0
  %v686 = vmax.f32 %v495, 0.0
  %v687 = vmax.f32 %v498, 0.0
  %v688 = vmax.f32 %v501, 0.0
  %v689 = vmax.f32 %v504, 0.0
  %v690 = vmax.f32 %v507, 0.0
  %v691 = vmax.f32 %v510, 0.0
  %v692 = vmax.f32 %v513, 0.0
  %v693 = vmax.f32 %v516, 0.0
  %v694 = vmax.f32 %v519, 0.0
  %v695 = vmax.f32 %v522, 0.0
  %v696 = vmax.f32 %v525, 0.0
  %v697 = vmax.f32 %v528, 0.0
  %v698 = vmax.f32 %v531, 0.0
  %v699 = vmax.f32 %v534, 0.0
  %v700 = vmax.f32 %v537, 0.0
  %v701 = vmax.f32 %v540, 0.0
  %v702 = vmax.f32 %v543, 0.0
  %v703 = vmax.f32 %v546, 0.0
  %v704 = vmax.f32 %v549, 0.0
  %v705 = vmax.f32 %v552, 0.0
  %v706 = vmax.f32 %v555, 0.0
  %v707 = vmax.f32 %v558, 0.0
  %v708 = vmax.f32 %v561, 0.0
  %v709 = vmax.f32 %v564, 0.0
  %v710 = vmax.f32 %v567, 0.0
  %v711 = vmax.f32 %v570, 0.0
  %v712 = vmax.f32 %v573, 0.0
  %v713 = vmax.f32 %v576, 0.0
  %v714 = vmax.f32 %v579, 0.0
  %v715 = vmax.f32 %v582, 0.0
  %v716 = vmax.f32 %v585, 0.0
  %v717 = vmax.f32 %v588, 0.0
  %v718 = vmax.f32 %v591, 0.0
  %v719 = vmax.f32 %v594, 0.0
  %v720 = vmax.f32 %v597, 0.0
  %v721 = vmax.f32 %v600, 0.0
  %v722 = vmax.f32 %v603, 0.0
  %v723 = vmax.f32 %v606, 0.0
  %v724 = vmax.f32 %v609, 0.0
  %v725 = vmax.f32 %v612, 0.0
  %v726 = vmax.f32 %v615, 0.0
  %v727 = vmax.f32 %v618, 0.0
  %v728 = vmax.f32 %v621, 0.0
  %v729 = vmax.f32 %v624, 0.0
  %v730 = vmax.f32 %v627, 0.0
  %v731 = vmax.f32 %v630, 0.0
  %v732 = vmax.f32 %v633, 0.0
  %v733 = vmax.f32 %v636, 0.0
  %v734 = vmax.f32 %v639, 0.0
  %v735 = vmax.f32 %v642, 0.0
  %v736 = vmax.f32 %v645, 0.0
  %v737 = vmax.f32 %v648, 0.0
  %v738 = vmax.f32 %v651, 0.0
  %v739 = vld [vmem:[%s3] sm:$0xff]
  %v740 = vld [vmem:[%s3 + $0x8] sm:$0xff]
  %v741 = vld [vmem:[%s3 + $0x10] sm:$0xff]
  %v742 = vld [vmem:[%s3 + $0x18] sm:$0xff]
  %v743 = vld [vmem:[%s3 + $0x20] sm:$0xff]
  %v744 = vld [vmem:[%s3 + $0x28] sm:$0xff]
  %v745 = vld [vmem:[%s3 + $0x30] sm:$0xff]
  %v746 = vld [vmem:[%s3 + $0x38] sm:$0xff]
  %v747 = vld [vmem:[%s3 + $0x40] sm:$0xff]
  %v748 = vld [vmem:[%s3 + $0x48] sm:$0xff]
  %v749 = vld [vmem:[%s3 + $0x50] sm:$0xff]
  %v750 = vld [vmem:[%s3 + $0x58] sm:$0xff]
  %v751 = vld [vmem:[%s3 + $0x60] sm:$0xff]
  %v752 = vld [vmem:[%s3 + $0x68] sm:$0xff]
  %v753 = vld [vmem:[%s3 + $0x70] sm:$0xff]
  %v754 = vld [vmem:[%s3 + $0x78] sm:$0xff]
  %v755 = vld [vmem:[%s4] sm:$0x1]
  %v757 = vperm.slane %v755, 0
  %759 = vmatpush.msra.mxu0 %v754
  %760 = vmatpush.msra.mxu0 %v753
  %761 = vmatpush.msra.mxu0 %v752
  %762 = vmatpush.msra.mxu0 %v751
  %763 = vmatpush.msra.mxu0 %v750
  %764 = vmatpush.msra.mxu0 %v749
  %765 = vmatpush.msra.mxu0 %v748
  %766 = vmatpush.msra.mxu0 %v747
  %767 = vmatpush.msra.mxu0 %v746
  %768 = vmatpush.msra.mxu0 %v745
  %769 = vmatpush.msra.mxu0 %v744
  %770 = vmatpush.msra.mxu0 %v743
  %771 = vmatpush.msra.mxu0 %v742
  %772 = vmatpush.msra.mxu0 %v741
  %773 = vmatpush.msra.mxu0 %v740
  %774 = vmatpush.msra.mxu0 %v739
  %775 = vmatmul.f32.gmra.mxu0 %v653
  %v776 = vpop.f32.mrf.mxu0
  %v777 = vadd.f32 %v757, %v776
  %778 = vmatmul.f32.gmra.mxu0 %v654
  %v779 = vpop.f32.mrf.mxu0
  %v780 = vadd.f32 %v757, %v779
  %781 = vmatmul.f32.gmra.mxu0 %v655
  %v782 = vpop.f32.mrf.mxu0
  %v783 = vadd.f32 %v757, %v782
  %784 = vmatmul.f32.gmra.mxu0 %v656
  %v785 = vpop.f32.mrf.mxu0
  %v786 = vadd.f32 %v757, %v785
  %787 = vmatmul.f32.gmra.mxu0 %v657
  %v788 = vpop.f32.mrf.mxu0
  %v789 = vadd.f32 %v757, %v788
  %790 = vmatmul.f32.gmra.mxu0 %v658
  %v791 = vpop.f32.mrf.mxu0
  %v792 = vadd.f32 %v757, %v791
  %793 = vmatmul.f32.gmra.mxu0 %v659
  %v794 = vpop.f32.mrf.mxu0
  %v795 = vadd.f32 %v757, %v794
  %796 = vmatmul.f32.gmra.mxu0 %v660
  %v797 = vpop.f32.mrf.mxu0
  %v798 = vadd.f32 %v757, %v797
  %799 = vmatmul.f32.gmra.mxu0 %v661
  %v800 = vpop.f32.mrf.mxu0
  %v801 = vadd.f32 %v757, %v800
  %802 = vmatmul.f32.gmra.mxu0 %v662
  %v803 = vpop.f32.mrf.mxu0
  %v804 = vadd.f32 %v757, %v803
  %805 = vmatmul.f32.gmra.mxu0 %v663
  %v806 = vpop.f32.mrf.mxu0
  %v807 = vadd.f32 %v757, %v806
  %808 = vmatmul.f32.gmra.mxu0 %v664
  %v809 = vpop.f32.mrf.mxu0
  %v810 = vadd.f32 %v757, %v809
  %811 = vmatmul.f32.gmra.mxu0 %v665
  %v812 = vpop.f32.mrf.mxu0
  %v813 = vadd.f32 %v757, %v812
  %814 = vmatmul.f32.gmra.mxu0 %v666
  %v815 = vpop.f32.mrf.mxu0
  %v816 = vadd.f32 %v757, %v815
  %817 = vmatmul.f32.gmra.mxu0 %v667
  %v818 = vpop.f32.mrf.mxu0
  %v819 = vadd.f32 %v757, %v818
  %820 = vmatmul.f32.gmra.mxu0 %v668
  %v821 = vpop.f32.mrf.mxu0
  %v822 = vadd.f32 %v757, %v821
  %823 = vmatmul.f32.gmra.mxu0 %v669
  %v824 = vpop.f32.mrf.mxu0
  %v825 = vadd.f32 %v757, %v824
  %826 = vmatmul.f32.gmra.mxu0 %v670
  %v827 = vpop.f32.mrf.mxu0
  %v828 = vadd.f32 %v757, %v827
  %829 = vmatmul.f32.gmra.mxu0 %v671
  %v830 = vpop.f32.mrf.mxu0
  %v831 = vadd.f32 %v757, %v830
  %832 = vmatmul.f32.gmra.mxu0 %v672
  %v833 = vpop.f32.mrf.mxu0
  %v834 = vadd.f32 %v757, %v833
  %835 = vmatmul.f32.gmra.mxu0 %v673
  %v836 = vpop.f32.mrf.mxu0
  %v837 = vadd.f32 %v757, %v836
  %838 = vmatmul.f32.gmra.mxu0 %v674
  %v839 = vpop.f32.mrf.mxu0
  %v840 = vadd.f32 %v757, %v839
  %841 = vmatmul.f32.gmra.mxu0 %v675
  %v842 = vpop.f32.mrf.mxu0
  %v843 = vadd.f32 %v757, %v842
  %844 = vmatmul.f32.gmra.mxu0 %v676
  %v845 = vpop.f32.mrf.mxu0
  %v846 = vadd.f32 %v757, %v845
  %847 = vmatmul.f32.gmra.mxu0 %v677
  %v848 = vpop.f32.mrf.mxu0
  %v849 = vadd.f32 %v757, %v848
  %850 = vmatmul.f32.gmra.mxu0 %v678
  %v851 = vpop.f32.mrf.mxu0
  %v852 = vadd.f32 %v757, %v851
  %853 = vmatmul.f32.gmra.mxu0 %v679
  %v854 = vpop.f32.mrf.mxu0
  %v855 = vadd.f32 %v757, %v854
  %856 = vmatmul.f32.gmra.mxu0 %v680
  %v857 = vpop.f32.mrf.mxu0
  %v858 = vadd.f32 %v757, %v857
  %859 = vmatmul.f32.gmra.mxu0 %v681
  %v860 = vpop.f32.mrf.mxu0
  %v861 = vadd.f32 %v757, %v860
  %862 = vmatmul.f32.gmra.mxu0 %v682
  %v863 = vpop.f32.mrf.mxu0
  %v864 = vadd.f32 %v757, %v863
  %865 = vmatmul.f32.gmra.mxu0 %v683
  %v866 = vpop.f32.mrf.mxu0
  %v867 = vadd.f32 %v757, %v866
  %868 = vmatmul.f32.gmra.mxu0 %v684
  %v869 = vpop.f32.mrf.mxu0
  %v870 = vadd.f32 %v757, %v869
  %871 = vmatmul.f32.gmra.mxu0 %v685
  %v872 = vpop.f32.mrf.mxu0
  %v873 = vadd.f32 %v757, %v872
  %874 = vmatmul.f32.gmra.mxu0 %v686
  %v875 = vpop.f32.mrf.mxu0
  %v876 = vadd.f32 %v757, %v875
  %877 = vmatmul.f32.gmra.mxu0 %v687
  %v878 = vpop.f32.mrf.mxu0
  %v879 = vadd.f32 %v757, %v878
  %880 = vmatmul.f32.gmra.mxu0 %v688
  %v881 = vpop.f32.mrf.mxu0
  %v882 = vadd.f32 %v757, %v881
  %883 = vmatmul.f32.gmra.mxu0 %v689
  %v884 = vpop.f32.mrf.mxu0
  %v885 = vadd.f32 %v757, %v884
  %886 = vmatmul.f32.gmra.mxu0 %v690
  %v887 = vpop.f32.mrf.mxu0
  %v888 = vadd.f32 %v757, %v887
  %889 = vmatmul.f32.gmra.mxu0 %v691
  %v890 = vpop.f32.mrf.mxu0
  %v891 = vadd.f32 %v757, %v890
  %892 = vmatmul.f32.gmra.mxu0 %v692
  %v893 = vpop.f32.mrf.mxu0
  %v894 = vadd.f32 %v757, %v893
  %895 = vmatmul.f32.gmra.mxu0 %v693
  %v896 = vpop.f32.mrf.mxu0
  %v897 = vadd.f32 %v757, %v896
  %898 = vmatmul.f32.gmra.mxu0 %v694
  %v899 = vpop.f32.mrf.mxu0
  %v900 = vadd.f32 %v757, %v899
  %901 = vmatmul.f32.gmra.mxu0 %v695
  %v902 = vpop.f32.mrf.mxu0
  %v903 = vadd.f32 %v757, %v902
  %904 = vmatmul.f32.gmra.mxu0 %v696
  %v905 = vpop.f32.mrf.mxu0
  %v906 = vadd.f32 %v757, %v905
  %907 = vmatmul.f32.gmra.mxu0 %v697
  %v908 = vpop.f32.mrf.mxu0
  %v909 = vadd.f32 %v757, %v908
  %910 = vmatmul.f32.gmra.mxu0 %v698
  %v911 = vpop.f32.mrf.mxu0
  %v912 = vadd.f32 %v757, %v911
  %913 = vmatmul.f32.gmra.mxu0 %v699
  %v914 = vpop.f32.mrf.mxu0
  %v915 = vadd.f32 %v757, %v914
  %916 = vmatmul.f32.gmra.mxu0 %v700
  %v917 = vpop.f32.mrf.mxu0
  %v918 = vadd.f32 %v757, %v917
  %919 = vmatmul.f32.gmra.mxu0 %v701
  %v920 = vpop.f32.mrf.mxu0
  %v921 = vadd.f32 %v757, %v920
  %922 = vmatmul.f32.gmra.mxu0 %v702
  %v923 = vpop.f32.mrf.mxu0
  %v924 = vadd.f32 %v757, %v923
  %925 = vmatmul.f32.gmra.mxu0 %v703
  %v926 = vpop.f32.mrf.mxu0
  %v927 = vadd.f32 %v757, %v926
  %928 = vmatmul.f32.gmra.mxu0 %v704
  %v929 = vpop.f32.mrf.mxu0
  %v930 = vadd.f32 %v757, %v929
  %931 = vmatmul.f32.gmra.mxu0 %v705
  %v932 = vpop.f32.mrf.mxu0
  %v933 = vadd.f32 %v757, %v932
  %934 = vmatmul.f32.gmra.mxu0 %v706
  %v935 = vpop.f32.mrf.mxu0
  %v936 = vadd.f32 %v757, %v935
  %937 = vmatmul.f32.gmra.mxu0 %v707
  %v938 = vpop.f32.mrf.mxu0
  %v939 = vadd.f32 %v757, %v938
  %940 = vmatmul.f32.gmra.mxu0 %v708
  %v941 = vpop.f32.mrf.mxu0
  %v942 = vadd.f32 %v757, %v941
  %943 = vmatmul.f32.gmra.mxu0 %v709
  %v944 = vpop.f32.mrf.mxu0
  %v945 = vadd.f32 %v757, %v944
  %946 = vmatmul.f32.gmra.mxu0 %v710
  %v947 = vpop.f32.mrf.mxu0
  %v948 = vadd.f32 %v757, %v947
  %949 = vmatmul.f32.gmra.mxu0 %v711
  %v950 = vpop.f32.mrf.mxu0
  %v951 = vadd.f32 %v757, %v950
  %952 = vmatmul.f32.gmra.mxu0 %v712
  %v953 = vpop.f32.mrf.mxu0
  %v954 = vadd.f32 %v757, %v953
  %955 = vmatmul.f32.gmra.mxu0 %v713
  %v956 = vpop.f32.mrf.mxu0
  %v957 = vadd.f32 %v757, %v956
  %958 = vmatmul.f32.gmra.mxu0 %v714
  %v959 = vpop.f32.mrf.mxu0
  %v960 = vadd.f32 %v757, %v959
  %961 = vmatmul.f32.gmra.mxu0 %v715
  %v962 = vpop.f32.mrf.mxu0
  %v963 = vadd.f32 %v757, %v962
  %964 = vmatmul.f32.gmra.mxu0 %v716
  %v965 = vpop.f32.mrf.mxu0
  %v966 = vadd.f32 %v757, %v965
  %967 = vmatmul.f32.gmra.mxu0 %v717
  %v968 = vpop.f32.mrf.mxu0
  %v969 = vadd.f32 %v757, %v968
  %970 = vmatmul.f32.gmra.mxu0 %v718
  %v971 = vpop.f32.mrf.mxu0
  %v972 = vadd.f32 %v757, %v971
  %973 = vmatmul.f32.gmra.mxu0 %v719
  %v974 = vpop.f32.mrf.mxu0
  %v975 = vadd.f32 %v757, %v974
  %976 = vmatmul.f32.gmra.mxu0 %v720
  %v977 = vpop.f32.mrf.mxu0
  %v978 = vadd.f32 %v757, %v977
  %979 = vmatmul.f32.gmra.mxu0 %v721
  %v980 = vpop.f32.mrf.mxu0
  %v981 = vadd.f32 %v757, %v980
  %982 = vmatmul.f32.gmra.mxu0 %v722
  %v983 = vpop.f32.mrf.mxu0
  %v984 = vadd.f32 %v757, %v983
  %985 = vmatmul.f32.gmra.mxu0 %v723
  %v986 = vpop.f32.mrf.mxu0
  %v987 = vadd.f32 %v757, %v986
  %988 = vmatmul.f32.gmra.mxu0 %v724
  %v989 = vpop.f32.mrf.mxu0
  %v990 = vadd.f32 %v757, %v989
  %991 = vmatmul.f32.gmra.mxu0 %v725
  %v992 = vpop.f32.mrf.mxu0
  %v993 = vadd.f32 %v757, %v992
  %994 = vmatmul.f32.gmra.mxu0 %v726
  %v995 = vpop.f32.mrf.mxu0
  %v996 = vadd.f32 %v757, %v995
  %997 = vmatmul.f32.gmra.mxu0 %v727
  %v998 = vpop.f32.mrf.mxu0
  %v999 = vadd.f32 %v757, %v998
  %1000 = vmatmul.f32.gmra.mxu0 %v728
  %v1001 = vpop.f32.mrf.mxu0
  %v1002 = vadd.f32 %v757, %v1001
  %1003 = vmatmul.f32.gmra.mxu0 %v729
  %v1004 = vpop.f32.mrf.mxu0
  %v1005 = vadd.f32 %v757, %v1004
  %1006 = vmatmul.f32.gmra.mxu0 %v730
  %v1007 = vpop.f32.mrf.mxu0
  %v1008 = vadd.f32 %v757, %v1007
  %1009 = vmatmul.f32.gmra.mxu0 %v731
  %v1010 = vpop.f32.mrf.mxu0
  %v1011 = vadd.f32 %v757, %v1010
  %1012 = vmatmul.f32.gmra.mxu0 %v732
  %v1013 = vpop.f32.mrf.mxu0
  %v1014 = vadd.f32 %v757, %v1013
  %1015 = vmatmul.f32.gmra.mxu0 %v733
  %v1016 = vpop.f32.mrf.mxu0
  %v1017 = vadd.f32 %v757, %v1016
  %1018 = vmatmul.f32.gmra.mxu0 %v734
  %v1019 = vpop.f32.mrf.mxu0
  %v1020 = vadd.f32 %v757, %v1019
  %1021 = vmatmul.f32.gmra.mxu0 %v735
  %v1022 = vpop.f32.mrf.mxu0
  %v1023 = vadd.f32 %v757, %v1022
  %1024 = vmatmul.f32.gmra.mxu0 %v736
  %v1025 = vpop.f32.mrf.mxu0
  %v1026 = vadd.f32 %v757, %v1025
  %1027 = vmatmul.f32.gmra.mxu0 %v737
  %v1028 = vpop.f32.mrf.mxu0
  %v1029 = vadd.f32 %v757, %v1028
  %1030 = vmatmul.f32.gmra.mxu0 %v738
  %v1031 = vpop.f32.mrf.mxu0
  %v1032 = vadd.f32 %v757, %v1031
  %1033 = vdwg.mxu0
  %1034 = vst [vmem:[%s7] sm:$0xff] %v777
  %1035 = vst [vmem:[%s7 + $0x8] sm:$0xff] %v780
  %1036 = vst [vmem:[%s7 + $0x10] sm:$0xff] %v783
  %1037 = vst [vmem:[%s7 + $0x18] sm:$0xff] %v786
  %1038 = vst [vmem:[%s7 + $0x20] sm:$0xff] %v789
  %1039 = vst [vmem:[%s7 + $0x28] sm:$0xff] %v792
  %1040 = vst [vmem:[%s7 + $0x30] sm:$0xff] %v795
  %1041 = vst [vmem:[%s7 + $0x38] sm:$0xff] %v798
  %1042 = vst [vmem:[%s7 + $0x40] sm:$0xff] %v801
  %1043 = vst [vmem:[%s7 + $0x48] sm:$0xff] %v804
  %1044 = vst [vmem:[%s7 + $0x50] sm:$0xff] %v807
  %1045 = vst [vmem:[%s7 + $0x58] sm:$0xff] %v810
  %1046 = vst [vmem:[%s7 + $0x60] sm:$0xff] %v813
  %1047 = vst [vmem:[%s7 + $0x68] sm:$0xff] %v816
  %1048 = vst [vmem:[%s7 + $0x70] sm:$0xff] %v819
  %1049 = vst [vmem:[%s7 + $0x78] sm:$0xff] %v822
  %1050 = vst [vmem:[%s7 + $0x80] sm:$0xff] %v825
  %1051 = vst [vmem:[%s7 + $0x88] sm:$0xff] %v828
  %1052 = vst [vmem:[%s7 + $0x90] sm:$0xff] %v831
  %1053 = vst [vmem:[%s7 + $0x98] sm:$0xff] %v834
  %1054 = vst [vmem:[%s7 + $0xa0] sm:$0xff] %v837
  %1055 = vst [vmem:[%s7 + $0xa8] sm:$0xff] %v840
  %1056 = vst [vmem:[%s7 + $0xb0] sm:$0xff] %v843
  %1057 = vst [vmem:[%s7 + $0xb8] sm:$0xff] %v846
  %1058 = vst [vmem:[%s7 + $0xc0] sm:$0xff] %v849
  %1059 = vst [vmem:[%s7 + $0xc8] sm:$0xff] %v852
  %1060 = vst [vmem:[%s7 + $0xd0] sm:$0xff] %v855
  %1061 = vst [vmem:[%s7 + $0xd8] sm:$0xff] %v858
  %1062 = vst [vmem:[%s7 + $0xe0] sm:$0xff] %v861
  %1063 = vst [vmem:[%s7 + $0xe8] sm:$0xff] %v864
  %1064 = vst [vmem:[%s7 + $0xf0] sm:$0xff] %v867
  %1065 = vst [vmem:[%s7 + $0xf8] sm:$0xff] %v870
  %1066 = vst [vmem:[%s7 + $0x100] sm:$0xff] %v873
  %1067 = vst [vmem:[%s7 + $0x108] sm:$0xff] %v876
  %1068 = vst [vmem:[%s7 + $0x110] sm:$0xff] %v879
  %1069 = vst [vmem:[%s7 + $0x118] sm:$0xff] %v882
  %1070 = vst [vmem:[%s7 + $0x120] sm:$0xff] %v885
  %1071 = vst [vmem:[%s7 + $0x128] sm:$0xff] %v888
  %1072 = vst [vmem:[%s7 + $0x130] sm:$0xff] %v891
  %1073 = vst [vmem:[%s7 + $0x138] sm:$0xff] %v894
  %1074 = vst [vmem:[%s7 + $0x140] sm:$0xff] %v897
  %1075 = vst [vmem:[%s7 + $0x148] sm:$0xff] %v900
  %1076 = vst [vmem:[%s7 + $0x150] sm:$0xff] %v903
  %1077 = vst [vmem:[%s7 + $0x158] sm:$0xff] %v906
  %1078 = vst [vmem:[%s7 + $0x160] sm:$0xff] %v909
  %1079 = vst [vmem:[%s7 + $0x168] sm:$0xff] %v912
  %1080 = vst [vmem:[%s7 + $0x170] sm:$0xff] %v915
  %1081 = vst [vmem:[%s7 + $0x178] sm:$0xff] %v918
  %1082 = vst [vmem:[%s7 + $0x180] sm:$0xff] %v921
  %1083 = vst [vmem:[%s7 + $0x188] sm:$0xff] %v924
  %1084 = vst [vmem:[%s7 + $0x190] sm:$0xff] %v927
  %1085 = vst [vmem:[%s7 + $0x198] sm:$0xff] %v930
  %1086 = vst [vmem:[%s7 + $0x1a0] sm:$0xff] %v933
  %1087 = vst [vmem:[%s7 + $0x1a8] sm:$0xff] %v936
  %1088 = vst [vmem:[%s7 + $0x1b0] sm:$0xff] %v939
  %1089 = vst [vmem:[%s7 + $0x1b8] sm:$0xff] %v942
  %1090 = vst [vmem:[%s7 + $0x1c0] sm:$0xff] %v945
  %1091 = vst [vmem:[%s7 + $0x1c8] sm:$0xff] %v948
  %1092 = vst [vmem:[%s7 + $0x1d0] sm:$0xff] %v951
  %1093 = vst [vmem:[%s7 + $0x1d8] sm:$0xff] %v954
  %1094 = vst [vmem:[%s7 + $0x1e0] sm:$0xff] %v957
  %1095 = vst [vmem:[%s7 + $0x1e8] sm:$0xff] %v960
  %1096 = vst [vmem:[%s7 + $0x1f0] sm:$0xff] %v963
  %1097 = vst [vmem:[%s7 + $0x1f8] sm:$0xff] %v966
  %1098 = vst [vmem:[%s7 + $0x200] sm:$0xff] %v969
  %1099 = vst [vmem:[%s7 + $0x208] sm:$0xff] %v972
  %1100 = vst [vmem:[%s7 + $0x210] sm:$0xff] %v975
  %1101 = vst [vmem:[%s7 + $0x218] sm:$0xff] %v978
  %1102 = vst [vmem:[%s7 + $0x220] sm:$0xff] %v981
  %1103 = vst [vmem:[%s7 + $0x228] sm:$0xff] %v984
  %1104 = vst [vmem:[%s7 + $0x230] sm:$0xff] %v987
  %1105 = vst [vmem:[%s7 + $0x238] sm:$0xff] %v990
  %1106 = vst [vmem:[%s7 + $0x240] sm:$0xff] %v993
  %1107 = vst [vmem:[%s7 + $0x248] sm:$0xff] %v996
  %1108 = vst [vmem:[%s7 + $0x250] sm:$0xff] %v999
  %1109 = vst [vmem:[%s7 + $0x258] sm:$0xff] %v1002
  %1110 = vst [vmem:[%s7 + $0x260] sm:$0xff] %v1005
  %1111 = vst [vmem:[%s7 + $0x268] sm:$0xff] %v1008
  %1112 = vst [vmem:[%s7 + $0x270] sm:$0xff] %v1011
  %1113 = vst [vmem:[%s7 + $0x278] sm:$0xff] %v1014
  %1114 = vst [vmem:[%s7 + $0x280] sm:$0xff] %v1017
  %1115 = vst [vmem:[%s7 + $0x288] sm:$0xff] %v1020
  %1116 = vst [vmem:[%s7 + $0x290] sm:$0xff] %v1023
  %1117 = vst [vmem:[%s7 + $0x298] sm:$0xff] %v1026
  %1118 = vst [vmem:[%s7 + $0x2a0] sm:$0xff] %v1029
  %1119 = vst [vmem:[%s7 + $0x2a8] sm:$0xff] %v1032
  %v1120 = vld [vmem:[%s5] sm:$0xff]
  %v1121 = vld [vmem:[%s5 + $0x8] sm:$0xff]
  %v1122 = vld [vmem:[%s5 + $0x10] sm:$0xff]
  %v1123 = vld [vmem:[%s5 + $0x18] sm:$0xff]
  %v1124 = vld [vmem:[%s5 + $0x20] sm:$0xff]
  %v1125 = vld [vmem:[%s5 + $0x28] sm:$0xff]
  %v1126 = vld [vmem:[%s5 + $0x30] sm:$0xff]
  %v1127 = vld [vmem:[%s5 + $0x38] sm:$0xff]
  %v1128 = vld [vmem:[%s5 + $0x40] sm:$0xff]
  %v1129 = vld [vmem:[%s5 + $0x48] sm:$0xff]
  %v1130 = vld [vmem:[%s5 + $0x50] sm:$0xff]
  %v1131 = vld [vmem:[%s5 + $0x58] sm:$0xff]
  %v1132 = vld [vmem:[%s5 + $0x60] sm:$0xff]
  %v1133 = vld [vmem:[%s5 + $0x68] sm:$0xff]
  %v1134 = vld [vmem:[%s5 + $0x70] sm:$0xff]
  %v1135 = vld [vmem:[%s5 + $0x78] sm:$0xff]
  %v1136 = vld [vmem:[%s6] sm:$0x1]
  %v1138 = vperm.slane %v1136, 0
  %1140 = vmatpush.msra.mxu0 %v1135
  %1141 = vmatpush.msra.mxu0 %v1134
  %1142 = vmatpush.msra.mxu0 %v1133
  %1143 = vmatpush.msra.mxu0 %v1132
  %1144 = vmatpush.msra.mxu0 %v1131
  %1145 = vmatpush.msra.mxu0 %v1130
  %1146 = vmatpush.msra.mxu0 %v1129
  %1147 = vmatpush.msra.mxu0 %v1128
  %1148 = vmatpush.msra.mxu0 %v1127
  %1149 = vmatpush.msra.mxu0 %v1126
  %1150 = vmatpush.msra.mxu0 %v1125
  %1151 = vmatpush.msra.mxu0 %v1124
  %1152 = vmatpush.msra.mxu0 %v1123
  %1153 = vmatpush.msra.mxu0 %v1122
  %1154 = vmatpush.msra.mxu0 %v1121
  %1155 = vmatpush.msra.mxu0 %v1120
  %1156 = vmatmul.f32.gmra.mxu0 %v653
  %v1157 = vpop.f32.mrf.mxu0
  %v1158 = vadd.f32 %v1138, %v1157
  %1159 = vmatmul.f32.gmra.mxu0 %v654
  %v1160 = vpop.f32.mrf.mxu0
  %v1161 = vadd.f32 %v1138, %v1160
  %1162 = vmatmul.f32.gmra.mxu0 %v655
  %v1163 = vpop.f32.mrf.mxu0
  %v1164 = vadd.f32 %v1138, %v1163
  %1165 = vmatmul.f32.gmra.mxu0 %v656
  %v1166 = vpop.f32.mrf.mxu0
  %v1167 = vadd.f32 %v1138, %v1166
  %1168 = vmatmul.f32.gmra.mxu0 %v657
  %v1169 = vpop.f32.mrf.mxu0
  %v1170 = vadd.f32 %v1138, %v1169
  %1171 = vmatmul.f32.gmra.mxu0 %v658
  %v1172 = vpop.f32.mrf.mxu0
  %v1173 = vadd.f32 %v1138, %v1172
  %1174 = vmatmul.f32.gmra.mxu0 %v659
  %v1175 = vpop.f32.mrf.mxu0
  %v1176 = vadd.f32 %v1138, %v1175
  %1177 = vmatmul.f32.gmra.mxu0 %v660
  %v1178 = vpop.f32.mrf.mxu0
  %v1179 = vadd.f32 %v1138, %v1178
  %1180 = vmatmul.f32.gmra.mxu0 %v661
  %v1181 = vpop.f32.mrf.mxu0
  %v1182 = vadd.f32 %v1138, %v1181
  %1183 = vmatmul.f32.gmra.mxu0 %v662
  %v1184 = vpop.f32.mrf.mxu0
  %v1185 = vadd.f32 %v1138, %v1184
  %1186 = vmatmul.f32.gmra.mxu0 %v663
  %v1187 = vpop.f32.mrf.mxu0
  %v1188 = vadd.f32 %v1138, %v1187
  %1189 = vmatmul.f32.gmra.mxu0 %v664
  %v1190 = vpop.f32.mrf.mxu0
  %v1191 = vadd.f32 %v1138, %v1190
  %1192 = vmatmul.f32.gmra.mxu0 %v665
  %v1193 = vpop.f32.mrf.mxu0
  %v1194 = vadd.f32 %v1138, %v1193
  %1195 = vmatmul.f32.gmra.mxu0 %v666
  %v1196 = vpop.f32.mrf.mxu0
  %v1197 = vadd.f32 %v1138, %v1196
  %1198 = vmatmul.f32.gmra.mxu0 %v667
  %v1199 = vpop.f32.mrf.mxu0
  %v1200 = vadd.f32 %v1138, %v1199
  %1201 = vmatmul.f32.gmra.mxu0 %v668
  %v1202 = vpop.f32.mrf.mxu0
  %v1203 = vadd.f32 %v1138, %v1202
  %1204 = vmatmul.f32.gmra.mxu0 %v669
  %v1205 = vpop.f32.mrf.mxu0
  %v1206 = vadd.f32 %v1138, %v1205
  %1207 = vmatmul.f32.gmra.mxu0 %v670
  %v1208 = vpop.f32.mrf.mxu0
  %v1209 = vadd.f32 %v1138, %v1208
  %1210 = vmatmul.f32.gmra.mxu0 %v671
  %v1211 = vpop.f32.mrf.mxu0
  %v1212 = vadd.f32 %v1138, %v1211
  %1213 = vmatmul.f32.gmra.mxu0 %v672
  %v1214 = vpop.f32.mrf.mxu0
  %v1215 = vadd.f32 %v1138, %v1214
  %1216 = vmatmul.f32.gmra.mxu0 %v673
  %v1217 = vpop.f32.mrf.mxu0
  %v1218 = vadd.f32 %v1138, %v1217
  %1219 = vmatmul.f32.gmra.mxu0 %v674
  %v1220 = vpop.f32.mrf.mxu0
  %v1221 = vadd.f32 %v1138, %v1220
  %1222 = vmatmul.f32.gmra.mxu0 %v675
  %v1223 = vpop.f32.mrf.mxu0
  %v1224 = vadd.f32 %v1138, %v1223
  %1225 = vmatmul.f32.gmra.mxu0 %v676
  %v1226 = vpop.f32.mrf.mxu0
  %v1227 = vadd.f32 %v1138, %v1226
  %1228 = vmatmul.f32.gmra.mxu0 %v677
  %v1229 = vpop.f32.mrf.mxu0
  %v1230 = vadd.f32 %v1138, %v1229
  %1231 = vmatmul.f32.gmra.mxu0 %v678
  %v1232 = vpop.f32.mrf.mxu0
  %v1233 = vadd.f32 %v1138, %v1232
  %1234 = vmatmul.f32.gmra.mxu0 %v679
  %v1235 = vpop.f32.mrf.mxu0
  %v1236 = vadd.f32 %v1138, %v1235
  %1237 = vmatmul.f32.gmra.mxu0 %v680
  %v1238 = vpop.f32.mrf.mxu0
  %v1239 = vadd.f32 %v1138, %v1238
  %1240 = vmatmul.f32.gmra.mxu0 %v681
  %v1241 = vpop.f32.mrf.mxu0
  %v1242 = vadd.f32 %v1138, %v1241
  %1243 = vmatmul.f32.gmra.mxu0 %v682
  %v1244 = vpop.f32.mrf.mxu0
  %v1245 = vadd.f32 %v1138, %v1244
  %1246 = vmatmul.f32.gmra.mxu0 %v683
  %v1247 = vpop.f32.mrf.mxu0
  %v1248 = vadd.f32 %v1138, %v1247
  %1249 = vmatmul.f32.gmra.mxu0 %v684
  %v1250 = vpop.f32.mrf.mxu0
  %v1251 = vadd.f32 %v1138, %v1250
  %1252 = vmatmul.f32.gmra.mxu0 %v685
  %v1253 = vpop.f32.mrf.mxu0
  %v1254 = vadd.f32 %v1138, %v1253
  %1255 = vmatmul.f32.gmra.mxu0 %v686
  %v1256 = vpop.f32.mrf.mxu0
  %v1257 = vadd.f32 %v1138, %v1256
  %1258 = vmatmul.f32.gmra.mxu0 %v687
  %v1259 = vpop.f32.mrf.mxu0
  %v1260 = vadd.f32 %v1138, %v1259
  %1261 = vmatmul.f32.gmra.mxu0 %v688
  %v1262 = vpop.f32.mrf.mxu0
  %v1263 = vadd.f32 %v1138, %v1262
  %1264 = vmatmul.f32.gmra.mxu0 %v689
  %v1265 = vpop.f32.mrf.mxu0
  %v1266 = vadd.f32 %v1138, %v1265
  %1267 = vmatmul.f32.gmra.mxu0 %v690
  %v1268 = vpop.f32.mrf.mxu0
  %v1269 = vadd.f32 %v1138, %v1268
  %1270 = vmatmul.f32.gmra.mxu0 %v691
  %v1271 = vpop.f32.mrf.mxu0
  %v1272 = vadd.f32 %v1138, %v1271
  %1273 = vmatmul.f32.gmra.mxu0 %v692
  %v1274 = vpop.f32.mrf.mxu0
  %v1275 = vadd.f32 %v1138, %v1274
  %1276 = vmatmul.f32.gmra.mxu0 %v693
  %v1277 = vpop.f32.mrf.mxu0
  %v1278 = vadd.f32 %v1138, %v1277
  %1279 = vmatmul.f32.gmra.mxu0 %v694
  %v1280 = vpop.f32.mrf.mxu0
  %v1281 = vadd.f32 %v1138, %v1280
  %1282 = vmatmul.f32.gmra.mxu0 %v695
  %v1283 = vpop.f32.mrf.mxu0
  %v1284 = vadd.f32 %v1138, %v1283
  %1285 = vmatmul.f32.gmra.mxu0 %v696
  %v1286 = vpop.f32.mrf.mxu0
  %v1287 = vadd.f32 %v1138, %v1286
  %1288 = vmatmul.f32.gmra.mxu0 %v697
  %v1289 = vpop.f32.mrf.mxu0
  %v1290 = vadd.f32 %v1138, %v1289
  %1291 = vmatmul.f32.gmra.mxu0 %v698
  %v1292 = vpop.f32.mrf.mxu0
  %v1293 = vadd.f32 %v1138, %v1292
  %1294 = vmatmul.f32.gmra.mxu0 %v699
  %v1295 = vpop.f32.mrf.mxu0
  %v1296 = vadd.f32 %v1138, %v1295
  %1297 = vmatmul.f32.gmra.mxu0 %v700
  %v1298 = vpop.f32.mrf.mxu0
  %v1299 = vadd.f32 %v1138, %v1298
  %1300 = vmatmul.f32.gmra.mxu0 %v701
  %v1301 = vpop.f32.mrf.mxu0
  %v1302 = vadd.f32 %v1138, %v1301
  %1303 = vmatmul.f32.gmra.mxu0 %v702
  %v1304 = vpop.f32.mrf.mxu0
  %v1305 = vadd.f32 %v1138, %v1304
  %1306 = vmatmul.f32.gmra.mxu0 %v703
  %v1307 = vpop.f32.mrf.mxu0
  %v1308 = vadd.f32 %v1138, %v1307
  %1309 = vmatmul.f32.gmra.mxu0 %v704
  %v1310 = vpop.f32.mrf.mxu0
  %v1311 = vadd.f32 %v1138, %v1310
  %1312 = vmatmul.f32.gmra.mxu0 %v705
  %v1313 = vpop.f32.mrf.mxu0
  %v1314 = vadd.f32 %v1138, %v1313
  %1315 = vmatmul.f32.gmra.mxu0 %v706
  %v1316 = vpop.f32.mrf.mxu0
  %v1317 = vadd.f32 %v1138, %v1316
  %1318 = vmatmul.f32.gmra.mxu0 %v707
  %v1319 = vpop.f32.mrf.mxu0
  %v1320 = vadd.f32 %v1138, %v1319
  %1321 = vmatmul.f32.gmra.mxu0 %v708
  %v1322 = vpop.f32.mrf.mxu0
  %v1323 = vadd.f32 %v1138, %v1322
  %1324 = vmatmul.f32.gmra.mxu0 %v709
  %v1325 = vpop.f32.mrf.mxu0
  %v1326 = vadd.f32 %v1138, %v1325
  %1327 = vmatmul.f32.gmra.mxu0 %v710
  %v1328 = vpop.f32.mrf.mxu0
  %v1329 = vadd.f32 %v1138, %v1328
  %1330 = vmatmul.f32.gmra.mxu0 %v711
  %v1331 = vpop.f32.mrf.mxu0
  %v1332 = vadd.f32 %v1138, %v1331
  %1333 = vmatmul.f32.gmra.mxu0 %v712
  %v1334 = vpop.f32.mrf.mxu0
  %v1335 = vadd.f32 %v1138, %v1334
  %1336 = vmatmul.f32.gmra.mxu0 %v713
  %v1337 = vpop.f32.mrf.mxu0
  %v1338 = vadd.f32 %v1138, %v1337
  %1339 = vmatmul.f32.gmra.mxu0 %v714
  %v1340 = vpop.f32.mrf.mxu0
  %v1341 = vadd.f32 %v1138, %v1340
  %1342 = vmatmul.f32.gmra.mxu0 %v715
  %v1343 = vpop.f32.mrf.mxu0
  %v1344 = vadd.f32 %v1138, %v1343
  %1345 = vmatmul.f32.gmra.mxu0 %v716
  %v1346 = vpop.f32.mrf.mxu0
  %v1347 = vadd.f32 %v1138, %v1346
  %1348 = vmatmul.f32.gmra.mxu0 %v717
  %v1349 = vpop.f32.mrf.mxu0
  %v1350 = vadd.f32 %v1138, %v1349
  %1351 = vmatmul.f32.gmra.mxu0 %v718
  %v1352 = vpop.f32.mrf.mxu0
  %v1353 = vadd.f32 %v1138, %v1352
  %1354 = vmatmul.f32.gmra.mxu0 %v719
  %v1355 = vpop.f32.mrf.mxu0
  %v1356 = vadd.f32 %v1138, %v1355
  %1357 = vmatmul.f32.gmra.mxu0 %v720
  %v1358 = vpop.f32.mrf.mxu0
  %v1359 = vadd.f32 %v1138, %v1358
  %1360 = vmatmul.f32.gmra.mxu0 %v721
  %v1361 = vpop.f32.mrf.mxu0
  %v1362 = vadd.f32 %v1138, %v1361
  %1363 = vmatmul.f32.gmra.mxu0 %v722
  %v1364 = vpop.f32.mrf.mxu0
  %v1365 = vadd.f32 %v1138, %v1364
  %1366 = vmatmul.f32.gmra.mxu0 %v723
  %v1367 = vpop.f32.mrf.mxu0
  %v1368 = vadd.f32 %v1138, %v1367
  %1369 = vmatmul.f32.gmra.mxu0 %v724
  %v1370 = vpop.f32.mrf.mxu0
  %v1371 = vadd.f32 %v1138, %v1370
  %1372 = vmatmul.f32.gmra.mxu0 %v725
  %v1373 = vpop.f32.mrf.mxu0
  %v1374 = vadd.f32 %v1138, %v1373
  %1375 = vmatmul.f32.gmra.mxu0 %v726
  %v1376 = vpop.f32.mrf.mxu0
  %v1377 = vadd.f32 %v1138, %v1376
  %1378 = vmatmul.f32.gmra.mxu0 %v727
  %v1379 = vpop.f32.mrf.mxu0
  %v1380 = vadd.f32 %v1138, %v1379
  %1381 = vmatmul.f32.gmra.mxu0 %v728
  %v1382 = vpop.f32.mrf.mxu0
  %v1383 = vadd.f32 %v1138, %v1382
  %1384 = vmatmul.f32.gmra.mxu0 %v729
  %v1385 = vpop.f32.mrf.mxu0
  %v1386 = vadd.f32 %v1138, %v1385
  %1387 = vmatmul.f32.gmra.mxu0 %v730
  %v1388 = vpop.f32.mrf.mxu0
  %v1389 = vadd.f32 %v1138, %v1388
  %1390 = vmatmul.f32.gmra.mxu0 %v731
  %v1391 = vpop.f32.mrf.mxu0
  %v1392 = vadd.f32 %v1138, %v1391
  %1393 = vmatmul.f32.gmra.mxu0 %v732
  %v1394 = vpop.f32.mrf.mxu0
  %v1395 = vadd.f32 %v1138, %v1394
  %1396 = vmatmul.f32.gmra.mxu0 %v733
  %v1397 = vpop.f32.mrf.mxu0
  %v1398 = vadd.f32 %v1138, %v1397
  %1399 = vmatmul.f32.gmra.mxu0 %v734
  %v1400 = vpop.f32.mrf.mxu0
  %v1401 = vadd.f32 %v1138, %v1400
  %1402 = vmatmul.f32.gmra.mxu0 %v735
  %v1403 = vpop.f32.mrf.mxu0
  %v1404 = vadd.f32 %v1138, %v1403
  %1405 = vmatmul.f32.gmra.mxu0 %v736
  %v1406 = vpop.f32.mrf.mxu0
  %v1407 = vadd.f32 %v1138, %v1406
  %1408 = vmatmul.f32.gmra.mxu0 %v737
  %v1409 = vpop.f32.mrf.mxu0
  %v1410 = vadd.f32 %v1138, %v1409
  %1411 = vmatmul.f32.gmra.mxu0 %v738
  %v1412 = vpop.f32.mrf.mxu0
  %v1413 = vadd.f32 %v1138, %v1412
  %1414 = vdwg.mxu0
  %1415 = vst [vmem:[%s8] sm:$0xff] %v1158
  %1416 = vst [vmem:[%s8 + $0x8] sm:$0xff] %v1161
  %1417 = vst [vmem:[%s8 + $0x10] sm:$0xff] %v1164
  %1418 = vst [vmem:[%s8 + $0x18] sm:$0xff] %v1167
  %1419 = vst [vmem:[%s8 + $0x20] sm:$0xff] %v1170
  %1420 = vst [vmem:[%s8 + $0x28] sm:$0xff] %v1173
  %1421 = vst [vmem:[%s8 + $0x30] sm:$0xff] %v1176
  %1422 = vst [vmem:[%s8 + $0x38] sm:$0xff] %v1179
  %1423 = vst [vmem:[%s8 + $0x40] sm:$0xff] %v1182
  %1424 = vst [vmem:[%s8 + $0x48] sm:$0xff] %v1185
  %1425 = vst [vmem:[%s8 + $0x50] sm:$0xff] %v1188
  %1426 = vst [vmem:[%s8 + $0x58] sm:$0xff] %v1191
  %1427 = vst [vmem:[%s8 + $0x60] sm:$0xff] %v1194
  %1428 = vst [vmem:[%s8 + $0x68] sm:$0xff] %v1197
  %1429 = vst [vmem:[%s8 + $0x70] sm:$0xff] %v1200
  %1430 = vst [vmem:[%s8 + $0x78] sm:$0xff] %v1203
  %1431 = vst [vmem:[%s8 + $0x80] sm:$0xff] %v1206
  %1432 = vst [vmem:[%s8 + $0x88] sm:$0xff] %v1209
  %1433 = vst [vmem:[%s8 + $0x90] sm:$0xff] %v1212
  %1434 = vst [vmem:[%s8 + $0x98] sm:$0xff] %v1215
  %1435 = vst [vmem:[%s8 + $0xa0] sm:$0xff] %v1218
  %1436 = vst [vmem:[%s8 + $0xa8] sm:$0xff] %v1221
  %1437 = vst [vmem:[%s8 + $0xb0] sm:$0xff] %v1224
  %1438 = vst [vmem:[%s8 + $0xb8] sm:$0xff] %v1227
  %1439 = vst [vmem:[%s8 + $0xc0] sm:$0xff] %v1230
  %1440 = vst [vmem:[%s8 + $0xc8] sm:$0xff] %v1233
  %1441 = vst [vmem:[%s8 + $0xd0] sm:$0xff] %v1236
  %1442 = vst [vmem:[%s8 + $0xd8] sm:$0xff] %v1239
  %1443 = vst [vmem:[%s8 + $0xe0] sm:$0xff] %v1242
  %1444 = vst [vmem:[%s8 + $0xe8] sm:$0xff] %v1245
  %1445 = vst [vmem:[%s8 + $0xf0] sm:$0xff] %v1248
  %1446 = vst [vmem:[%s8 + $0xf8] sm:$0xff] %v1251
  %1447 = vst [vmem:[%s8 + $0x100] sm:$0xff] %v1254
  %1448 = vst [vmem:[%s8 + $0x108] sm:$0xff] %v1257
  %1449 = vst [vmem:[%s8 + $0x110] sm:$0xff] %v1260
  %1450 = vst [vmem:[%s8 + $0x118] sm:$0xff] %v1263
  %1451 = vst [vmem:[%s8 + $0x120] sm:$0xff] %v1266
  %1452 = vst [vmem:[%s8 + $0x128] sm:$0xff] %v1269
  %1453 = vst [vmem:[%s8 + $0x130] sm:$0xff] %v1272
  %1454 = vst [vmem:[%s8 + $0x138] sm:$0xff] %v1275
  %1455 = vst [vmem:[%s8 + $0x140] sm:$0xff] %v1278
  %1456 = vst [vmem:[%s8 + $0x148] sm:$0xff] %v1281
  %1457 = vst [vmem:[%s8 + $0x150] sm:$0xff] %v1284
  %1458 = vst [vmem:[%s8 + $0x158] sm:$0xff] %v1287
  %1459 = vst [vmem:[%s8 + $0x160] sm:$0xff] %v1290
  %1460 = vst [vmem:[%s8 + $0x168] sm:$0xff] %v1293
  %1461 = vst [vmem:[%s8 + $0x170] sm:$0xff] %v1296
  %1462 = vst [vmem:[%s8 + $0x178] sm:$0xff] %v1299
  %1463 = vst [vmem:[%s8 + $0x180] sm:$0xff] %v1302
  %1464 = vst [vmem:[%s8 + $0x188] sm:$0xff] %v1305
  %1465 = vst [vmem:[%s8 + $0x190] sm:$0xff] %v1308
  %1466 = vst [vmem:[%s8 + $0x198] sm:$0xff] %v1311
  %1467 = vst [vmem:[%s8 + $0x1a0] sm:$0xff] %v1314
  %1468 = vst [vmem:[%s8 + $0x1a8] sm:$0xff] %v1317
  %1469 = vst [vmem:[%s8 + $0x1b0] sm:$0xff] %v1320
  %1470 = vst [vmem:[%s8 + $0x1b8] sm:$0xff] %v1323
  %1471 = vst [vmem:[%s8 + $0x1c0] sm:$0xff] %v1326
  %1472 = vst [vmem:[%s8 + $0x1c8] sm:$0xff] %v1329
  %1473 = vst [vmem:[%s8 + $0x1d0] sm:$0xff] %v1332
  %1474 = vst [vmem:[%s8 + $0x1d8] sm:$0xff] %v1335
  %1475 = vst [vmem:[%s8 + $0x1e0] sm:$0xff] %v1338
  %1476 = vst [vmem:[%s8 + $0x1e8] sm:$0xff] %v1341
  %1477 = vst [vmem:[%s8 + $0x1f0] sm:$0xff] %v1344
  %1478 = vst [vmem:[%s8 + $0x1f8] sm:$0xff] %v1347
  %1479 = vst [vmem:[%s8 + $0x200] sm:$0xff] %v1350
  %1480 = vst [vmem:[%s8 + $0x208] sm:$0xff] %v1353
  %1481 = vst [vmem:[%s8 + $0x210] sm:$0xff] %v1356
  %1482 = vst [vmem:[%s8 + $0x218] sm:$0xff] %v1359
  %1483 = vst [vmem:[%s8 + $0x220] sm:$0xff] %v1362
  %1484 = vst [vmem:[%s8 + $0x228] sm:$0xff] %v1365
  %1485 = vst [vmem:[%s8 + $0x230] sm:$0xff] %v1368
  %1486 = vst [vmem:[%s8 + $0x238] sm:$0xff] %v1371
  %1487 = vst [vmem:[%s8 + $0x240] sm:$0xff] %v1374
  %1488 = vst [vmem:[%s8 + $0x248] sm:$0xff] %v1377
  %1489 = vst [vmem:[%s8 + $0x250] sm:$0xff] %v1380
  %1490 = vst [vmem:[%s8 + $0x258] sm:$0xff] %v1383
  %1491 = vst [vmem:[%s8 + $0x260] sm:$0xff] %v1386
  %1492 = vst [vmem:[%s8 + $0x268] sm:$0xff] %v1389
  %1493 = vst [vmem:[%s8 + $0x270] sm:$0xff] %v1392
  %1494 = vst [vmem:[%s8 + $0x278] sm:$0xff] %v1395
  %1495 = vst [vmem:[%s8 + $0x280] sm:$0xff] %v1398
  %1496 = vst [vmem:[%s8 + $0x288] sm:$0xff] %v1401
  %1497 = vst [vmem:[%s8 + $0x290] sm:$0xff] %v1404
  %1498 = vst [vmem:[%s8 + $0x298] sm:$0xff] %v1407
  %1499 = vst [vmem:[%s8 + $0x2a0] sm:$0xff] %v1410
  %1500 = vst [vmem:[%s8 + $0x2a8] sm:$0xff] %v1413
  // Predicated region
  $region30: #{det_bench_train_forward.3} parent=0 // pred_check
    _
  $region31: #{det_bench_train_forward.3} parent=0 // pred_check_branch
    %1502 = sbr.rel (0) target = $region33
  $region32: #{det_bench_train_forward.3} parent=0 // pred_region
    _
  $region33: #{det_bench_train_forward.3} parent=0 // pred_fallthru
    _
  // Predicated region
  $region34: #{det_bench_train_forward.3} parent=0 // pred_check
    _
  $region35: #{det_bench_train_forward.3} parent=0 // pred_check_branch
    %1504 = sbr.rel (0) target = $region37
  $region36: #{det_bench_train_forward.3} parent=0 // pred_region
    _
  $region37: #{det_bench_train_forward.3} parent=0 // pred_fallthru
    _
  // Predicated region
  $region38: #{det_bench_train_forward.3} parent=0 // pred_check
    _
  $region39: #{det_bench_train_forward.3} parent=0 // pred_check_branch
    %1506 = sbr.rel (0) target = $region41
  $region40: #{det_bench_train_forward.3} parent=0 // pred_region
    _
  $region41: #{det_bench_train_forward.3} parent=0 // pred_fallthru
    _
  // Predicated region
  $region42: #{det_bench_train_forward.3} parent=0 // pred_check
    _
  $region43: #{det_bench_train_forward.3} parent=0 // pred_check_branch
    %1508 = sbr.rel (0) target = $region45
  $region44: #{det_bench_train_forward.3} parent=0 // pred_region
    _
  $region45: #{det_bench_train_forward.3} parent=0 // pred_fallthru
    _

// kernel: det_bench_train_forward.5
$region0: #{det_bench_train_forward.5}
  #allocation0 [shape = 'u32[]', space=smem, size = 0x4, offset = 0x4, fixed_abs, tag = 'smem constant byte address 0x4 - core index']
  #allocation1 [shape = 'u32[72,128]{1,0:T(1,128)}', space=vmem, size = 0x9000, scoped, tag = 'internal scratch']
  #allocation2 [shape = 'f32[1,1]{1,0:T(1,128)S(6)}', space=smem, size = 0x200, scoped, tag = 'scoped memory for det_bench_train_forward.5']
  %s0 = inlined_call_operand.vmem [shape: f32[688,128], index: 0, kind: input, shape index: {}]
  %s1 = inlined_call_operand.vmem [shape: s32[688,128], index: 1, kind: input, shape index: {}]
  %s2 = inlined_call_operand.vmem [shape: f32[688,128], index: 2, kind: input, shape index: {}]
  %s3 = inlined_call_operand.vmem [shape: f32[688,128], index: 3, kind: input, shape index: {}]
  %s4 = inlined_call_operand.<no memory space> [shape: f32[1,1], index: 4, kind: input, shape index: {}]
  %s5 = inlined_call_operand.hbm [shape: f32[1,1], index: 5, kind: output, shape index: {0}]
  %s6 = inlined_call_operand.hbm [shape: f32[1,1], index: 6, kind: output, shape index: {1}]
  %s7 = inlined_call_operand.hbm [shape: f32[1,1], index: 7, kind: output, shape index: {2}]
  %8 = xla_tuple %s5, %s6, %s7
  %s9 = sld [smem:[#allocation0]]
  $region46: #{det_bench_train_forward.5} parent=0
    _
  %s11 = ssub.s32 1, %s9
  %s12 = scalar_select 0, %s11, %s9
  %13 = sst [smem:[#allocation2]] %s4
  $region1: #{det_bench_train_forward.5} parent=0
    #allocation3 [shape = 'u8[512]{0}', space=smem, size = 0x200, scoped, tag = 'output window, operand 0, single buffered']
    #allocation4 [shape = 's32[1]{0}', space=sflag, size = 0x4, scoped, tag = 'scoped memory for det_bench_train_forward.5']
    #allocation5 [shape = 'u8[512]{0}', space=smem, size = 0x200, scoped, tag = 'output window, operand 1, single buffered']
    #allocation6 [shape = 's32[1]{0}', space=sflag, size = 0x4, scoped, tag = 'scoped memory for det_bench_train_forward.5']
    #allocation7 [shape = 'u8[512]{0}', space=smem, size = 0x200, scoped, tag = 'output window, operand 2, single buffered']
    %14 = vsyncpa [#allocation4], 0
    %15 = vsyncpa [#allocation6], 0
    // Predicated region
    $region2: #{det_bench_train_forward.5} parent=1 // pred_check
      _
    $region3: #{det_bench_train_forward.5} parent=1 // pred_check_branch
      %17 = sbr.rel (0) target = $region5
    $region4: #{det_bench_train_forward.5} parent=1 // pred_region
      _
    $region5: #{det_bench_train_forward.5} parent=1 // pred_fallthru
      _
    // Predicated region
    $region6: #{det_bench_train_forward.5} parent=1 // pred_check
      _
    $region7: #{det_bench_train_forward.5} parent=1 // pred_check_branch
      %19 = sbr.rel (0) target = $region9
    $region8: #{det_bench_train_forward.5} parent=1 // pred_region
      _
    $region9: #{det_bench_train_forward.5} parent=1 // pred_fallthru
      _
    // Predicated region
    $region10: #{det_bench_train_forward.5} parent=1 // pred_check
      _
    $region11: #{det_bench_train_forward.5} parent=1 // pred_check_branch
      %21 = sbr.rel (0) target = $region13
    $region12: #{det_bench_train_forward.5} parent=1 // pred_region
      _
    $region13: #{det_bench_train_forward.5} parent=1 // pred_fallthru
      _
    // Predicated region
    $region14: #{det_bench_train_forward.5} parent=1 // pred_check
      _
    $region15: #{det_bench_train_forward.5} parent=1 // pred_check_branch
      %23 = sbr.rel (0) target = $region17
    $region16: #{det_bench_train_forward.5} parent=1 // pred_region
      _
    $region17: #{det_bench_train_forward.5} parent=1 // pred_fallthru
      _
    // Predicated region
    $region18: #{det_bench_train_forward.5} parent=1 // pred_check
      _
    $region19: #{det_bench_train_forward.5} parent=1 // pred_check_branch
      %25 = sbr.rel (0) target = $region21
    $region20: #{det_bench_train_forward.5} parent=1 // pred_region
      _
    $region21: #{det_bench_train_forward.5} parent=1 // pred_fallthru
      _
    %v26 = vld [vmem:[%s0] sm:$0xff]
    %v27 = vld [vmem:[%s0 + $0x8] sm:$0xff]
    %v28 = vld [vmem:[%s0 + $0x10] sm:$0xff]
    %v29 = vld [vmem:[%s0 + $0x18] sm:$0xff]
    %v30 = vld [vmem:[%s0 + $0x20] sm:$0xff]
    %v31 = vld [vmem:[%s0 + $0x28] sm:$0xff]
    %v32 = vld [vmem:[%s0 + $0x30] sm:$0xff]
    %v33 = vld [vmem:[%s0 + $0x38] sm:$0xff]
    %v34 = vld [vmem:[%s0 + $0x40] sm:$0xff]
    %v35 = vld [vmem:[%s0 + $0x48] sm:$0xff]
    %v36 = vld [vmem:[%s0 + $0x50] sm:$0xff]
    %v37 = vld [vmem:[%s0 + $0x58] sm:$0xff]
    %v38 = vld [vmem:[%s0 + $0x60] sm:$0xff]
    %v39 = vld [vmem:[%s0 + $0x68] sm:$0xff]
    %v40 = vld [vmem:[%s0 + $0x70] sm:$0xff]
    %v41 = vld [vmem:[%s0 + $0x78] sm:$0xff]
    %v42 = vld [vmem:[%s0 + $0x80] sm:$0xff]
    %v43 = vld [vmem:[%s0 + $0x88] sm:$0xff]
    %v44 = vld [vmem:[%s0 + $0x90] sm:$0xff]
    %v45 = vld [vmem:[%s0 + $0x98] sm:$0xff]
    %v46 = vld [vmem:[%s0 + $0xa0] sm:$0xff]
    %v47 = vld [vmem:[%s0 + $0xa8] sm:$0xff]
    %v48 = vld [vmem:[%s0 + $0xb0] sm:$0xff]
    %v49 = vld [vmem:[%s0 + $0xb8] sm:$0xff]
    %v50 = vld [vmem:[%s0 + $0xc0] sm:$0xff]
    %v51 = vld [vmem:[%s0 + $0xc8] sm:$0xff]
    %v52 = vld [vmem:[%s0 + $0xd0] sm:$0xff]
    %v53 = vld [vmem:[%s0 + $0xd8] sm:$0xff]
    %v54 = vld [vmem:[%s0 + $0xe0] sm:$0xff]
    %v55 = vld [vmem:[%s0 + $0xe8] sm:$0xff]
    %v56 = vld [vmem:[%s0 + $0xf0] sm:$0xff]
    %v57 = vld [vmem:[%s0 + $0xf8] sm:$0xff]
    %v58 = vld [vmem:[%s0 + $0x100] sm:$0xff]
    %v59 = vld [vmem:[%s0 + $0x108] sm:$0xff]
    %v60 = vld [vmem:[%s0 + $0x110] sm:$0xff]
    %v61 = vld [vmem:[%s0 + $0x118] sm:$0xff]
    %v62 = vld [vmem:[%s0 + $0x120] sm:$0xff]
    %v63 = vld [vmem:[%s0 + $0x128] sm:$0xff]
    %v64 = vld [vmem:[%s0 + $0x130] sm:$0xff]
    %v65 = vld [vmem:[%s0 + $0x138] sm:$0xff]
    %v66 = vld [vmem:[%s0 + $0x140] sm:$0xff]
    %v67 = vld [vmem:[%s0 + $0x148] sm:$0xff]
    %v68 = vld [vmem:[%s0 + $0x150] sm:$0xff]
    %v69 = vld [vmem:[%s0 + $0x158] sm:$0xff]
    %v70 = vld [vmem:[%s0 + $0x160] sm:$0xff]
    %v71 = vld [vmem:[%s0 + $0x168] sm:$0xff]
    %v72 = vld [vmem:[%s0 + $0x170] sm:$0xff]
    %v73 = vld [vmem:[%s0 + $0x178] sm:$0xff]
    %v74 = vld [vmem:[%s0 + $0x180] sm:$0xff]
    %v75 = vld [vmem:[%s0 + $0x188] sm:$0xff]
    %v76 = vld [vmem:[%s0 + $0x190] sm:$0xff]
    %v77 = vld [vmem:[%s0 + $0x198] sm:$0xff]
    %v78 = vld [vmem:[%s0 + $0x1a0] sm:$0xff]
    %v79 = vld [vmem:[%s0 + $0x1a8] sm:$0xff]
    %v80 = vld [vmem:[%s0 + $0x1b0] sm:$0xff]
    %v81 = vld [vmem:[%s0 + $0x1b8] sm:$0xff]
    %v82 = vld [vmem:[%s0 + $0x1c0] sm:$0xff]
    %v83 = vld [vmem:[%s0 + $0x1c8] sm:$0xff]
    %v84 = vld [vmem:[%s0 + $0x1d0] sm:$0xff]
    %v85 = vld [vmem:[%s0 + $0x1d8] sm:$0xff]
    %v86 = vld [vmem:[%s0 + $0x1e0] sm:$0xff]
    %v87 = vld [vmem:[%s0 + $0x1e8] sm:$0xff]
    %v88 = vld [vmem:[%s0 + $0x1f0] sm:$0xff]
    %v89 = vld [vmem:[%s0 + $0x1f8] sm:$0xff]
    %v90 = vld [vmem:[%s0 + $0x200] sm:$0xff]
    %v91 = vld [vmem:[%s0 + $0x208] sm:$0xff]
    %v92 = vld [vmem:[%s0 + $0x210] sm:$0xff]
    %v93 = vld [vmem:[%s0 + $0x218] sm:$0xff]
    %v94 = vld [vmem:[%s0 + $0x220] sm:$0xff]
    %v95 = vld [vmem:[%s0 + $0x228] sm:$0xff]
    %v96 = vld [vmem:[%s0 + $0x230] sm:$0xff]
    %v97 = vld [vmem:[%s0 + $0x238] sm:$0xff]
    %v98 = vld [vmem:[%s0 + $0x240] sm:$0xff]
    %v99 = vld [vmem:[%s0 + $0x248] sm:$0xff]
    %v100 = vld [vmem:[%s0 + $0x250] sm:$0xff]
    %v101 = vld [vmem:[%s0 + $0x258] sm:$0xff]
    %v102 = vld [vmem:[%s0 + $0x260] sm:$0xff]
    %v103 = vld [vmem:[%s0 + $0x268] sm:$0xff]
    %v104 = vld [vmem:[%s0 + $0x270] sm:$0xff]
    %v105 = vld [vmem:[%s0 + $0x278] sm:$0xff]
    %v106 = vld [vmem:[%s0 + $0x280] sm:$0xff]
    %v107 = vld [vmem:[%s0 + $0x288] sm:$0xff]
    %v108 = vld [vmem:[%s0 + $0x290] sm:$0xff]
    %v109 = vld [vmem:[%s0 + $0x298] sm:$0xff]
    %v110 = vld [vmem:[%s0 + $0x2a0] sm:$0xff]
    %v111 = vld [vmem:[%s0 + $0x2a8] sm:$0xff]
    %v112 = vld [vmem:[%s1] sm:$0xff]
    %v113 = vld [vmem:[%s1 + $0x8] sm:$0xff]
    %v114 = vld [vmem:[%s1 + $0x10] sm:$0xff]
    %v115 = vld [vmem:[%s1 + $0x18] sm:$0xff]
    %v116 = vld [vmem:[%s1 + $0x20] sm:$0xff]
    %v117 = vld [vmem:[%s1 + $0x28] sm:$0xff]
    %v118 = vld [vmem:[%s1 + $0x30] sm:$0xff]
    %v119 = vld [vmem:[%s1 + $0x38] sm:$0xff]
    %v120 = vld [vmem:[%s1 + $0x40] sm:$0xff]
    %v121 = vld [vmem:[%s1 + $0x48] sm:$0xff]
    %v122 = vld [vmem:[%s1 + $0x50] sm:$0xff]
    %v123 = vld [vmem:[%s1 + $0x58] sm:$0xff]
    %v124 = vld [vmem:[%s1 + $0x60] sm:$0xff]
    %v125 = vld [vmem:[%s1 + $0x68] sm:$0xff]
    %v126 = vld [vmem:[%s1 + $0x70] sm:$0xff]
    %v127 = vld [vmem:[%s1 + $0x78] sm:$0xff]
    %v128 = vld [vmem:[%s1 + $0x80] sm:$0xff]
    %v129 = vld [vmem:[%s1 + $0x88] sm:$0xff]
    %v130 = vld [vmem:[%s1 + $0x90] sm:$0xff]
    %v131 = vld [vmem:[%s1 + $0x98] sm:$0xff]
    %v132 = vld [vmem:[%s1 + $0xa0] sm:$0xff]
    %v133 = vld [vmem:[%s1 + $0xa8] sm:$0xff]
    %v134 = vld [vmem:[%s1 + $0xb0] sm:$0xff]
    %v135 = vld [vmem:[%s1 + $0xb8] sm:$0xff]
    %v136 = vld [vmem:[%s1 + $0xc0] sm:$0xff]
    %v137 = vld [vmem:[%s1 + $0xc8] sm:$0xff]
    %v138 = vld [vmem:[%s1 + $0xd0] sm:$0xff]
    %v139 = vld [vmem:[%s1 + $0xd8] sm:$0xff]
    %v140 = vld [vmem:[%s1 + $0xe0] sm:$0xff]
    %v141 = vld [vmem:[%s1 + $0xe8] sm:$0xff]
    %v142 = vld [vmem:[%s1 + $0xf0] sm:$0xff]
    %v143 = vld [vmem:[%s1 + $0xf8] sm:$0xff]
    %v144 = vld [vmem:[%s1 + $0x100] sm:$0xff]
    %v145 = vld [vmem:[%s1 + $0x108] sm:$0xff]
    %v146 = vld [vmem:[%s1 + $0x110] sm:$0xff]
    %v147 = vld [vmem:[%s1 + $0x118] sm:$0xff]
    %v148 = vld [vmem:[%s1 + $0x120] sm:$0xff]
    %v149 = vld [vmem:[%s1 + $0x128] sm:$0xff]
    %v150 = vld [vmem:[%s1 + $0x130] sm:$0xff]
    %v151 = vld [vmem:[%s1 + $0x138] sm:$0xff]
    %v152 = vld [vmem:[%s1 + $0x140] sm:$0xff]
    %v153 = vld [vmem:[%s1 + $0x148] sm:$0xff]
    %v154 = vld [vmem:[%s1 + $0x150] sm:$0xff]
    %v155 = vld [vmem:[%s1 + $0x158] sm:$0xff]
    %v156 = vld [vmem:[%s1 + $0x160] sm:$0xff]
    %v157 = vld [vmem:[%s1 + $0x168] sm:$0xff]
    %v158 = vld [vmem:[%s1 + $0x170] sm:$0xff]
    %v159 = vld [vmem:[%s1 + $0x178] sm:$0xff]
    %v160 = vld [vmem:[%s1 + $0x180] sm:$0xff]
    %v161 = vld [vmem:[%s1 + $0x188] sm:$0xff]
    %v162 = vld [vmem:[%s1 + $0x190] sm:$0xff]
    %v163 = vld [vmem:[%s1 + $0x198] sm:$0xff]
    %v164 = vld [vmem:[%s1 + $0x1a0] sm:$0xff]
    %v165 = vld [vmem:[%s1 + $0x1a8] sm:$0xff]
    %v166 = vld [vmem:[%s1 + $0x1b0] sm:$0xff]
    %v167 = vld [vmem:[%s1 + $0x1b8] sm:$0xff]
    %v168 = vld [vmem:[%s1 + $0x1c0] sm:$0xff]
    %v169 = vld [vmem:[%s1 + $0x1c8] sm:$0xff]
    %v170 = vld [vmem:[%s1 + $0x1d0] sm:$0xff]
    %v171 = vld [vmem:[%s1 + $0x1d8] sm:$0xff]
    %v172 = vld [vmem:[%s1 + $0x1e0] sm:$0xff]
    %v173 = vld [vmem:[%s1 + $0x1e8] sm:$0xff]
    %v174 = vld [vmem:[%s1 + $0x1f0] sm:$0xff]
    %v175 = vld [vmem:[%s1 + $0x1f8] sm:$0xff]
    %v176 = vld [vmem:[%s1 + $0x200] sm:$0xff]
    %v177 = vld [vmem:[%s1 + $0x208] sm:$0xff]
    %v178 = vld [vmem:[%s1 + $0x210] sm:$0xff]
    %v179 = vld [vmem:[%s1 + $0x218] sm:$0xff]
    %v180 = vld [vmem:[%s1 + $0x220] sm:$0xff]
    %v181 = vld [vmem:[%s1 + $0x228] sm:$0xff]
    %v182 = vld [vmem:[%s1 + $0x230] sm:$0xff]
    %v183 = vld [vmem:[%s1 + $0x238] sm:$0xff]
    %v184 = vld [vmem:[%s1 + $0x240] sm:$0xff]
    %v185 = vld [vmem:[%s1 + $0x248] sm:$0xff]
    %v186 = vld [vmem:[%s1 + $0x250] sm:$0xff]
    %v187 = vld [vmem:[%s1 + $0x258] sm:$0xff]
    %v188 = vld [vmem:[%s1 + $0x260] sm:$0xff]
    %v189 = vld [vmem:[%s1 + $0x268] sm:$0xff]
    %v190 = vld [vmem:[%s1 + $0x270] sm:$0xff]
    %v191 = vld [vmem:[%s1 + $0x278] sm:$0xff]
    %v192 = vld [vmem:[%s1 + $0x280] sm:$0xff]
    %v193 = vld [vmem:[%s1 + $0x288] sm:$0xff]
    %v194 = vld [vmem:[%s1 + $0x290] sm:$0xff]
    %v195 = vld [vmem:[%s1 + $0x298] sm:$0xff]
    %v196 = vld [vmem:[%s1 + $0x2a0] sm:$0xff]
    %v197 = vld [vmem:[%s1 + $0x2a8] sm:$0xff]
    %s198 = sld [smem:[#allocation2]]
    %v199 = vlaneseq
    %v200 = vand.u32 %v199, 127
    %v201 = vand.u32 %v200, 7
    %vm202 = vcmp.ge.s32.totalorder %v112, 0
    %vm203 = vcmp.ge.s32.totalorder %v113, 0
    %vm204 = vcmp.ge.s32.totalorder %v114, 0
    %vm205 = vcmp.ge.s32.totalorder %v115, 0
    %vm206 = vcmp.ge.s32.totalorder %v116, 0
    %vm207 = vcmp.ge.s32.totalorder %v117, 0
    %vm208 = vcmp.ge.s32.totalorder %v118, 0
    %vm209 = vcmp.ge.s32.totalorder %v119, 0
    %vm210 = vcmp.ge.s32.totalorder %v120, 0
    %vm211 = vcmp.ge.s32.totalorder %v121, 0
    %vm212 = vcmp.ge.s32.totalorder %v122, 0
    %vm213 = vcmp.ge.s32.totalorder %v123, 0
    %vm214 = vcmp.ge.s32.totalorder %v124, 0
    %vm215 = vcmp.ge.s32.totalorder %v125, 0
    %vm216 = vcmp.ge.s32.totalorder %v126, 0
    %vm217 = vcmp.ge.s32.totalorder %v127, 0
    %vm218 = vcmp.ge.s32.totalorder %v128, 0
    %vm219 = vcmp.ge.s32.totalorder %v129, 0
    %vm220 = vcmp.ge.s32.totalorder %v130, 0
    %vm221 = vcmp.ge.s32.totalorder %v131, 0
    %vm222 = vcmp.ge.s32.totalorder %v132, 0
    %vm223 = vcmp.ge.s32.totalorder %v133, 0
    %vm224 = vcmp.ge.s32.totalorder %v134, 0
    %vm225 = vcmp.ge.s32.totalorder %v135, 0
    %vm226 = vcmp.ge.s32.totalorder %v136, 0
    %vm227 = vcmp.ge.s32.totalorder %v137, 0
    %vm228 = vcmp.ge.s32.totalorder %v138, 0
    %vm229 = vcmp.ge.s32.totalorder %v139, 0
    %vm230 = vcmp.ge.s32.totalorder %v140, 0
    %vm231 = vcmp.ge.s32.totalorder %v141, 0
    %vm232 = vcmp.ge.s32.totalorder %v142, 0
    %vm233 = vcmp.ge.s32.totalorder %v143, 0
    %vm234 = vcmp.ge.s32.totalorder %v144, 0
    %vm235 = vcmp.ge.s32.totalorder %v145, 0
    %vm236 = vcmp.ge.s32.totalorder %v146, 0
    %vm237 = vcmp.ge.s32.totalorder %v147, 0
    %vm238 = vcmp.ge.s32.totalorder %v148, 0
    %vm239 = vcmp.ge.s32.totalorder %v149, 0
    %vm240 = vcmp.ge.s32.totalorder %v150, 0
    %vm241 = vcmp.ge.s32.totalorder %v151, 0
    %vm242 = vcmp.ge.s32.totalorder %v152, 0
    %vm243 = vcmp.ge.s32.totalorder %v153, 0
    %vm244 = vcmp.ge.s32.totalorder %v154, 0
    %vm245 = vcmp.ge.s32.totalorder %v155, 0
    %vm246 = vcmp.ge.s32.totalorder %v156, 0
    %vm247 = vcmp.ge.s32.totalorder %v157, 0
    %vm248 = vcmp.ge.s32.totalorder %v158, 0
    %vm249 = vcmp.ge.s32.totalorder %v159, 0
    %vm250 = vcmp.ge.s32.totalorder %v160, 0
    %vm251 = vcmp.ge.s32.totalorder %v161, 0
    %vm252 = vcmp.ge.s32.totalorder %v162, 0
    %vm253 = vcmp.ge.s32.totalorder %v163, 0
    %vm254 = vcmp.ge.s32.totalorder %v164, 0
    %vm255 = vcmp.ge.s32.totalorder %v165, 0
    %vm256 = vcmp.ge.s32.totalorder %v166, 0
    %vm257 = vcmp.ge.s32.totalorder %v167, 0
    %vm258 = vcmp.ge.s32.totalorder %v168, 0
    %vm259 = vcmp.ge.s32.totalorder %v169, 0
    %vm260 = vcmp.ge.s32.totalorder %v170, 0
    %vm261 = vcmp.ge.s32.totalorder %v171, 0
    %vm262 = vcmp.ge.s32.totalorder %v172, 0
    %vm263 = vcmp.ge.s32.totalorder %v173, 0
    %vm264 = vcmp.ge.s32.totalorder %v174, 0
    %vm265 = vcmp.ge.s32.totalorder %v175, 0
    %vm266 = vcmp.ge.s32.totalorder %v176, 0
    %vm267 = vcmp.ge.s32.totalorder %v177, 0
    %vm268 = vcmp.ge.s32.totalorder %v178, 0
    %vm269 = vcmp.ge.s32.totalorder %v179, 0
    %vm270 = vcmp.ge.s32.totalorder %v180, 0
    %vm271 = vcmp.ge.s32.totalorder %v181, 0
    %vm272 = vcmp.ge.s32.totalorder %v182, 0
    %vm273 = vcmp.ge.s32.totalorder %v183, 0
    %vm274 = vcmp.ge.s32.totalorder %v184, 0
    %vm275 = vcmp.ge.s32.totalorder %v185, 0
    %vm276 = vcmp.ge.s32.totalorder %v186, 0
    %vm277 = vcmp.ge.s32.totalorder %v187, 0
    %vm278 = vcmp.ge.s32.totalorder %v188, 0
    %vm279 = vcmp.ge.s32.totalorder %v189, 0
    %vm280 = vcmp.ge.s32.totalorder %v190, 0
    %vm281 = vcmp.ge.s32.totalorder %v191, 0
    %vm282 = vcmp.ge.s32.totalorder %v192, 0
    %vm283 = vcmp.ge.s32.totalorder %v193, 0
    %vm284 = vcmp.ge.s32.totalorder %v194, 0
    %vm285 = vcmp.ge.s32.totalorder %v195, 0
    %vm286 = vcmp.ge.s32.totalorder %v196, 0
    %vm287 = vcmp.ge.s32.totalorder %v197, 0
    %vm288 = vcmp.eq.s32.totalorder %v201, %v112
    %vm289 = vcmp.eq.s32.totalorder %v201, %v113
    %vm290 = vcmp.eq.s32.totalorder %v201, %v114
    %vm291 = vcmp.eq.s32.totalorder %v201, %v115
    %vm292 = vcmp.eq.s32.totalorder %v201, %v116
    %vm293 = vcmp.eq.s32.totalorder %v201, %v117
    %vm294 = vcmp.eq.s32.totalorder %v201, %v118
    %vm295 = vcmp.eq.s32.totalorder %v201, %v119
    %vm296 = vcmp.eq.s32.totalorder %v201, %v120
    %vm297 = vcmp.eq.s32.totalorder %v201, %v121
    %vm298 = vcmp.eq.s32.totalorder %v201, %v122
    %vm299 = vcmp.eq.s32.totalorder %v201, %v123
    %vm300 = vcmp.eq.s32.totalorder %v201, %v124
    %vm301 = vcmp.eq.s32.totalorder %v201, %v125
    %vm302 = vcmp.eq.s32.totalorder %v201, %v126
    %vm303 = vcmp.eq.s32.totalorder %v201, %v127
    %vm304 = vcmp.eq.s32.totalorder %v201, %v128
    %vm305 = vcmp.eq.s32.totalorder %v201, %v129
    %vm306 = vcmp.eq.s32.totalorder %v201, %v130
    %vm307 = vcmp.eq.s32.totalorder %v201, %v131
    %vm308 = vcmp.eq.s32.totalorder %v201, %v132
    %vm309 = vcmp.eq.s32.totalorder %v201, %v133
    %vm310 = vcmp.eq.s32.totalorder %v201, %v134
    %vm311 = vcmp.eq.s32.totalorder %v201, %v135
    %vm312 = vcmp.eq.s32.totalorder %v201, %v136
    %vm313 = vcmp.eq.s32.totalorder %v201, %v137
    %vm314 = vcmp.eq.s32.totalorder %v201, %v138
    %vm315 = vcmp.eq.s32.totalorder %v201, %v139
    %vm316 = vcmp.eq.s32.totalorder %v201, %v140
    %vm317 = vcmp.eq.s32.totalorder %v201, %v141
    %vm318 = vcmp.eq.s32.totalorder %v201, %v142
    %vm319 = vcmp.eq.s32.totalorder %v201, %v143
    %vm320 = vcmp.eq.s32.totalorder %v201, %v144
    %vm321 = vcmp.eq.s32.totalorder %v201, %v145
    %vm322 = vcmp.eq.s32.totalorder %v201, %v146
    %vm323 = vcmp.eq.s32.totalorder %v201, %v147
    %vm324 = vcmp.eq.s32.totalorder %v201, %v148
    %vm325 = vcmp.eq.s32.totalorder %v201, %v149
    %vm326 = vcmp.eq.s32.totalorder %v201, %v150
    %vm327 = vcmp.eq.s32.totalorder %v201, %v151
    %vm328 = vcmp.eq.s32.totalorder %v201, %v152
    %vm329 = vcmp.eq.s32.totalorder %v201, %v153
    %vm330 = vcmp.eq.s32.totalorder %v201, %v154
    %vm331 = vcmp.eq.s32.totalorder %v201, %v155
    %vm332 = vcmp.eq.s32.totalorder %v201, %v156
    %vm333 = vcmp.eq.s32.totalorder %v201, %v157
    %vm334 = vcmp.eq.s32.totalorder %v201, %v158
    %vm335 = vcmp.eq.s32.totalorder %v201, %v159
    %vm336 = vcmp.eq.s32.totalorder %v201, %v160
    %vm337 = vcmp.eq.s32.totalorder %v201, %v161
    %vm338 = vcmp.eq.s32.totalorder %v201, %v162
    %vm339 = vcmp.eq.s32.totalorder %v201, %v163
    %vm340 = vcmp.eq.s32.totalorder %v201, %v164
    %vm341 = vcmp.eq.s32.totalorder %v201, %v165
    %vm342 = vcmp.eq.s32.totalorder %v201, %v166
    %vm343 = vcmp.eq.s32.totalorder %v201, %v167
    %vm344 = vcmp.eq.s32.totalorder %v201, %v168
    %vm345 = vcmp.eq.s32.totalorder %v201, %v169
    %vm346 = vcmp.eq.s32.totalorder %v201, %v170
    %vm347 = vcmp.eq.s32.totalorder %v201, %v171
    %vm348 = vcmp.eq.s32.totalorder %v201, %v172
    %vm349 = vcmp.eq.s32.totalorder %v201, %v173
    %vm350 = vcmp.eq.s32.totalorder %v201, %v174
    %vm351 = vcmp.eq.s32.totalorder %v201, %v175
    %vm352 = vcmp.eq.s32.totalorder %v201, %v176
    %vm353 = vcmp.eq.s32.totalorder %v201, %v177
    %vm354 = vcmp.eq.s32.totalorder %v201, %v178
    %vm355 = vcmp.eq.s32.totalorder %v201, %v179
    %vm356 = vcmp.eq.s32.totalorder %v201, %v180
    %vm357 = vcmp.eq.s32.totalorder %v201, %v181
    %vm358 = vcmp.eq.s32.totalorder %v201, %v182
    %vm359 = vcmp.eq.s32.totalorder %v201, %v183
    %vm360 = vcmp.eq.s32.totalorder %v201, %v184
    %vm361 = vcmp.eq.s32.totalorder %v201, %v185
    %vm362 = vcmp.eq.s32.totalorder %v201, %v186
    %vm363 = vcmp.eq.s32.totalorder %v201, %v187
    %vm364 = vcmp.eq.s32.totalorder %v201, %v188
    %vm365 = vcmp.eq.s32.totalorder %v201, %v189
    %vm366 = vcmp.eq.s32.totalorder %v201, %v190
    %vm367 = vcmp.eq.s32.totalorder %v201, %v191
    %vm368 = vcmp.eq.s32.totalorder %v201, %v192
    %vm369 = vcmp.eq.s32.totalorder %v201, %v193
    %vm370 = vcmp.eq.s32.totalorder %v201, %v194
    %vm371 = vcmp.eq.s32.totalorder %v201, %v195
    %vm372 = vcmp.eq.s32.totalorder %v201, %v196
    %vm373 = vcmp.eq.s32.totalorder %v201, %v197
    %vm374 = vmand %vm288, %vm202
    %vm375 = vmand %vm289, %vm203
    %vm376 = vmand %vm290, %vm204
    %vm377 = vmand %vm291, %vm205
    %vm378 = vmand %vm292, %vm206
    %vm379 = vmand %vm293, %vm207
    %vm380 = vmand %vm294, %vm208
    %vm381 = vmand %vm295, %vm209
    %vm382 = vmand %vm296, %vm210
    %vm383 = vmand %vm297, %vm211
    %vm384 = vmand %vm298, %vm212
    %vm385 = vmand %vm299, %vm213
    %vm386 = vmand %vm300, %vm214
    %vm387 = vmand %vm301, %vm215
    %vm388 = vmand %vm302, %vm216
    %vm389 = vmand %vm303, %vm217
    %vm390 = vmand %vm304, %vm218
    %vm391 = vmand %vm305, %vm219
    %vm392 = vmand %vm306, %vm220
    %vm393 = vmand %vm307, %vm221
    %vm394 = vmand %vm308, %vm222
    %vm395 = vmand %vm309, %vm223
    %vm396 = vmand %vm310, %vm224
    %vm397 = vmand %vm311, %vm225
    %vm398 = vmand %vm312, %vm226
    %vm399 = vmand %vm313, %vm227
    %vm400 = vmand %vm314, %vm228
    %vm401 = vmand %vm315, %vm229
    %vm402 = vmand %vm316, %vm230
    %vm403 = vmand %vm317, %vm231
    %vm404 = vmand %vm318, %vm232
    %vm405 = vmand %vm319, %vm233
    %vm406 = vmand %vm320, %vm234
    %vm407 = vmand %vm321, %vm235
    %vm408 = vmand %vm322, %vm236
    %vm409 = vmand %vm323, %vm237
    %vm410 = vmand %vm324, %vm238
    %vm411 = vmand %vm325, %vm239
    %vm412 = vmand %vm326, %vm240
    %vm413 = vmand %vm327, %vm241
    %vm414 = vmand %vm328, %vm242
    %vm415 = vmand %vm329, %vm243
    %vm416 = vmand %vm330, %vm244
    %vm417 = vmand %vm331, %vm245
    %vm418 = vmand %vm332, %vm246
    %vm419 = vmand %vm333, %vm247
    %vm420 = vmand %vm334, %vm248
    %vm421 = vmand %vm335, %vm249
    %vm422 = vmand %vm336, %vm250
    %vm423 = vmand %vm337, %vm251
    %vm424 = vmand %vm338, %vm252
    %vm425 = vmand %vm339, %vm253
    %vm426 = vmand %vm340, %vm254
    %vm427 = vmand %vm341, %vm255
    %vm428 = vmand %vm342, %vm256
    %vm429 = vmand %vm343, %vm257
    %vm430 = vmand %vm344, %vm258
    %vm431 = vmand %vm345, %vm259
    %vm432 = vmand %vm346, %vm260
    %vm433 = vmand %vm347, %vm261
    %vm434 = vmand %vm348, %vm262
    %vm435 = vmand %vm349, %vm263
    %vm436 = vmand %vm350, %vm264
    %vm437 = vmand %vm351, %vm265
    %vm438 = vmand %vm352, %vm266
    %vm439 = vmand %vm353, %vm267
    %vm440 = vmand %vm354, %vm268
    %vm441 = vmand %vm355, %vm269
    %vm442 = vmand %vm356, %vm270
    %vm443 = vmand %vm357, %vm271
    %vm444 = vmand %vm358, %vm272
    %vm445 = vmand %vm359, %vm273
    %vm446 = vmand %vm360, %vm274
    %vm447 = vmand %vm361, %vm275
    %vm448 = vmand %vm362, %vm276
    %vm449 = vmand %vm363, %vm277
    %vm450 = vmand %vm364, %vm278
    %vm451 = vmand %vm365, %vm279
    %vm452 = vmand %vm366, %vm280
    %vm453 = vmand %vm367, %vm281
    %vm454 = vmand %vm368, %vm282
    %vm455 = vmand %vm369, %vm283
    %vm456 = vmand %vm370, %vm284
    %vm457 = vmand %vm371, %vm285
    %vm458 = vmand %vm372, %vm286
    %vm459 = vmand %vm373, %vm287
    %v460 = vsel %vm374, 1, 0
    %v461 = vsel %vm375, 1, 0
    %v462 = vsel %vm376, 1, 0
    %v463 = vsel %vm377, 1, 0
    %v464 = vsel %vm378, 1, 0
    %v465 = vsel %vm379, 1, 0
    %v466 = vsel %vm380, 1, 0
    %v467 = vsel %vm381, 1, 0
    %v468 = vsel %vm382, 1, 0
    %v469 = vsel %vm383, 1, 0
    %v470 = vsel %vm384, 1, 0
    %v471 = vsel %vm385, 1, 0
    %v472 = vsel %vm386, 1, 0
    %v473 = vsel %vm387, 1, 0
    %v474 = vsel %vm388, 1, 0
    %v475 = vsel %vm389, 1, 0
    %v476 = vsel %vm390, 1, 0
    %v477 = vsel %vm391, 1, 0
    %v478 = vsel %vm392, 1, 0
    %v479 = vsel %vm393, 1, 0
    %v480 = vsel %vm394, 1, 0
    %v481 = vsel %vm395, 1, 0
    %v482 = vsel %vm396, 1, 0
    %v483 = vsel %vm397, 1, 0
    %v484 = vsel %vm398, 1, 0
    %v485 = vsel %vm399, 1, 0
    %v486 = vsel %vm400, 1, 0
    %v487 = vsel %vm401, 1, 0
    %v488 = vsel %vm402, 1, 0
    %v489 = vsel %vm403, 1, 0
    %v490 = vsel %vm404, 1, 0
    %v491 = vsel %vm405, 1, 0
    %v492 = vsel %vm406, 1, 0
    %v493 = vsel %vm407, 1, 0
    %v494 = vsel %vm408, 1, 0
    %v495 = vsel %vm409, 1, 0
    %v496 = vsel %vm410, 1, 0
    %v497 = vsel %vm411, 1, 0
    %v498 = vsel %vm412, 1, 0
    %v499 = vsel %vm413, 1, 0
    %v500 = vsel %vm414, 1, 0
    %v501 = vsel %vm415, 1, 0
    %v502 = vsel %vm416, 1, 0
    %v503 = vsel %vm417, 1, 0
    %v504 = vsel %vm418, 1, 0
    %v505 = vsel %vm419, 1, 0
    %v506 = vsel %vm420, 1, 0
    %v507 = vsel %vm421, 1, 0
    %v508 = vsel %vm422, 1, 0
    %v509 = vsel %vm423, 1, 0
    %v510 = vsel %vm424, 1, 0
    %v511 = vsel %vm425, 1, 0
    %v512 = vsel %vm426, 1, 0
    %v513 = vsel %vm427, 1, 0
    %v514 = vsel %vm428, 1, 0
    %v515 = vsel %vm429, 1, 0
    %v516 = vsel %vm430, 1, 0
    %v517 = vsel %vm431, 1, 0
    %v518 = vsel %vm432, 1, 0
    %v519 = vsel %vm433, 1, 0
    %v520 = vsel %vm434, 1, 0
    %v521 = vsel %vm435, 1, 0
    %v522 = vsel %vm436, 1, 0
    %v523 = vsel %vm437, 1, 0
    %v524 = vsel %vm438, 1, 0
    %v525 = vsel %vm439, 1, 0
    %v526 = vsel %vm440, 1, 0
    %v527 = vsel %vm441, 1, 0
    %v528 = vsel %vm442, 1, 0
    %v529 = vsel %vm443, 1, 0
    %v530 = vsel %vm444, 1, 0
    %v531 = vsel %vm445, 1, 0
    %v532 = vsel %vm446, 1, 0
    %v533 = vsel %vm447, 1, 0
    %v534 = vsel %vm448, 1, 0
    %v535 = vsel %vm449, 1, 0
    %v536 = vsel %vm450, 1, 0
    %v537 = vsel %vm451, 1, 0
    %v538 = vsel %vm452, 1, 0
    %v539 = vsel %vm453, 1, 0
    %v540 = vsel %vm454, 1, 0
    %v541 = vsel %vm455, 1, 0
    %v542 = vsel %vm456, 1, 0
    %v543 = vsel %vm457, 1, 0
    %v544 = vsel %vm458, 1, 0
    %v545 = vsel %vm459, 1, 0
    %v546 = vcvt.s32.f32 %v460
    %v547 = vcvt.s32.f32 %v461
    %v548 = vcvt.s32.f32 %v462
    %v549 = vcvt.s32.f32 %v463
    %v550 = vcvt.s32.f32 %v464
    %v551 = vcvt.s32.f32 %v465
    %v552 = vcvt.s32.f32 %v466
    %v553 = vcvt.s32.f32 %v467
    %v554 = vcvt.s32.f32 %v468
    %v555 = vcvt.s32.f32 %v469
    %v556 = vcvt.s32.f32 %v470
    %v557 = vcvt.s32.f32 %v471
    %v558 = vcvt.s32.f32 %v472
    %v559 = vcvt.s32.f32 %v473
    %v560 = vcvt.s32.f32 %v474
    %v561 = vcvt.s32.f32 %v475
    %v562 = vcvt.s32.f32 %v476
    %v563 = vcvt.s32.f32 %v477
    %v564 = vcvt.s32.f32 %v478
    %v565 = vcvt.s32.f32 %v479
    %v566 = vcvt.s32.f32 %v480
    %v567 = vcvt.s32.f32 %v481
    %v568 = vcvt.s32.f32 %v482
    %v569 = vcvt.s32.f32 %v483
    %v570 = vcvt.s32.f32 %v484
    %v571 = vcvt.s32.f32 %v485
    %v572 = vcvt.s32.f32 %v486
    %v573 = vcvt.s32.f32 %v487
    %v574 = vcvt.s32.f32 %v488
    %v575 = vcvt.s32.f32 %v489
    %v576 = vcvt.s32.f32 %v490
    %v577 = vcvt.s32.f32 %v491
    %v578 = vcvt.s32.f32 %v492
    %v579 = vcvt.s32.f32 %v493
    %v580 = vcvt.s32.f32 %v494
    %v581 = vcvt.s32.f32 %v495
    %v582 = vcvt.s32.f32 %v496
    %v583 = vcvt.s32.f32 %v497
    %v584 = vcvt.s32.f32 %v498
    %v585 = vcvt.s32.f32 %v499
    %v586 = vcvt.s32.f32 %v500
    %v587 = vcvt.s32.f32 %v501
    %v588 = vcvt.s32.f32 %v502
    %v589 = vcvt.s32.f32 %v503
    %v590 = vcvt.s32.f32 %v504
    %v591 = vcvt.s32.f32 %v505
    %v592 = vcvt.s32.f32 %v506
    %v593 = vcvt.s32.f32 %v507
    %v594 = vcvt.s32.f32 %v508
    %v595 = vcvt.s32.f32 %v509
    %v596 = vcvt.s32.f32 %v510
    %v597 = vcvt.s32.f32 %v511
    %v598 = vcvt.s32.f32 %v512
    %v599 = vcvt.s32.f32 %v513
    %v600 = vcvt.s32.f32 %v514
    %v601 = vcvt.s32.f32 %v515
    %v602 = vcvt.s32.f32 %v516
    %v603 = vcvt.s32.f32 %v517
    %v604 = vcvt.s32.f32 %v518
    %v605 = vcvt.s32.f32 %v519
    %v606 = vcvt.s32.f32 %v520
    %v607 = vcvt.s32.f32 %v521
    %v608 = vcvt.s32.f32 %v522
    %v609 = vcvt.s32.f32 %v523
    %v610 = vcvt.s32.f32 %v524
    %v611 = vcvt.s32.f32 %v525
    %v612 = vcvt.s32.f32 %v526
    %v613 = vcvt.s32.f32 %v527
    %v614 = vcvt.s32.f32 %v528
    %v615 = vcvt.s32.f32 %v529
    %v616 = vcvt.s32.f32 %v530
    %v617 = vcvt.s32.f32 %v531
    %v618 = vcvt.s32.f32 %v532
    %v619 = vcvt.s32.f32 %v533
    %v620 = vcvt.s32.f32 %v534
    %v621 = vcvt.s32.f32 %v535
    %v622 = vcvt.s32.f32 %v536
    %v623 = vcvt.s32.f32 %v537
    %v624 = vcvt.s32.f32 %v538
    %v625 = vcvt.s32.f32 %v539
    %v626 = vcvt.s32.f32 %v540
    %v627 = vcvt.s32.f32 %v541
    %v628 = vcvt.s32.f32 %v542
    %v629 = vcvt.s32.f32 %v543
    %v630 = vcvt.s32.f32 %v544
    %v631 = vcvt.s32.f32 %v545
    %v632 = vand.u32 2147483647, %v26
    %v633 = vand.u32 2147483647, %v27
    %v634 = vand.u32 2147483647, %v28
    %v635 = vand.u32 2147483647, %v29
    %v636 = vand.u32 2147483647, %v30
    %v637 = vand.u32 2147483647, %v31
    %v638 = vand.u32 2147483647, %v32
    %v639 = vand.u32 2147483647, %v33
    %v640 = vand.u32 2147483647, %v34
    %v641 = vand.u32 2147483647, %v35
    %v642 = vand.u32 2147483647, %v36
    %v643 = vand.u32 2147483647, %v37
    %v644 = vand.u32 2147483647, %v38
    %v645 = vand.u32 2147483647, %v39
    %v646 = vand.u32 2147483647, %v40
    %v647 = vand.u32 2147483647, %v41
    %v648 = vand.u32 2147483647, %v42
    %v649 = vand.u32 2147483647, %v43
    %v650 = vand.u32 2147483647, %v44
    %v651 = vand.u32 2147483647, %v45
    %v652 = vand.u32 2147483647, %v46
    %v653 = vand.u32 2147483647, %v47
    %v654 = vand.u32 2147483647, %v48
    %v655 = vand.u32 2147483647, %v49
    %v656 = vand.u32 2147483647, %v50
    %v657 = vand.u32 2147483647, %v51
    %v658 = vand.u32 2147483647, %v52
    %v659 = vand.u32 2147483647, %v53
    %v660 = vand.u32 2147483647, %v54
    %v661 = vand.u32 2147483647, %v55
    %v662 = vand.u32 2147483647, %v56
    %v663 = vand.u32 2147483647, %v57
    %v664 = vand.u32 2147483647, %v58
    %v665 = vand.u32 2147483647, %v59
    %v666 = vand.u32 2147483647, %v60
    %v667 = vand.u32 2147483647, %v61
    %v668 = vand.u32 2147483647, %v62
    %v669 = vand.u32 2147483647, %v63
    %v670 = vand.u32 2147483647, %v64
    %v671 = vand.u32 2147483647, %v65
    %v672 = vand.u32 2147483647, %v66
    %v673 = vand.u32 2147483647, %v67
    %v674 = vand.u32 2147483647, %v68
    %v675 = vand.u32 2147483647, %v69
    %v676 = vand.u32 2147483647, %v70
    %v677 = vand.u32 2147483647, %v71
    %v678 = vand.u32 2147483647, %v72
    %v679 = vand.u32 2147483647, %v73
    %v680 = vand.u32 2147483647, %v74
    %v681 = vand.u32 2147483647, %v75
    %v682 = vand.u32 2147483647, %v76
    %v683 = vand.u32 2147483647, %v77
    %v684 = vand.u32 2147483647, %v78
    %v685 = vand.u32 2147483647, %v79
    %v686 = vand.u32 2147483647, %v80
    %v687 = vand.u32 2147483647, %v81
    %v688 = vand.u32 2147483647, %v82
    %v689 = vand.u32 2147483647, %v83
    %v690 = vand.u32 2147483647, %v84
    %v691 = vand.u32 2147483647, %v85
    %v692 = vand.u32 2147483647, %v86
    %v693 = vand.u32 2147483647, %v87
    %v694 = vand.u32 2147483647, %v88
    %v695 = vand.u32 2147483647, %v89
    %v696 = vand.u32 2147483647, %v90
    %v697 = vand.u32 2147483647, %v91
    %v698 = vand.u32 2147483647, %v92
    %v699 = vand.u32 2147483647, %v93
    %v700 = vand.u32 2147483647, %v94
    %v701 = vand.u32 2147483647, %v95
    %v702 = vand.u32 2147483647, %v96
    %v703 = vand.u32 2147483647, %v97
    %v704 = vand.u32 2147483647, %v98
    %v705 = vand.u32 2147483647, %v99
    %v706 = vand.u32 2147483647, %v100
    %v707 = vand.u32 2147483647, %v101
    %v708 = vand.u32 2147483647, %v102
    %v709 = vand.u32 2147483647, %v103
    %v710 = vand.u32 2147483647, %v104
    %v711 = vand.u32 2147483647, %v105
    %v712 = vand.u32 2147483647, %v106
    %v713 = vand.u32 2147483647, %v107
    %v714 = vand.u32 2147483647, %v108
    %v715 = vand.u32 2147483647, %v109
    %v716 = vand.u32 2147483647, %v110
    %v717 = vand.u32 2147483647, %v111
    %v718 = vsub.f32 0.0, %v632
    %v719 = vsub.f32 0.0, %v633
    %v720 = vsub.f32 0.0, %v634
    %v721 = vsub.f32 0.0, %v635
    %v722 = vsub.f32 0.0, %v636
    %v723 = vsub.f32 0.0, %v637
    %v724 = vsub.f32 0.0, %v638
    %v725 = vsub.f32 0.0, %v639
    %v726 = vsub.f32 0.0, %v640
    %v727 = vsub.f32 0.0, %v641
    %v728 = vsub.f32 0.0, %v642
    %v729 = vsub.f32 0.0, %v643
    %v730 = vsub.f32 0.0, %v644
    %v731 = vsub.f32 0.0, %v645
    %v732 = vsub.f32 0.0, %v646
    %v733 = vsub.f32 0.0, %v647
    %v734 = vsub.f32 0.0, %v648
    %v735 = vsub.f32 0.0, %v649
    %v736 = vsub.f32 0.0, %v650
    %v737 = vsub.f32 0.0, %v651
    %v738 = vsub.f32 0.0, %v652
    %v739 = vsub.f32 0.0, %v653
    %v740 = vsub.f32 0.0, %v654
    %v741 = vsub.f32 0.0, %v655
    %v742 = vsub.f32 0.0, %v656
    %v743 = vsub.f32 0.0, %v657
    %v744 = vsub.f32 0.0, %v658
    %v745 = vsub.f32 0.0, %v659
    %v746 = vsub.f32 0.0, %v660
    %v747 = vsub.f32 0.0, %v661
    %v748 = vsub.f32 0.0, %v662
    %v749 = vsub.f32 0.0, %v663
    %v750 = vsub.f32 0.0, %v664
    %v751 = vsub.f32 0.0, %v665
    %v752 = vsub.f32 0.0, %v666
    %v753 = vsub.f32 0.0, %v667
    %v754 = vsub.f32 0.0, %v668
    %v755 = vsub.f32 0.0, %v669
    %v756 = vsub.f32 0.0, %v670
    %v757 = vsub.f32 0.0, %v671
    %v758 = vsub.f32 0.0, %v672
    %v759 = vsub.f32 0.0, %v673
    %v760 = vsub.f32 0.0, %v674
    %v761 = vsub.f32 0.0, %v675
    %v762 = vsub.f32 0.0, %v676
    %v763 = vsub.f32 0.0, %v677
    %v764 = vsub.f32 0.0, %v678
    %v765 = vsub.f32 0.0, %v679
    %v766 = vsub.f32 0.0, %v680
    %v767 = vsub.f32 0.0, %v681
    %v768 = vsub.f32 0.0, %v682
    %v769 = vsub.f32 0.0, %v683
    %v770 = vsub.f32 0.0, %v684
    %v771 = vsub.f32 0.0, %v685
    %v772 = vsub.f32 0.0, %v686
    %v773 = vsub.f32 0.0, %v687
    %v774 = vsub.f32 0.0, %v688
    %v775 = vsub.f32 0.0, %v689
    %v776 = vsub.f32 0.0, %v690
    %v777 = vsub.f32 0.0, %v691
    %v778 = vsub.f32 0.0, %v692
    %v779 = vsub.f32 0.0, %v693
    %v780 = vsub.f32 0.0, %v694
    %v781 = vsub.f32 0.0, %v695
    %v782 = vsub.f32 0.0, %v696
    %v783 = vsub.f32 0.0, %v697
    %v784 = vsub.f32 0.0, %v698
    %v785 = vsub.f32 0.0, %v699
    %v786 = vsub.f32 0.0, %v700
    %v787 = vsub.f32 0.0, %v701
    %v788 = vsub.f32 0.0, %v702
    %v789 = vsub.f32 0.0, %v703
    %v790 = vsub.f32 0.0, %v704
    %v791 = vsub.f32 0.0, %v705
    %v792 = vsub.f32 0.0, %v706
    %v793 = vsub.f32 0.0, %v707
    %v794 = vsub.f32 0.0, %v708
    %v795 = vsub.f32 0.0, %v709
    %v796 = vsub.f32 0.0, %v710
    %v797 = vsub.f32 0.0, %v711
    %v798 = vsub.f32 0.0, %v712
    %v799 = vsub.f32 0.0, %v713
    %v800 = vsub.f32 0.0, %v714
    %v801 = vsub.f32 0.0, %v715
    %v802 = vsub.f32 0.0, %v716
    %v803 = vsub.f32 0.0, %v717
    %v804 = vmul.f32 %v718, 1.442695
    %v805 = vpow.pop %v804
    %v806 = vmul.f32 %v719, 1.442695
    %v807 = vpow.pop %v806
    %v808 = vmul.f32 %v720, 1.442695
    %v809 = vpow.pop %v808
    %v810 = vmul.f32 %v721, 1.442695
    %v811 = vpow.pop %v810
    %v812 = vmul.f32 %v722, 1.442695
    %v813 = vpow.pop %v812
    %v814 = vmul.f32 %v723, 1.442695
    %v815 = vpow.pop %v814
    %v816 = vmul.f32 %v724, 1.442695
    %v817 = vpow.pop %v816
    %v818 = vmul.f32 %v725, 1.442695
    %v819 = vpow.pop %v818
    %v820 = vmul.f32 %v726, 1.442695
    %v821 = vpow.pop %v820
    %v822 = vmul.f32 %v727, 1.442695
    %v823 = vpow.pop %v822
    %v824 = vmul.f32 %v728, 1.442695
    %v825 = vpow.pop %v824
    %v826 = vmul.f32 %v729, 1.442695
    %v827 = vpow.pop %v826
    %v828 = vmul.f32 %v730, 1.442695
    %v829 = vpow.pop %v828
    %v830 = vmul.f32 %v731, 1.442695
    %v831 = vpow.pop %v830
    %v832 = vmul.f32 %v732, 1.442695
    %v833 = vpow.pop %v832
    %v834 = vmul.f32 %v733, 1.442695
    %v835 = vpow.pop %v834
    %v836 = vmul.f32 %v734, 1.442695
    %v837 = vpow.pop %v836
    %v838 = vmul.f32 %v735, 1.442695
    %v839 = vpow.pop %v838
    %v840 = vmul.f32 %v736, 1.442695
    %v841 = vpow.pop %v840
    %v842 = vmul.f32 %v737, 1.442695
    %v843 = vpow.pop %v842
    %v844 = vmul.f32 %v738, 1.442695
    %v845 = vpow.pop %v844
    %v846 = vmul.f32 %v739, 1.442695
    %v847 = vpow.pop %v846
    %v848 = vmul.f32 %v740, 1.442695
    %v849 = vpow.pop %v848
    %v850 = vmul.f32 %v741, 1.442695
    %v851 = vpow.pop %v850
    %v852 = vmul.f32 %v742, 1.442695
    %v853 = vpow.pop %v852
    %v854 = vmul.f32 %v743, 1.442695
    %v855 = vpow.pop %v854
    %v856 = vmul.f32 %v744, 1.442695
    %v857 = vpow.pop %v856
    %v858 = vmul.f32 %v745, 1.442695
    %v859 = vpow.pop %v858
    %v860 = vmul.f32 %v746, 1.442695
    %v861 = vpow.pop %v860
    %v862 = vmul.f32 %v747, 1.442695
    %v863 = vpow.pop %v862
    %v864 = vmul.f32 %v748, 1.442695
    %v865 = vpow.pop %v864
    %v866 = vmul.f32 %v749, 1.442695
    %v867 = vpow.pop %v866
    %v868 = vmul.f32 %v750, 1.442695
    %v869 = vpow.pop %v868
    %v870 = vmul.f32 %v751, 1.442695
    %v871 = vpow.pop %v870
    %v872 = vmul.f32 %v752, 1.442695
    %v873 = vpow.pop %v872
    %v874 = vmul.f32 %v753, 1.442695
    %v875 = vpow.pop %v874
    %v876 = vmul.f32 %v754, 1.442695
    %v877 = vpow.pop %v876
    %v878 = vmul.f32 %v755, 1.442695
    %v879 = vpow.pop %v878
    %v880 = vmul.f32 %v756, 1.442695
    %v881 = vpow.pop %v880
    %v882 = vmul.f32 %v757, 1.442695
    %v883 = vpow.pop %v882
    %v884 = vmul.f32 %v758, 1.442695
    %v885 = vpow.pop %v884
    %v886 = vmul.f32 %v759, 1.442695
    %v887 = vpow.pop %v886
    %v888 = vmul.f32 %v760, 1.442695
    %v889 = vpow.pop %v888
    %v890 = vmul.f32 %v761, 1.442695
    %v891 = vpow.pop %v890
    %v892 = vmul.f32 %v762, 1.442695
    %v893 = vpow.pop %v892
    %v894 = vmul.f32 %v763, 1.442695
    %v895 = vpow.pop %v894
    %v896 = vmul.f32 %v764, 1.442695
    %v897 = vpow.pop %v896
    %v898 = vmul.f32 %v765, 1.442695
    %v899 = vpow.pop %v898
    %v900 = vmul.f32 %v766, 1.442695
    %v901 = vpow.pop %v900
    %v902 = vmul.f32 %v767, 1.442695
    %v903 = vpow.pop %v902
    %v904 = vmul.f32 %v768, 1.442695
    %v905 = vpow.pop %v904
    %v906 = vmul.f32 %v769, 1.442695
    %v907 = vpow.pop %v906
    %v908 = vmul.f32 %v770, 1.442695
    %v909 = vpow.pop %v908
    %v910 = vmul.f32 %v771, 1.442695
    %v911 = vpow.pop %v910
    %v912 = vmul.f32 %v772, 1.442695
    %v913 = vpow.pop %v912
    %v914 = vmul.f32 %v773, 1.442695
    %v915 = vpow.pop %v914
    %v916 = vmul.f32 %v774, 1.442695
    %v917 = vpow.pop %v916
    %v918 = vmul.f32 %v775, 1.442695
    %v919 = vpow.pop %v918
    %v920 = vmul.f32 %v776, 1.442695
    %v921 = vpow.pop %v920
    %v922 = vmul.f32 %v777, 1.442695
    %v923 = vpow.pop %v922
    %v924 = vmul.f32 %v778, 1.442695
    %v925 = vpow.pop %v924
    %v926 = vmul.f32 %v779, 1.442695
    %v927 = vpow.pop %v926
    %v928 = vmul.f32 %v780, 1.442695
    %v929 = vpow.pop %v928
    %v930 = vmul.f32 %v781, 1.442695
    %v931 = vpow.pop %v930
    %v932 = vmul.f32 %v782, 1.442695
    %v933 = vpow.pop %v932
    %v934 = vmul.f32 %v783, 1.442695
    %v935 = vpow.pop %v934
    %v936 = vmul.f32 %v784, 1.442695
    %v937 = vpow.pop %v936
    %v938 = vmul.f32 %v785, 1.442695
    %v939 = vpow.pop %v938
    %v940 = vmul.f32 %v786, 1.442695
    %v941 = vpow.pop %v940
    %v942 = vmul.f32 %v787, 1.442695
    %v943 = vpow.pop %v942
    %v944 = vmul.f32 %v788, 1.442695
    %v945 = vpow.pop %v944
    %v946 = vmul.f32 %v789, 1.442695
    %v947 = vpow.pop %v946
    %v948 = vmul.f32 %v790, 1.442695
    %v949 = vpow.pop %v948
    %v950 = vmul.f32 %v791, 1.442695
    %v951 = vpow.pop %v950
    %v952 = vmul.f32 %v792, 1.442695
    %v953 = vpow.pop %v952
    %v954 = vmul.f32 %v793, 1.442695
    %v955 = vpow.pop %v954
    %v956 = vmul.f32 %v794, 1.442695
    %v957 = vpow.pop %v956
    %v958 = vmul.f32 %v795, 1.442695
    %v959 = vpow.pop %v958
    %v960 = vmul.f32 %v796, 1.442695
    %v961 = vpow.pop %v960
    %v962 = vmul.f32 %v797, 1.442695
    %v963 = vpow.pop %v962
    %v964 = vmul.f32 %v798, 1.442695
    %v965 = vpow.pop %v964
    %v966 = vmul.f32 %v799, 1.442695
    %v967 = vpow.pop %v966
    %v968 = vmul.f32 %v800, 1.442695
    %v969 = vpow.pop %v968
    %v970 = vmul.f32 %v801, 1.442695
    %v971 = vpow.pop %v970
    %v972 = vmul.f32 %v802, 1.442695
    %v973 = vpow.pop %v972
    %v974 = vmul.f32 %v803, 1.442695
    %v975 = vpow.pop %v974
    %v976 = vadd.f32 %v805, 1.0
    %v977 = vlog2.pop %v976
    %v978 = vmul.f32 %v977, 0.6931472
    %v979 = vmul.f32 -0.5, %v805
    %v980 = vadd.f32 %v979, 1.0
    %v981 = vmul.f32 %v980, %v805
    %v982 = vand.u32 2147483647, %v805
    %vm983 = vcmp.lt.f32.partialorder %v982, 0.0004427343
    %v984 = vsel %vm983, %v981, %v978
    %v985 = vadd.f32 %v807, 1.0
    %v986 = vlog2.pop %v985
    %v987 = vmul.f32 %v986, 0.6931472
    %v988 = vmul.f32 -0.5, %v807
    %v989 = vadd.f32 %v988, 1.0
    %v990 = vmul.f32 %v989, %v807
    %v991 = vand.u32 2147483647, %v807
    %vm992 = vcmp.lt.f32.partialorder %v991, 0.0004427343
    %v993 = vsel %vm992, %v990, %v987
    %v994 = vadd.f32 %v809, 1.0
    %v995 = vlog2.pop %v994
    %v996 = vmul.f32 %v995, 0.6931472
    %v997 = vmul.f32 -0.5, %v809
    %v998 = vadd.f32 %v997, 1.0
    %v999 = vmul.f32 %v998, %v809
    %v1000 = vand.u32 2147483647, %v809
    %vm1001 = vcmp.lt.f32.partialorder %v1000, 0.0004427343
    %v1002 = vsel %vm1001, %v999, %v996
    %v1003 = vadd.f32 %v811, 1.0
    %v1004 = vlog2.pop %v1003
    %v1005 = vmul.f32 %v1004, 0.6931472
    %v1006 = vmul.f32 -0.5, %v811
    %v1007 = vadd.f32 %v1006, 1.0
    %v1008 = vmul.f32 %v1007, %v811
    %v1009 = vand.u32 2147483647, %v811
    %vm1010 = vcmp.lt.f32.partialorder %v1009, 0.0004427343
    %v1011 = vsel %vm1010, %v1008, %v1005
    %v1012 = vadd.f32 %v813, 1.0
    %v1013 = vlog2.pop %v1012
    %v1014 = vmul.f32 %v1013, 0.6931472
    %v1015 = vmul.f32 -0.5, %v813
    %v1016 = vadd.f32 %v1015, 1.0
    %v1017 = vmul.f32 %v1016, %v813
    %v1018 = vand.u32 2147483647, %v813
    %vm1019 = vcmp.lt.f32.partialorder %v1018, 0.0004427343
    %v1020 = vsel %vm1019, %v1017, %v1014
    %v1021 = vadd.f32 %v815, 1.0
    %v1022 = vlog2.pop %v1021
    %v1023 = vmul.f32 %v1022, 0.6931472
    %v1024 = vmul.f32 -0.5, %v815
    %v1025 = vadd.f32 %v1024, 1.0
    %v1026 = vmul.f32 %v1025, %v815
    %v1027 = vand.u32 2147483647, %v815
    %vm1028 = vcmp.lt.f32.partialorder %v1027, 0.0004427343
    %v1029 = vsel %vm1028, %v1026, %v1023
    %v1030 = vadd.f32 %v817, 1.0
    %v1031 = vlog2.pop %v1030
    %v1032 = vmul.f32 %v1031, 0.6931472
    %v1033 = vmul.f32 -0.5, %v817
    %v1034 = vadd.f32 %v1033, 1.0
    %v1035 = vmul.f32 %v1034, %v817
    %v1036 = vand.u32 2147483647, %v817
    %vm1037 = vcmp.lt.f32.partialorder %v1036, 0.0004427343
    %v1038 = vsel %vm1037, %v1035, %v1032
    %v1039 = vadd.f32 %v819, 1.0
    %v1040 = vlog2.pop %v1039
    %v1041 = vmul.f32 %v1040, 0.6931472
    %v1042 = vmul.f32 -0.5, %v819
    %v1043 = vadd.f32 %v1042, 1.0
    %v1044 = vmul.f32 %v1043, %v819
    %v1045 = vand.u32 2147483647, %v819
    %vm1046 = vcmp.lt.f32.partialorder %v1045, 0.0004427343
    %v1047 = vsel %vm1046, %v1044, %v1041
    %v1048 = vadd.f32 %v821, 1.0
    %v1049 = vlog2.pop %v1048
    %v1050 = vmul.f32 %v1049, 0.6931472
    %v1051 = vmul.f32 -0.5, %v821
    %v1052 = vadd.f32 %v1051, 1.0
    %v1053 = vmul.f32 %v1052, %v821
    %v1054 = vand.u32 2147483647, %v821
    %vm1055 = vcmp.lt.f32.partialorder %v1054, 0.0004427343
    %v1056 = vsel %vm1055, %v1053, %v1050
    %v1057 = vadd.f32 %v823, 1.0
    %v1058 = vlog2.pop %v1057
    %v1059 = vmul.f32 %v1058, 0.6931472
    %v1060 = vmul.f32 -0.5, %v823
    %v1061 = vadd.f32 %v1060, 1.0
    %v1062 = vmul.f32 %v1061, %v823
    %v1063 = vand.u32 2147483647, %v823
    %vm1064 = vcmp.lt.f32.partialorder %v1063, 0.0004427343
    %v1065 = vsel %vm1064, %v1062, %v1059
    %v1066 = vadd.f32 %v825, 1.0
    %v1067 = vlog2.pop %v1066
    %v1068 = vmul.f32 %v1067, 0.6931472
    %v1069 = vmul.f32 -0.5, %v825
    %v1070 = vadd.f32 %v1069, 1.0
    %v1071 = vmul.f32 %v1070, %v825
    %v1072 = vand.u32 2147483647, %v825
    %vm1073 = vcmp.lt.f32.partialorder %v1072, 0.0004427343
    %v1074 = vsel %vm1073, %v1071, %v1068
    %v1075 = vadd.f32 %v827, 1.0
    %v1076 = vlog2.pop %v1075
    %v1077 = vmul.f32 %v1076, 0.6931472
    %v1078 = vmul.f32 -0.5, %v827
    %v1079 = vadd.f32 %v1078, 1.0
    %v1080 = vmul.f32 %v1079, %v827
    %v1081 = vand.u32 2147483647, %v827
    %vm1082 = vcmp.lt.f32.partialorder %v1081, 0.0004427343
    %v1083 = vsel %vm1082, %v1080, %v1077
    %v1084 = vadd.f32 %v829, 1.0
    %v1085 = vlog2.pop %v1084
    %v1086 = vmul.f32 %v1085, 0.6931472
    %v1087 = vmul.f32 -0.5, %v829
    %v1088 = vadd.f32 %v1087, 1.0
    %v1089 = vmul.f32 %v1088, %v829
    %v1090 = vand.u32 2147483647, %v829
    %vm1091 = vcmp.lt.f32.partialorder %v1090, 0.0004427343
    %v1092 = vsel %vm1091, %v1089, %v1086
    %v1093 = vadd.f32 %v831, 1.0
    %v1094 = vlog2.pop %v1093
    %v1095 = vmul.f32 %v1094, 0.6931472
    %v1096 = vmul.f32 -0.5, %v831
    %v1097 = vadd.f32 %v1096, 1.0
    %v1098 = vmul.f32 %v1097, %v831
    %v1099 = vand.u32 2147483647, %v831
    %vm1100 = vcmp.lt.f32.partialorder %v1099, 0.0004427343
    %v1101 = vsel %vm1100, %v1098, %v1095
    %v1102 = vadd.f32 %v833, 1.0
    %v1103 = vlog2.pop %v1102
    %v1104 = vmul.f32 %v1103, 0.6931472
    %v1105 = vmul.f32 -0.5, %v833
    %v1106 = vadd.f32 %v1105, 1.0
    %v1107 = vmul.f32 %v1106, %v833
    %v1108 = vand.u32 2147483647, %v833
    %vm1109 = vcmp.lt.f32.partialorder %v1108, 0.0004427343
    %v1110 = vsel %vm1109, %v1107, %v1104
    %v1111 = vadd.f32 %v835, 1.0
    %v1112 = vlog2.pop %v1111
    %v1113 = vmul.f32 %v1112, 0.6931472
    %v1114 = vmul.f32 -0.5, %v835
    %v1115 = vadd.f32 %v1114, 1.0
    %v1116 = vmul.f32 %v1115, %v835
    %v1117 = vand.u32 2147483647, %v835
    %vm1118 = vcmp.lt.f32.partialorder %v1117, 0.0004427343
    %v1119 = vsel %vm1118, %v1116, %v1113
    %v1120 = vadd.f32 %v837, 1.0
    %v1121 = vlog2.pop %v1120
    %v1122 = vmul.f32 %v1121, 0.6931472
    %v1123 = vmul.f32 -0.5, %v837
    %v1124 = vadd.f32 %v1123, 1.0
    %v1125 = vmul.f32 %v1124, %v837
    %v1126 = vand.u32 2147483647, %v837
    %vm1127 = vcmp.lt.f32.partialorder %v1126, 0.0004427343
    %v1128 = vsel %vm1127, %v1125, %v1122
    %v1129 = vadd.f32 %v839, 1.0
    %v1130 = vlog2.pop %v1129
    %v1131 = vmul.f32 %v1130, 0.6931472
    %v1132 = vmul.f32 -0.5, %v839
    %v1133 = vadd.f32 %v1132, 1.0
    %v1134 = vmul.f32 %v1133, %v839
    %v1135 = vand.u32 2147483647, %v839
    %vm1136 = vcmp.lt.f32.partialorder %v1135, 0.0004427343
    %v1137 = vsel %vm1136, %v1134, %v1131
    %v1138 = vadd.f32 %v841, 1.0
    %v1139 = vlog2.pop %v1138
    %v1140 = vmul.f32 %v1139, 0.6931472
    %v1141 = vmul.f32 -0.5, %v841
    %v1142 = vadd.f32 %v1141, 1.0
    %v1143 = vmul.f32 %v1142, %v841
    %v1144 = vand.u32 2147483647, %v841
    %vm1145 = vcmp.lt.f32.partialorder %v1144, 0.0004427343
    %v1146 = vsel %vm1145, %v1143, %v1140
    %v1147 = vadd.f32 %v843, 1.0
    %v1148 = vlog2.pop %v1147
    %v1149 = vmul.f32 %v1148, 0.6931472
    %v1150 = vmul.f32 -0.5, %v843
    %v1151 = vadd.f32 %v1150, 1.0
    %v1152 = vmul.f32 %v1151, %v843
    %v1153 = vand.u32 2147483647, %v843
    %vm1154 = vcmp.lt.f32.partialorder %v1153, 0.0004427343
    %v1155 = vsel %vm1154, %v1152, %v1149
    %v1156 = vadd.f32 %v845, 1.0
    %v1157 = vlog2.pop %v1156
    %v1158 = vmul.f32 %v1157, 0.6931472
    %v1159 = vmul.f32 -0.5, %v845
    %v1160 = vadd.f32 %v1159, 1.0
    %v1161 = vmul.f32 %v1160, %v845
    %v1162 = vand.u32 2147483647, %v845
    %vm1163 = vcmp.lt.f32.partialorder %v1162, 0.0004427343
    %v1164 = vsel %vm1163, %v1161, %v1158
    %v1165 = vadd.f32 %v847, 1.0
    %v1166 = vlog2.pop %v1165
    %v1167 = vmul.f32 %v1166, 0.6931472
    %v1168 = vmul.f32 -0.5, %v847
    %v1169 = vadd.f32 %v1168, 1.0
    %v1170 = vmul.f32 %v1169, %v847
    %v1171 = vand.u32 2147483647, %v847
    %vm1172 = vcmp.lt.f32.partialorder %v1171, 0.0004427343
    %v1173 = vsel %vm1172, %v1170, %v1167
    %v1174 = vadd.f32 %v849, 1.0
    %v1175 = vlog2.pop %v1174
    %v1176 = vmul.f32 %v1175, 0.6931472
    %v1177 = vmul.f32 -0.5, %v849
    %v1178 = vadd.f32 %v1177, 1.0
    %v1179 = vmul.f32 %v1178, %v849
    %v1180 = vand.u32 2147483647, %v849
    %vm1181 = vcmp.lt.f32.partialorder %v1180, 0.0004427343
    %v1182 = vsel %vm1181, %v1179, %v1176
    %v1183 = vadd.f32 %v851, 1.0
    %v1184 = vlog2.pop %v1183
    %v1185 = vmul.f32 %v1184, 0.6931472
    %v1186 = vmul.f32 -0.5, %v851
    %v1187 = vadd.f32 %v1186, 1.0
    %v1188 = vmul.f32 %v1187, %v851
    %v1189 = vand.u32 2147483647, %v851
    %vm1190 = vcmp.lt.f32.partialorder %v1189, 0.0004427343
    %v1191 = vsel %vm1190, %v1188, %v1185
    %v1192 = vadd.f32 %v853, 1.0
    %v1193 = vlog2.pop %v1192
    %v1194 = vmul.f32 %v1193, 0.6931472
    %v1195 = vmul.f32 -0.5, %v853
    %v1196 = vadd.f32 %v1195, 1.0
    %v1197 = vmul.f32 %v1196, %v853
    %v1198 = vand.u32 2147483647, %v853
    %vm1199 = vcmp.lt.f32.partialorder %v1198, 0.0004427343
    %v1200 = vsel %vm1199, %v1197, %v1194
    %v1201 = vadd.f32 %v855, 1.0
    %v1202 = vlog2.pop %v1201
    %v1203 = vmul.f32 %v1202, 0.6931472
    %v1204 = vmul.f32 -0.5, %v855
    %v1205 = vadd.f32 %v1204, 1.0
    %v1206 = vmul.f32 %v1205, %v855
    %v1207 = vand.u32 2147483647, %v855
    %vm1208 = vcmp.lt.f32.partialorder %v1207, 0.0004427343
    %v1209 = vsel %vm1208, %v1206, %v1203
    %v1210 = vadd.f32 %v857, 1.0
    %v1211 = vlog2.pop %v1210
    %v1212 = vmul.f32 %v1211, 0.6931472
    %v1213 = vmul.f32 -0.5, %v857
    %v1214 = vadd.f32 %v1213, 1.0
    %v1215 = vmul.f32 %v1214, %v857
    %v1216 = vand.u32 2147483647, %v857
    %vm1217 = vcmp.lt.f32.partialorder %v1216, 0.0004427343
    %v1218 = vsel %vm1217, %v1215, %v1212
    %v1219 = vadd.f32 %v859, 1.0
    %v1220 = vlog2.pop %v1219
    %v1221 = vmul.f32 %v1220, 0.6931472
    %v1222 = vmul.f32 -0.5, %v859
    %v1223 = vadd.f32 %v1222, 1.0
    %v1224 = vmul.f32 %v1223, %v859
    %v1225 = vand.u32 2147483647, %v859
    %vm1226 = vcmp.lt.f32.partialorder %v1225, 0.0004427343
    %v1227 = vsel %vm1226, %v1224, %v1221
    %v1228 = vadd.f32 %v861, 1.0
    %v1229 = vlog2.pop %v1228
    %v1230 = vmul.f32 %v1229, 0.6931472
    %v1231 = vmul.f32 -0.5, %v861
    %v1232 = vadd.f32 %v1231, 1.0
    %v1233 = vmul.f32 %v1232, %v861
    %v1234 = vand.u32 2147483647, %v861
    %vm1235 = vcmp.lt.f32.partialorder %v1234, 0.0004427343
    %v1236 = vsel %vm1235, %v1233, %v1230
    %v1237 = vadd.f32 %v863, 1.0
    %v1238 = vlog2.pop %v1237
    %v1239 = vmul.f32 %v1238, 0.6931472
    %v1240 = vmul.f32 -0.5, %v863
    %v1241 = vadd.f32 %v1240, 1.0
    %v1242 = vmul.f32 %v1241, %v863
    %v1243 = vand.u32 2147483647, %v863
    %vm1244 = vcmp.lt.f32.partialorder %v1243, 0.0004427343
    %v1245 = vsel %vm1244, %v1242, %v1239
    %v1246 = vadd.f32 %v865, 1.0
    %v1247 = vlog2.pop %v1246
    %v1248 = vmul.f32 %v1247, 0.6931472
    %v1249 = vmul.f32 -0.5, %v865
    %v1250 = vadd.f32 %v1249, 1.0
    %v1251 = vmul.f32 %v1250, %v865
    %v1252 = vand.u32 2147483647, %v865
    %vm1253 = vcmp.lt.f32.partialorder %v1252, 0.0004427343
    %v1254 = vsel %vm1253, %v1251, %v1248
    %v1255 = vadd.f32 %v867, 1.0
    %v1256 = vlog2.pop %v1255
    %v1257 = vmul.f32 %v1256, 0.6931472
    %v1258 = vmul.f32 -0.5, %v867
    %v1259 = vadd.f32 %v1258, 1.0
    %v1260 = vmul.f32 %v1259, %v867
    %v1261 = vand.u32 2147483647, %v867
    %vm1262 = vcmp.lt.f32.partialorder %v1261, 0.0004427343
    %v1263 = vsel %vm1262, %v1260, %v1257
    %v1264 = vadd.f32 %v869, 1.0
    %v1265 = vlog2.pop %v1264
    %v1266 = vmul.f32 %v1265, 0.6931472
    %v1267 = vmul.f32 -0.5, %v869
    %v1268 = vadd.f32 %v1267, 1.0
    %v1269 = vmul.f32 %v1268, %v869
    %v1270 = vand.u32 2147483647, %v869
    %vm1271 = vcmp.lt.f32.partialorder %v1270, 0.0004427343
    %v1272 = vsel %vm1271, %v1269, %v1266
    %v1273 = vadd.f32 %v871, 1.0
    %v1274 = vlog2.pop %v1273
    %v1275 = vmul.f32 %v1274, 0.6931472
    %v1276 = vmul.f32 -0.5, %v871
    %v1277 = vadd.f32 %v1276, 1.0
    %v1278 = vmul.f32 %v1277, %v871
    %v1279 = vand.u32 2147483647, %v871
    %vm1280 = vcmp.lt.f32.partialorder %v1279, 0.0004427343
    %v1281 = vsel %vm1280, %v1278, %v1275
    %v1282 = vadd.f32 %v873, 1.0
    %v1283 = vlog2.pop %v1282
    %v1284 = vmul.f32 %v1283, 0.6931472
    %v1285 = vmul.f32 -0.5, %v873
    %v1286 = vadd.f32 %v1285, 1.0
    %v1287 = vmul.f32 %v1286, %v873
    %v1288 = vand.u32 2147483647, %v873
    %vm1289 = vcmp.lt.f32.partialorder %v1288, 0.0004427343
    %v1290 = vsel %vm1289, %v1287, %v1284
    %v1291 = vadd.f32 %v875, 1.0
    %v1292 = vlog2.pop %v1291
    %v1293 = vmul.f32 %v1292, 0.6931472
    %v1294 = vmul.f32 -0.5, %v875
    %v1295 = vadd.f32 %v1294, 1.0
    %v1296 = vmul.f32 %v1295, %v875
    %v1297 = vand.u32 2147483647, %v875
    %vm1298 = vcmp.lt.f32.partialorder %v1297, 0.0004427343
    %v1299 = vsel %vm1298, %v1296, %v1293
    %v1300 = vadd.f32 %v877, 1.0
    %v1301 = vlog2.pop %v1300
    %v1302 = vmul.f32 %v1301, 0.6931472
    %v1303 = vmul.f32 -0.5, %v877
    %v1304 = vadd.f32 %v1303, 1.0
    %v1305 = vmul.f32 %v1304, %v877
    %v1306 = vand.u32 2147483647, %v877
    %vm1307 = vcmp.lt.f32.partialorder %v1306, 0.0004427343
    %v1308 = vsel %vm1307, %v1305, %v1302
    %v1309 = vadd.f32 %v879, 1.0
    %v1310 = vlog2.pop %v1309
    %v1311 = vmul.f32 %v1310, 0.6931472
    %v1312 = vmul.f32 -0.5, %v879
    %v1313 = vadd.f32 %v1312, 1.0
    %v1314 = vmul.f32 %v1313, %v879
    %v1315 = vand.u32 2147483647, %v879
    %vm1316 = vcmp.lt.f32.partialorder %v1315, 0.0004427343
    %v1317 = vsel %vm1316, %v1314, %v1311
    %v1318 = vadd.f32 %v881, 1.0
    %v1319 = vlog2.pop %v1318
    %v1320 = vmul.f32 %v1319, 0.6931472
    %v1321 = vmul.f32 -0.5, %v881
    %v1322 = vadd.f32 %v1321, 1.0
    %v1323 = vmul.f32 %v1322, %v881
    %v1324 = vand.u32 2147483647, %v881
    %vm1325 = vcmp.lt.f32.partialorder %v1324, 0.0004427343
    %v1326 = vsel %vm1325, %v1323, %v1320
    %v1327 = vadd.f32 %v883, 1.0
    %v1328 = vlog2.pop %v1327
    %v1329 = vmul.f32 %v1328, 0.6931472
    %v1330 = vmul.f32 -0.5, %v883
    %v1331 = vadd.f32 %v1330, 1.0
    %v1332 = vmul.f32 %v1331, %v883
    %v1333 = vand.u32 2147483647, %v883
    %vm1334 = vcmp.lt.f32.partialorder %v1333, 0.0004427343
    %v1335 = vsel %vm1334, %v1332, %v1329
    %v1336 = vadd.f32 %v885, 1.0
    %v1337 = vlog2.pop %v1336
    %v1338 = vmul.f32 %v1337, 0.6931472
    %v1339 = vmul.f32 -0.5, %v885
    %v1340 = vadd.f32 %v1339, 1.0
    %v1341 = vmul.f32 %v1340, %v885
    %v1342 = vand.u32 2147483647, %v885
    %vm1343 = vcmp.lt.f32.partialorder %v1342, 0.0004427343
    %v1344 = vsel %vm1343, %v1341, %v1338
    %v1345 = vadd.f32 %v887, 1.0
    %v1346 = vlog2.pop %v1345
    %v1347 = vmul.f32 %v1346, 0.6931472
    %v1348 = vmul.f32 -0.5, %v887
    %v1349 = vadd.f32 %v1348, 1.0
    %v1350 = vmul.f32 %v1349, %v887
    %v1351 = vand.u32 2147483647, %v887
    %vm1352 = vcmp.lt.f32.partialorder %v1351, 0.0004427343
    %v1353 = vsel %vm1352, %v1350, %v1347
    %v1354 = vadd.f32 %v889, 1.0
    %v1355 = vlog2.pop %v1354
    %v1356 = vmul.f32 %v1355, 0.6931472
    %v1357 = vmul.f32 -0.5, %v889
    %v1358 = vadd.f32 %v1357, 1.0
    %v1359 = vmul.f32 %v1358, %v889
    %v1360 = vand.u32 2147483647, %v889
    %vm1361 = vcmp.lt.f32.partialorder %v1360, 0.0004427343
    %v1362 = vsel %vm1361, %v1359, %v1356
    %v1363 = vadd.f32 %v891, 1.0
    %v1364 = vlog2.pop %v1363
    %v1365 = vmul.f32 %v1364, 0.6931472
    %v1366 = vmul.f32 -0.5, %v891
    %v1367 = vadd.f32 %v1366, 1.0
    %v1368 = vmul.f32 %v1367, %v891
    %v1369 = vand.u32 2147483647, %v891
    %vm1370 = vcmp.lt.f32.partialorder %v1369, 0.0004427343
    %v1371 = vsel %vm1370, %v1368, %v1365
    %v1372 = vadd.f32 %v893, 1.0
    %v1373 = vlog2.pop %v1372
    %v1374 = vmul.f32 %v1373, 0.6931472
    %v1375 = vmul.f32 -0.5, %v893
    %v1376 = vadd.f32 %v1375, 1.0
    %v1377 = vmul.f32 %v1376, %v893
    %v1378 = vand.u32 2147483647, %v893
    %vm1379 = vcmp.lt.f32.partialorder %v1378, 0.0004427343
    %v1380 = vsel %vm1379, %v1377, %v1374
    %v1381 = vadd.f32 %v895, 1.0
    %v1382 = vlog2.pop %v1381
    %v1383 = vmul.f32 %v1382, 0.6931472
    %v1384 = vmul.f32 -0.5, %v895
    %v1385 = vadd.f32 %v1384, 1.0
    %v1386 = vmul.f32 %v1385, %v895
    %v1387 = vand.u32 2147483647, %v895
    %vm1388 = vcmp.lt.f32.partialorder %v1387, 0.0004427343
    %v1389 = vsel %vm1388, %v1386, %v1383
    %v1390 = vadd.f32 %v897, 1.0
    %v1391 = vlog2.pop %v1390
    %v1392 = vmul.f32 %v1391, 0.6931472
    %v1393 = vmul.f32 -0.5, %v897
    %v1394 = vadd.f32 %v1393, 1.0
    %v1395 = vmul.f32 %v1394, %v897
    %v1396 = vand.u32 2147483647, %v897
    %vm1397 = vcmp.lt.f32.partialorder %v1396, 0.0004427343
    %v1398 = vsel %vm1397, %v1395, %v1392
    %v1399 = vadd.f32 %v899, 1.0
    %v1400 = vlog2.pop %v1399
    %v1401 = vmul.f32 %v1400, 0.6931472
    %v1402 = vmul.f32 -0.5, %v899
    %v1403 = vadd.f32 %v1402, 1.0
    %v1404 = vmul.f32 %v1403, %v899
    %v1405 = vand.u32 2147483647, %v899
    %vm1406 = vcmp.lt.f32.partialorder %v1405, 0.0004427343
    %v1407 = vsel %vm1406, %v1404, %v1401
    %v1408 = vadd.f32 %v901, 1.0
    %v1409 = vlog2.pop %v1408
    %v1410 = vmul.f32 %v1409, 0.6931472
    %v1411 = vmul.f32 -0.5, %v901
    %v1412 = vadd.f32 %v1411, 1.0
    %v1413 = vmul.f32 %v1412, %v901
    %v1414 = vand.u32 2147483647, %v901
    %vm1415 = vcmp.lt.f32.partialorder %v1414, 0.0004427343
    %v1416 = vsel %vm1415, %v1413, %v1410
    %v1417 = vadd.f32 %v903, 1.0
    %v1418 = vlog2.pop %v1417
    %v1419 = vmul.f32 %v1418, 0.6931472
    %v1420 = vmul.f32 -0.5, %v903
    %v1421 = vadd.f32 %v1420, 1.0
    %v1422 = vmul.f32 %v1421, %v903
    %v1423 = vand.u32 2147483647, %v903
    %vm1424 = vcmp.lt.f32.partialorder %v1423, 0.0004427343
    %v1425 = vsel %vm1424, %v1422, %v1419
    %v1426 = vadd.f32 %v905, 1.0
    %v1427 = vlog2.pop %v1426
    %v1428 = vmul.f32 %v1427, 0.6931472
    %v1429 = vmul.f32 -0.5, %v905
    %v1430 = vadd.f32 %v1429, 1.0
    %v1431 = vmul.f32 %v1430, %v905
    %v1432 = vand.u32 2147483647, %v905
    %vm1433 = vcmp.lt.f32.partialorder %v1432, 0.0004427343
    %v1434 = vsel %vm1433, %v1431, %v1428
    %v1435 = vadd.f32 %v907, 1.0
    %v1436 = vlog2.pop %v1435
    %v1437 = vmul.f32 %v1436, 0.6931472
    %v1438 = vmul.f32 -0.5, %v907
    %v1439 = vadd.f32 %v1438, 1.0
    %v1440 = vmul.f32 %v1439, %v907
    %v1441 = vand.u32 2147483647, %v907
    %vm1442 = vcmp.lt.f32.partialorder %v1441, 0.0004427343
    %v1443 = vsel %vm1442, %v1440, %v1437
    %v1444 = vadd.f32 %v909, 1.0
    %v1445 = vlog2.pop %v1444
    %v1446 = vmul.f32 %v1445, 0.6931472
    %v1447 = vmul.f32 -0.5, %v909
    %v1448 = vadd.f32 %v1447, 1.0
    %v1449 = vmul.f32 %v1448, %v909
    %v1450 = vand.u32 2147483647, %v909
    %vm1451 = vcmp.lt.f32.partialorder %v1450, 0.0004427343
    %v1452 = vsel %vm1451, %v1449, %v1446
    %v1453 = vadd.f32 %v911, 1.0
    %v1454 = vlog2.pop %v1453
    %v1455 = vmul.f32 %v1454, 0.6931472
    %v1456 = vmul.f32 -0.5, %v911
    %v1457 = vadd.f32 %v1456, 1.0
    %v1458 = vmul.f32 %v1457, %v911
    %v1459 = vand.u32 2147483647, %v911
    %vm1460 = vcmp.lt.f32.partialorder %v1459, 0.0004427343
    %v1461 = vsel %vm1460, %v1458, %v1455
    %v1462 = vadd.f32 %v913, 1.0
    %v1463 = vlog2.pop %v1462
    %v1464 = vmul.f32 %v1463, 0.6931472
    %v1465 = vmul.f32 -0.5, %v913
    %v1466 = vadd.f32 %v1465, 1.0
    %v1467 = vmul.f32 %v1466, %v913
    %v1468 = vand.u32 2147483647, %v913
    %vm1469 = vcmp.lt.f32.partialorder %v1468, 0.0004427343
    %v1470 = vsel %vm1469, %v1467, %v1464
    %v1471 = vadd.f32 %v915, 1.0
    %v1472 = vlog2.pop %v1471
    %v1473 = vmul.f32 %v1472, 0.6931472
    %v1474 = vmul.f32 -0.5, %v915
    %v1475 = vadd.f32 %v1474, 1.0
    %v1476 = vmul.f32 %v1475, %v915
    %v1477 = vand.u32 2147483647, %v915
    %vm1478 = vcmp.lt.f32.partialorder %v1477, 0.0004427343
    %v1479 = vsel %vm1478, %v1476, %v1473
    %v1480 = vadd.f32 %v917, 1.0
    %v1481 = vlog2.pop %v1480
    %v1482 = vmul.f32 %v1481, 0.6931472
    %v1483 = vmul.f32 -0.5, %v917
    %v1484 = vadd.f32 %v1483, 1.0
    %v1485 = vmul.f32 %v1484, %v917
    %v1486 = vand.u32 2147483647, %v917
    %vm1487 = vcmp.lt.f32.partialorder %v1486, 0.0004427343
    %v1488 = vsel %vm1487, %v1485, %v1482
    %v1489 = vadd.f32 %v919, 1.0
    %v1490 = vlog2.pop %v1489
    %v1491 = vmul.f32 %v1490, 0.6931472
    %v1492 = vmul.f32 -0.5, %v919
    %v1493 = vadd.f32 %v1492, 1.0
    %v1494 = vmul.f32 %v1493, %v919
    %v1495 = vand.u32 2147483647, %v919
    %vm1496 = vcmp.lt.f32.partialorder %v1495, 0.0004427343
    %v1497 = vsel %vm1496, %v1494, %v1491
    %v1498 = vadd.f32 %v921, 1.0
    %v1499 = vlog2.pop %v1498
    %v1500 = vmul.f32 %v1499, 0.6931472
    %v1501 = vmul.f32 -0.5, %v921
    %v1502 = vadd.f32 %v1501, 1.0
    %v1503 = vmul.f32 %v1502, %v921
    %v1504 = vand.u32 2147483647, %v921
    %vm1505 = vcmp.lt.f32.partialorder %v1504, 0.0004427343
    %v1506 = vsel %vm1505, %v1503, %v1500
    %v1507 = vadd.f32 %v923, 1.0
    %v1508 = vlog2.pop %v1507
    %v1509 = vmul.f32 %v1508, 0.6931472
    %v1510 = vmul.f32 -0.5, %v923
    %v1511 = vadd.f32 %v1510, 1.0
    %v1512 = vmul.f32 %v1511, %v923
    %v1513 = vand.u32 2147483647, %v923
    %vm1514 = vcmp.lt.f32.partialorder %v1513, 0.0004427343
    %v1515 = vsel %vm1514, %v1512, %v1509
    %v1516 = vadd.f32 %v925, 1.0
    %v1517 = vlog2.pop %v1516
    %v1518 = vmul.f32 %v1517, 0.6931472
    %v1519 = vmul.f32 -0.5, %v925
    %v1520 = vadd.f32 %v1519, 1.0
    %v1521 = vmul.f32 %v1520, %v925
    %v1522 = vand.u32 2147483647, %v925
    %vm1523 = vcmp.lt.f32.partialorder %v1522, 0.0004427343
    %v1524 = vsel %vm1523, %v1521, %v1518
    %v1525 = vadd.f32 %v927, 1.0
    %v1526 = vlog2.pop %v1525
    %v1527 = vmul.f32 %v1526, 0.6931472
    %v1528 = vmul.f32 -0.5, %v927
    %v1529 = vadd.f32 %v1528, 1.0
    %v1530 = vmul.f32 %v1529, %v927
    %v1531 = vand.u32 2147483647, %v927
    %vm1532 = vcmp.lt.f32.partialorder %v1531, 0.0004427343
    %v1533 = vsel %vm1532, %v1530, %v1527
    %v1534 = vadd.f32 %v929, 1.0
    %v1535 = vlog2.pop %v1534
    %v1536 = vmul.f32 %v1535, 0.6931472
    %v1537 = vmul.f32 -0.5, %v929
    %v1538 = vadd.f32 %v1537, 1.0
    %v1539 = vmul.f32 %v1538, %v929
    %v1540 = vand.u32 2147483647, %v929
    %vm1541 = vcmp.lt.f32.partialorder %v1540, 0.0004427343
    %v1542 = vsel %vm1541, %v1539, %v1536
    %v1543 = vadd.f32 %v931, 1.0
    %v1544 = vlog2.pop %v1543
    %v1545 = vmul.f32 %v1544, 0.6931472
    %v1546 = vmul.f32 -0.5, %v931
    %v1547 = vadd.f32 %v1546, 1.0
    %v1548 = vmul.f32 %v1547, %v931
    %v1549 = vand.u32 2147483647, %v931
    %vm1550 = vcmp.lt.f32.partialorder %v1549, 0.0004427343
    %v1551 = vsel %vm1550, %v1548, %v1545
    %v1552 = vadd.f32 %v933, 1.0
    %v1553 = vlog2.pop %v1552
    %v1554 = vmul.f32 %v1553, 0.6931472
    %v1555 = vmul.f32 -0.5, %v933
    %v1556 = vadd.f32 %v1555, 1.0
    %v1557 = vmul.f32 %v1556, %v933
    %v1558 = vand.u32 2147483647, %v933
    %vm1559 = vcmp.lt.f32.partialorder %v1558, 0.0004427343
    %v1560 = vsel %vm1559, %v1557, %v1554
    %v1561 = vadd.f32 %v935, 1.0
    %v1562 = vlog2.pop %v1561
    %v1563 = vmul.f32 %v1562, 0.6931472
    %v1564 = vmul.f32 -0.5, %v935
    %v1565 = vadd.f32 %v1564, 1.0
    %v1566 = vmul.f32 %v1565, %v935
    %v1567 = vand.u32 2147483647, %v935
    %vm1568 = vcmp.lt.f32.partialorder %v1567, 0.0004427343
    %v1569 = vsel %vm1568, %v1566, %v1563
    %v1570 = vadd.f32 %v937, 1.0
    %v1571 = vlog2.pop %v1570
    %v1572 = vmul.f32 %v1571, 0.6931472
    %v1573 = vmul.f32 -0.5, %v937
    %v1574 = vadd.f32 %v1573, 1.0
    %v1575 = vmul.f32 %v1574, %v937
    %v1576 = vand.u32 2147483647, %v937
    %vm1577 = vcmp.lt.f32.partialorder %v1576, 0.0004427343
    %v1578 = vsel %vm1577, %v1575, %v1572
    %v1579 = vadd.f32 %v939, 1.0
    %v1580 = vlog2.pop %v1579
    %v1581 = vmul.f32 %v1580, 0.6931472
    %v1582 = vmul.f32 -0.5, %v939
    %v1583 = vadd.f32 %v1582, 1.0
    %v1584 = vmul.f32 %v1583, %v939
    %v1585 = vand.u32 2147483647, %v939
    %vm1586 = vcmp.lt.f32.partialorder %v1585, 0.0004427343
    %v1587 = vsel %vm1586, %v1584, %v1581
    %v1588 = vadd.f32 %v941, 1.0
    %v1589 = vlog2.pop %v1588
    %v1590 = vmul.f32 %v1589, 0.6931472
    %v1591 = vmul.f32 -0.5, %v941
    %v1592 = vadd.f32 %v1591, 1.0
    %v1593 = vmul.f32 %v1592, %v941
    %v1594 = vand.u32 2147483647, %v941
    %vm1595 = vcmp.lt.f32.partialorder %v1594, 0.0004427343
    %v1596 = vsel %vm1595, %v1593, %v1590
    %v1597 = vadd.f32 %v943, 1.0
    %v1598 = vlog2.pop %v1597
    %v1599 = vmul.f32 %v1598, 0.6931472
    %v1600 = vmul.f32 -0.5, %v943
    %v1601 = vadd.f32 %v1600, 1.0
    %v1602 = vmul.f32 %v1601, %v943
    %v1603 = vand.u32 2147483647, %v943
    %vm1604 = vcmp.lt.f32.partialorder %v1603, 0.0004427343
    %v1605 = vsel %vm1604, %v1602, %v1599
    %v1606 = vadd.f32 %v945, 1.0
    %v1607 = vlog2.pop %v1606
    %v1608 = vmul.f32 %v1607, 0.6931472
    %v1609 = vmul.f32 -0.5, %v945
    %v1610 = vadd.f32 %v1609, 1.0
    %v1611 = vmul.f32 %v1610, %v945
    %v1612 = vand.u32 2147483647, %v945
    %vm1613 = vcmp.lt.f32.partialorder %v1612, 0.0004427343
    %v1614 = vsel %vm1613, %v1611, %v1608
    %v1615 = vadd.f32 %v947, 1.0
    %v1616 = vlog2.pop %v1615
    %v1617 = vmul.f32 %v1616, 0.6931472
    %v1618 = vmul.f32 -0.5, %v947
    %v1619 = vadd.f32 %v1618, 1.0
    %v1620 = vmul.f32 %v1619, %v947
    %v1621 = vand.u32 2147483647, %v947
    %vm1622 = vcmp.lt.f32.partialorder %v1621, 0.0004427343
    %v1623 = vsel %vm1622, %v1620, %v1617
    %v1624 = vadd.f32 %v949, 1.0
    %v1625 = vlog2.pop %v1624
    %v1626 = vmul.f32 %v1625, 0.6931472
    %v1627 = vmul.f32 -0.5, %v949
    %v1628 = vadd.f32 %v1627, 1.0
    %v1629 = vmul.f32 %v1628, %v949
    %v1630 = vand.u32 2147483647, %v949
    %vm1631 = vcmp.lt.f32.partialorder %v1630, 0.0004427343
    %v1632 = vsel %vm1631, %v1629, %v1626
    %v1633 = vadd.f32 %v951, 1.0
    %v1634 = vlog2.pop %v1633
    %v1635 = vmul.f32 %v1634, 0.6931472
    %v1636 = vmul.f32 -0.5, %v951
    %v1637 = vadd.f32 %v1636, 1.0
    %v1638 = vmul.f32 %v1637, %v951
    %v1639 = vand.u32 2147483647, %v951
    %vm1640 = vcmp.lt.f32.partialorder %v1639, 0.0004427343
    %v1641 = vsel %vm1640, %v1638, %v1635
    %v1642 = vadd.f32 %v953, 1.0
    %v1643 = vlog2.pop %v1642
    %v1644 = vmul.f32 %v1643, 0.6931472
    %v1645 = vmul.f32 -0.5, %v953
    %v1646 = vadd.f32 %v1645, 1.0
    %v1647 = vmul.f32 %v1646, %v953
    %v1648 = vand.u32 2147483647, %v953
    %vm1649 = vcmp.lt.f32.partialorder %v1648, 0.0004427343
    %v1650 = vsel %vm1649, %v1647, %v1644
    %v1651 = vadd.f32 %v955, 1.0
    %v1652 = vlog2.pop %v1651
    %v1653 = vmul.f32 %v1652, 0.6931472
    %v1654 = vmul.f32 -0.5, %v955
    %v1655 = vadd.f32 %v1654, 1.0
    %v1656 = vmul.f32 %v1655, %v955
    %v1657 = vand.u32 2147483647, %v955
    %vm1658 = vcmp.lt.f32.partialorder %v1657, 0.0004427343
    %v1659 = vsel %vm1658, %v1656, %v1653
    %v1660 = vadd.f32 %v957, 1.0
    %v1661 = vlog2.pop %v1660
    %v1662 = vmul.f32 %v1661, 0.6931472
    %v1663 = vmul.f32 -0.5, %v957
    %v1664 = vadd.f32 %v1663, 1.0
    %v1665 = vmul.f32 %v1664, %v957
    %v1666 = vand.u32 2147483647, %v957
    %vm1667 = vcmp.lt.f32.partialorder %v1666, 0.0004427343
    %v1668 = vsel %vm1667, %v1665, %v1662
    %v1669 = vadd.f32 %v959, 1.0
    %v1670 = vlog2.pop %v1669
    %v1671 = vmul.f32 %v1670, 0.6931472
    %v1672 = vmul.f32 -0.5, %v959
    %v1673 = vadd.f32 %v1672, 1.0
    %v1674 = vmul.f32 %v1673, %v959
    %v1675 = vand.u32 2147483647, %v959
    %vm1676 = vcmp.lt.f32.partialorder %v1675, 0.0004427343
    %v1677 = vsel %vm1676, %v1674, %v1671
    %v1678 = vadd.f32 %v961, 1.0
    %v1679 = vlog2.pop %v1678
    %v1680 = vmul.f32 %v1679, 0.6931472
    %v1681 = vmul.f32 -0.5, %v961
    %v1682 = vadd.f32 %v1681, 1.0
    %v1683 = vmul.f32 %v1682, %v961
    %v1684 = vand.u32 2147483647, %v961
    %vm1685 = vcmp.lt.f32.partialorder %v1684, 0.0004427343
    %v1686 = vsel %vm1685, %v1683, %v1680
    %v1687 = vadd.f32 %v963, 1.0
    %v1688 = vlog2.pop %v1687
    %v1689 = vmul.f32 %v1688, 0.6931472
    %v1690 = vmul.f32 -0.5, %v963
    %v1691 = vadd.f32 %v1690, 1.0
    %v1692 = vmul.f32 %v1691, %v963
    %v1693 = vand.u32 2147483647, %v963
    %vm1694 = vcmp.lt.f32.partialorder %v1693, 0.0004427343
    %v1695 = vsel %vm1694, %v1692, %v1689
    %v1696 = vadd.f32 %v965, 1.0
    %v1697 = vlog2.pop %v1696
    %v1698 = vmul.f32 %v1697, 0.6931472
    %v1699 = vmul.f32 -0.5, %v965
    %v1700 = vadd.f32 %v1699, 1.0
    %v1701 = vmul.f32 %v1700, %v965
    %v1702 = vand.u32 2147483647, %v965
    %vm1703 = vcmp.lt.f32.partialorder %v1702, 0.0004427343
    %v1704 = vsel %vm1703, %v1701, %v1698
    %v1705 = vadd.f32 %v967, 1.0
    %v1706 = vlog2.pop %v1705
    %v1707 = vmul.f32 %v1706, 0.6931472
    %v1708 = vmul.f32 -0.5, %v967
    %v1709 = vadd.f32 %v1708, 1.0
    %v1710 = vmul.f32 %v1709, %v967
    %v1711 = vand.u32 2147483647, %v967
    %vm1712 = vcmp.lt.f32.partialorder %v1711, 0.0004427343
    %v1713 = vsel %vm1712, %v1710, %v1707
    %v1714 = vadd.f32 %v969, 1.0
    %v1715 = vlog2.pop %v1714
    %v1716 = vmul.f32 %v1715, 0.6931472
    %v1717 = vmul.f32 -0.5, %v969
    %v1718 = vadd.f32 %v1717, 1.0
    %v1719 = vmul.f32 %v1718, %v969
    %v1720 = vand.u32 2147483647, %v969
    %vm1721 = vcmp.lt.f32.partialorder %v1720, 0.0004427343
    %v1722 = vsel %vm1721, %v1719, %v1716
    %v1723 = vadd.f32 %v971, 1.0
    %v1724 = vlog2.pop %v1723
    %v1725 = vmul.f32 %v1724, 0.6931472
    %v1726 = vmul.f32 -0.5, %v971
    %v1727 = vadd.f32 %v1726, 1.0
    %v1728 = vmul.f32 %v1727, %v971
    %v1729 = vand.u32 2147483647, %v971
    %vm1730 = vcmp.lt.f32.partialorder %v1729, 0.0004427343
    %v1731 = vsel %vm1730, %v1728, %v1725
    %v1732 = vadd.f32 %v973, 1.0
    %v1733 = vlog2.pop %v1732
    %v1734 = vmul.f32 %v1733, 0.6931472
    %v1735 = vmul.f32 -0.5, %v973
    %v1736 = vadd.f32 %v1735, 1.0
    %v1737 = vmul.f32 %v1736, %v973
    %v1738 = vand.u32 2147483647, %v973
    %vm1739 = vcmp.lt.f32.partialorder %v1738, 0.0004427343
    %v1740 = vsel %vm1739, %v1737, %v1734
    %v1741 = vadd.f32 %v975, 1.0
    %v1742 = vlog2.pop %v1741
    %v1743 = vmul.f32 %v1742, 0.6931472
    %v1744 = vmul.f32 -0.5, %v975
    %v1745 = vadd.f32 %v1744, 1.0
    %v1746 = vmul.f32 %v1745, %v975
    %v1747 = vand.u32 2147483647, %v975
    %vm1748 = vcmp.lt.f32.partialorder %v1747, 0.0004427343
    %v1749 = vsel %vm1748, %v1746, %v1743
    %v1750 = vmax.f32 %v26, 0.0
    %v1751 = vmax.f32 %v27, 0.0
    %v1752 = vmax.f32 %v28, 0.0
    %v1753 = vmax.f32 %v29, 0.0
    %v1754 = vmax.f32 %v30, 0.0
    %v1755 = vmax.f32 %v31, 0.0
    %v1756 = vmax.f32 %v32, 0.0
    %v1757 = vmax.f32 %v33, 0.0
    %v1758 = vmax.f32 %v34, 0.0
    %v1759 = vmax.f32 %v35, 0.0
    %v1760 = vmax.f32 %v36, 0.0
    %v1761 = vmax.f32 %v37, 0.0
    %v1762 = vmax.f32 %v38, 0.0
    %v1763 = vmax.f32 %v39, 0.0
    %v1764 = vmax.f32 %v40, 0.0
    %v1765 = vmax.f32 %v41, 0.0
    %v1766 = vmax.f32 %v42, 0.0
    %v1767 = vmax.f32 %v43, 0.0
    %v1768 = vmax.f32 %v44, 0.0
    %v1769 = vmax.f32 %v45, 0.0
    %v1770 = vmax.f32 %v46, 0.0
    %v1771 = vmax.f32 %v47, 0.0
    %v1772 = vmax.f32 %v48, 0.0
    %v1773 = vmax.f32 %v49, 0.0
    %v1774 = vmax.f32 %v50, 0.0
    %v1775 = vmax.f32 %v51, 0.0
    %v1776 = vmax.f32 %v52, 0.0
    %v1777 = vmax.f32 %v53, 0.0
    %v1778 = vmax.f32 %v54, 0.0
    %v1779 = vmax.f32 %v55, 0.0
    %v1780 = vmax.f32 %v56, 0.0
    %v1781 = vmax.f32 %v57, 0.0
    %v1782 = vmax.f32 %v58, 0.0
    %v1783 = vmax.f32 %v59, 0.0
    %v1784 = vmax.f32 %v60, 0.0
    %v1785 = vmax.f32 %v61, 0.0
    %v1786 = vmax.f32 %v62, 0.0
    %v1787 = vmax.f32 %v63, 0.0
    %v1788 = vmax.f32 %v64, 0.0
    %v1789 = vmax.f32 %v65, 0.0
    %v1790 = vmax.f32 %v66, 0.0
    %v1791 = vmax.f32 %v67, 0.0
    %v1792 = vmax.f32 %v68, 0.0
    %v1793 = vmax.f32 %v69, 0.0
    %v1794 = vmax.f32 %v70, 0.0
    %v1795 = vmax.f32 %v71, 0.0
    %v1796 = vmax.f32 %v72, 0.0
    %v1797 = vmax.f32 %v73, 0.0
    %v1798 = vmax.f32 %v74, 0.0
    %v1799 = vmax.f32 %v75, 0.0
    %v1800 = vmax.f32 %v76, 0.0
    %v1801 = vmax.f32 %v77, 0.0
    %v1802 = vmax.f32 %v78, 0.0
    %v1803 = vmax.f32 %v79, 0.0
    %v1804 = vmax.f32 %v80, 0.0
    %v1805 = vmax.f32 %v81, 0.0
    %v1806 = vmax.f32 %v82, 0.0
    %v1807 = vmax.f32 %v83, 0.0
    %v1808 = vmax.f32 %v84, 0.0
    %v1809 = vmax.f32 %v85, 0.0
    %v1810 = vmax.f32 %v86, 0.0
    %v1811 = vmax.f32 %v87, 0.0
    %v1812 = vmax.f32 %v88, 0.0
    %v1813 = vmax.f32 %v89, 0.0
    %v1814 = vmax.f32 %v90, 0.0
    %v1815 = vmax.f32 %v91, 0.0
    %v1816 = vmax.f32 %v92, 0.0
    %v1817 = vmax.f32 %v93, 0.0
    %v1818 = vmax.f32 %v94, 0.0
    %v1819 = vmax.f32 %v95, 0.0
    %v1820 = vmax.f32 %v96, 0.0
    %v1821 = vmax.f32 %v97, 0.0
    %v1822 = vmax.f32 %v98, 0.0
    %v1823 = vmax.f32 %v99, 0.0
    %v1824 = vmax.f32 %v100, 0.0
    %v1825 = vmax.f32 %v101, 0.0
    %v1826 = vmax.f32 %v102, 0.0
    %v1827 = vmax.f32 %v103, 0.0
    %v1828 = vmax.f32 %v104, 0.0
    %v1829 = vmax.f32 %v105, 0.0
    %v1830 = vmax.f32 %v106, 0.0
    %v1831 = vmax.f32 %v107, 0.0
    %v1832 = vmax.f32 %v108, 0.0
    %v1833 = vmax.f32 %v109, 0.0
    %v1834 = vmax.f32 %v110, 0.0
    %v1835 = vmax.f32 %v111, 0.0
    %v1836 = vmul.f32 %v26, %v546
    %v1837 = vmul.f32 %v27, %v547
    %v1838 = vmul.f32 %v28, %v548
    %v1839 = vmul.f32 %v29, %v549
    %v1840 = vmul.f32 %v30, %v550
    %v1841 = vmul.f32 %v31, %v551
    %v1842 = vmul.f32 %v32, %v552
    %v1843 = vmul.f32 %v33, %v553
    %v1844 = vmul.f32 %v34, %v554
    %v1845 = vmul.f32 %v35, %v555
    %v1846 = vmul.f32 %v36, %v556
    %v1847 = vmul.f32 %v37, %v557
    %v1848 = vmul.f32 %v38, %v558
    %v1849 = vmul.f32 %v39, %v559
    %v1850 = vmul.f32 %v40, %v560
    %v1851 = vmul.f32 %v41, %v561
    %v1852 = vmul.f32 %v42, %v562
    %v1853 = vmul.f32 %v43, %v563
    %v1854 = vmul.f32 %v44, %v564
    %v1855 = vmul.f32 %v45, %v565
    %v1856 = vmul.f32 %v46, %v566
    %v1857 = vmul.f32 %v47, %v567
    %v1858 = vmul.f32 %v48, %v568
    %v1859 = vmul.f32 %v49, %v569
    %v1860 = vmul.f32 %v50, %v570
    %v1861 = vmul.f32 %v51, %v571
    %v1862 = vmul.f32 %v52, %v572
    %v1863 = vmul.f32 %v53, %v573
    %v1864 = vmul.f32 %v54, %v574
    %v1865 = vmul.f32 %v55, %v575
    %v1866 = vmul.f32 %v56, %v576
    %v1867 = vmul.f32 %v57, %v577
    %v1868 = vmul.f32 %v58, %v578
    %v1869 = vmul.f32 %v59, %v579
    %v1870 = vmul.f32 %v60, %v580
    %v1871 = vmul.f32 %v61, %v581
    %v1872 = vmul.f32 %v62, %v582
    %v1873 = vmul.f32 %v63, %v583
    %v1874 = vmul.f32 %v64, %v584
    %v1875 = vmul.f32 %v65, %v585
    %v1876 = vmul.f32 %v66, %v586
    %v1877 = vmul.f32 %v67, %v587
    %v1878 = vmul.f32 %v68, %v588
    %v1879 = vmul.f32 %v69, %v589
    %v1880 = vmul.f32 %v70, %v590
    %v1881 = vmul.f32 %v71, %v591
    %v1882 = vmul.f32 %v72, %v592
    %v1883 = vmul.f32 %v73, %v593
    %v1884 = vmul.f32 %v74, %v594
    %v1885 = vmul.f32 %v75, %v595
    %v1886 = vmul.f32 %v76, %v596
    %v1887 = vmul.f32 %v77, %v597
    %v1888 = vmul.f32 %v78, %v598
    %v1889 = vmul.f32 %v79, %v599
    %v1890 = vmul.f32 %v80, %v600
    %v1891 = vmul.f32 %v81, %v601
    %v1892 = vmul.f32 %v82, %v602
    %v1893 = vmul.f32 %v83, %v603
    %v1894 = vmul.f32 %v84, %v604
    %v1895 = vmul.f32 %v85, %v605
    %v1896 = vmul.f32 %v86, %v606
    %v1897 = vmul.f32 %v87, %v607
    %v1898 = vmul.f32 %v88, %v608
    %v1899 = vmul.f32 %v89, %v609
    %v1900 = vmul.f32 %v90, %v610
    %v1901 = vmul.f32 %v91, %v611
    %v1902 = vmul.f32 %v92, %v612
    %v1903 = vmul.f32 %v93, %v613
    %v1904 = vmul.f32 %v94, %v614
    %v1905 = vmul.f32 %v95, %v615
    %v1906 = vmul.f32 %v96, %v616
    %v1907 = vmul.f32 %v97, %v617
    %v1908 = vmul.f32 %v98, %v618
    %v1909 = vmul.f32 %v99, %v619
    %v1910 = vmul.f32 %v100, %v620
    %v1911 = vmul.f32 %v101, %v621
    %v1912 = vmul.f32 %v102, %v622
    %v1913 = vmul.f32 %v103, %v623
    %v1914 = vmul.f32 %v104, %v624
    %v1915 = vmul.f32 %v105, %v625
    %v1916 = vmul.f32 %v106, %v626
    %v1917 = vmul.f32 %v107, %v627
    %v1918 = vmul.f32 %v108, %v628
    %v1919 = vmul.f32 %v109, %v629
    %v1920 = vmul.f32 %v110, %v630
    %v1921 = vmul.f32 %v111, %v631
    %v1922 = vsub.f32 %v1750, %v1836
    %v1923 = vsub.f32 %v1751, %v1837
    %v1924 = vsub.f32 %v1752, %v1838
    %v1925 = vsub.f32 %v1753, %v1839
    %v1926 = vsub.f32 %v1754, %v1840
    %v1927 = vsub.f32 %v1755, %v1841
    %v1928 = vsub.f32 %v1756, %v1842
    %v1929 = vsub.f32 %v1757, %v1843
    %v1930 = vsub.f32 %v1758, %v1844
    %v1931 = vsub.f32 %v1759, %v1845
    %v1932 = vsub.f32 %v1760, %v1846
    %v1933 = vsub.f32 %v1761, %v1847
    %v1934 = vsub.f32 %v1762, %v1848
    %v1935 = vsub.f32 %v1763, %v1849
    %v1936 = vsub.f32 %v1764, %v1850
    %v1937 = vsub.f32 %v1765, %v1851
    %v1938 = vsub.f32 %v1766, %v1852
    %v1939 = vsub.f32 %v1767, %v1853
    %v1940 = vsub.f32 %v1768, %v1854
    %v1941 = vsub.f32 %v1769, %v1855
    %v1942 = vsub.f32 %v1770, %v1856
    %v1943 = vsub.f32 %v1771, %v1857
    %v1944 = vsub.f32 %v1772, %v1858
    %v1945 = vsub.f32 %v1773, %v1859
    %v1946 = vsub.f32 %v1774, %v1860
    %v1947 = vsub.f32 %v1775, %v1861
    %v1948 = vsub.f32 %v1776, %v1862
    %v1949 = vsub.f32 %v1777, %v1863
    %v1950 = vsub.f32 %v1778, %v1864
    %v1951 = vsub.f32 %v1779, %v1865
    %v1952 = vsub.f32 %v1780, %v1866
    %v1953 = vsub.f32 %v1781, %v1867
    %v1954 = vsub.f32 %v1782, %v1868
    %v1955 = vsub.f32 %v1783, %v1869
    %v1956 = vsub.f32 %v1784, %v1870
    %v1957 = vsub.f32 %v1785, %v1871
    %v1958 = vsub.f32 %v1786, %v1872
    %v1959 = vsub.f32 %v1787, %v1873
    %v1960 = vsub.f32 %v1788, %v1874
    %v1961 = vsub.f32 %v1789, %v1875
    %v1962 = vsub.f32 %v1790, %v1876
    %v1963 = vsub.f32 %v1791, %v1877
    %v1964 = vsub.f32 %v1792, %v1878
    %v1965 = vsub.f32 %v1793, %v1879
    %v1966 = vsub.f32 %v1794, %v1880
    %v1967 = vsub.f32 %v1795, %v1881
    %v1968 = vsub.f32 %v1796, %v1882
    %v1969 = vsub.f32 %v1797, %v1883
    %v1970 = vsub.f32 %v1798, %v1884
    %v1971 = vsub.f32 %v1799, %v1885
    %v1972 = vsub.f32 %v1800, %v1886
    %v1973 = vsub.f32 %v1801, %v1887
    %v1974 = vsub.f32 %v1802, %v1888
    %v1975 = vsub.f32 %v1803, %v1889
    %v1976 = vsub.f32 %v1804, %v1890
    %v1977 = vsub.f32 %v1805, %v1891
    %v1978 = vsub.f32 %v1806, %v1892
    %v1979 = vsub.f32 %v1807, %v1893
    %v1980 = vsub.f32 %v1808, %v1894
    %v1981 = vsub.f32 %v1809, %v1895
    %v1982 = vsub.f32 %v1810, %v1896
    %v1983 = vsub.f32 %v1811, %v1897
    %v1984 = vsub.f32 %v1812, %v1898
    %v1985 = vsub.f32 %v1813, %v1899
    %v1986 = vsub.f32 %v1814, %v1900
    %v1987 = vsub.f32 %v1815, %v1901
    %v1988 = vsub.f32 %v1816, %v1902
    %v1989 = vsub.f32 %v1817, %v1903
    %v1990 = vsub.f32 %v1818, %v1904
    %v1991 = vsub.f32 %v1819, %v1905
    %v1992 = vsub.f32 %v1820, %v1906
    %v1993 = vsub.f32 %v1821, %v1907
    %v1994 = vsub.f32 %v1822, %v1908
    %v1995 = vsub.f32 %v1823, %v1909
    %v1996 = vsub.f32 %v1824, %v1910
    %v1997 = vsub.f32 %v1825, %v1911
    %v1998 = vsub.f32 %v1826, %v1912
    %v1999 = vsub.f32 %v1827, %v1913
    %v2000 = vsub.f32 %v1828, %v1914
    %v2001 = vsub.f32 %v1829, %v1915
    %v2002 = vsub.f32 %v1830, %v1916
    %v2003 = vsub.f32 %v1831, %v1917
    %v2004 = vsub.f32 %v1832, %v1918
    %v2005 = vsub.f32 %v1833, %v1919
    %v2006 = vsub.f32 %v1834, %v1920
    %v2007 = vsub.f32 %v1835, %v1921
    %v2008 = vadd.f32 %v1922, %v984
    %v2009 = vadd.f32 %v1923, %v993
    %v2010 = vadd.f32 %v1924, %v1002
    %v2011 = vadd.f32 %v1925, %v1011
    %v2012 = vadd.f32 %v1926, %v1020
    %v2013 = vadd.f32 %v1927, %v1029
    %v2014 = vadd.f32 %v1928, %v1038
    %v2015 = vadd.f32 %v1929, %v1047
    %v2016 = vadd.f32 %v1930, %v1056
    %v2017 = vadd.f32 %v1931, %v1065
    %v2018 = vadd.f32 %v1932, %v1074
    %v2019 = vadd.f32 %v1933, %v1083
    %v2020 = vadd.f32 %v1934, %v1092
    %v2021 = vadd.f32 %v1935, %v1101
    %v2022 = vadd.f32 %v1936, %v1110
    %v2023 = vadd.f32 %v1937, %v1119
    %v2024 = vadd.f32 %v1938, %v1128
    %v2025 = vadd.f32 %v1939, %v1137
    %v2026 = vadd.f32 %v1940, %v1146
    %v2027 = vadd.f32 %v1941, %v1155
    %v2028 = vadd.f32 %v1942, %v1164
    %v2029 = vadd.f32 %v1943, %v1173
    %v2030 = vadd.f32 %v1944, %v1182
    %v2031 = vadd.f32 %v1945, %v1191
    %v2032 = vadd.f32 %v1946, %v1200
    %v2033 = vadd.f32 %v1947, %v1209
    %v2034 = vadd.f32 %v1948, %v1218
    %v2035 = vadd.f32 %v1949, %v1227
    %v2036 = vadd.f32 %v1950, %v1236
    %v2037 = vadd.f32 %v1951, %v1245
    %v2038 = vadd.f32 %v1952, %v1254
    %v2039 = vadd.f32 %v1953, %v1263
    %v2040 = vadd.f32 %v1954, %v1272
    %v2041 = vadd.f32 %v1955, %v1281
    %v2042 = vadd.f32 %v1956, %v1290
    %v2043 = vadd.f32 %v1957, %v1299
    %v2044 = vadd.f32 %v1958, %v1308
    %v2045 = vadd.f32 %v1959, %v1317
    %v2046 = vadd.f32 %v1960, %v1326
    %v2047 = vadd.f32 %v1961, %v1335
    %v2048 = vadd.f32 %v1962, %v1344
    %v2049 = vadd.f32 %v1963, %v1353
    %v2050 = vadd.f32 %v1964, %v1362
    %v2051 = vadd.f32 %v1965, %v1371
    %v2052 = vadd.f32 %v1966, %v1380
    %v2053 = vadd.f32 %v1967, %v1389
    %v2054 = vadd.f32 %v1968, %v1398
    %v2055 = vadd.f32 %v1969, %v1407
    %v2056 = vadd.f32 %v1970, %v1416
    %v2057 = vadd.f32 %v1971, %v1425
    %v2058 = vadd.f32 %v1972, %v1434
    %v2059 = vadd.f32 %v1973, %v1443
    %v2060 = vadd.f32 %v1974, %v1452
    %v2061 = vadd.f32 %v1975, %v1461
    %v2062 = vadd.f32 %v1976, %v1470
    %v2063 = vadd.f32 %v1977, %v1479
    %v2064 = vadd.f32 %v1978, %v1488
    %v2065 = vadd.f32 %v1979, %v1497
    %v2066 = vadd.f32 %v1980, %v1506
    %v2067 = vadd.f32 %v1981, %v1515
    %v2068 = vadd.f32 %v1982, %v1524
    %v2069 = vadd.f32 %v1983, %v1533
    %v2070 = vadd.f32 %v1984, %v1542
    %v2071 = vadd.f32 %v1985, %v1551
    %v2072 = vadd.f32 %v1986, %v1560
    %v2073 = vadd.f32 %v1987, %v1569
    %v2074 = vadd.f32 %v1988, %v1578
    %v2075 = vadd.f32 %v1989, %v1587
    %v2076 = vadd.f32 %v1990, %v1596
    %v2077 = vadd.f32 %v1991, %v1605
    %v2078 = vadd.f32 %v1992, %v1614
    %v2079 = vadd.f32 %v1993, %v1623
    %v2080 = vadd.f32 %v1994, %v1632
    %v2081 = vadd.f32 %v1995, %v1641
    %v2082 = vadd.f32 %v1996, %v1650
    %v2083 = vadd.f32 %v1997, %v1659
    %v2084 = vadd.f32 %v1998, %v1668
    %v2085 = vadd.f32 %v1999, %v1677
    %v2086 = vadd.f32 %v2000, %v1686
    %v2087 = vadd.f32 %v2001, %v1695
    %v2088 = vadd.f32 %v2002, %v1704
    %v2089 = vadd.f32 %v2003, %v1713
    %v2090 = vadd.f32 %v2004, %v1722
    %v2091 = vadd.f32 %v2005, %v1731
    %v2092 = vadd.f32 %v2006, %v1740
    %v2093 = vadd.f32 %v2007, %v1749
    %v2094 = vsub.f32 0.0, %v26
    %v2095 = vsub.f32 0.0, %v27
    %v2096 = vsub.f32 0.0, %v28
    %v2097 = vsub.f32 0.0, %v29
    %v2098 = vsub.f32 0.0, %v30
    %v2099 = vsub.f32 0.0, %v31
    %v2100 = vsub.f32 0.0, %v32
    %v2101 = vsub.f32 0.0, %v33
    %v2102 = vsub.f32 0.0, %v34
    %v2103 = vsub.f32 0.0, %v35
    %v2104 = vsub.f32 0.0, %v36
    %v2105 = vsub.f32 0.0, %v37
    %v2106 = vsub.f32 0.0, %v38
    %v2107 = vsub.f32 0.0, %v39
    %v2108 = vsub.f32 0.0, %v40
    %v2109 = vsub.f32 0.0, %v41
    %v2110 = vsub.f32 0.0, %v42
    %v2111 = vsub.f32 0.0, %v43
    %v2112 = vsub.f32 0.0, %v44
    %v2113 = vsub.f32 0.0, %v45
    %v2114 = vsub.f32 0.0, %v46
    %v2115 = vsub.f32 0.0, %v47
    %v2116 = vsub.f32 0.0, %v48
    %v2117 = vsub.f32 0.0, %v49
    %v2118 = vsub.f32 0.0, %v50
    %v2119 = vsub.f32 0.0, %v51
    %v2120 = vsub.f32 0.0, %v52
    %v2121 = vsub.f32 0.0, %v53
    %v2122 = vsub.f32 0.0, %v54
    %v2123 = vsub.f32 0.0, %v55
    %v2124 = vsub.f32 0.0, %v56
    %v2125 = vsub.f32 0.0, %v57
    %v2126 = vsub.f32 0.0, %v58
    %v2127 = vsub.f32 0.0, %v59
    %v2128 = vsub.f32 0.0, %v60
    %v2129 = vsub.f32 0.0, %v61
    %v2130 = vsub.f32 0.0, %v62
    %v2131 = vsub.f32 0.0, %v63
    %v2132 = vsub.f32 0.0, %v64
    %v2133 = vsub.f32 0.0, %v65
    %v2134 = vsub.f32 0.0, %v66
    %v2135 = vsub.f32 0.0, %v67
    %v2136 = vsub.f32 0.0, %v68
    %v2137 = vsub.f32 0.0, %v69
    %v2138 = vsub.f32 0.0, %v70
    %v2139 = vsub.f32 0.0, %v71
    %v2140 = vsub.f32 0.0, %v72
    %v2141 = vsub.f32 0.0, %v73
    %v2142 = vsub.f32 0.0, %v74
    %v2143 = vsub.f32 0.0, %v75
    %v2144 = vsub.f32 0.0, %v76
    %v2145 = vsub.f32 0.0, %v77
    %v2146 = vsub.f32 0.0, %v78
    %v2147 = vsub.f32 0.0, %v79
    %v2148 = vsub.f32 0.0, %v80
    %v2149 = vsub.f32 0.0, %v81
    %v2150 = vsub.f32 0.0, %v82
    %v2151 = vsub.f32 0.0, %v83
    %v2152 = vsub.f32 0.0, %v84
    %v2153 = vsub.f32 0.0, %v85
    %v2154 = vsub.f32 0.0, %v86
    %v2155 = vsub.f32 0.0, %v87
    %v2156 = vsub.f32 0.0, %v88
    %v2157 = vsub.f32 0.0, %v89
    %v2158 = vsub.f32 0.0, %v90
    %v2159 = vsub.f32 0.0, %v91
    %v2160 = vsub.f32 0.0, %v92
    %v2161 = vsub.f32 0.0, %v93
    %v2162 = vsub.f32 0.0, %v94
    %v2163 = vsub.f32 0.0, %v95
    %v2164 = vsub.f32 0.0, %v96
    %v2165 = vsub.f32 0.0, %v97
    %v2166 = vsub.f32 0.0, %v98
    %v2167 = vsub.f32 0.0, %v99
    %v2168 = vsub.f32 0.0, %v100
    %v2169 = vsub.f32 0.0, %v101
    %v2170 = vsub.f32 0.0, %v102
    %v2171 = vsub.f32 0.0, %v103
    %v2172 = vsub.f32 0.0, %v104
    %v2173 = vsub.f32 0.0, %v105
    %v2174 = vsub.f32 0.0, %v106
    %v2175 = vsub.f32 0.0, %v107
    %v2176 = vsub.f32 0.0, %v108
    %v2177 = vsub.f32 0.0, %v109
    %v2178 = vsub.f32 0.0, %v110
    %v2179 = vsub.f32 0.0, %v111
    %v2180 = vmax.f32 %v2094, 0.0
    %v2181 = vmax.f32 %v2095, 0.0
    %v2182 = vmax.f32 %v2096, 0.0
    %v2183 = vmax.f32 %v2097, 0.0
    %v2184 = vmax.f32 %v2098, 0.0
    %v2185 = vmax.f32 %v2099, 0.0
    %v2186 = vmax.f32 %v2100, 0.0
    %v2187 = vmax.f32 %v2101, 0.0
    %v2188 = vmax.f32 %v2102, 0.0
    %v2189 = vmax.f32 %v2103, 0.0
    %v2190 = vmax.f32 %v2104, 0.0
    %v2191 = vmax.f32 %v2105, 0.0
    %v2192 = vmax.f32 %v2106, 0.0
    %v2193 = vmax.f32 %v2107, 0.0
    %v2194 = vmax.f32 %v2108, 0.0
    %v2195 = vmax.f32 %v2109, 0.0
    %v2196 = vmax.f32 %v2110, 0.0
    %v2197 = vmax.f32 %v2111, 0.0
    %v2198 = vmax.f32 %v2112, 0.0
    %v2199 = vmax.f32 %v2113, 0.0
    %v2200 = vmax.f32 %v2114, 0.0
    %v2201 = vmax.f32 %v2115, 0.0
    %v2202 = vmax.f32 %v2116, 0.0
    %v2203 = vmax.f32 %v2117, 0.0
    %v2204 = vmax.f32 %v2118, 0.0
    %v2205 = vmax.f32 %v2119, 0.0
    %v2206 = vmax.f32 %v2120, 0.0
    %v2207 = vmax.f32 %v2121, 0.0
    %v2208 = vmax.f32 %v2122, 0.0
    %v2209 = vmax.f32 %v2123, 0.0
    %v2210 = vmax.f32 %v2124, 0.0
    %v2211 = vmax.f32 %v2125, 0.0
    %v2212 = vmax.f32 %v2126, 0.0
    %v2213 = vmax.f32 %v2127, 0.0
    %v2214 = vmax.f32 %v2128, 0.0
    %v2215 = vmax.f32 %v2129, 0.0
    %v2216 = vmax.f32 %v2130, 0.0
    %v2217 = vmax.f32 %v2131, 0.0
    %v2218 = vmax.f32 %v2132, 0.0
    %v2219 = vmax.f32 %v2133, 0.0
    %v2220 = vmax.f32 %v2134, 0.0
    %v2221 = vmax.f32 %v2135, 0.0
    %v2222 = vmax.f32 %v2136, 0.0
    %v2223 = vmax.f32 %v2137, 0.0
    %v2224 = vmax.f32 %v2138, 0.0
    %v2225 = vmax.f32 %v2139, 0.0
    %v2226 = vmax.f32 %v2140, 0.0
    %v2227 = vmax.f32 %v2141, 0.0
    %v2228 = vmax.f32 %v2142, 0.0
    %v2229 = vmax.f32 %v2143, 0.0
    %v2230 = vmax.f32 %v2144, 0.0
    %v2231 = vmax.f32 %v2145, 0.0
    %v2232 = vmax.f32 %v2146, 0.0
    %v2233 = vmax.f32 %v2147, 0.0
    %v2234 = vmax.f32 %v2148, 0.0
    %v2235 = vmax.f32 %v2149, 0.0
    %v2236 = vmax.f32 %v2150, 0.0
    %v2237 = vmax.f32 %v2151, 0.0
    %v2238 = vmax.f32 %v2152, 0.0
    %v2239 = vmax.f32 %v2153, 0.0
    %v2240 = vmax.f32 %v2154, 0.0
    %v2241 = vmax.f32 %v2155, 0.0
    %v2242 = vmax.f32 %v2156, 0.0
    %v2243 = vmax.f32 %v2157, 0.0
    %v2244 = vmax.f32 %v2158, 0.0
    %v2245 = vmax.f32 %v2159, 0.0
    %v2246 = vmax.f32 %v2160, 0.0
    %v2247 = vmax.f32 %v2161, 0.0
    %v2248 = vmax.f32 %v2162, 0.0
    %v2249 = vmax.f32 %v2163, 0.0
    %v2250 = vmax.f32 %v2164, 0.0
    %v2251 = vmax.f32 %v2165, 0.0
    %v2252 = vmax.f32 %v2166, 0.0
    %v2253 = vmax.f32 %v2167, 0.0
    %v2254 = vmax.f32 %v2168, 0.0
    %v2255 = vmax.f32 %v2169, 0.0
    %v2256 = vmax.f32 %v2170, 0.0
    %v2257 = vmax.f32 %v2171, 0.0
    %v2258 = vmax.f32 %v2172, 0.0
    %v2259 = vmax.f32 %v2173, 0.0
    %v2260 = vmax.f32 %v2174, 0.0
    %v2261 = vmax.f32 %v2175, 0.0
    %v2262 = vmax.f32 %v2176, 0.0
    %v2263 = vmax.f32 %v2177, 0.0
    %v2264 = vmax.f32 %v2178, 0.0
    %v2265 = vmax.f32 %v2179, 0.0
    %v2266 = vadd.f32 %v2180, %v984
    %v2267 = vadd.f32 %v2181, %v993
    %v2268 = vadd.f32 %v2182, %v1002
    %v2269 = vadd.f32 %v2183, %v1011
    %v2270 = vadd.f32 %v2184, %v1020
    %v2271 = vadd.f32 %v2185, %v1029
    %v2272 = vadd.f32 %v2186, %v1038
    %v2273 = vadd.f32 %v2187, %v1047
    %v2274 = vadd.f32 %v2188, %v1056
    %v2275 = vadd.f32 %v2189, %v1065
    %v2276 = vadd.f32 %v2190, %v1074
    %v2277 = vadd.f32 %v2191, %v1083
    %v2278 = vadd.f32 %v2192, %v1092
    %v2279 = vadd.f32 %v2193, %v1101
    %v2280 = vadd.f32 %v2194, %v1110
    %v2281 = vadd.f32 %v2195, %v1119
    %v2282 = vadd.f32 %v2196, %v1128
    %v2283 = vadd.f32 %v2197, %v1137
    %v2284 = vadd.f32 %v2198, %v1146
    %v2285 = vadd.f32 %v2199, %v1155
    %v2286 = vadd.f32 %v2200, %v1164
    %v2287 = vadd.f32 %v2201, %v1173
    %v2288 = vadd.f32 %v2202, %v1182
    %v2289 = vadd.f32 %v2203, %v1191
    %v2290 = vadd.f32 %v2204, %v1200
    %v2291 = vadd.f32 %v2205, %v1209
    %v2292 = vadd.f32 %v2206, %v1218
    %v2293 = vadd.f32 %v2207, %v1227
    %v2294 = vadd.f32 %v2208, %v1236
    %v2295 = vadd.f32 %v2209, %v1245
    %v2296 = vadd.f32 %v2210, %v1254
    %v2297 = vadd.f32 %v2211, %v1263
    %v2298 = vadd.f32 %v2212, %v1272
    %v2299 = vadd.f32 %v2213, %v1281
    %v2300 = vadd.f32 %v2214, %v1290
    %v2301 = vadd.f32 %v2215, %v1299
    %v2302 = vadd.f32 %v2216, %v1308
    %v2303 = vadd.f32 %v2217, %v1317
    %v2304 = vadd.f32 %v2218, %v1326
    %v2305 = vadd.f32 %v2219, %v1335
    %v2306 = vadd.f32 %v2220, %v1344
    %v2307 = vadd.f32 %v2221, %v1353
    %v2308 = vadd.f32 %v2222, %v1362
    %v2309 = vadd.f32 %v2223, %v1371
    %v2310 = vadd.f32 %v2224, %v1380
    %v2311 = vadd.f32 %v2225, %v1389
    %v2312 = vadd.f32 %v2226, %v1398
    %v2313 = vadd.f32 %v2227, %v1407
    %v2314 = vadd.f32 %v2228, %v1416
    %v2315 = vadd.f32 %v2229, %v1425
    %v2316 = vadd.f32 %v2230, %v1434
    %v2317 = vadd.f32 %v2231, %v1443
    %v2318 = vadd.f32 %v2232, %v1452
    %v2319 = vadd.f32 %v2233, %v1461
    %v2320 = vadd.f32 %v2234, %v1470
    %v2321 = vadd.f32 %v2235, %v1479
    %v2322 = vadd.f32 %v2236, %v1488
    %v2323 = vadd.f32 %v2237, %v1497
    %v2324 = vadd.f32 %v2238, %v1506
    %v2325 = vadd.f32 %v2239, %v1515
    %v2326 = vadd.f32 %v2240, %v1524
    %v2327 = vadd.f32 %v2241, %v1533
    %v2328 = vadd.f32 %v2242, %v1542
    %v2329 = vadd.f32 %v2243, %v1551
    %v2330 = vadd.f32 %v2244, %v1560
    %v2331 = vadd.f32 %v2245, %v1569
    %v2332 = vadd.f32 %v2246, %v1578
    %v2333 = vadd.f32 %v2247, %v1587
    %v2334 = vadd.f32 %v2248, %v1596
    %v2335 = vadd.f32 %v2249, %v1605
    %v2336 = vadd.f32 %v2250, %v1614
    %v2337 = vadd.f32 %v2251, %v1623
    %v2338 = vadd.f32 %v2252, %v1632
    %v2339 = vadd.f32 %v2253, %v1641
    %v2340 = vadd.f32 %v2254, %v1650
    %v2341 = vadd.f32 %v2255, %v1659
    %v2342 = vadd.f32 %v2256, %v1668
    %v2343 = vadd.f32 %v2257, %v1677
    %v2344 = vadd.f32 %v2258, %v1686
    %v2345 = vadd.f32 %v2259, %v1695
    %v2346 = vadd.f32 %v2260, %v1704
    %v2347 = vadd.f32 %v2261, %v1713
    %v2348 = vadd.f32 %v2262, %v1722
    %v2349 = vadd.f32 %v2263, %v1731
    %v2350 = vadd.f32 %v2264, %v1740
    %v2351 = vadd.f32 %v2265, %v1749
    %v2352 = vadd.f32 %v1836, %v2266
    %v2353 = vadd.f32 %v1837, %v2267
    %v2354 = vadd.f32 %v1838, %v2268
    %v2355 = vadd.f32 %v1839, %v2269
    %v2356 = vadd.f32 %v1840, %v2270
    %v2357 = vadd.f32 %v1841, %v2271
    %v2358 = vadd.f32 %v1842, %v2272
    %v2359 = vadd.f32 %v1843, %v2273
    %v2360 = vadd.f32 %v1844, %v2274
    %v2361 = vadd.f32 %v1845, %v2275
    %v2362 = vadd.f32 %v1846, %v2276
    %v2363 = vadd.f32 %v1847, %v2277
    %v2364 = vadd.f32 %v1848, %v2278
    %v2365 = vadd.f32 %v1849, %v2279
    %v2366 = vadd.f32 %v1850, %v2280
    %v2367 = vadd.f32 %v1851, %v2281
    %v2368 = vadd.f32 %v1852, %v2282
    %v2369 = vadd.f32 %v1853, %v2283
    %v2370 = vadd.f32 %v1854, %v2284
    %v2371 = vadd.f32 %v1855, %v2285
    %v2372 = vadd.f32 %v1856, %v2286
    %v2373 = vadd.f32 %v1857, %v2287
    %v2374 = vadd.f32 %v1858, %v2288
    %v2375 = vadd.f32 %v1859, %v2289
    %v2376 = vadd.f32 %v1860, %v2290
    %v2377 = vadd.f32 %v1861, %v2291
    %v2378 = vadd.f32 %v1862, %v2292
    %v2379 = vadd.f32 %v1863, %v2293
    %v2380 = vadd.f32 %v1864, %v2294
    %v2381 = vadd.f32 %v1865, %v2295
    %v2382 = vadd.f32 %v1866, %v2296
    %v2383 = vadd.f32 %v1867, %v2297
    %v2384 = vadd.f32 %v1868, %v2298
    %v2385 = vadd.f32 %v1869, %v2299
    %v2386 = vadd.f32 %v1870, %v2300
    %v2387 = vadd.f32 %v1871, %v2301
    %v2388 = vadd.f32 %v1872, %v2302
    %v2389 = vadd.f32 %v1873, %v2303
    %v2390 = vadd.f32 %v1874, %v2304
    %v2391 = vadd.f32 %v1875, %v2305
    %v2392 = vadd.f32 %v1876, %v2306
    %v2393 = vadd.f32 %v1877, %v2307
    %v2394 = vadd.f32 %v1878, %v2308
    %v2395 = vadd.f32 %v1879, %v2309
    %v2396 = vadd.f32 %v1880, %v2310
    %v2397 = vadd.f32 %v1881, %v2311
    %v2398 = vadd.f32 %v1882, %v2312
    %v2399 = vadd.f32 %v1883, %v2313
    %v2400 = vadd.f32 %v1884, %v2314
    %v2401 = vadd.f32 %v1885, %v2315
    %v2402 = vadd.f32 %v1886, %v2316
    %v2403 = vadd.f32 %v1887, %v2317
    %v2404 = vadd.f32 %v1888, %v2318
    %v2405 = vadd.f32 %v1889, %v2319
    %v2406 = vadd.f32 %v1890, %v2320
    %v2407 = vadd.f32 %v1891, %v2321
    %v2408 = vadd.f32 %v1892, %v2322
    %v2409 = vadd.f32 %v1893, %v2323
    %v2410 = vadd.f32 %v1894, %v2324
    %v2411 = vadd.f32 %v1895, %v2325
    %v2412 = vadd.f32 %v1896, %v2326
    %v2413 = vadd.f32 %v1897, %v2327
    %v2414 = vadd.f32 %v1898, %v2328
    %v2415 = vadd.f32 %v1899, %v2329
    %v2416 = vadd.f32 %v1900, %v2330
    %v2417 = vadd.f32 %v1901, %v2331
    %v2418 = vadd.f32 %v1902, %v2332
    %v2419 = vadd.f32 %v1903, %v2333
    %v2420 = vadd.f32 %v1904, %v2334
    %v2421 = vadd.f32 %v1905, %v2335
    %v2422 = vadd.f32 %v1906, %v2336
    %v2423 = vadd.f32 %v1907, %v2337
    %v2424 = vadd.f32 %v1908, %v2338
    %v2425 = vadd.f32 %v1909, %v2339
    %v2426 = vadd.f32 %v1910, %v2340
    %v2427 = vadd.f32 %v1911, %v2341
    %v2428 = vadd.f32 %v1912, %v2342
    %v2429 = vadd.f32 %v1913, %v2343
    %v2430 = vadd.f32 %v1914, %v2344
    %v2431 = vadd.f32 %v1915, %v2345
    %v2432 = vadd.f32 %v1916, %v2346
    %v2433 = vadd.f32 %v1917, %v2347
    %v2434 = vadd.f32 %v1918, %v2348
    %v2435 = vadd.f32 %v1919, %v2349
    %v2436 = vadd.f32 %v1920, %v2350
    %v2437 = vadd.f32 %v1921, %v2351
    %v2438 = vmul.f32 %v2352, -1.5
    %v2439 = vmul.f32 %v2353, -1.5
    %v2440 = vmul.f32 %v2354, -1.5
    %v2441 = vmul.f32 %v2355, -1.5
    %v2442 = vmul.f32 %v2356, -1.5
    %v2443 = vmul.f32 %v2357, -1.5
    %v2444 = vmul.f32 %v2358, -1.5
    %v2445 = vmul.f32 %v2359, -1.5
    %v2446 = vmul.f32 %v2360, -1.5
    %v2447 = vmul.f32 %v2361, -1.5
    %v2448 = vmul.f32 %v2362, -1.5
    %v2449 = vmul.f32 %v2363, -1.5
    %v2450 = vmul.f32 %v2364, -1.5
    %v2451 = vmul.f32 %v2365, -1.5
    %v2452 = vmul.f32 %v2366, -1.5
    %v2453 = vmul.f32 %v2367, -1.5
    %v2454 = vmul.f32 %v2368, -1.5
    %v2455 = vmul.f32 %v2369, -1.5
    %v2456 = vmul.f32 %v2370, -1.5
    %v2457 = vmul.f32 %v2371, -1.5
    %v2458 = vmul.f32 %v2372, -1.5
    %v2459 = vmul.f32 %v2373, -1.5
    %v2460 = vmul.f32 %v2374, -1.5
    %v2461 = vmul.f32 %v2375, -1.5
    %v2462 = vmul.f32 %v2376, -1.5
    %v2463 = vmul.f32 %v2377, -1.5
    %v2464 = vmul.f32 %v2378, -1.5
    %v2465 = vmul.f32 %v2379, -1.5
    %v2466 = vmul.f32 %v2380, -1.5
    %v2467 = vmul.f32 %v2381, -1.5
    %v2468 = vmul.f32 %v2382, -1.5
    %v2469 = vmul.f32 %v2383, -1.5
    %v2470 = vmul.f32 %v2384, -1.5
    %v2471 = vmul.f32 %v2385, -1.5
    %v2472 = vmul.f32 %v2386, -1.5
    %v2473 = vmul.f32 %v2387, -1.5
    %v2474 = vmul.f32 %v2388, -1.5
    %v2475 = vmul.f32 %v2389, -1.5
    %v2476 = vmul.f32 %v2390, -1.5
    %v2477 = vmul.f32 %v2391, -1.5
    %v2478 = vmul.f32 %v2392, -1.5
    %v2479 = vmul.f32 %v2393, -1.5
    %v2480 = vmul.f32 %v2394, -1.5
    %v2481 = vmul.f32 %v2395, -1.5
    %v2482 = vmul.f32 %v2396, -1.5
    %v2483 = vmul.f32 %v2397, -1.5
    %v2484 = vmul.f32 %v2398, -1.5
    %v2485 = vmul.f32 %v2399, -1.5
    %v2486 = vmul.f32 %v2400, -1.5
    %v2487 = vmul.f32 %v2401, -1.5
    %v2488 = vmul.f32 %v2402, -1.5
    %v2489 = vmul.f32 %v2403, -1.5
    %v2490 = vmul.f32 %v2404, -1.5
    %v2491 = vmul.f32 %v2405, -1.5
    %v2492 = vmul.f32 %v2406, -1.5
    %v2493 = vmul.f32 %v2407, -1.5
    %v2494 = vmul.f32 %v2408, -1.5
    %v2495 = vmul.f32 %v2409, -1.5
    %v2496 = vmul.f32 %v2410, -1.5
    %v2497 = vmul.f32 %v2411, -1.5
    %v2498 = vmul.f32 %v2412, -1.5
    %v2499 = vmul.f32 %v2413, -1.5
    %v2500 = vmul.f32 %v2414, -1.5
    %v2501 = vmul.f32 %v2415, -1.5
    %v2502 = vmul.f32 %v2416, -1.5
    %v2503 = vmul.f32 %v2417, -1.5
    %v2504 = vmul.f32 %v2418, -1.5
    %v2505 = vmul.f32 %v2419, -1.5
    %v2506 = vmul.f32 %v2420, -1.5
    %v2507 = vmul.f32 %v2421, -1.5
    %v2508 = vmul.f32 %v2422, -1.5
    %v2509 = vmul.f32 %v2423, -1.5
    %v2510 = vmul.f32 %v2424, -1.5
    %v2511 = vmul.f32 %v2425, -1.5
    %v2512 = vmul.f32 %v2426, -1.5
    %v2513 = vmul.f32 %v2427, -1.5
    %v2514 = vmul.f32 %v2428, -1.5
    %v2515 = vmul.f32 %v2429, -1.5
    %v2516 = vmul.f32 %v2430, -1.5
    %v2517 = vmul.f32 %v2431, -1.5
    %v2518 = vmul.f32 %v2432, -1.5
    %v2519 = vmul.f32 %v2433, -1.5
    %v2520 = vmul.f32 %v2434, -1.5
    %v2521 = vmul.f32 %v2435, -1.5
    %v2522 = vmul.f32 %v2436, -1.5
    %v2523 = vmul.f32 %v2437, -1.5
    %v2524 = vmul.f32 %v2438, 1.442695
    %v2525 = vpow.pop %v2524
    %v2526 = vmul.f32 %v2439, 1.442695
    %v2527 = vpow.pop %v2526
    %v2528 = vmul.f32 %v2440, 1.442695
    %v2529 = vpow.pop %v2528
    %v2530 = vmul.f32 %v2441, 1.442695
    %v2531 = vpow.pop %v2530
    %v2532 = vmul.f32 %v2442, 1.442695
    %v2533 = vpow.pop %v2532
    %v2534 = vmul.f32 %v2443, 1.442695
    %v2535 = vpow.pop %v2534
    %v2536 = vmul.f32 %v2444, 1.442695
    %v2537 = vpow.pop %v2536
    %v2538 = vmul.f32 %v2445, 1.442695
    %v2539 = vpow.pop %v2538
    %v2540 = vmul.f32 %v2446, 1.442695
    %v2541 = vpow.pop %v2540
    %v2542 = vmul.f32 %v2447, 1.442695
    %v2543 = vpow.pop %v2542
    %v2544 = vmul.f32 %v2448, 1.442695
    %v2545 = vpow.pop %v2544
    %v2546 = vmul.f32 %v2449, 1.442695
    %v2547 = vpow.pop %v2546
    %v2548 = vmul.f32 %v2450, 1.442695
    %v2549 = vpow.pop %v2548
    %v2550 = vmul.f32 %v2451, 1.442695
    %v2551 = vpow.pop %v2550
    %v2552 = vmul.f32 %v2452, 1.442695
    %v2553 = vpow.pop %v2552
    %v2554 = vmul.f32 %v2453, 1.442695
    %v2555 = vpow.pop %v2554
    %v2556 = vmul.f32 %v2454, 1.442695
    %v2557 = vpow.pop %v2556
    %v2558 = vmul.f32 %v2455, 1.442695
    %v2559 = vpow.pop %v2558
    %v2560 = vmul.f32 %v2456, 1.442695
    %v2561 = vpow.pop %v2560
    %v2562 = vmul.f32 %v2457, 1.442695
    %v2563 = vpow.pop %v2562
    %v2564 = vmul.f32 %v2458, 1.442695
    %v2565 = vpow.pop %v2564
    %v2566 = vmul.f32 %v2459, 1.442695
    %v2567 = vpow.pop %v2566
    %v2568 = vmul.f32 %v2460, 1.442695
    %v2569 = vpow.pop %v2568
    %v2570 = vmul.f32 %v2461, 1.442695
    %v2571 = vpow.pop %v2570
    %v2572 = vmul.f32 %v2462, 1.442695
    %v2573 = vpow.pop %v2572
    %v2574 = vmul.f32 %v2463, 1.442695
    %v2575 = vpow.pop %v2574
    %v2576 = vmul.f32 %v2464, 1.442695
    %v2577 = vpow.pop %v2576
    %v2578 = vmul.f32 %v2465, 1.442695
    %v2579 = vpow.pop %v2578
    %v2580 = vmul.f32 %v2466, 1.442695
    %v2581 = vpow.pop %v2580
    %v2582 = vmul.f32 %v2467, 1.442695
    %v2583 = vpow.pop %v2582
    %v2584 = vmul.f32 %v2468, 1.442695
    %v2585 = vpow.pop %v2584
    %v2586 = vmul.f32 %v2469, 1.442695
    %v2587 = vpow.pop %v2586
    %v2588 = vmul.f32 %v2470, 1.442695
    %v2589 = vpow.pop %v2588
    %v2590 = vmul.f32 %v2471, 1.442695
    %v2591 = vpow.pop %v2590
    %v2592 = vmul.f32 %v2472, 1.442695
    %v2593 = vpow.pop %v2592
    %v2594 = vmul.f32 %v2473, 1.442695
    %v2595 = vpow.pop %v2594
    %v2596 = vmul.f32 %v2474, 1.442695
    %v2597 = vpow.pop %v2596
    %v2598 = vmul.f32 %v2475, 1.442695
    %v2599 = vpow.pop %v2598
    %v2600 = vmul.f32 %v2476, 1.442695
    %v2601 = vpow.pop %v2600
    %v2602 = vmul.f32 %v2477, 1.442695
    %v2603 = vpow.pop %v2602
    %v2604 = vmul.f32 %v2478, 1.442695
    %v2605 = vpow.pop %v2604
    %v2606 = vmul.f32 %v2479, 1.442695
    %v2607 = vpow.pop %v2606
    %v2608 = vmul.f32 %v2480, 1.442695
    %v2609 = vpow.pop %v2608
    %v2610 = vmul.f32 %v2481, 1.442695
    %v2611 = vpow.pop %v2610
    %v2612 = vmul.f32 %v2482, 1.442695
    %v2613 = vpow.pop %v2612
    %v2614 = vmul.f32 %v2483, 1.442695
    %v2615 = vpow.pop %v2614
    %v2616 = vmul.f32 %v2484, 1.442695
    %v2617 = vpow.pop %v2616
    %v2618 = vmul.f32 %v2485, 1.442695
    %v2619 = vpow.pop %v2618
    %v2620 = vmul.f32 %v2486, 1.442695
    %v2621 = vpow.pop %v2620
    %v2622 = vmul.f32 %v2487, 1.442695
    %v2623 = vpow.pop %v2622
    %v2624 = vmul.f32 %v2488, 1.442695
    %v2625 = vpow.pop %v2624
    %v2626 = vmul.f32 %v2489, 1.442695
    %v2627 = vpow.pop %v2626
    %v2628 = vmul.f32 %v2490, 1.442695
    %v2629 = vpow.pop %v2628
    %v2630 = vmul.f32 %v2491, 1.442695
    %v2631 = vpow.pop %v2630
    %v2632 = vmul.f32 %v2492, 1.442695
    %v2633 = vpow.pop %v2632
    %v2634 = vmul.f32 %v2493, 1.442695
    %v2635 = vpow.pop %v2634
    %v2636 = vmul.f32 %v2494, 1.442695
    %v2637 = vpow.pop %v2636
    %v2638 = vmul.f32 %v2495, 1.442695
    %v2639 = vpow.pop %v2638
    %v2640 = vmul.f32 %v2496, 1.442695
    %v2641 = vpow.pop %v2640
    %v2642 = vmul.f32 %v2497, 1.442695
    %v2643 = vpow.pop %v2642
    %v2644 = vmul.f32 %v2498, 1.442695
    %v2645 = vpow.pop %v2644
    %v2646 = vmul.f32 %v2499, 1.442695
    %v2647 = vpow.pop %v2646
    %v2648 = vmul.f32 %v2500, 1.442695
    %v2649 = vpow.pop %v2648
    %v2650 = vmul.f32 %v2501, 1.442695
    %v2651 = vpow.pop %v2650
    %v2652 = vmul.f32 %v2502, 1.442695
    %v2653 = vpow.pop %v2652
    %v2654 = vmul.f32 %v2503, 1.442695
    %v2655 = vpow.pop %v2654
    %v2656 = vmul.f32 %v2504, 1.442695
    %v2657 = vpow.pop %v2656
    %v2658 = vmul.f32 %v2505, 1.442695
    %v2659 = vpow.pop %v2658
    %v2660 = vmul.f32 %v2506, 1.442695
    %v2661 = vpow.pop %v2660
    %v2662 = vmul.f32 %v2507, 1.442695
    %v2663 = vpow.pop %v2662
    %v2664 = vmul.f32 %v2508, 1.442695
    %v2665 = vpow.pop %v2664
    %v2666 = vmul.f32 %v2509, 1.442695
    %v2667 = vpow.pop %v2666
    %v2668 = vmul.f32 %v2510, 1.442695
    %v2669 = vpow.pop %v2668
    %v2670 = vmul.f32 %v2511, 1.442695
    %v2671 = vpow.pop %v2670
    %v2672 = vmul.f32 %v2512, 1.442695
    %v2673 = vpow.pop %v2672
    %v2674 = vmul.f32 %v2513, 1.442695
    %v2675 = vpow.pop %v2674
    %v2676 = vmul.f32 %v2514, 1.442695
    %v2677 = vpow.pop %v2676
    %v2678 = vmul.f32 %v2515, 1.442695
    %v2679 = vpow.pop %v2678
    %v2680 = vmul.f32 %v2516, 1.442695
    %v2681 = vpow.pop %v2680
    %v2682 = vmul.f32 %v2517, 1.442695
    %v2683 = vpow.pop %v2682
    %v2684 = vmul.f32 %v2518, 1.442695
    %v2685 = vpow.pop %v2684
    %v2686 = vmul.f32 %v2519, 1.442695
    %v2687 = vpow.pop %v2686
    %v2688 = vmul.f32 %v2520, 1.442695
    %v2689 = vpow.pop %v2688
    %v2690 = vmul.f32 %v2521, 1.442695
    %v2691 = vpow.pop %v2690
    %v2692 = vmul.f32 %v2522, 1.442695
    %v2693 = vpow.pop %v2692
    %v2694 = vmul.f32 %v2523, 1.442695
    %v2695 = vpow.pop %v2694
    %v2696 = vmul.f32 %v2525, %v2008
    %v2697 = vmul.f32 %v2527, %v2009
    %v2698 = vmul.f32 %v2529, %v2010
    %v2699 = vmul.f32 %v2531, %v2011
    %v2700 = vmul.f32 %v2533, %v2012
    %v2701 = vmul.f32 %v2535, %v2013
    %v2702 = vmul.f32 %v2537, %v2014
    %v2703 = vmul.f32 %v2539, %v2015
    %v2704 = vmul.f32 %v2541, %v2016
    %v2705 = vmul.f32 %v2543, %v2017
    %v2706 = vmul.f32 %v2545, %v2018
    %v2707 = vmul.f32 %v2547, %v2019
    %v2708 = vmul.f32 %v2549, %v2020
    %v2709 = vmul.f32 %v2551, %v2021
    %v2710 = vmul.f32 %v2553, %v2022
    %v2711 = vmul.f32 %v2555, %v2023
    %v2712 = vmul.f32 %v2557, %v2024
    %v2713 = vmul.f32 %v2559, %v2025
    %v2714 = vmul.f32 %v2561, %v2026
    %v2715 = vmul.f32 %v2563, %v2027
    %v2716 = vmul.f32 %v2565, %v2028
    %v2717 = vmul.f32 %v2567, %v2029
    %v2718 = vmul.f32 %v2569, %v2030
    %v2719 = vmul.f32 %v2571, %v2031
    %v2720 = vmul.f32 %v2573, %v2032
    %v2721 = vmul.f32 %v2575, %v2033
    %v2722 = vmul.f32 %v2577, %v2034
    %v2723 = vmul.f32 %v2579, %v2035
    %v2724 = vmul.f32 %v2581, %v2036
    %v2725 = vmul.f32 %v2583, %v2037
    %v2726 = vmul.f32 %v2585, %v2038
    %v2727 = vmul.f32 %v2587, %v2039
    %v2728 = vmul.f32 %v2589, %v2040
    %v2729 = vmul.f32 %v2591, %v2041
    %v2730 = vmul.f32 %v2593, %v2042
    %v2731 = vmul.f32 %v2595, %v2043
    %v2732 = vmul.f32 %v2597, %v2044
    %v2733 = vmul.f32 %v2599, %v2045
    %v2734 = vmul.f32 %v2601, %v2046
    %v2735 = vmul.f32 %v2603, %v2047
    %v2736 = vmul.f32 %v2605, %v2048
    %v2737 = vmul.f32 %v2607, %v2049
    %v2738 = vmul.f32 %v2609, %v2050
    %v2739 = vmul.f32 %v2611, %v2051
    %v2740 = vmul.f32 %v2613, %v2052
    %v2741 = vmul.f32 %v2615, %v2053
    %v2742 = vmul.f32 %v2617, %v2054
    %v2743 = vmul.f32 %v2619, %v2055
    %v2744 = vmul.f32 %v2621, %v2056
    %v2745 = vmul.f32 %v2623, %v2057
    %v2746 = vmul.f32 %v2625, %v2058
    %v2747 = vmul.f32 %v2627, %v2059
    %v2748 = vmul.f32 %v2629, %v2060
    %v2749 = vmul.f32 %v2631, %v2061
    %v2750 = vmul.f32 %v2633, %v2062
    %v2751 = vmul.f32 %v2635, %v2063
    %v2752 = vmul.f32 %v2637, %v2064
    %v2753 = vmul.f32 %v2639, %v2065
    %v2754 = vmul.f32 %v2641, %v2066
    %v2755 = vmul.f32 %v2643, %v2067
    %v2756 = vmul.f32 %v2645, %v2068
    %v2757 = vmul.f32 %v2647, %v2069
    %v2758 = vmul.f32 %v2649, %v2070
    %v2759 = vmul.f32 %v2651, %v2071
    %v2760 = vmul.f32 %v2653, %v2072
    %v2761 = vmul.f32 %v2655, %v2073
    %v2762 = vmul.f32 %v2657, %v2074
    %v2763 = vmul.f32 %v2659, %v2075
    %v2764 = vmul.f32 %v2661, %v2076
    %v2765 = vmul.f32 %v2663, %v2077
    %v2766 = vmul.f32 %v2665, %v2078
    %v2767 = vmul.f32 %v2667, %v2079
    %v2768 = vmul.f32 %v2669, %v2080
    %v2769 = vmul.f32 %v2671, %v2081
    %v2770 = vmul.f32 %v2673, %v2082
    %v2771 = vmul.f32 %v2675, %v2083
    %v2772 = vmul.f32 %v2677, %v2084
    %v2773 = vmul.f32 %v2679, %v2085
    %v2774 = vmul.f32 %v2681, %v2086
    %v2775 = vmul.f32 %v2683, %v2087
    %v2776 = vmul.f32 %v2685, %v2088
    %v2777 = vmul.f32 %v2687, %v2089
    %v2778 = vmul.f32 %v2689, %v2090
    %v2779 = vmul.f32 %v2691, %v2091
    %v2780 = vmul.f32 %v2693, %v2092
    %v2781 = vmul.f32 %v2695, %v2093
    %v2782 = vmul.f32 %v2696, 0.25
    %v2783 = vmul.f32 %v2697, 0.25
    %v2784 = vmul.f32 %v2698, 0.25
    %v2785 = vmul.f32 %v2699, 0.25
    %v2786 = vmul.f32 %v2700, 0.25
    %v2787 = vmul.f32 %v2701, 0.25
    %v2788 = vmul.f32 %v2702, 0.25
    %v2789 = vmul.f32 %v2703, 0.25
    %v2790 = vmul.f32 %v2704, 0.25
    %v2791 = vmul.f32 %v2705, 0.25
    %v2792 = vmul.f32 %v2706, 0.25
    %v2793 = vmul.f32 %v2707, 0.25
    %v2794 = vmul.f32 %v2708, 0.25
    %v2795 = vmul.f32 %v2709, 0.25
    %v2796 = vmul.f32 %v2710, 0.25
    %v2797 = vmul.f32 %v2711, 0.25
    %v2798 = vmul.f32 %v2712, 0.25
    %v2799 = vmul.f32 %v2713, 0.25
    %v2800 = vmul.f32 %v2714, 0.25
    %v2801 = vmul.f32 %v2715, 0.25
    %v2802 = vmul.f32 %v2716, 0.25
    %v2803 = vmul.f32 %v2717, 0.25
    %v2804 = vmul.f32 %v2718, 0.25
    %v2805 = vmul.f32 %v2719, 0.25
    %v2806 = vmul.f32 %v2720, 0.25
    %v2807 = vmul.f32 %v2721, 0.25
    %v2808 = vmul.f32 %v2722, 0.25
    %v2809 = vmul.f32 %v2723, 0.25
    %v2810 = vmul.f32 %v2724, 0.25
    %v2811 = vmul.f32 %v2725, 0.25
    %v2812 = vmul.f32 %v2726, 0.25
    %v2813 = vmul.f32 %v2727, 0.25
    %v2814 = vmul.f32 %v2728, 0.25
    %v2815 = vmul.f32 %v2729, 0.25
    %v2816 = vmul.f32 %v2730, 0.25
    %v2817 = vmul.f32 %v2731, 0.25
    %v2818 = vmul.f32 %v2732, 0.25
    %v2819 = vmul.f32 %v2733, 0.25
    %v2820 = vmul.f32 %v2734, 0.25
    %v2821 = vmul.f32 %v2735, 0.25
    %v2822 = vmul.f32 %v2736, 0.25
    %v2823 = vmul.f32 %v2737, 0.25
    %v2824 = vmul.f32 %v2738, 0.25
    %v2825 = vmul.f32 %v2739, 0.25
    %v2826 = vmul.f32 %v2740, 0.25
    %v2827 = vmul.f32 %v2741, 0.25
    %v2828 = vmul.f32 %v2742, 0.25
    %v2829 = vmul.f32 %v2743, 0.25
    %v2830 = vmul.f32 %v2744, 0.25
    %v2831 = vmul.f32 %v2745, 0.25
    %v2832 = vmul.f32 %v2746, 0.25
    %v2833 = vmul.f32 %v2747, 0.25
    %v2834 = vmul.f32 %v2748, 0.25
    %v2835 = vmul.f32 %v2749, 0.25
    %v2836 = vmul.f32 %v2750, 0.25
    %v2837 = vmul.f32 %v2751, 0.25
    %v2838 = vmul.f32 %v2752, 0.25
    %v2839 = vmul.f32 %v2753, 0.25
    %v2840 = vmul.f32 %v2754, 0.25
    %v2841 = vmul.f32 %v2755, 0.25
    %v2842 = vmul.f32 %v2756, 0.25
    %v2843 = vmul.f32 %v2757, 0.25
    %v2844 = vmul.f32 %v2758, 0.25
    %v2845 = vmul.f32 %v2759, 0.25
    %v2846 = vmul.f32 %v2760, 0.25
    %v2847 = vmul.f32 %v2761, 0.25
    %v2848 = vmul.f32 %v2762, 0.25
    %v2849 = vmul.f32 %v2763, 0.25
    %v2850 = vmul.f32 %v2764, 0.25
    %v2851 = vmul.f32 %v2765, 0.25
    %v2852 = vmul.f32 %v2766, 0.25
    %v2853 = vmul.f32 %v2767, 0.25
    %v2854 = vmul.f32 %v2768, 0.25
    %v2855 = vmul.f32 %v2769, 0.25
    %v2856 = vmul.f32 %v2770, 0.25
    %v2857 = vmul.f32 %v2771, 0.25
    %v2858 = vmul.f32 %v2772, 0.25
    %v2859 = vmul.f32 %v2773, 0.25
    %v2860 = vmul.f32 %v2774, 0.25
    %v2861 = vmul.f32 %v2775, 0.25
    %v2862 = vmul.f32 %v2776, 0.25
    %v2863 = vmul.f32 %v2777, 0.25
    %v2864 = vmul.f32 %v2778, 0.25
    %v2865 = vmul.f32 %v2779, 0.25
    %v2866 = vmul.f32 %v2780, 0.25
    %v2867 = vmul.f32 %v2781, 0.25
    %v2868 = vmul.f32 %v2696, 0.75
    %v2869 = vmul.f32 %v2697, 0.75
    %v2870 = vmul.f32 %v2698, 0.75
    %v2871 = vmul.f32 %v2699, 0.75
    %v2872 = vmul.f32 %v2700, 0.75
    %v2873 = vmul.f32 %v2701, 0.75
    %v2874 = vmul.f32 %v2702, 0.75
    %v2875 = vmul.f32 %v2703, 0.75
    %v2876 = vmul.f32 %v2704, 0.75
    %v2877 = vmul.f32 %v2705, 0.75
    %v2878 = vmul.f32 %v2706, 0.75
    %v2879 = vmul.f32 %v2707, 0.75
    %v2880 = vmul.f32 %v2708, 0.75
    %v2881 = vmul.f32 %v2709, 0.75
    %v2882 = vmul.f32 %v2710, 0.75
    %v2883 = vmul.f32 %v2711, 0.75
    %v2884 = vmul.f32 %v2712, 0.75
    %v2885 = vmul.f32 %v2713, 0.75
    %v2886 = vmul.f32 %v2714, 0.75
    %v2887 = vmul.f32 %v2715, 0.75
    %v2888 = vmul.f32 %v2716, 0.75
    %v2889 = vmul.f32 %v2717, 0.75
    %v2890 = vmul.f32 %v2718, 0.75
    %v2891 = vmul.f32 %v2719, 0.75
    %v2892 = vmul.f32 %v2720, 0.75
    %v2893 = vmul.f32 %v2721, 0.75
    %v2894 = vmul.f32 %v2722, 0.75
    %v2895 = vmul.f32 %v2723, 0.75
    %v2896 = vmul.f32 %v2724, 0.75
    %v2897 = vmul.f32 %v2725, 0.75
    %v2898 = vmul.f32 %v2726, 0.75
    %v2899 = vmul.f32 %v2727, 0.75
    %v2900 = vmul.f32 %v2728, 0.75
    %v2901 = vmul.f32 %v2729, 0.75
    %v2902 = vmul.f32 %v2730, 0.75
    %v2903 = vmul.f32 %v2731, 0.75
    %v2904 = vmul.f32 %v2732, 0.75
    %v2905 = vmul.f32 %v2733, 0.75
    %v2906 = vmul.f32 %v2734, 0.75
    %v2907 = vmul.f32 %v2735, 0.75
    %v2908 = vmul.f32 %v2736, 0.75
    %v2909 = vmul.f32 %v2737, 0.75
    %v2910 = vmul.f32 %v2738, 0.75
    %v2911 = vmul.f32 %v2739, 0.75
    %v2912 = vmul.f32 %v2740, 0.75
    %v2913 = vmul.f32 %v2741, 0.75
    %v2914 = vmul.f32 %v2742, 0.75
    %v2915 = vmul.f32 %v2743, 0.75
    %v2916 = vmul.f32 %v2744, 0.75
    %v2917 = vmul.f32 %v2745, 0.75
    %v2918 = vmul.f32 %v2746, 0.75
    %v2919 = vmul.f32 %v2747, 0.75
    %v2920 = vmul.f32 %v2748, 0.75
    %v2921 = vmul.f32 %v2749, 0.75
    %v2922 = vmul.f32 %v2750, 0.75
    %v2923 = vmul.f32 %v2751, 0.75
    %v2924 = vmul.f32 %v2752, 0.75
    %v2925 = vmul.f32 %v2753, 0.75
    %v2926 = vmul.f32 %v2754, 0.75
    %v2927 = vmul.f32 %v2755, 0.75
    %v2928 = vmul.f32 %v2756, 0.75
    %v2929 = vmul.f32 %v2757, 0.75
    %v2930 = vmul.f32 %v2758, 0.75
    %v2931 = vmul.f32 %v2759, 0.75
    %v2932 = vmul.f32 %v2760, 0.75
    %v2933 = vmul.f32 %v2761, 0.75
    %v2934 = vmul.f32 %v2762, 0.75
    %v2935 = vmul.f32 %v2763, 0.75
    %v2936 = vmul.f32 %v2764, 0.75
    %v2937 = vmul.f32 %v2765, 0.75
    %v2938 = vmul.f32 %v2766, 0.75
    %v2939 = vmul.f32 %v2767, 0.75
    %v2940 = vmul.f32 %v2768, 0.75
    %v2941 = vmul.f32 %v2769, 0.75
    %v2942 = vmul.f32 %v2770, 0.75
    %v2943 = vmul.f32 %v2771, 0.75
    %v2944 = vmul.f32 %v2772, 0.75
    %v2945 = vmul.f32 %v2773, 0.75
    %v2946 = vmul.f32 %v2774, 0.75
    %v2947 = vmul.f32 %v2775, 0.75
    %v2948 = vmul.f32 %v2776, 0.75
    %v2949 = vmul.f32 %v2777, 0.75
    %v2950 = vmul.f32 %v2778, 0.75
    %v2951 = vmul.f32 %v2779, 0.75
    %v2952 = vmul.f32 %v2780, 0.75
    %v2953 = vmul.f32 %v2781, 0.75
    %v2954 = vsel %vm374, %v2782, %v2868
    %v2955 = vsel %vm375, %v2783, %v2869
    %v2956 = vsel %vm376, %v2784, %v2870
    %v2957 = vsel %vm377, %v2785, %v2871
    %v2958 = vsel %vm378, %v2786, %v2872
    %v2959 = vsel %vm379, %v2787, %v2873
    %v2960 = vsel %vm380, %v2788, %v2874
    %v2961 = vsel %vm381, %v2789, %v2875
    %v2962 = vsel %vm382, %v2790, %v2876
    %v2963 = vsel %vm383, %v2791, %v2877
    %v2964 = vsel %vm384, %v2792, %v2878
    %v2965 = vsel %vm385, %v2793, %v2879
    %v2966 = vsel %vm386, %v2794, %v2880
    %v2967 = vsel %vm387, %v2795, %v2881
    %v2968 = vsel %vm388, %v2796, %v2882
    %v2969 = vsel %vm389, %v2797, %v2883
    %v2970 = vsel %vm390, %v2798, %v2884
    %v2971 = vsel %vm391, %v2799, %v2885
    %v2972 = vsel %vm392, %v2800, %v2886
    %v2973 = vsel %vm393, %v2801, %v2887
    %v2974 = vsel %vm394, %v2802, %v2888
    %v2975 = vsel %vm395, %v2803, %v2889
    %v2976 = vsel %vm396, %v2804, %v2890
    %v2977 = vsel %vm397, %v2805, %v2891
    %v2978 = vsel %vm398, %v2806, %v2892
    %v2979 = vsel %vm399, %v2807, %v2893
    %v2980 = vsel %vm400, %v2808, %v2894
    %v2981 = vsel %vm401, %v2809, %v2895
    %v2982 = vsel %vm402, %v2810, %v2896
    %v2983 = vsel %vm403, %v2811, %v2897
    %v2984 = vsel %vm404, %v2812, %v2898
    %v2985 = vsel %vm405, %v2813, %v2899
    %v2986 = vsel %vm406, %v2814, %v2900
    %v2987 = vsel %vm407, %v2815, %v2901
    %v2988 = vsel %vm408, %v2816, %v2902
    %v2989 = vsel %vm409, %v2817, %v2903
    %v2990 = vsel %vm410, %v2818, %v2904
    %v2991 = vsel %vm411, %v2819, %v2905
    %v2992 = vsel %vm412, %v2820, %v2906
    %v2993 = vsel %vm413, %v2821, %v2907
    %v2994 = vsel %vm414, %v2822, %v2908
    %v2995 = vsel %vm415, %v2823, %v2909
    %v2996 = vsel %vm416, %v2824, %v2910
    %v2997 = vsel %vm417, %v2825, %v2911
    %v2998 = vsel %vm418, %v2826, %v2912
    %v2999 = vsel %vm419, %v2827, %v2913
    %v3000 = vsel %vm420, %v2828, %v2914
    %v3001 = vsel %vm421, %v2829, %v2915
    %v3002 = vsel %vm422, %v2830, %v2916
    %v3003 = vsel %vm423, %v2831, %v2917
    %v3004 = vsel %vm424, %v2832, %v2918
    %v3005 = vsel %vm425, %v2833, %v2919
    %v3006 = vsel %vm426, %v2834, %v2920
    %v3007 = vsel %vm427, %v2835, %v2921
    %v3008 = vsel %vm428, %v2836, %v2922
    %v3009 = vsel %vm429, %v2837, %v2923
    %v3010 = vsel %vm430, %v2838, %v2924
    %v3011 = vsel %vm431, %v2839, %v2925
    %v3012 = vsel %vm432, %v2840, %v2926
    %v3013 = vsel %vm433, %v2841, %v2927
    %v3014 = vsel %vm434, %v2842, %v2928
    %v3015 = vsel %vm435, %v2843, %v2929
    %v3016 = vsel %vm436, %v2844, %v2930
    %v3017 = vsel %vm437, %v2845, %v2931
    %v3018 = vsel %vm438, %v2846, %v2932
    %v3019 = vsel %vm439, %v2847, %v2933
    %v3020 = vsel %vm440, %v2848, %v2934
    %v3021 = vsel %vm441, %v2849, %v2935
    %v3022 = vsel %vm442, %v2850, %v2936
    %v3023 = vsel %vm443, %v2851, %v2937
    %v3024 = vsel %vm444, %v2852, %v2938
    %v3025 = vsel %vm445, %v2853, %v2939
    %v3026 = vsel %vm446, %v2854, %v2940
    %v3027 = vsel %vm447, %v2855, %v2941
    %v3028 = vsel %vm448, %v2856, %v2942
    %v3029 = vsel %vm449, %v2857, %v2943
    %v3030 = vsel %vm450, %v2858, %v2944
    %v3031 = vsel %vm451, %v2859, %v2945
    %v3032 = vsel %vm452, %v2860, %v2946
    %v3033 = vsel %vm453, %v2861, %v2947
    %v3034 = vsel %vm454, %v2862, %v2948
    %v3035 = vsel %vm455, %v2863, %v2949
    %v3036 = vsel %vm456, %v2864, %v2950
    %v3037 = vsel %vm457, %v2865, %v2951
    %v3038 = vsel %vm458, %v2866, %v2952
    %v3039 = vsel %vm459, %v2867, %v2953
    %vm3040 = vcmp.ne.s32.totalorder %v112, 4294967294
    %vm3041 = vcmp.ne.s32.totalorder %v113, 4294967294
    %vm3042 = vcmp.ne.s32.totalorder %v114, 4294967294
    %vm3043 = vcmp.ne.s32.totalorder %v115, 4294967294
    %vm3044 = vcmp.ne.s32.totalorder %v116, 4294967294
    %vm3045 = vcmp.ne.s32.totalorder %v117, 4294967294
    %vm3046 = vcmp.ne.s32.totalorder %v118, 4294967294
    %vm3047 = vcmp.ne.s32.totalorder %v119, 4294967294
    %vm3048 = vcmp.ne.s32.totalorder %v120, 4294967294
    %vm3049 = vcmp.ne.s32.totalorder %v121, 4294967294
    %vm3050 = vcmp.ne.s32.totalorder %v122, 4294967294
    %vm3051 = vcmp.ne.s32.totalorder %v123, 4294967294
    %vm3052 = vcmp.ne.s32.totalorder %v124, 4294967294
    %vm3053 = vcmp.ne.s32.totalorder %v125, 4294967294
    %vm3054 = vcmp.ne.s32.totalorder %v126, 4294967294
    %vm3055 = vcmp.ne.s32.totalorder %v127, 4294967294
    %vm3056 = vcmp.ne.s32.totalorder %v128, 4294967294
    %vm3057 = vcmp.ne.s32.totalorder %v129, 4294967294
    %vm3058 = vcmp.ne.s32.totalorder %v130, 4294967294
    %vm3059 = vcmp.ne.s32.totalorder %v131, 4294967294
    %vm3060 = vcmp.ne.s32.totalorder %v132, 4294967294
    %vm3061 = vcmp.ne.s32.totalorder %v133, 4294967294
    %vm3062 = vcmp.ne.s32.totalorder %v134, 4294967294
    %vm3063 = vcmp.ne.s32.totalorder %v135, 4294967294
    %vm3064 = vcmp.ne.s32.totalorder %v136, 4294967294
    %vm3065 = vcmp.ne.s32.totalorder %v137, 4294967294
    %vm3066 = vcmp.ne.s32.totalorder %v138, 4294967294
    %vm3067 = vcmp.ne.s32.totalorder %v139, 4294967294
    %vm3068 = vcmp.ne.s32.totalorder %v140, 4294967294
    %vm3069 = vcmp.ne.s32.totalorder %v141, 4294967294
    %vm3070 = vcmp.ne.s32.totalorder %v142, 4294967294
    %vm3071 = vcmp.ne.s32.totalorder %v143, 4294967294
    %vm3072 = vcmp.ne.s32.totalorder %v144, 4294967294
    %vm3073 = vcmp.ne.s32.totalorder %v145, 4294967294
    %vm3074 = vcmp.ne.s32.totalorder %v146, 4294967294
    %vm3075 = vcmp.ne.s32.totalorder %v147, 4294967294
    %vm3076 = vcmp.ne.s32.totalorder %v148, 4294967294
    %vm3077 = vcmp.ne.s32.totalorder %v149, 4294967294
    %vm3078 = vcmp.ne.s32.totalorder %v150, 4294967294
    %vm3079 = vcmp.ne.s32.totalorder %v151, 4294967294
    %vm3080 = vcmp.ne.s32.totalorder %v152, 4294967294
    %vm3081 = vcmp.ne.s32.totalorder %v153, 4294967294
    %vm3082 = vcmp.ne.s32.totalorder %v154, 4294967294
    %vm3083 = vcmp.ne.s32.totalorder %v155, 4294967294
    %vm3084 = vcmp.ne.s32.totalorder %v156, 4294967294
    %vm3085 = vcmp.ne.s32.totalorder %v157, 4294967294
    %vm3086 = vcmp.ne.s32.totalorder %v158, 4294967294
    %vm3087 = vcmp.ne.s32.totalorder %v159, 4294967294
    %vm3088 = vcmp.ne.s32.totalorder %v160, 4294967294
    %vm3089 = vcmp.ne.s32.totalorder %v161, 4294967294
    %vm3090 = vcmp.ne.s32.totalorder %v162, 4294967294
    %vm3091 = vcmp.ne.s32.totalorder %v163, 4294967294
    %vm3092 = vcmp.ne.s32.totalorder %v164, 4294967294
    %vm3093 = vcmp.ne.s32.totalorder %v165, 4294967294
    %vm3094 = vcmp.ne.s32.totalorder %v166, 4294967294
    %vm3095 = vcmp.ne.s32.totalorder %v167, 4294967294
    %vm3096 = vcmp.ne.s32.totalorder %v168, 4294967294
    %vm3097 = vcmp.ne.s32.totalorder %v169, 4294967294
    %vm3098 = vcmp.ne.s32.totalorder %v170, 4294967294
    %vm3099 = vcmp.ne.s32.totalorder %v171, 4294967294
    %vm3100 = vcmp.ne.s32.totalorder %v172, 4294967294
    %vm3101 = vcmp.ne.s32.totalorder %v173, 4294967294
    %vm3102 = vcmp.ne.s32.totalorder %v174, 4294967294
    %vm3103 = vcmp.ne.s32.totalorder %v175, 4294967294
    %vm3104 = vcmp.ne.s32.totalorder %v176, 4294967294
    %vm3105 = vcmp.ne.s32.totalorder %v177, 4294967294
    %vm3106 = vcmp.ne.s32.totalorder %v178, 4294967294
    %vm3107 = vcmp.ne.s32.totalorder %v179, 4294967294
    %vm3108 = vcmp.ne.s32.totalorder %v180, 4294967294
    %vm3109 = vcmp.ne.s32.totalorder %v181, 4294967294
    %vm3110 = vcmp.ne.s32.totalorder %v182, 4294967294
    %vm3111 = vcmp.ne.s32.totalorder %v183, 4294967294
    %vm3112 = vcmp.ne.s32.totalorder %v184, 4294967294
    %vm3113 = vcmp.ne.s32.totalorder %v185, 4294967294
    %vm3114 = vcmp.ne.s32.totalorder %v186, 4294967294
    %vm3115 = vcmp.ne.s32.totalorder %v187, 4294967294
    %vm3116 = vcmp.ne.s32.totalorder %v188, 4294967294
    %vm3117 = vcmp.ne.s32.totalorder %v189, 4294967294
    %vm3118 = vcmp.ne.s32.totalorder %v190, 4294967294
    %vm3119 = vcmp.ne.s32.totalorder %v191, 4294967294
    %vm3120 = vcmp.ne.s32.totalorder %v192, 4294967294
    %vm3121 = vcmp.ne.s32.totalorder %v193, 4294967294
    %vm3122 = vcmp.ne.s32.totalorder %v194, 4294967294
    %vm3123 = vcmp.ne.s32.totalorder %v195, 4294967294
    %vm3124 = vcmp.ne.s32.totalorder %v196, 4294967294
    %vm3125 = vcmp.ne.s32.totalorder %v197, 4294967294
    %v3126 = vsel %vm3040, 1, 0
    %v3127 = vsel %vm3041, 1, 0
    %v3128 = vsel %vm3042, 1, 0
    %v3129 = vsel %vm3043, 1, 0
    %v3130 = vsel %vm3044, 1, 0
    %v3131 = vsel %vm3045, 1, 0
    %v3132 = vsel %vm3046, 1, 0
    %v3133 = vsel %vm3047, 1, 0
    %v3134 = vsel %vm3048, 1, 0
    %v3135 = vsel %vm3049, 1, 0
    %v3136 = vsel %vm3050, 1, 0
    %v3137 = vsel %vm3051, 1, 0
    %v3138 = vsel %vm3052, 1, 0
    %v3139 = vsel %vm3053, 1, 0
    %v3140 = vsel %vm3054, 1, 0
    %v3141 = vsel %vm3055, 1, 0
    %v3142 = vsel %vm3056, 1, 0
    %v3143 = vsel %vm3057, 1, 0
    %v3144 = vsel %vm3058, 1, 0
    %v3145 = vsel %vm3059, 1, 0
    %v3146 = vsel %vm3060, 1, 0
    %v3147 = vsel %vm3061, 1, 0
    %v3148 = vsel %vm3062, 1, 0
    %v3149 = vsel %vm3063, 1, 0
    %v3150 = vsel %vm3064, 1, 0
    %v3151 = vsel %vm3065, 1, 0
    %v3152 = vsel %vm3066, 1, 0
    %v3153 = vsel %vm3067, 1, 0
    %v3154 = vsel %vm3068, 1, 0
    %v3155 = vsel %vm3069, 1, 0
    %v3156 = vsel %vm3070, 1, 0
    %v3157 = vsel %vm3071, 1, 0
    %v3158 = vsel %vm3072, 1, 0
    %v3159 = vsel %vm3073, 1, 0
    %v3160 = vsel %vm3074, 1, 0
    %v3161 = vsel %vm3075, 1, 0
    %v3162 = vsel %vm3076, 1, 0
    %v3163 = vsel %vm3077, 1, 0
    %v3164 = vsel %vm3078, 1, 0
    %v3165 = vsel %vm3079, 1, 0
    %v3166 = vsel %vm3080, 1, 0
    %v3167 = vsel %vm3081, 1, 0
    %v3168 = vsel %vm3082, 1, 0
    %v3169 = vsel %vm3083, 1, 0
    %v3170 = vsel %vm3084, 1, 0
    %v3171 = vsel %vm3085, 1, 0
    %v3172 = vsel %vm3086, 1, 0
    %v3173 = vsel %vm3087, 1, 0
    %v3174 = vsel %vm3088, 1, 0
    %v3175 = vsel %vm3089, 1, 0
    %v3176 = vsel %vm3090, 1, 0
    %v3177 = vsel %vm3091, 1, 0
    %v3178 = vsel %vm3092, 1, 0
    %v3179 = vsel %vm3093, 1, 0
    %v3180 = vsel %vm3094, 1, 0
    %v3181 = vsel %vm3095, 1, 0
    %v3182 = vsel %vm3096, 1, 0
    %v3183 = vsel %vm3097, 1, 0
    %v3184 = vsel %vm3098, 1, 0
    %v3185 = vsel %vm3099, 1, 0
    %v3186 = vsel %vm3100, 1, 0
    %v3187 = vsel %vm3101, 1, 0
    %v3188 = vsel %vm3102, 1, 0
    %v3189 = vsel %vm3103, 1, 0
    %v3190 = vsel %vm3104, 1, 0
    %v3191 = vsel %vm3105, 1, 0
    %v3192 = vsel %vm3106, 1, 0
    %v3193 = vsel %vm3107, 1, 0
    %v3194 = vsel %vm3108, 1, 0
    %v3195 = vsel %vm3109, 1, 0
    %v3196 = vsel %vm3110, 1, 0
    %v3197 = vsel %vm3111, 1, 0
    %v3198 = vsel %vm3112, 1, 0
    %v3199 = vsel %vm3113, 1, 0
    %v3200 = vsel %vm3114, 1, 0
    %v3201 = vsel %vm3115, 1, 0
    %v3202 = vsel %vm3116, 1, 0
    %v3203 = vsel %vm3117, 1, 0
    %v3204 = vsel %vm3118, 1, 0
    %v3205 = vsel %vm3119, 1, 0
    %v3206 = vsel %vm3120, 1, 0
    %v3207 = vsel %vm3121, 1, 0
    %v3208 = vsel %vm3122, 1, 0
    %v3209 = vsel %vm3123, 1, 0
    %v3210 = vsel %vm3124, 1, 0
    %v3211 = vsel %vm3125, 1, 0
    %v3212 = vcvt.s32.f32 %v3126
    %v3213 = vcvt.s32.f32 %v3127
    %v3214 = vcvt.s32.f32 %v3128
    %v3215 = vcvt.s32.f32 %v3129
    %v3216 = vcvt.s32.f32 %v3130
    %v3217 = vcvt.s32.f32 %v3131
    %v3218 = vcvt.s32.f32 %v3132
    %v3219 = vcvt.s32.f32 %v3133
    %v3220 = vcvt.s32.f32 %v3134
    %v3221 = vcvt.s32.f32 %v3135
    %v3222 = vcvt.s32.f32 %v3136
    %v3223 = vcvt.s32.f32 %v3137
    %v3224 = vcvt.s32.f32 %v3138
    %v3225 = vcvt.s32.f32 %v3139
    %v3226 = vcvt.s32.f32 %v3140
    %v3227 = vcvt.s32.f32 %v3141
    %v3228 = vcvt.s32.f32 %v3142
    %v3229 = vcvt.s32.f32 %v3143
    %v3230 = vcvt.s32.f32 %v3144
    %v3231 = vcvt.s32.f32 %v3145
    %v3232 = vcvt.s32.f32 %v3146
    %v3233 = vcvt.s32.f32 %v3147
    %v3234 = vcvt.s32.f32 %v3148
    %v3235 = vcvt.s32.f32 %v3149
    %v3236 = vcvt.s32.f32 %v3150
    %v3237 = vcvt.s32.f32 %v3151
    %v3238 = vcvt.s32.f32 %v3152
    %v3239 = vcvt.s32.f32 %v3153
    %v3240 = vcvt.s32.f32 %v3154
    %v3241 = vcvt.s32.f32 %v3155
    %v3242 = vcvt.s32.f32 %v3156
    %v3243 = vcvt.s32.f32 %v3157
    %v3244 = vcvt.s32.f32 %v3158
    %v3245 = vcvt.s32.f32 %v3159
    %v3246 = vcvt.s32.f32 %v3160
    %v3247 = vcvt.s32.f32 %v3161
    %v3248 = vcvt.s32.f32 %v3162
    %v3249 = vcvt.s32.f32 %v3163
    %v3250 = vcvt.s32.f32 %v3164
    %v3251 = vcvt.s32.f32 %v3165
    %v3252 = vcvt.s32.f32 %v3166
    %v3253 = vcvt.s32.f32 %v3167
    %v3254 = vcvt.s32.f32 %v3168
    %v3255 = vcvt.s32.f32 %v3169
    %v3256 = vcvt.s32.f32 %v3170
    %v3257 = vcvt.s32.f32 %v3171
    %v3258 = vcvt.s32.f32 %v3172
    %v3259 = vcvt.s32.f32 %v3173
    %v3260 = vcvt.s32.f32 %v3174
    %v3261 = vcvt.s32.f32 %v3175
    %v3262 = vcvt.s32.f32 %v3176
    %v3263 = vcvt.s32.f32 %v3177
    %v3264 = vcvt.s32.f32 %v3178
    %v3265 = vcvt.s32.f32 %v3179
    %v3266 = vcvt.s32.f32 %v3180
    %v3267 = vcvt.s32.f32 %v3181
    %v3268 = vcvt.s32.f32 %v3182
    %v3269 = vcvt.s32.f32 %v3183
    %v3270 = vcvt.s32.f32 %v3184
    %v3271 = vcvt.s32.f32 %v3185
    %v3272 = vcvt.s32.f32 %v3186
    %v3273 = vcvt.s32.f32 %v3187
    %v3274 = vcvt.s32.f32 %v3188
    %v3275 = vcvt.s32.f32 %v3189
    %v3276 = vcvt.s32.f32 %v3190
    %v3277 = vcvt.s32.f32 %v3191
    %v3278 = vcvt.s32.f32 %v3192
    %v3279 = vcvt.s32.f32 %v3193
    %v3280 = vcvt.s32.f32 %v3194
    %v3281 = vcvt.s32.f32 %v3195
    %v3282 = vcvt.s32.f32 %v3196
    %v3283 = vcvt.s32.f32 %v3197
    %v3284 = vcvt.s32.f32 %v3198
    %v3285 = vcvt.s32.f32 %v3199
    %v3286 = vcvt.s32.f32 %v3200
    %v3287 = vcvt.s32.f32 %v3201
    %v3288 = vcvt.s32.f32 %v3202
    %v3289 = vcvt.s32.f32 %v3203
    %v3290 = vcvt.s32.f32 %v3204
    %v3291 = vcvt.s32.f32 %v3205
    %v3292 = vcvt.s32.f32 %v3206
    %v3293 = vcvt.s32.f32 %v3207
    %v3294 = vcvt.s32.f32 %v3208
    %v3295 = vcvt.s32.f32 %v3209
    %v3296 = vcvt.s32.f32 %v3210
    %v3297 = vcvt.s32.f32 %v3211
    %v3298 = vmul.f32 %v2954, %v3212
    %v3299 = vmul.f32 %v2955, %v3213
    %v3300 = vmul.f32 %v2956, %v3214
    %v3301 = vmul.f32 %v2957, %v3215
    %v3302 = vmul.f32 %v2958, %v3216
    %v3303 = vmul.f32 %v2959, %v3217
    %v3304 = vmul.f32 %v2960, %v3218
    %v3305 = vmul.f32 %v2961, %v3219
    %v3306 = vmul.f32 %v2962, %v3220
    %v3307 = vmul.f32 %v2963, %v3221
    %v3308 = vmul.f32 %v2964, %v3222
    %v3309 = vmul.f32 %v2965, %v3223
    %v3310 = vmul.f32 %v2966, %v3224
    %v3311 = vmul.f32 %v2967, %v3225
    %v3312 = vmul.f32 %v2968, %v3226
    %v3313 = vmul.f32 %v2969, %v3227
    %v3314 = vmul.f32 %v2970, %v3228
    %v3315 = vmul.f32 %v2971, %v3229
    %v3316 = vmul.f32 %v2972, %v3230
    %v3317 = vmul.f32 %v2973, %v3231
    %v3318 = vmul.f32 %v2974, %v3232
    %v3319 = vmul.f32 %v2975, %v3233
    %v3320 = vmul.f32 %v2976, %v3234
    %v3321 = vmul.f32 %v2977, %v3235
    %v3322 = vmul.f32 %v2978, %v3236
    %v3323 = vmul.f32 %v2979, %v3237
    %v3324 = vmul.f32 %v2980, %v3238
    %v3325 = vmul.f32 %v2981, %v3239
    %v3326 = vmul.f32 %v2982, %v3240
    %v3327 = vmul.f32 %v2983, %v3241
    %v3328 = vmul.f32 %v2984, %v3242
    %v3329 = vmul.f32 %v2985, %v3243
    %v3330 = vmul.f32 %v2986, %v3244
    %v3331 = vmul.f32 %v2987, %v3245
    %v3332 = vmul.f32 %v2988, %v3246
    %v3333 = vmul.f32 %v2989, %v3247
    %v3334 = vmul.f32 %v2990, %v3248
    %v3335 = vmul.f32 %v2991, %v3249
    %v3336 = vmul.f32 %v2992, %v3250
    %v3337 = vmul.f32 %v2993, %v3251
    %v3338 = vmul.f32 %v2994, %v3252
    %v3339 = vmul.f32 %v2995, %v3253
    %v3340 = vmul.f32 %v2996, %v3254
    %v3341 = vmul.f32 %v2997, %v3255
    %v3342 = vmul.f32 %v2998, %v3256
    %v3343 = vmul.f32 %v2999, %v3257
    %v3344 = vmul.f32 %v3000, %v3258
    %v3345 = vmul.f32 %v3001, %v3259
    %v3346 = vmul.f32 %v3002, %v3260
    %v3347 = vmul.f32 %v3003, %v3261
    %v3348 = vmul.f32 %v3004, %v3262
    %v3349 = vmul.f32 %v3005, %v3263
    %v3350 = vmul.f32 %v3006, %v3264
    %v3351 = vmul.f32 %v3007, %v3265
    %v3352 = vmul.f32 %v3008, %v3266
    %v3353 = vmul.f32 %v3009, %v3267
    %v3354 = vmul.f32 %v3010, %v3268
    %v3355 = vmul.f32 %v3011, %v3269
    %v3356 = vmul.f32 %v3012, %v3270
    %v3357 = vmul.f32 %v3013, %v3271
    %v3358 = vmul.f32 %v3014, %v3272
    %v3359 = vmul.f32 %v3015, %v3273
    %v3360 = vmul.f32 %v3016, %v3274
    %v3361 = vmul.f32 %v3017, %v3275
    %v3362 = vmul.f32 %v3018, %v3276
    %v3363 = vmul.f32 %v3019, %v3277
    %v3364 = vmul.f32 %v3020, %v3278
    %v3365 = vmul.f32 %v3021, %v3279
    %v3366 = vmul.f32 %v3022, %v3280
    %v3367 = vmul.f32 %v3023, %v3281
    %v3368 = vmul.f32 %v3024, %v3282
    %v3369 = vmul.f32 %v3025, %v3283
    %v3370 = vmul.f32 %v3026, %v3284
    %v3371 = vmul.f32 %v3027, %v3285
    %v3372 = vmul.f32 %v3028, %v3286
    %v3373 = vmul.f32 %v3029, %v3287
    %v3374 = vmul.f32 %v3030, %v3288
    %v3375 = vmul.f32 %v3031, %v3289
    %v3376 = vmul.f32 %v3032, %v3290
    %v3377 = vmul.f32 %v3033, %v3291
    %v3378 = vmul.f32 %v3034, %v3292
    %v3379 = vmul.f32 %v3035, %v3293
    %v3380 = vmul.f32 %v3036, %v3294
    %v3381 = vmul.f32 %v3037, %v3295
    %v3382 = vmul.f32 %v3038, %v3296
    %v3383 = vmul.f32 %v3039, %v3297
    %v3384 = vadd.f32 %v3298, %v3299
    %v3385 = vadd.f32 %v3384, %v3300
    %v3386 = vadd.f32 %v3385, %v3301
    %v3387 = vadd.f32 %v3386, %v3302
    %v3388 = vadd.f32 %v3387, %v3303
    %v3389 = vadd.f32 %v3388, %v3304
    %v3390 = vadd.f32 %v3389, %v3305
    %v3391 = vadd.f32 %v3390, %v3306
    %v3392 = vadd.f32 %v3391, %v3307
    %v3393 = vadd.f32 %v3392, %v3308
    %v3394 = vadd.f32 %v3393, %v3309
    %v3395 = vadd.f32 %v3394, %v3310
    %v3396 = vadd.f32 %v3395, %v3311
    %v3397 = vadd.f32 %v3396, %v3312
    %v3398 = vadd.f32 %v3397, %v3313
    %v3399 = vadd.f32 %v3398, %v3314
    %v3400 = vadd.f32 %v3399, %v3315
    %v3401 = vadd.f32 %v3400, %v3316
    %v3402 = vadd.f32 %v3401, %v3317
    %v3403 = vadd.f32 %v3402, %v3318
    %v3404 = vadd.f32 %v3403, %v3319
    %v3405 = vadd.f32 %v3404, %v3320
    %v3406 = vadd.f32 %v3405, %v3321
    %v3407 = vadd.f32 %v3406, %v3322
    %v3408 = vadd.f32 %v3407, %v3323
    %v3409 = vadd.f32 %v3408, %v3324
    %v3410 = vadd.f32 %v3409, %v3325
    %v3411 = vadd.f32 %v3410, %v3326
    %v3412 = vadd.f32 %v3411, %v3327
    %v3413 = vadd.f32 %v3412, %v3328
    %v3414 = vadd.f32 %v3413, %v3329
    %v3415 = vadd.f32 %v3414, %v3330
    %v3416 = vadd.f32 %v3415, %v3331
    %v3417 = vadd.f32 %v3416, %v3332
    %v3418 = vadd.f32 %v3417, %v3333
    %v3419 = vadd.f32 %v3418, %v3334
    %v3420 = vadd.f32 %v3419, %v3335
    %v3421 = vadd.f32 %v3420, %v3336
    %v3422 = vadd.f32 %v3421, %v3337
    %v3423 = vadd.f32 %v3422, %v3338
    %v3424 = vadd.f32 %v3423, %v3339
    %v3425 = vadd.f32 %v3424, %v3340
    %v3426 = vadd.f32 %v3425, %v3341
    %v3427 = vadd.f32 %v3426, %v3342
    %v3428 = vadd.f32 %v3427, %v3343
    %v3429 = vadd.f32 %v3428, %v3344
    %v3430 = vadd.f32 %v3429, %v3345
    %v3431 = vadd.f32 %v3430, %v3346
    %v3432 = vadd.f32 %v3431, %v3347
    %v3433 = vadd.f32 %v3432, %v3348
    %v3434 = vadd.f32 %v3433, %v3349
    %v3435 = vadd.f32 %v3434, %v3350
    %v3436 = vadd.f32 %v3435, %v3351
    %v3437 = vadd.f32 %v3436, %v3352
    %v3438 = vadd.f32 %v3437, %v3353
    %v3439 = vadd.f32 %v3438, %v3354
    %v3440 = vadd.f32 %v3439, %v3355
    %v3441 = vadd.f32 %v3440, %v3356
    %v3442 = vadd.f32 %v3441, %v3357
    %v3443 = vadd.f32 %v3442, %v3358
    %v3444 = vadd.f32 %v3443, %v3359
    %v3445 = vadd.f32 %v3444, %v3360
    %v3446 = vadd.f32 %v3445, %v3361
    %v3447 = vadd.f32 %v3446, %v3362
    %v3448 = vadd.f32 %v3447, %v3363
    %v3449 = vadd.f32 %v3448, %v3364
    %v3450 = vadd.f32 %v3449, %v3365
    %v3451 = vadd.f32 %v3450, %v3366
    %v3452 = vadd.f32 %v3451, %v3367
    %v3453 = vadd.f32 %v3452, %v3368
    %v3454 = vadd.f32 %v3453, %v3369
    %v3455 = vadd.f32 %v3454, %v3370
    %v3456 = vadd.f32 %v3455, %v3371
    %v3457 = vadd.f32 %v3456, %v3372
    %v3458 = vadd.f32 %v3457, %v3373
    %v3459 = vadd.f32 %v3458, %v3374
    %v3460 = vadd.f32 %v3459, %v3375
    %v3461 = vadd.f32 %v3460, %v3376
    %v3462 = vadd.f32 %v3461, %v3377
    %v3463 = vadd.f32 %v3462, %v3378
    %v3464 = vadd.f32 %v3463, %v3379
    %v3465 = vadd.f32 %v3464, %v3380
    %v3466 = vadd.f32 %v3465, %v3381
    %v3467 = vadd.f32 %v3466, %v3382
    %v3468 = vadd.f32 %v3467, %v3383
    %3469 = vadd.xlane.f32.xlu0 %v3468
    %v3470 = vpop.xlane.xlu0 %3469
    %v3471 = vrot.slane %v3470, 4
    %v3472 = vadd.f32 %v3470, %v3471
    %v3473 = vrot.slane %v3472, 2
    %v3474 = vadd.f32 %v3472, %v3473
    %v3475 = vrot.slane %v3474, 1
    %v3476 = vadd.f32 %v3474, %v3475
    %s3477 = vtos %v3476
    %v3478 = vstv %s198
    %v3479 = vrcp.pop %v3478
    %v3480 = vmul.f32 %v3478, %v3479
    %v3481 = vsub.f32 1.0, %v3480
    %v3482 = vmul.f32 %v3479, %v3481
    %v3483 = vadd.f32 %v3479, %v3482
    %vm3484 = vweird.f32 %v3478
    %vm3485 = vweird.f32 %v3479
    %vm3486 = vmor %vm3484, %vm3485
    %v3487 = vsel %vm3486, %v3479, %v3483
    %v3488 = vand.u32 2147483647, %v3478
    %vm3489 = vcmp.eq.f32.partialorder %v3488, 8.507059e+37
    %v3490 = vand.u32 %v3478, 2147483648
    %v3491 = vor.u32 1.1754944e-38, %v3490
    %v3492 = vsel %vm3489, %v3491, %v3487
    %s3493 = vtos %v3492
    %s3494 = smul.f32 %s3477, %s3493
    %v3495 = vld [vmem:[%s2] sm:$0xff]
    %v3496 = vld [vmem:[%s2 + $0x8] sm:$0xff]
    %v3497 = vld [vmem:[%s2 + $0x10] sm:$0xff]
    %v3498 = vld [vmem:[%s2 + $0x18] sm:$0xff]
    %v3499 = vld [vmem:[%s2 + $0x20] sm:$0xff]
    %v3500 = vld [vmem:[%s2 + $0x28] sm:$0xff]
    %v3501 = vld [vmem:[%s2 + $0x30] sm:$0xff]
    %v3502 = vld [vmem:[%s2 + $0x38] sm:$0xff]
    %v3503 = vld [vmem:[%s2 + $0x40] sm:$0xff]
    %v3504 = vld [vmem:[%s2 + $0x48] sm:$0xff]
    %v3505 = vld [vmem:[%s2 + $0x50] sm:$0xff]
    %v3506 = vld [vmem:[%s2 + $0x58] sm:$0xff]
    %v3507 = vld [vmem:[%s2 + $0x60] sm:$0xff]
    %v3508 = vld [vmem:[%s2 + $0x68] sm:$0xff]
    %v3509 = vld [vmem:[%s2 + $0x70] sm:$0xff]
    %v3510 = vld [vmem:[%s2 + $0x78] sm:$0xff]
    %v3511 = vld [vmem:[%s2 + $0x80] sm:$0xff]
    %v3512 = vld [vmem:[%s2 + $0x88] sm:$0xff]
    %v3513 = vld [vmem:[%s2 + $0x90] sm:$0xff]
    %v3514 = vld [vmem:[%s2 + $0x98] sm:$0xff]
    %v3515 = vld [vmem:[%s2 + $0xa0] sm:$0xff]
    %v3516 = vld [vmem:[%s2 + $0xa8] sm:$0xff]
    %v3517 = vld [vmem:[%s2 + $0xb0] sm:$0xff]
    %v3518 = vld [vmem:[%s2 + $0xb8] sm:$0xff]
    %v3519 = vld [vmem:[%s2 + $0xc0] sm:$0xff]
    %v3520 = vld [vmem:[%s2 + $0xc8] sm:$0xff]
    %v3521 = vld [vmem:[%s2 + $0xd0] sm:$0xff]
    %v3522 = vld [vmem:[%s2 + $0xd8] sm:$0xff]
    %v3523 = vld [vmem:[%s2 + $0xe0] sm:$0xff]
    %v3524 = vld [vmem:[%s2 + $0xe8] sm:$0xff]
    %v3525 = vld [vmem:[%s2 + $0xf0] sm:$0xff]
    %v3526 = vld [vmem:[%s2 + $0xf8] sm:$0xff]
    %v3527 = vld [vmem:[%s2 + $0x100] sm:$0xff]
    %v3528 = vld [vmem:[%s2 + $0x108] sm:$0xff]
    %v3529 = vld [vmem:[%s2 + $0x110] sm:$0xff]
    %v3530 = vld [vmem:[%s2 + $0x118] sm:$0xff]
    %v3531 = vld [vmem:[%s2 + $0x120] sm:$0xff]
    %v3532 = vld [vmem:[%s2 + $0x128] sm:$0xff]
    %v3533 = vld [vmem:[%s2 + $0x130] sm:$0xff]
    %v3534 = vld [vmem:[%s2 + $0x138] sm:$0xff]
    %v3535 = vld [vmem:[%s2 + $0x140] sm:$0xff]
    %v3536 = vld [vmem:[%s2 + $0x148] sm:$0xff]
    %v3537 = vld [vmem:[%s2 + $0x150] sm:$0xff]
    %v3538 = vld [vmem:[%s2 + $0x158] sm:$0xff]
    %v3539 = vld [vmem:[%s2 + $0x160] sm:$0xff]
    %v3540 = vld [vmem:[%s2 + $0x168] sm:$0xff]
    %v3541 = vld [vmem:[%s2 + $0x170] sm:$0xff]
    %v3542 = vld [vmem:[%s2 + $0x178] sm:$0xff]
    %v3543 = vld [vmem:[%s2 + $0x180] sm:$0xff]
    %v3544 = vld [vmem:[%s2 + $0x188] sm:$0xff]
    %v3545 = vld [vmem:[%s2 + $0x190] sm:$0xff]
    %v3546 = vld [vmem:[%s2 + $0x198] sm:$0xff]
    %v3547 = vld [vmem:[%s2 + $0x1a0] sm:$0xff]
    %v3548 = vld [vmem:[%s2 + $0x1a8] sm:$0xff]
    %v3549 = vld [vmem:[%s2 + $0x1b0] sm:$0xff]
    %v3550 = vld [vmem:[%s2 + $0x1b8] sm:$0xff]
    %v3551 = vld [vmem:[%s2 + $0x1c0] sm:$0xff]
    %v3552 = vld [vmem:[%s2 + $0x1c8] sm:$0xff]
    %v3553 = vld [vmem:[%s2 + $0x1d0] sm:$0xff]
    %v3554 = vld [vmem:[%s2 + $0x1d8] sm:$0xff]
    %v3555 = vld [vmem:[%s2 + $0x1e0] sm:$0xff]
    %v3556 = vld [vmem:[%s2 + $0x1e8] sm:$0xff]
    %v3557 = vld [vmem:[%s2 + $0x1f0] sm:$0xff]
    %v3558 = vld [vmem:[%s2 + $0x1f8] sm:$0xff]
    %v3559 = vld [vmem:[%s2 + $0x200] sm:$0xff]
    %v3560 = vld [vmem:[%s2 + $0x208] sm:$0xff]
    %v3561 = vld [vmem:[%s2 + $0x210] sm:$0xff]
    %v3562 = vld [vmem:[%s2 + $0x218] sm:$0xff]
    %v3563 = vld [vmem:[%s2 + $0x220] sm:$0xff]
    %v3564 = vld [vmem:[%s2 + $0x228] sm:$0xff]
    %v3565 = vld [vmem:[%s2 + $0x230] sm:$0xff]
    %v3566 = vld [vmem:[%s2 + $0x238] sm:$0xff]
    %v3567 = vld [vmem:[%s2 + $0x240] sm:$0xff]
    %v3568 = vld [vmem:[%s2 + $0x248] sm:$0xff]
    %v3569 = vld [vmem:[%s2 + $0x250] sm:$0xff]
    %v3570 = vld [vmem:[%s2 + $0x258] sm:$0xff]
    %v3571 = vld [vmem:[%s2 + $0x260] sm:$0xff]
    %v3572 = vld [vmem:[%s2 + $0x268] sm:$0xff]
    %v3573 = vld [vmem:[%s2 + $0x270] sm:$0xff]
    %v3574 = vld [vmem:[%s2 + $0x278] sm:$0xff]
    %v3575 = vld [vmem:[%s2 + $0x280] sm:$0xff]
    %v3576 = vld [vmem:[%s2 + $0x288] sm:$0xff]
    %v3577 = vld [vmem:[%s2 + $0x290] sm:$0xff]
    %v3578 = vld [vmem:[%s2 + $0x298] sm:$0xff]
    %v3579 = vld [vmem:[%s2 + $0x2a0] sm:$0xff]
    %v3580 = vld [vmem:[%s2 + $0x2a8] sm:$0xff]
    %v3581 = vld [vmem:[%s3] sm:$0xff]
    %v3582 = vld [vmem:[%s3 + $0x8] sm:$0xff]
    %v3583 = vld [vmem:[%s3 + $0x10] sm:$0xff]
    %v3584 = vld [vmem:[%s3 + $0x18] sm:$0xff]
    %v3585 = vld [vmem:[%s3 + $0x20] sm:$0xff]
    %v3586 = vld [vmem:[%s3 + $0x28] sm:$0xff]
    %v3587 = vld [vmem:[%s3 + $0x30] sm:$0xff]
    %v3588 = vld [vmem:[%s3 + $0x38] sm:$0xff]
    %v3589 = vld [vmem:[%s3 + $0x40] sm:$0xff]
    %v3590 = vld [vmem:[%s3 + $0x48] sm:$0xff]
    %v3591 = vld [vmem:[%s3 + $0x50] sm:$0xff]
    %v3592 = vld [vmem:[%s3 + $0x58] sm:$0xff]
    %v3593 = vld [vmem:[%s3 + $0x60] sm:$0xff]
    %v3594 = vld [vmem:[%s3 + $0x68] sm:$0xff]
    %v3595 = vld [vmem:[%s3 + $0x70] sm:$0xff]
    %v3596 = vld [vmem:[%s3 + $0x78] sm:$0xff]
    %v3597 = vld [vmem:[%s3 + $0x80] sm:$0xff]
    %v3598 = vld [vmem:[%s3 + $0x88] sm:$0xff]
    %v3599 = vld [vmem:[%s3 + $0x90] sm:$0xff]
    %v3600 = vld [vmem:[%s3 + $0x98] sm:$0xff]
    %v3601 = vld [vmem:[%s3 + $0xa0] sm:$0xff]
    %v3602 = vld [vmem:[%s3 + $0xa8] sm:$0xff]
    %v3603 = vld [vmem:[%s3 + $0xb0] sm:$0xff]
    %v3604 = vld [vmem:[%s3 + $0xb8] sm:$0xff]
    %v3605 = vld [vmem:[%s3 + $0xc0] sm:$0xff]
    %v3606 = vld [vmem:[%s3 + $0xc8] sm:$0xff]
    %v3607 = vld [vmem:[%s3 + $0xd0] sm:$0xff]
    %v3608 = vld [vmem:[%s3 + $0xd8] sm:$0xff]
    %v3609 = vld [vmem:[%s3 + $0xe0] sm:$0xff]
    %v3610 = vld [vmem:[%s3 + $0xe8] sm:$0xff]
    %v3611 = vld [vmem:[%s3 + $0xf0] sm:$0xff]
    %v3612 = vld [vmem:[%s3 + $0xf8] sm:$0xff]
    %v3613 = vld [vmem:[%s3 + $0x100] sm:$0xff]
    %v3614 = vld [vmem:[%s3 + $0x108] sm:$0xff]
    %v3615 = vld [vmem:[%s3 + $0x110] sm:$0xff]
    %v3616 = vld [vmem:[%s3 + $0x118] sm:$0xff]
    %v3617 = vld [vmem:[%s3 + $0x120] sm:$0xff]
    %v3618 = vld [vmem:[%s3 + $0x128] sm:$0xff]
    %v3619 = vld [vmem:[%s3 + $0x130] sm:$0xff]
    %v3620 = vld [vmem:[%s3 + $0x138] sm:$0xff]
    %v3621 = vld [vmem:[%s3 + $0x140] sm:$0xff]
    %v3622 = vld [vmem:[%s3 + $0x148] sm:$0xff]
    %v3623 = vld [vmem:[%s3 + $0x150] sm:$0xff]
    %v3624 = vld [vmem:[%s3 + $0x158] sm:$0xff]
    %v3625 = vld [vmem:[%s3 + $0x160] sm:$0xff]
    %v3626 = vld [vmem:[%s3 + $0x168] sm:$0xff]
    %v3627 = vld [vmem:[%s3 + $0x170] sm:$0xff]
    %v3628 = vld [vmem:[%s3 + $0x178] sm:$0xff]
    %v3629 = vld [vmem:[%s3 + $0x180] sm:$0xff]
    %v3630 = vld [vmem:[%s3 + $0x188] sm:$0xff]
    %v3631 = vld [vmem:[%s3 + $0x190] sm:$0xff]
    %v3632 = vld [vmem:[%s3 + $0x198] sm:$0xff]
    %v3633 = vld [vmem:[%s3 + $0x1a0] sm:$0xff]
    %v3634 = vld [vmem:[%s3 + $0x1a8] sm:$0xff]
    %v3635 = vld [vmem:[%s3 + $0x1b0] sm:$0xff]
    %v3636 = vld [vmem:[%s3 + $0x1b8] sm:$0xff]
    %v3637 = vld [vmem:[%s3 + $0x1c0] sm:$0xff]
    %v3638 = vld [vmem:[%s3 + $0x1c8] sm:$0xff]
    %v3639 = vld [vmem:[%s3 + $0x1d0] sm:$0xff]
    %v3640 = vld [vmem:[%s3 + $0x1d8] sm:$0xff]
    %v3641 = vld [vmem:[%s3 + $0x1e0] sm:$0xff]
    %v3642 = vld [vmem:[%s3 + $0x1e8] sm:$0xff]
    %v3643 = vld [vmem:[%s3 + $0x1f0] sm:$0xff]
    %v3644 = vld [vmem:[%s3 + $0x1f8] sm:$0xff]
    %v3645 = vld [vmem:[%s3 + $0x200] sm:$0xff]
    %v3646 = vld [vmem:[%s3 + $0x208] sm:$0xff]
    %v3647 = vld [vmem:[%s3 + $0x210] sm:$0xff]
    %v3648 = vld [vmem:[%s3 + $0x218] sm:$0xff]
    %v3649 = vld [vmem:[%s3 + $0x220] sm:$0xff]
    %v3650 = vld [vmem:[%s3 + $0x228] sm:$0xff]
    %v3651 = vld [vmem:[%s3 + $0x230] sm:$0xff]
    %v3652 = vld [vmem:[%s3 + $0x238] sm:$0xff]
    %v3653 = vld [vmem:[%s3 + $0x240] sm:$0xff]
    %v3654 = vld [vmem:[%s3 + $0x248] sm:$0xff]
    %v3655 = vld [vmem:[%s3 + $0x250] sm:$0xff]
    %v3656 = vld [vmem:[%s3 + $0x258] sm:$0xff]
    %v3657 = vld [vmem:[%s3 + $0x260] sm:$0xff]
    %v3658 = vld [vmem:[%s3 + $0x268] sm:$0xff]
    %v3659 = vld [vmem:[%s3 + $0x270] sm:$0xff]
    %v3660 = vld [vmem:[%s3 + $0x278] sm:$0xff]
    %v3661 = vld [vmem:[%s3 + $0x280] sm:$0xff]
    %v3662 = vld [vmem:[%s3 + $0x288] sm:$0xff]
    %v3663 = vld [vmem:[%s3 + $0x290] sm:$0xff]
    %v3664 = vld [vmem:[%s3 + $0x298] sm:$0xff]
    %v3665 = vld [vmem:[%s3 + $0x2a0] sm:$0xff]
    %v3666 = vld [vmem:[%s3 + $0x2a8] sm:$0xff]
    %v3667 = vsub.f32 %v3581, %v3495
    %v3668 = vsub.f32 %v3582, %v3496
    %v3669 = vsub.f32 %v3583, %v3497
    %v3670 = vsub.f32 %v3584, %v3498
    %v3671 = vsub.f32 %v3585, %v3499
    %v3672 = vsub.f32 %v3586, %v3500
    %v3673 = vsub.f32 %v3587, %v3501
    %v3674 = vsub.f32 %v3588, %v3502
    %v3675 = vsub.f32 %v3589, %v3503
    %v3676 = vsub.f32 %v3590, %v3504
    %v3677 = vsub.f32 %v3591, %v3505
    %v3678 = vsub.f32 %v3592, %v3506
    %v3679 = vsub.f32 %v3593, %v3507
    %v3680 = vsub.f32 %v3594, %v3508
    %v3681 = vsub.f32 %v3595, %v3509
    %v3682 = vsub.f32 %v3596, %v3510
    %v3683 = vsub.f32 %v3597, %v3511
    %v3684 = vsub.f32 %v3598, %v3512
    %v3685 = vsub.f32 %v3599, %v3513
    %v3686 = vsub.f32 %v3600, %v3514
    %v3687 = vsub.f32 %v3601, %v3515
    %v3688 = vsub.f32 %v3602, %v3516
    %v3689 = vsub.f32 %v3603, %v3517
    %v3690 = vsub.f32 %v3604, %v3518
    %v3691 = vsub.f32 %v3605, %v3519
    %v3692 = vsub.f32 %v3606, %v3520
    %v3693 = vsub.f32 %v3607, %v3521
    %v3694 = vsub.f32 %v3608, %v3522
    %v3695 = vsub.f32 %v3609, %v3523
    %v3696 = vsub.f32 %v3610, %v3524
    %v3697 = vsub.f32 %v3611, %v3525
    %v3698 = vsub.f32 %v3612, %v3526
    %v3699 = vsub.f32 %v3613, %v3527
    %v3700 = vsub.f32 %v3614, %v3528
    %v3701 = vsub.f32 %v3615, %v3529
    %v3702 = vsub.f32 %v3616, %v3530
    %v3703 = vsub.f32 %v3617, %v3531
    %v3704 = vsub.f32 %v3618, %v3532
    %v3705 = vsub.f32 %v3619, %v3533
    %v3706 = vsub.f32 %v3620, %v3534
    %v3707 = vsub.f32 %v3621, %v3535
    %v3708 = vsub.f32 %v3622, %v3536
    %v3709 = vsub.f32 %v3623, %v3537
    %v3710 = vsub.f32 %v3624, %v3538
    %v3711 = vsub.f32 %v3625, %v3539
    %v3712 = vsub.f32 %v3626, %v3540
    %v3713 = vsub.f32 %v3627, %v3541
    %v3714 = vsub.f32 %v3628, %v3542
    %v3715 = vsub.f32 %v3629, %v3543
    %v3716 = vsub.f32 %v3630, %v3544
    %v3717 = vsub.f32 %v3631, %v3545
    %v3718 = vsub.f32 %v3632, %v3546
    %v3719 = vsub.f32 %v3633, %v3547
    %v3720 = vsub.f32 %v3634, %v3548
    %v3721 = vsub.f32 %v3635, %v3549
    %v3722 = vsub.f32 %v3636, %v3550
    %v3723 = vsub.f32 %v3637, %v3551
    %v3724 = vsub.f32 %v3638, %v3552
    %v3725 = vsub.f32 %v3639, %v3553
    %v3726 = vsub.f32 %v3640, %v3554
    %v3727 = vsub.f32 %v3641, %v3555
    %v3728 = vsub.f32 %v3642, %v3556
    %v3729 = vsub.f32 %v3643, %v3557
    %v3730 = vsub.f32 %v3644, %v3558
    %v3731 = vsub.f32 %v3645, %v3559
    %v3732 = vsub.f32 %v3646, %v3560
    %v3733 = vsub.f32 %v3647, %v3561
    %v3734 = vsub.f32 %v3648, %v3562
    %v3735 = vsub.f32 %v3649, %v3563
    %v3736 = vsub.f32 %v3650, %v3564
    %v3737 = vsub.f32 %v3651, %v3565
    %v3738 = vsub.f32 %v3652, %v3566
    %v3739 = vsub.f32 %v3653, %v3567
    %v3740 = vsub.f32 %v3654, %v3568
    %v3741 = vsub.f32 %v3655, %v3569
    %v3742 = vsub.f32 %v3656, %v3570
    %v3743 = vsub.f32 %v3657, %v3571
    %v3744 = vsub.f32 %v3658, %v3572
    %v3745 = vsub.f32 %v3659, %v3573
    %v3746 = vsub.f32 %v3660, %v3574
    %v3747 = vsub.f32 %v3661, %v3575
    %v3748 = vsub.f32 %v3662, %v3576
    %v3749 = vsub.f32 %v3663, %v3577
    %v3750 = vsub.f32 %v3664, %v3578
    %v3751 = vsub.f32 %v3665, %v3579
    %v3752 = vsub.f32 %v3666, %v3580
    %v3753 = vand.u32 2147483647, %v3667
    %v3754 = vand.u32 2147483647, %v3668
    %v3755 = vand.u32 2147483647, %v3669
    %v3756 = vand.u32 2147483647, %v3670
    %v3757 = vand.u32 2147483647, %v3671
    %v3758 = vand.u32 2147483647, %v3672
    %v3759 = vand.u32 2147483647, %v3673
    %v3760 = vand.u32 2147483647, %v3674
    %v3761 = vand.u32 2147483647, %v3675
    %v3762 = vand.u32 2147483647, %v3676
    %v3763 = vand.u32 2147483647, %v3677
    %v3764 = vand.u32 2147483647, %v3678
    %v3765 = vand.u32 2147483647, %v3679
    %v3766 = vand.u32 2147483647, %v3680
    %v3767 = vand.u32 2147483647, %v3681
    %v3768 = vand.u32 2147483647, %v3682
    %v3769 = vand.u32 2147483647, %v3683
    %v3770 = vand.u32 2147483647, %v3684
    %v3771 = vand.u32 2147483647, %v3685
    %v3772 = vand.u32 2147483647, %v3686
    %v3773 = vand.u32 2147483647, %v3687
    %v3774 = vand.u32 2147483647, %v3688
    %v3775 = vand.u32 2147483647, %v3689
    %v3776 = vand.u32 2147483647, %v3690
    %v3777 = vand.u32 2147483647, %v3691
    %v3778 = vand.u32 2147483647, %v3692
    %v3779 = vand.u32 2147483647, %v3693
    %v3780 = vand.u32 2147483647, %v3694
    %v3781 = vand.u32 2147483647, %v3695
    %v3782 = vand.u32 2147483647, %v3696
    %v3783 = vand.u32 2147483647, %v3697
    %v3784 = vand.u32 2147483647, %v3698
    %v3785 = vand.u32 2147483647, %v3699
    %v3786 = vand.u32 2147483647, %v3700
    %v3787 = vand.u32 2147483647, %v3701
    %v3788 = vand.u32 2147483647, %v3702
    %v3789 = vand.u32 2147483647, %v3703
    %v3790 = vand.u32 2147483647, %v3704
    %v3791 = vand.u32 2147483647, %v3705
    %v3792 = vand.u32 2147483647, %v3706
    %v3793 = vand.u32 2147483647, %v3707
    %v3794 = vand.u32 2147483647, %v3708
    %v3795 = vand.u32 2147483647, %v3709
    %v3796 = vand.u32 2147483647, %v3710
    %v3797 = vand.u32 2147483647, %v3711
    %v3798 = vand.u32 2147483647, %v3712
    %v3799 = vand.u32 2147483647, %v3713
    %v3800 = vand.u32 2147483647, %v3714
    %v3801 = vand.u32 2147483647, %v3715
    %v3802 = vand.u32 2147483647, %v3716
    %v3803 = vand.u32 2147483647, %v3717
    %v3804 = vand.u32 2147483647, %v3718
    %v3805 = vand.u32 2147483647, %v3719
    %v3806 = vand.u32 2147483647, %v3720
    %v3807 = vand.u32 2147483647, %v3721
    %v3808 = vand.u32 2147483647, %v3722
    %v3809 = vand.u32 2147483647, %v3723
    %v3810 = vand.u32 2147483647, %v3724
    %v3811 = vand.u32 2147483647, %v3725
    %v3812 = vand.u32 2147483647, %v3726
    %v3813 = vand.u32 2147483647, %v3727
    %v3814 = vand.u32 2147483647, %v3728
    %v3815 = vand.u32 2147483647, %v3729
    %v3816 = vand.u32 2147483647, %v3730
    %v3817 = vand.u32 2147483647, %v3731
    %v3818 = vand.u32 2147483647, %v3732
    %v3819 = vand.u32 2147483647, %v3733
    %v3820 = vand.u32 2147483647, %v3734
    %v3821 = vand.u32 2147483647, %v3735
    %v3822 = vand.u32 2147483647, %v3736
    %v3823 = vand.u32 2147483647, %v3737
    %v3824 = vand.u32 2147483647, %v3738
    %v3825 = vand.u32 2147483647, %v3739
    %v3826 = vand.u32 2147483647, %v3740
    %v3827 = vand.u32 2147483647, %v3741
    %v3828 = vand.u32 2147483647, %v3742
    %v3829 = vand.u32 2147483647, %v3743
    %v3830 = vand.u32 2147483647, %v3744
    %v3831 = vand.u32 2147483647, %v3745
    %v3832 = vand.u32 2147483647, %v3746
    %v3833 = vand.u32 2147483647, %v3747
    %v3834 = vand.u32 2147483647, %v3748
    %v3835 = vand.u32 2147483647, %v3749
    %v3836 = vand.u32 2147483647, %v3750
    %v3837 = vand.u32 2147483647, %v3751
    %v3838 = vand.u32 2147483647, %v3752
    %v3839 = vmin.f32 %v3753, 0.1
    %v3840 = vmin.f32 %v3754, 0.1
    %v3841 = vmin.f32 %v3755, 0.1
    %v3842 = vmin.f32 %v3756, 0.1
    %v3843 = vmin.f32 %v3757, 0.1
    %v3844 = vmin.f32 %v3758, 0.1
    %v3845 = vmin.f32 %v3759, 0.1
    %v3846 = vmin.f32 %v3760, 0.1
    %v3847 = vmin.f32 %v3761, 0.1
    %v3848 = vmin.f32 %v3762, 0.1
    %v3849 = vmin.f32 %v3763, 0.1
    %v3850 = vmin.f32 %v3764, 0.1
    %v3851 = vmin.f32 %v3765, 0.1
    %v3852 = vmin.f32 %v3766, 0.1
    %v3853 = vmin.f32 %v3767, 0.1
    %v3854 = vmin.f32 %v3768, 0.1
    %v3855 = vmin.f32 %v3769, 0.1
    %v3856 = vmin.f32 %v3770, 0.1
    %v3857 = vmin.f32 %v3771, 0.1
    %v3858 = vmin.f32 %v3772, 0.1
    %v3859 = vmin.f32 %v3773, 0.1
    %v3860 = vmin.f32 %v3774, 0.1
    %v3861 = vmin.f32 %v3775, 0.1
    %v3862 = vmin.f32 %v3776, 0.1
    %v3863 = vmin.f32 %v3777, 0.1
    %v3864 = vmin.f32 %v3778, 0.1
    %v3865 = vmin.f32 %v3779, 0.1
    %v3866 = vmin.f32 %v3780, 0.1
    %v3867 = vmin.f32 %v3781, 0.1
    %v3868 = vmin.f32 %v3782, 0.1
    %v3869 = vmin.f32 %v3783, 0.1
    %v3870 = vmin.f32 %v3784, 0.1
    %v3871 = vmin.f32 %v3785, 0.1
    %v3872 = vmin.f32 %v3786, 0.1
    %v3873 = vmin.f32 %v3787, 0.1
    %v3874 = vmin.f32 %v3788, 0.1
    %v3875 = vmin.f32 %v3789, 0.1
    %v3876 = vmin.f32 %v3790, 0.1
    %v3877 = vmin.f32 %v3791, 0.1
    %v3878 = vmin.f32 %v3792, 0.1
    %v3879 = vmin.f32 %v3793, 0.1
    %v3880 = vmin.f32 %v3794, 0.1
    %v3881 = vmin.f32 %v3795, 0.1
    %v3882 = vmin.f32 %v3796, 0.1
    %v3883 = vmin.f32 %v3797, 0.1
    %v3884 = vmin.f32 %v3798, 0.1
    %v3885 = vmin.f32 %v3799, 0.1
    %v3886 = vmin.f32 %v3800, 0.1
    %v3887 = vmin.f32 %v3801, 0.1
    %v3888 = vmin.f32 %v3802, 0.1
    %v3889 = vmin.f32 %v3803, 0.1
    %v3890 = vmin.f32 %v3804, 0.1
    %v3891 = vmin.f32 %v3805, 0.1
    %v3892 = vmin.f32 %v3806, 0.1
    %v3893 = vmin.f32 %v3807, 0.1
    %v3894 = vmin.f32 %v3808, 0.1
    %v3895 = vmin.f32 %v3809, 0.1
    %v3896 = vmin.f32 %v3810, 0.1
    %v3897 = vmin.f32 %v3811, 0.1
    %v3898 = vmin.f32 %v3812, 0.1
    %v3899 = vmin.f32 %v3813, 0.1
    %v3900 = vmin.f32 %v3814, 0.1
    %v3901 = vmin.f32 %v3815, 0.1
    %v3902 = vmin.f32 %v3816, 0.1
    %v3903 = vmin.f32 %v3817, 0.1
    %v3904 = vmin.f32 %v3818, 0.1
    %v3905 = vmin.f32 %v3819, 0.1
    %v3906 = vmin.f32 %v3820, 0.1
    %v3907 = vmin.f32 %v3821, 0.1
    %v3908 = vmin.f32 %v3822, 0.1
    %v3909 = vmin.f32 %v3823, 0.1
    %v3910 = vmin.f32 %v3824, 0.1
    %v3911 = vmin.f32 %v3825, 0.1
    %v3912 = vmin.f32 %v3826, 0.1
    %v3913 = vmin.f32 %v3827, 0.1
    %v3914 = vmin.f32 %v3828, 0.1
    %v3915 = vmin.f32 %v3829, 0.1
    %v3916 = vmin.f32 %v3830, 0.1
    %v3917 = vmin.f32 %v3831, 0.1
    %v3918 = vmin.f32 %v3832, 0.1
    %v3919 = vmin.f32 %v3833, 0.1
    %v3920 = vmin.f32 %v3834, 0.1
    %v3921 = vmin.f32 %v3835, 0.1
    %v3922 = vmin.f32 %v3836, 0.1
    %v3923 = vmin.f32 %v3837, 0.1
    %v3924 = vmin.f32 %v3838, 0.1
    %v3925 = vsub.f32 %v3753, %v3839
    %v3926 = vsub.f32 %v3754, %v3840
    %v3927 = vsub.f32 %v3755, %v3841
    %v3928 = vsub.f32 %v3756, %v3842
    %v3929 = vsub.f32 %v3757, %v3843
    %v3930 = vsub.f32 %v3758, %v3844
    %v3931 = vsub.f32 %v3759, %v3845
    %v3932 = vsub.f32 %v3760, %v3846
    %v3933 = vsub.f32 %v3761, %v3847
    %v3934 = vsub.f32 %v3762, %v3848
    %v3935 = vsub.f32 %v3763, %v3849
    %v3936 = vsub.f32 %v3764, %v3850
    %v3937 = vsub.f32 %v3765, %v3851
    %v3938 = vsub.f32 %v3766, %v3852
    %v3939 = vsub.f32 %v3767, %v3853
    %v3940 = vsub.f32 %v3768, %v3854
    %v3941 = vsub.f32 %v3769, %v3855
    %v3942 = vsub.f32 %v3770, %v3856
    %v3943 = vsub.f32 %v3771, %v3857
    %v3944 = vsub.f32 %v3772, %v3858
    %v3945 = vsub.f32 %v3773, %v3859
    %v3946 = vsub.f32 %v3774, %v3860
    %v3947 = vsub.f32 %v3775, %v3861
    %v3948 = vsub.f32 %v3776, %v3862
    %v3949 = vsub.f32 %v3777, %v3863
    %v3950 = vsub.f32 %v3778, %v3864
    %v3951 = vsub.f32 %v3779, %v3865
    %v3952 = vsub.f32 %v3780, %v3866
    %v3953 = vsub.f32 %v3781, %v3867
    %v3954 = vsub.f32 %v3782, %v3868
    %v3955 = vsub.f32 %v3783, %v3869
    %v3956 = vsub.f32 %v3784, %v3870
    %v3957 = vsub.f32 %v3785, %v3871
    %v3958 = vsub.f32 %v3786, %v3872
    %v3959 = vsub.f32 %v3787, %v3873
    %v3960 = vsub.f32 %v3788, %v3874
    %v3961 = vsub.f32 %v3789, %v3875
    %v3962 = vsub.f32 %v3790, %v3876
    %v3963 = vsub.f32 %v3791, %v3877
    %v3964 = vsub.f32 %v3792, %v3878
    %v3965 = vsub.f32 %v3793, %v3879
    %v3966 = vsub.f32 %v3794, %v3880
    %v3967 = vsub.f32 %v3795, %v3881
    %v3968 = vsub.f32 %v3796, %v3882
    %v3969 = vsub.f32 %v3797, %v3883
    %v3970 = vsub.f32 %v3798, %v3884
    %v3971 = vsub.f32 %v3799, %v3885
    %v3972 = vsub.f32 %v3800, %v3886
    %v3973 = vsub.f32 %v3801, %v3887
    %v3974 = vsub.f32 %v3802, %v3888
    %v3975 = vsub.f32 %v3803, %v3889
    %v3976 = vsub.f32 %v3804, %v3890
    %v3977 = vsub.f32 %v3805, %v3891
    %v3978 = vsub.f32 %v3806, %v3892
    %v3979 = vsub.f32 %v3807, %v3893
    %v3980 = vsub.f32 %v3808, %v3894
    %v3981 = vsub.f32 %v3809, %v3895
    %v3982 = vsub.f32 %v3810, %v3896
    %v3983 = vsub.f32 %v3811, %v3897
    %v3984 = vsub.f32 %v3812, %v3898
    %v3985 = vsub.f32 %v3813, %v3899
    %v3986 = vsub.f32 %v3814, %v3900
    %v3987 = vsub.f32 %v3815, %v3901
    %v3988 = vsub.f32 %v3816, %v3902
    %v3989 = vsub.f32 %v3817, %v3903
    %v3990 = vsub.f32 %v3818, %v3904
    %v3991 = vsub.f32 %v3819, %v3905
    %v3992 = vsub.f32 %v3820, %v3906
    %v3993 = vsub.f32 %v3821, %v3907
    %v3994 = vsub.f32 %v3822, %v3908
    %v3995 = vsub.f32 %v3823, %v3909
    %v3996 = vsub.f32 %v3824, %v3910
    %v3997 = vsub.f32 %v3825, %v3911
    %v3998 = vsub.f32 %v3826, %v3912
    %v3999 = vsub.f32 %v3827, %v3913
    %v4000 = vsub.f32 %v3828, %v3914
    %v4001 = vsub.f32 %v3829, %v3915
    %v4002 = vsub.f32 %v3830, %v3916
    %v4003 = vsub.f32 %v3831, %v3917
    %v4004 = vsub.f32 %v3832, %v3918
    %v4005 = vsub.f32 %v3833, %v3919
    %v4006 = vsub.f32 %v3834, %v3920
    %v4007 = vsub.f32 %v3835, %v3921
    %v4008 = vsub.f32 %v3836, %v3922
    %v4009 = vsub.f32 %v3837, %v3923
    %v4010 = vsub.f32 %v3838, %v3924
    %v4011 = vmul.f32 %v3839, 0.5
    %v4012 = vmul.f32 %v3840, 0.5
    %v4013 = vmul.f32 %v3841, 0.5
    %v4014 = vmul.f32 %v3842, 0.5
    %v4015 = vmul.f32 %v3843, 0.5
    %v4016 = vmul.f32 %v3844, 0.5
    %v4017 = vmul.f32 %v3845, 0.5
    %v4018 = vmul.f32 %v3846, 0.5
    %v4019 = vmul.f32 %v3847, 0.5
    %v4020 = vmul.f32 %v3848, 0.5
    %v4021 = vmul.f32 %v3849, 0.5
    %v4022 = vmul.f32 %v3850, 0.5
    %v4023 = vmul.f32 %v3851, 0.5
    %v4024 = vmul.f32 %v3852, 0.5
    %v4025 = vmul.f32 %v3853, 0.5
    %v4026 = vmul.f32 %v3854, 0.5
    %v4027 = vmul.f32 %v3855, 0.5
    %v4028 = vmul.f32 %v3856, 0.5
    %v4029 = vmul.f32 %v3857, 0.5
    %v4030 = vmul.f32 %v3858, 0.5
    %v4031 = vmul.f32 %v3859, 0.5
    %v4032 = vmul.f32 %v3860, 0.5
    %v4033 = vmul.f32 %v3861, 0.5
    %v4034 = vmul.f32 %v3862, 0.5
    %v4035 = vmul.f32 %v3863, 0.5
    %v4036 = vmul.f32 %v3864, 0.5
    %v4037 = vmul.f32 %v3865, 0.5
    %v4038 = vmul.f32 %v3866, 0.5
    %v4039 = vmul.f32 %v3867, 0.5
    %v4040 = vmul.f32 %v3868, 0.5
    %v4041 = vmul.f32 %v3869, 0.5
    %v4042 = vmul.f32 %v3870, 0.5
    %v4043 = vmul.f32 %v3871, 0.5
    %v4044 = vmul.f32 %v3872, 0.5
    %v4045 = vmul.f32 %v3873, 0.5
    %v4046 = vmul.f32 %v3874, 0.5
    %v4047 = vmul.f32 %v3875, 0.5
    %v4048 = vmul.f32 %v3876, 0.5
    %v4049 = vmul.f32 %v3877, 0.5
    %v4050 = vmul.f32 %v3878, 0.5
    %v4051 = vmul.f32 %v3879, 0.5
    %v4052 = vmul.f32 %v3880, 0.5
    %v4053 = vmul.f32 %v3881, 0.5
    %v4054 = vmul.f32 %v3882, 0.5
    %v4055 = vmul.f32 %v3883, 0.5
    %v4056 = vmul.f32 %v3884, 0.5
    %v4057 = vmul.f32 %v3885, 0.5
    %v4058 = vmul.f32 %v3886, 0.5
    %v4059 = vmul.f32 %v3887, 0.5
    %v4060 = vmul.f32 %v3888, 0.5
    %v4061 = vmul.f32 %v3889, 0.5
    %v4062 = vmul.f32 %v3890, 0.5
    %v4063 = vmul.f32 %v3891, 0.5
    %v4064 = vmul.f32 %v3892, 0.5
    %v4065 = vmul.f32 %v3893, 0.5
    %v4066 = vmul.f32 %v3894, 0.5
    %v4067 = vmul.f32 %v3895, 0.5
    %v4068 = vmul.f32 %v3896, 0.5
    %v4069 = vmul.f32 %v3897, 0.5
    %v4070 = vmul.f32 %v3898, 0.5
    %v4071 = vmul.f32 %v3899, 0.5
    %v4072 = vmul.f32 %v3900, 0.5
    %v4073 = vmul.f32 %v3901, 0.5
    %v4074 = vmul.f32 %v3902, 0.5
    %v4075 = vmul.f32 %v3903, 0.5
    %v4076 = vmul.f32 %v3904, 0.5
    %v4077 = vmul.f32 %v3905, 0.5
    %v4078 = vmul.f32 %v3906, 0.5
    %v4079 = vmul.f32 %v3907, 0.5
    %v4080 = vmul.f32 %v3908, 0.5
    %v4081 = vmul.f32 %v3909, 0.5
    %v4082 = vmul.f32 %v3910, 0.5
    %v4083 = vmul.f32 %v3911, 0.5
    %v4084 = vmul.f32 %v3912, 0.5
    %v4085 = vmul.f32 %v3913, 0.5
    %v4086 = vmul.f32 %v3914, 0.5
    %v4087 = vmul.f32 %v3915, 0.5
    %v4088 = vmul.f32 %v3916, 0.5
    %v4089 = vmul.f32 %v3917, 0.5
    %v4090 = vmul.f32 %v3918, 0.5
    %v4091 = vmul.f32 %v3919, 0.5
    %v4092 = vmul.f32 %v3920, 0.5
    %v4093 = vmul.f32 %v3921, 0.5
    %v4094 = vmul.f32 %v3922, 0.5
    %v4095 = vmul.f32 %v3923, 0.5
    %v4096 = vmul.f32 %v3924, 0.5
    %v4097 = vmul.f32 %v4011, %v3839
    %v4098 = vmul.f32 %v4012, %v3840
    %v4099 = vmul.f32 %v4013, %v3841
    %v4100 = vmul.f32 %v4014, %v3842
    %v4101 = vmul.f32 %v4015, %v3843
    %v4102 = vmul.f32 %v4016, %v3844
    %v4103 = vmul.f32 %v4017, %v3845
    %v4104 = vmul.f32 %v4018, %v3846
    %v4105 = vmul.f32 %v4019, %v3847
    %v4106 = vmul.f32 %v4020, %v3848
    %v4107 = vmul.f32 %v4021, %v3849
    %v4108 = vmul.f32 %v4022, %v3850
    %v4109 = vmul.f32 %v4023, %v3851
    %v4110 = vmul.f32 %v4024, %v3852
    %v4111 = vmul.f32 %v4025, %v3853
    %v4112 = vmul.f32 %v4026, %v3854
    %v4113 = vmul.f32 %v4027, %v3855
    %v4114 = vmul.f32 %v4028, %v3856
    %v4115 = vmul.f32 %v4029, %v3857
    %v4116 = vmul.f32 %v4030, %v3858
    %v4117 = vmul.f32 %v4031, %v3859
    %v4118 = vmul.f32 %v4032, %v3860
    %v4119 = vmul.f32 %v4033, %v3861
    %v4120 = vmul.f32 %v4034, %v3862
    %v4121 = vmul.f32 %v4035, %v3863
    %v4122 = vmul.f32 %v4036, %v3864
    %v4123 = vmul.f32 %v4037, %v3865
    %v4124 = vmul.f32 %v4038, %v3866
    %v4125 = vmul.f32 %v4039, %v3867
    %v4126 = vmul.f32 %v4040, %v3868
    %v4127 = vmul.f32 %v4041, %v3869
    %v4128 = vmul.f32 %v4042, %v3870
    %v4129 = vmul.f32 %v4043, %v3871
    %v4130 = vmul.f32 %v4044, %v3872
    %v4131 = vmul.f32 %v4045, %v3873
    %v4132 = vmul.f32 %v4046, %v3874
    %v4133 = vmul.f32 %v4047, %v3875
    %v4134 = vmul.f32 %v4048, %v3876
    %v4135 = vmul.f32 %v4049, %v3877
    %v4136 = vmul.f32 %v4050, %v3878
    %v4137 = vmul.f32 %v4051, %v3879
    %v4138 = vmul.f32 %v4052, %v3880
    %v4139 = vmul.f32 %v4053, %v3881
    %v4140 = vmul.f32 %v4054, %v3882
    %v4141 = vmul.f32 %v4055, %v3883
    %v4142 = vmul.f32 %v4056, %v3884
    %v4143 = vmul.f32 %v4057, %v3885
    %v4144 = vmul.f32 %v4058, %v3886
    %v4145 = vmul.f32 %v4059, %v3887
    %v4146 = vmul.f32 %v4060, %v3888
    %v4147 = vmul.f32 %v4061, %v3889
    %v4148 = vmul.f32 %v4062, %v3890
    %v4149 = vmul.f32 %v4063, %v3891
    %v4150 = vmul.f32 %v4064, %v3892
    %v4151 = vmul.f32 %v4065, %v3893
    %v4152 = vmul.f32 %v4066, %v3894
    %v4153 = vmul.f32 %v4067, %v3895
    %v4154 = vmul.f32 %v4068, %v3896
    %v4155 = vmul.f32 %v4069, %v3897
    %v4156 = vmul.f32 %v4070, %v3898
    %v4157 = vmul.f32 %v4071, %v3899
    %v4158 = vmul.f32 %v4072, %v3900
    %v4159 = vmul.f32 %v4073, %v3901
    %v4160 = vmul.f32 %v4074, %v3902
    %v4161 = vmul.f32 %v4075, %v3903
    %v4162 = vmul.f32 %v4076, %v3904
    %v4163 = vmul.f32 %v4077, %v3905
    %v4164 = vmul.f32 %v4078, %v3906
    %v4165 = vmul.f32 %v4079, %v3907
    %v4166 = vmul.f32 %v4080, %v3908
    %v4167 = vmul.f32 %v4081, %v3909
    %v4168 = vmul.f32 %v4082, %v3910
    %v4169 = vmul.f32 %v4083, %v3911
    %v4170 = vmul.f32 %v4084, %v3912
    %v4171 = vmul.f32 %v4085, %v3913
    %v4172 = vmul.f32 %v4086, %v3914
    %v4173 = vmul.f32 %v4087, %v3915
    %v4174 = vmul.f32 %v4088, %v3916
    %v4175 = vmul.f32 %v4089, %v3917
    %v4176 = vmul.f32 %v4090, %v3918
    %v4177 = vmul.f32 %v4091, %v3919
    %v4178 = vmul.f32 %v4092, %v3920
    %v4179 = vmul.f32 %v4093, %v3921
    %v4180 = vmul.f32 %v4094, %v3922
    %v4181 = vmul.f32 %v4095, %v3923
    %v4182 = vmul.f32 %v4096, %v3924
    %v4183 = vmul.f32 %v3925, 0.1
    %v4184 = vmul.f32 %v3926, 0.1
    %v4185 = vmul.f32 %v3927, 0.1
    %v4186 = vmul.f32 %v3928, 0.1
    %v4187 = vmul.f32 %v3929, 0.1
    %v4188 = vmul.f32 %v3930, 0.1
    %v4189 = vmul.f32 %v3931, 0.1
    %v4190 = vmul.f32 %v3932, 0.1
    %v4191 = vmul.f32 %v3933, 0.1
    %v4192 = vmul.f32 %v3934, 0.1
    %v4193 = vmul.f32 %v3935, 0.1
    %v4194 = vmul.f32 %v3936, 0.1
    %v4195 = vmul.f32 %v3937, 0.1
    %v4196 = vmul.f32 %v3938, 0.1
    %v4197 = vmul.f32 %v3939, 0.1
    %v4198 = vmul.f32 %v3940, 0.1
    %v4199 = vmul.f32 %v3941, 0.1
    %v4200 = vmul.f32 %v3942, 0.1
    %v4201 = vmul.f32 %v3943, 0.1
    %v4202 = vmul.f32 %v3944, 0.1
    %v4203 = vmul.f32 %v3945, 0.1
    %v4204 = vmul.f32 %v3946, 0.1
    %v4205 = vmul.f32 %v3947, 0.1
    %v4206 = vmul.f32 %v3948, 0.1
    %v4207 = vmul.f32 %v3949, 0.1
    %v4208 = vmul.f32 %v3950, 0.1
    %v4209 = vmul.f32 %v3951, 0.1
    %v4210 = vmul.f32 %v3952, 0.1
    %v4211 = vmul.f32 %v3953, 0.1
    %v4212 = vmul.f32 %v3954, 0.1
    %v4213 = vmul.f32 %v3955, 0.1
    %v4214 = vmul.f32 %v3956, 0.1
    %v4215 = vmul.f32 %v3957, 0.1
    %v4216 = vmul.f32 %v3958, 0.1
    %v4217 = vmul.f32 %v3959, 0.1
    %v4218 = vmul.f32 %v3960, 0.1
    %v4219 = vmul.f32 %v3961, 0.1
    %v4220 = vmul.f32 %v3962, 0.1
    %v4221 = vmul.f32 %v3963, 0.1
    %v4222 = vmul.f32 %v3964, 0.1
    %v4223 = vmul.f32 %v3965, 0.1
    %v4224 = vmul.f32 %v3966, 0.1
    %v4225 = vmul.f32 %v3967, 0.1
    %v4226 = vmul.f32 %v3968, 0.1
    %v4227 = vmul.f32 %v3969, 0.1
    %v4228 = vmul.f32 %v3970, 0.1
    %v4229 = vmul.f32 %v3971, 0.1
    %v4230 = vmul.f32 %v3972, 0.1
    %v4231 = vmul.f32 %v3973, 0.1
    %v4232 = vmul.f32 %v3974, 0.1
    %v4233 = vmul.f32 %v3975, 0.1
    %v4234 = vmul.f32 %v3976, 0.1
    %v4235 = vmul.f32 %v3977, 0.1
    %v4236 = vmul.f32 %v3978, 0.1
    %v4237 = vmul.f32 %v3979, 0.1
    %v4238 = vmul.f32 %v3980, 0.1
    %v4239 = vmul.f32 %v3981, 0.1
    %v4240 = vmul.f32 %v3982, 0.1
    %v4241 = vmul.f32 %v3983, 0.1
    %v4242 = vmul.f32 %v3984, 0.1
    %v4243 = vmul.f32 %v3985, 0.1
    %v4244 = vmul.f32 %v3986, 0.1
    %v4245 = vmul.f32 %v3987, 0.1
    %v4246 = vmul.f32 %v3988, 0.1
    %v4247 = vmul.f32 %v3989, 0.1
    %v4248 = vmul.f32 %v3990, 0.1
    %v4249 = vmul.f32 %v3991, 0.1
    %v4250 = vmul.f32 %v3992, 0.1
    %v4251 = vmul.f32 %v3993, 0.1
    %v4252 = vmul.f32 %v3994, 0.1
    %v4253 = vmul.f32 %v3995, 0.1
    %v4254 = vmul.f32 %v3996, 0.1
    %v4255 = vmul.f32 %v3997, 0.1
    %v4256 = vmul.f32 %v3998, 0.1
    %v4257 = vmul.f32 %v3999, 0.1
    %v4258 = vmul.f32 %v4000, 0.1
    %v4259 = vmul.f32 %v4001, 0.1
    %v4260 = vmul.f32 %v4002, 0.1
    %v4261 = vmul.f32 %v4003, 0.1
    %v4262 = vmul.f32 %v4004, 0.1
    %v4263 = vmul.f32 %v4005, 0.1
    %v4264 = vmul.f32 %v4006, 0.1
    %v4265 = vmul.f32 %v4007, 0.1
    %v4266 = vmul.f32 %v4008, 0.1
    %v4267 = vmul.f32 %v4009, 0.1
    %v4268 = vmul.f32 %v4010, 0.1
    %v4269 = vadd.f32 %v4097, %v4183
    %v4270 = vadd.f32 %v4098, %v4184
    %v4271 = vadd.f32 %v4099, %v4185
    %v4272 = vadd.f32 %v4100, %v4186
    %v4273 = vadd.f32 %v4101, %v4187
    %v4274 = vadd.f32 %v4102, %v4188
    %v4275 = vadd.f32 %v4103, %v4189
    %v4276 = vadd.f32 %v4104, %v4190
    %v4277 = vadd.f32 %v4105, %v4191
    %v4278 = vadd.f32 %v4106, %v4192
    %v4279 = vadd.f32 %v4107, %v4193
    %v4280 = vadd.f32 %v4108, %v4194
    %v4281 = vadd.f32 %v4109, %v4195
    %v4282 = vadd.f32 %v4110, %v4196
    %v4283 = vadd.f32 %v4111, %v4197
    %v4284 = vadd.f32 %v4112, %v4198
    %v4285 = vadd.f32 %v4113, %v4199
    %v4286 = vadd.f32 %v4114, %v4200
    %v4287 = vadd.f32 %v4115, %v4201
    %v4288 = vadd.f32 %v4116, %v4202
    %v4289 = vadd.f32 %v4117, %v4203
    %v4290 = vadd.f32 %v4118, %v4204
    %v4291 = vadd.f32 %v4119, %v4205
    %v4292 = vadd.f32 %v4120, %v4206
    %v4293 = vadd.f32 %v4121, %v4207
    %v4294 = vadd.f32 %v4122, %v4208
    %v4295 = vadd.f32 %v4123, %v4209
    %v4296 = vadd.f32 %v4124, %v4210
    %v4297 = vadd.f32 %v4125, %v4211
    %v4298 = vadd.f32 %v4126, %v4212
    %v4299 = vadd.f32 %v4127, %v4213
    %v4300 = vadd.f32 %v4128, %v4214
    %v4301 = vadd.f32 %v4129, %v4215
    %v4302 = vadd.f32 %v4130, %v4216
    %v4303 = vadd.f32 %v4131, %v4217
    %v4304 = vadd.f32 %v4132, %v4218
    %v4305 = vadd.f32 %v4133, %v4219
    %v4306 = vadd.f32 %v4134, %v4220
    %v4307 = vadd.f32 %v4135, %v4221
    %v4308 = vadd.f32 %v4136, %v4222
    %v4309 = vadd.f32 %v4137, %v4223
    %v4310 = vadd.f32 %v4138, %v4224
    %v4311 = vadd.f32 %v4139, %v4225
    %v4312 = vadd.f32 %v4140, %v4226
    %v4313 = vadd.f32 %v4141, %v4227
    %v4314 = vadd.f32 %v4142, %v4228
    %v4315 = vadd.f32 %v4143, %v4229
    %v4316 = vadd.f32 %v4144, %v4230
    %v4317 = vadd.f32 %v4145, %v4231
    %v4318 = vadd.f32 %v4146, %v4232
    %v4319 = vadd.f32 %v4147, %v4233
    %v4320 = vadd.f32 %v4148, %v4234
    %v4321 = vadd.f32 %v4149, %v4235
    %v4322 = vadd.f32 %v4150, %v4236
    %v4323 = vadd.f32 %v4151, %v4237
    %v4324 = vadd.f32 %v4152, %v4238
    %v4325 = vadd.f32 %v4153, %v4239
    %v4326 = vadd.f32 %v4154, %v4240
    %v4327 = vadd.f32 %v4155, %v4241
    %v4328 = vadd.f32 %v4156, %v4242
    %v4329 = vadd.f32 %v4157, %v4243
    %v4330 = vadd.f32 %v4158, %v4244
    %v4331 = vadd.f32 %v4159, %v4245
    %v4332 = vadd.f32 %v4160, %v4246
    %v4333 = vadd.f32 %v4161, %v4247
    %v4334 = vadd.f32 %v4162, %v4248
    %v4335 = vadd.f32 %v4163, %v4249
    %v4336 = vadd.f32 %v4164, %v4250
    %v4337 = vadd.f32 %v4165, %v4251
    %v4338 = vadd.f32 %v4166, %v4252
    %v4339 = vadd.f32 %v4167, %v4253
    %v4340 = vadd.f32 %v4168, %v4254
    %v4341 = vadd.f32 %v4169, %v4255
    %v4342 = vadd.f32 %v4170, %v4256
    %v4343 = vadd.f32 %v4171, %v4257
    %v4344 = vadd.f32 %v4172, %v4258
    %v4345 = vadd.f32 %v4173, %v4259
    %v4346 = vadd.f32 %v4174, %v4260
    %v4347 = vadd.f32 %v4175, %v4261
    %v4348 = vadd.f32 %v4176, %v4262
    %v4349 = vadd.f32 %v4177, %v4263
    %v4350 = vadd.f32 %v4178, %v4264
    %v4351 = vadd.f32 %v4179, %v4265
    %v4352 = vadd.f32 %v4180, %v4266
    %v4353 = vadd.f32 %v4181, %v4267
    %v4354 = vadd.f32 %v4182, %v4268
    %vm4355 = vcmp.ne.f32.partialorder %v3581, 0.0
    %vm4356 = vcmp.ne.f32.partialorder %v3582, 0.0
    %vm4357 = vcmp.ne.f32.partialorder %v3583, 0.0
    %vm4358 = vcmp.ne.f32.partialorder %v3584, 0.0
    %vm4359 = vcmp.ne.f32.partialorder %v3585, 0.0
    %vm4360 = vcmp.ne.f32.partialorder %v3586, 0.0
    %vm4361 = vcmp.ne.f32.partialorder %v3587, 0.0
    %vm4362 = vcmp.ne.f32.partialorder %v3588, 0.0
    %vm4363 = vcmp.ne.f32.partialorder %v3589, 0.0
    %vm4364 = vcmp.ne.f32.partialorder %v3590, 0.0
    %vm4365 = vcmp.ne.f32.partialorder %v3591, 0.0
    %vm4366 = vcmp.ne.f32.partialorder %v3592, 0.0
    %vm4367 = vcmp.ne.f32.partialorder %v3593, 0.0
    %vm4368 = vcmp.ne.f32.partialorder %v3594, 0.0
    %vm4369 = vcmp.ne.f32.partialorder %v3595, 0.0
    %vm4370 = vcmp.ne.f32.partialorder %v3596, 0.0
    %vm4371 = vcmp.ne.f32.partialorder %v3597, 0.0
    %vm4372 = vcmp.ne.f32.partialorder %v3598, 0.0
    %vm4373 = vcmp.ne.f32.partialorder %v3599, 0.0
    %vm4374 = vcmp.ne.f32.partialorder %v3600, 0.0
    %vm4375 = vcmp.ne.f32.partialorder %v3601, 0.0
    %vm4376 = vcmp.ne.f32.partialorder %v3602, 0.0
    %vm4377 = vcmp.ne.f32.partialorder %v3603, 0.0
    %vm4378 = vcmp.ne.f32.partialorder %v3604, 0.0
    %vm4379 = vcmp.ne.f32.partialorder %v3605, 0.0
    %vm4380 = vcmp.ne.f32.partialorder %v3606, 0.0
    %vm4381 = vcmp.ne.f32.partialorder %v3607, 0.0
    %vm4382 = vcmp.ne.f32.partialorder %v3608, 0.0
    %vm4383 = vcmp.ne.f32.partialorder %v3609, 0.0
    %vm4384 = vcmp.ne.f32.partialorder %v3610, 0.0
    %vm4385 = vcmp.ne.f32.partialorder %v3611, 0.0
    %vm4386 = vcmp.ne.f32.partialorder %v3612, 0.0
    %vm4387 = vcmp.ne.f32.partialorder %v3613, 0.0
    %vm4388 = vcmp.ne.f32.partialorder %v3614, 0.0
    %vm4389 = vcmp.ne.f32.partialorder %v3615, 0.0
    %vm4390 = vcmp.ne.f32.partialorder %v3616, 0.0
    %vm4391 = vcmp.ne.f32.partialorder %v3617, 0.0
    %vm4392 = vcmp.ne.f32.partialorder %v3618, 0.0
    %vm4393 = vcmp.ne.f32.partialorder %v3619, 0.0
    %vm4394 = vcmp.ne.f32.partialorder %v3620, 0.0
    %vm4395 = vcmp.ne.f32.partialorder %v3621, 0.0
    %vm4396 = vcmp.ne.f32.partialorder %v3622, 0.0
    %vm4397 = vcmp.ne.f32.partialorder %v3623, 0.0
    %vm4398 = vcmp.ne.f32.partialorder %v3624, 0.0
    %vm4399 = vcmp.ne.f32.partialorder %v3625, 0.0
    %vm4400 = vcmp.ne.f32.partialorder %v3626, 0.0
    %vm4401 = vcmp.ne.f32.partialorder %v3627, 0.0
    %vm4402 = vcmp.ne.f32.partialorder %v3628, 0.0
    %vm4403 = vcmp.ne.f32.partialorder %v3629, 0.0
    %vm4404 = vcmp.ne.f32.partialorder %v3630, 0.0
    %vm4405 = vcmp.ne.f32.partialorder %v3631, 0.0
    %vm4406 = vcmp.ne.f32.partialorder %v3632, 0.0
    %vm4407 = vcmp.ne.f32.partialorder %v3633, 0.0
    %vm4408 = vcmp.ne.f32.partialorder %v3634, 0.0
    %vm4409 = vcmp.ne.f32.partialorder %v3635, 0.0
    %vm4410 = vcmp.ne.f32.partialorder %v3636, 0.0
    %vm4411 = vcmp.ne.f32.partialorder %v3637, 0.0
    %vm4412 = vcmp.ne.f32.partialorder %v3638, 0.0
    %vm4413 = vcmp.ne.f32.partialorder %v3639, 0.0
    %vm4414 = vcmp.ne.f32.partialorder %v3640, 0.0
    %vm4415 = vcmp.ne.f32.partialorder %v3641, 0.0
    %vm4416 = vcmp.ne.f32.partialorder %v3642, 0.0
    %vm4417 = vcmp.ne.f32.partialorder %v3643, 0.0
    %vm4418 = vcmp.ne.f32.partialorder %v3644, 0.0
    %vm4419 = vcmp.ne.f32.partialorder %v3645, 0.0
    %vm4420 = vcmp.ne.f32.partialorder %v3646, 0.0
    %vm4421 = vcmp.ne.f32.partialorder %v3647, 0.0
    %vm4422 = vcmp.ne.f32.partialorder %v3648, 0.0
    %vm4423 = vcmp.ne.f32.partialorder %v3649, 0.0
    %vm4424 = vcmp.ne.f32.partialorder %v3650, 0.0
    %vm4425 = vcmp.ne.f32.partialorder %v3651, 0.0
    %vm4426 = vcmp.ne.f32.partialorder %v3652, 0.0
    %vm4427 = vcmp.ne.f32.partialorder %v3653, 0.0
    %vm4428 = vcmp.ne.f32.partialorder %v3654, 0.0
    %vm4429 = vcmp.ne.f32.partialorder %v3655, 0.0
    %vm4430 = vcmp.ne.f32.partialorder %v3656, 0.0
    %vm4431 = vcmp.ne.f32.partialorder %v3657, 0.0
    %vm4432 = vcmp.ne.f32.partialorder %v3658, 0.0
    %vm4433 = vcmp.ne.f32.partialorder %v3659, 0.0
    %vm4434 = vcmp.ne.f32.partialorder %v3660, 0.0
    %vm4435 = vcmp.ne.f32.partialorder %v3661, 0.0
    %vm4436 = vcmp.ne.f32.partialorder %v3662, 0.0
    %vm4437 = vcmp.ne.f32.partialorder %v3663, 0.0
    %vm4438 = vcmp.ne.f32.partialorder %v3664, 0.0
    %vm4439 = vcmp.ne.f32.partialorder %v3665, 0.0
    %vm4440 = vcmp.ne.f32.partialorder %v3666, 0.0
    %v4441 = vsel %vm4355, 1, 0
    %v4442 = vsel %vm4356, 1, 0
    %v4443 = vsel %vm4357, 1, 0
    %v4444 = vsel %vm4358, 1, 0
    %v4445 = vsel %vm4359, 1, 0
    %v4446 = vsel %vm4360, 1, 0
    %v4447 = vsel %vm4361, 1, 0
    %v4448 = vsel %vm4362, 1, 0
    %v4449 = vsel %vm4363, 1, 0
    %v4450 = vsel %vm4364, 1, 0
    %v4451 = vsel %vm4365, 1, 0
    %v4452 = vsel %vm4366, 1, 0
    %v4453 = vsel %vm4367, 1, 0
    %v4454 = vsel %vm4368, 1, 0
    %v4455 = vsel %vm4369, 1, 0
    %v4456 = vsel %vm4370, 1, 0
    %v4457 = vsel %vm4371, 1, 0
    %v4458 = vsel %vm4372, 1, 0
    %v4459 = vsel %vm4373, 1, 0
    %v4460 = vsel %vm4374, 1, 0
    %v4461 = vsel %vm4375, 1, 0
    %v4462 = vsel %vm4376, 1, 0
    %v4463 = vsel %vm4377, 1, 0
    %v4464 = vsel %vm4378, 1, 0
    %v4465 = vsel %vm4379, 1, 0
    %v4466 = vsel %vm4380, 1, 0
    %v4467 = vsel %vm4381, 1, 0
    %v4468 = vsel %vm4382, 1, 0
    %v4469 = vsel %vm4383, 1, 0
    %v4470 = vsel %vm4384, 1, 0
    %v4471 = vsel %vm4385, 1, 0
    %v4472 = vsel %vm4386, 1, 0
    %v4473 = vsel %vm4387, 1, 0
    %v4474 = vsel %vm4388, 1, 0
    %v4475 = vsel %vm4389, 1, 0
    %v4476 = vsel %vm4390, 1, 0
    %v4477 = vsel %vm4391, 1, 0
    %v4478 = vsel %vm4392, 1, 0
    %v4479 = vsel %vm4393, 1, 0
    %v4480 = vsel %vm4394, 1, 0
    %v4481 = vsel %vm4395, 1, 0
    %v4482 = vsel %vm4396, 1, 0
    %v4483 = vsel %vm4397, 1, 0
    %v4484 = vsel %vm4398, 1, 0
    %v4485 = vsel %vm4399, 1, 0
    %v4486 = vsel %vm4400, 1, 0
    %v4487 = vsel %vm4401, 1, 0
    %v4488 = vsel %vm4402, 1, 0
    %v4489 = vsel %vm4403, 1, 0
    %v4490 = vsel %vm4404, 1, 0
    %v4491 = vsel %vm4405, 1, 0
    %v4492 = vsel %vm4406, 1, 0
    %v4493 = vsel %vm4407, 1, 0
    %v4494 = vsel %vm4408, 1, 0
    %v4495 = vsel %vm4409, 1, 0
    %v4496 = vsel %vm4410, 1, 0
    %v4497 = vsel %vm4411, 1, 0
    %v4498 = vsel %vm4412, 1, 0
    %v4499 = vsel %vm4413, 1, 0
    %v4500 = vsel %vm4414, 1, 0
    %v4501 = vsel %vm4415, 1, 0
    %v4502 = vsel %vm4416, 1, 0
    %v4503 = vsel %vm4417, 1, 0
    %v4504 = vsel %vm4418, 1, 0
    %v4505 = vsel %vm4419, 1, 0
    %v4506 = vsel %vm4420, 1, 0
    %v4507 = vsel %vm4421, 1, 0
    %v4508 = vsel %vm4422, 1, 0
    %v4509 = vsel %vm4423, 1, 0
    %v4510 = vsel %vm4424, 1, 0
    %v4511 = vsel %vm4425, 1, 0
    %v4512 = vsel %vm4426, 1, 0
    %v4513 = vsel %vm4427, 1, 0
    %v4514 = vsel %vm4428, 1, 0
    %v4515 = vsel %vm4429, 1, 0
    %v4516 = vsel %vm4430, 1, 0
    %v4517 = vsel %vm4431, 1, 0
    %v4518 = vsel %vm4432, 1, 0
    %v4519 = vsel %vm4433, 1, 0
    %v4520 = vsel %vm4434, 1, 0
    %v4521 = vsel %vm4435, 1, 0
    %v4522 = vsel %vm4436, 1, 0
    %v4523 = vsel %vm4437, 1, 0
    %v4524 = vsel %vm4438, 1, 0
    %v4525 = vsel %vm4439, 1, 0
    %v4526 = vsel %vm4440, 1, 0
    %v4527 = vcvt.s32.f32 %v4441
    %v4528 = vcvt.s32.f32 %v4442
    %v4529 = vcvt.s32.f32 %v4443
    %v4530 = vcvt.s32.f32 %v4444
    %v4531 = vcvt.s32.f32 %v4445
    %v4532 = vcvt.s32.f32 %v4446
    %v4533 = vcvt.s32.f32 %v4447
    %v4534 = vcvt.s32.f32 %v4448
    %v4535 = vcvt.s32.f32 %v4449
    %v4536 = vcvt.s32.f32 %v4450
    %v4537 = vcvt.s32.f32 %v4451
    %v4538 = vcvt.s32.f32 %v4452
    %v4539 = vcvt.s32.f32 %v4453
    %v4540 = vcvt.s32.f32 %v4454
    %v4541 = vcvt.s32.f32 %v4455
    %v4542 = vcvt.s32.f32 %v4456
    %v4543 = vcvt.s32.f32 %v4457
    %v4544 = vcvt.s32.f32 %v4458
    %v4545 = vcvt.s32.f32 %v4459
    %v4546 = vcvt.s32.f32 %v4460
    %v4547 = vcvt.s32.f32 %v4461
    %v4548 = vcvt.s32.f32 %v4462
    %v4549 = vcvt.s32.f32 %v4463
    %v4550 = vcvt.s32.f32 %v4464
    %v4551 = vcvt.s32.f32 %v4465
    %v4552 = vcvt.s32.f32 %v4466
    %v4553 = vcvt.s32.f32 %v4467
    %v4554 = vcvt.s32.f32 %v4468
    %v4555 = vcvt.s32.f32 %v4469
    %v4556 = vcvt.s32.f32 %v4470
    %v4557 = vcvt.s32.f32 %v4471
    %v4558 = vcvt.s32.f32 %v4472
    %v4559 = vcvt.s32.f32 %v4473
    %v4560 = vcvt.s32.f32 %v4474
    %v4561 = vcvt.s32.f32 %v4475
    %v4562 = vcvt.s32.f32 %v4476
    %v4563 = vcvt.s32.f32 %v4477
    %v4564 = vcvt.s32.f32 %v4478
    %v4565 = vcvt.s32.f32 %v4479
    %v4566 = vcvt.s32.f32 %v4480
    %v4567 = vcvt.s32.f32 %v4481
    %v4568 = vcvt.s32.f32 %v4482
    %v4569 = vcvt.s32.f32 %v4483
    %v4570 = vcvt.s32.f32 %v4484
    %v4571 = vcvt.s32.f32 %v4485
    %v4572 = vcvt.s32.f32 %v4486
    %v4573 = vcvt.s32.f32 %v4487
    %v4574 = vcvt.s32.f32 %v4488
    %v4575 = vcvt.s32.f32 %v4489
    %v4576 = vcvt.s32.f32 %v4490
    %v4577 = vcvt.s32.f32 %v4491
    %v4578 = vcvt.s32.f32 %v4492
    %v4579 = vcvt.s32.f32 %v4493
    %v4580 = vcvt.s32.f32 %v4494
    %v4581 = vcvt.s32.f32 %v4495
    %v4582 = vcvt.s32.f32 %v4496
    %v4583 = vcvt.s32.f32 %v4497
    %v4584 = vcvt.s32.f32 %v4498
    %v4585 = vcvt.s32.f32 %v4499
    %v4586 = vcvt.s32.f32 %v4500
    %v4587 = vcvt.s32.f32 %v4501
    %v4588 = vcvt.s32.f32 %v4502
    %v4589 = vcvt.s32.f32 %v4503
    %v4590 = vcvt.s32.f32 %v4504
    %v4591 = vcvt.s32.f32 %v4505
    %v4592 = vcvt.s32.f32 %v4506
    %v4593 = vcvt.s32.f32 %v4507
    %v4594 = vcvt.s32.f32 %v4508
    %v4595 = vcvt.s32.f32 %v4509
    %v4596 = vcvt.s32.f32 %v4510
    %v4597 = vcvt.s32.f32 %v4511
    %v4598 = vcvt.s32.f32 %v4512
    %v4599 = vcvt.s32.f32 %v4513
    %v4600 = vcvt.s32.f32 %v4514
    %v4601 = vcvt.s32.f32 %v4515
    %v4602 = vcvt.s32.f32 %v4516
    %v4603 = vcvt.s32.f32 %v4517
    %v4604 = vcvt.s32.f32 %v4518
    %v4605 = vcvt.s32.f32 %v4519
    %v4606 = vcvt.s32.f32 %v4520
    %v4607 = vcvt.s32.f32 %v4521
    %v4608 = vcvt.s32.f32 %v4522
    %v4609 = vcvt.s32.f32 %v4523
    %v4610 = vcvt.s32.f32 %v4524
    %v4611 = vcvt.s32.f32 %v4525
    %v4612 = vcvt.s32.f32 %v4526
    %v4613 = vmul.f32 %v4269, %v4527
    %v4614 = vmul.f32 %v4270, %v4528
    %v4615 = vmul.f32 %v4271, %v4529
    %v4616 = vmul.f32 %v4272, %v4530
    %v4617 = vmul.f32 %v4273, %v4531
    %v4618 = vmul.f32 %v4274, %v4532
    %v4619 = vmul.f32 %v4275, %v4533
    %v4620 = vmul.f32 %v4276, %v4534
    %v4621 = vmul.f32 %v4277, %v4535
    %v4622 = vmul.f32 %v4278, %v4536
    %v4623 = vmul.f32 %v4279, %v4537
    %v4624 = vmul.f32 %v4280, %v4538
    %v4625 = vmul.f32 %v4281, %v4539
    %v4626 = vmul.f32 %v4282, %v4540
    %v4627 = vmul.f32 %v4283, %v4541
    %v4628 = vmul.f32 %v4284, %v4542
    %v4629 = vmul.f32 %v4285, %v4543
    %v4630 = vmul.f32 %v4286, %v4544
    %v4631 = vmul.f32 %v4287, %v4545
    %v4632 = vmul.f32 %v4288, %v4546
    %v4633 = vmul.f32 %v4289, %v4547
    %v4634 = vmul.f32 %v4290, %v4548
    %v4635 = vmul.f32 %v4291, %v4549
    %v4636 = vmul.f32 %v4292, %v4550
    %v4637 = vmul.f32 %v4293, %v4551
    %v4638 = vmul.f32 %v4294, %v4552
    %v4639 = vmul.f32 %v4295, %v4553
    %v4640 = vmul.f32 %v4296, %v4554
    %v4641 = vmul.f32 %v4297, %v4555
    %v4642 = vmul.f32 %v4298, %v4556
    %v4643 = vmul.f32 %v4299, %v4557
    %v4644 = vmul.f32 %v4300, %v4558
    %v4645 = vmul.f32 %v4301, %v4559
    %v4646 = vmul.f32 %v4302, %v4560
    %v4647 = vmul.f32 %v4303, %v4561
    %v4648 = vmul.f32 %v4304, %v4562
    %v4649 = vmul.f32 %v4305, %v4563
    %v4650 = vmul.f32 %v4306, %v4564
    %v4651 = vmul.f32 %v4307, %v4565
    %v4652 = vmul.f32 %v4308, %v4566
    %v4653 = vmul.f32 %v4309, %v4567
    %v4654 = vmul.f32 %v4310, %v4568
    %v4655 = vmul.f32 %v4311, %v4569
    %v4656 = vmul.f32 %v4312, %v4570
    %v4657 = vmul.f32 %v4313, %v4571
    %v4658 = vmul.f32 %v4314, %v4572
    %v4659 = vmul.f32 %v4315, %v4573
    %v4660 = vmul.f32 %v4316, %v4574
    %v4661 = vmul.f32 %v4317, %v4575
    %v4662 = vmul.f32 %v4318, %v4576
    %v4663 = vmul.f32 %v4319, %v4577
    %v4664 = vmul.f32 %v4320, %v4578
    %v4665 = vmul.f32 %v4321, %v4579
    %v4666 = vmul.f32 %v4322, %v4580
    %v4667 = vmul.f32 %v4323, %v4581
    %v4668 = vmul.f32 %v4324, %v4582
    %v4669 = vmul.f32 %v4325, %v4583
    %v4670 = vmul.f32 %v4326, %v4584
    %v4671 = vmul.f32 %v4327, %v4585
    %v4672 = vmul.f32 %v4328, %v4586
    %v4673 = vmul.f32 %v4329, %v4587
    %v4674 = vmul.f32 %v4330, %v4588
    %v4675 = vmul.f32 %v4331, %v4589
    %v4676 = vmul.f32 %v4332, %v4590
    %v4677 = vmul.f32 %v4333, %v4591
    %v4678 = vmul.f32 %v4334, %v4592
    %v4679 = vmul.f32 %v4335, %v4593
    %v4680 = vmul.f32 %v4336, %v4594
    %v4681 = vmul.f32 %v4337, %v4595
    %v4682 = vmul.f32 %v4338, %v4596
    %v4683 = vmul.f32 %v4339, %v4597
    %v4684 = vmul.f32 %v4340, %v4598
    %v4685 = vmul.f32 %v4341, %v4599
    %v4686 = vmul.f32 %v4342, %v4600
    %v4687 = vmul.f32 %v4343, %v4601
    %v4688 = vmul.f32 %v4344, %v4602
    %v4689 = vmul.f32 %v4345, %v4603
    %v4690 = vmul.f32 %v4346, %v4604
    %v4691 = vmul.f32 %v4347, %v4605
    %v4692 = vmul.f32 %v4348, %v4606
    %v4693 = vmul.f32 %v4349, %v4607
    %v4694 = vmul.f32 %v4350, %v4608
    %v4695 = vmul.f32 %v4351, %v4609
    %v4696 = vmul.f32 %v4352, %v4610
    %v4697 = vmul.f32 %v4353, %v4611
    %v4698 = vmul.f32 %v4354, %v4612
    %v4699 = vadd.f32 %v4613, %v4614
    %v4700 = vadd.f32 %v4699, %v4615
    %v4701 = vadd.f32 %v4700, %v4616
    %v4702 = vadd.f32 %v4701, %v4617
    %v4703 = vadd.f32 %v4702, %v4618
    %v4704 = vadd.f32 %v4703, %v4619
    %v4705 = vadd.f32 %v4704, %v4620
    %v4706 = vadd.f32 %v4705, %v4621
    %v4707 = vadd.f32 %v4706, %v4622
    %v4708 = vadd.f32 %v4707, %v4623
    %v4709 = vadd.f32 %v4708, %v4624
    %v4710 = vadd.f32 %v4709, %v4625
    %v4711 = vadd.f32 %v4710, %v4626
    %v4712 = vadd.f32 %v4711, %v4627
    %v4713 = vadd.f32 %v4712, %v4628
    %v4714 = vadd.f32 %v4713, %v4629
    %v4715 = vadd.f32 %v4714, %v4630
    %v4716 = vadd.f32 %v4715, %v4631
    %v4717 = vadd.f32 %v4716, %v4632
    %v4718 = vadd.f32 %v4717, %v4633
    %v4719 = vadd.f32 %v4718, %v4634
    %v4720 = vadd.f32 %v4719, %v4635
    %v4721 = vadd.f32 %v4720, %v4636
    %v4722 = vadd.f32 %v4721, %v4637
    %v4723 = vadd.f32 %v4722, %v4638
    %v4724 = vadd.f32 %v4723, %v4639
    %v4725 = vadd.f32 %v4724, %v4640
    %v4726 = vadd.f32 %v4725, %v4641
    %v4727 = vadd.f32 %v4726, %v4642
    %v4728 = vadd.f32 %v4727, %v4643
    %v4729 = vadd.f32 %v4728, %v4644
    %v4730 = vadd.f32 %v4729, %v4645
    %v4731 = vadd.f32 %v4730, %v4646
    %v4732 = vadd.f32 %v4731, %v4647
    %v4733 = vadd.f32 %v4732, %v4648
    %v4734 = vadd.f32 %v4733, %v4649
    %v4735 = vadd.f32 %v4734, %v4650
    %v4736 = vadd.f32 %v4735, %v4651
    %v4737 = vadd.f32 %v4736, %v4652
    %v4738 = vadd.f32 %v4737, %v4653
    %v4739 = vadd.f32 %v4738, %v4654
    %v4740 = vadd.f32 %v4739, %v4655
    %v4741 = vadd.f32 %v4740, %v4656
    %v4742 = vadd.f32 %v4741, %v4657
    %v4743 = vadd.f32 %v4742, %v4658
    %v4744 = vadd.f32 %v4743, %v4659
    %v4745 = vadd.f32 %v4744, %v4660
    %v4746 = vadd.f32 %v4745, %v4661
    %v4747 = vadd.f32 %v4746, %v4662
    %v4748 = vadd.f32 %v4747, %v4663
    %v4749 = vadd.f32 %v4748, %v4664
    %v4750 = vadd.f32 %v4749, %v4665
    %v4751 = vadd.f32 %v4750, %v4666
    %v4752 = vadd.f32 %v4751, %v4667
    %v4753 = vadd.f32 %v4752, %v4668
    %v4754 = vadd.f32 %v4753, %v4669
    %v4755 = vadd.f32 %v4754, %v4670
    %v4756 = vadd.f32 %v4755, %v4671
    %v4757 = vadd.f32 %v4756, %v4672
    %v4758 = vadd.f32 %v4757, %v4673
    %v4759 = vadd.f32 %v4758, %v4674
    %v4760 = vadd.f32 %v4759, %v4675
    %v4761 = vadd.f32 %v4760, %v4676
    %v4762 = vadd.f32 %v4761, %v4677
    %v4763 = vadd.f32 %v4762, %v4678
    %v4764 = vadd.f32 %v4763, %v4679
    %v4765 = vadd.f32 %v4764, %v4680
    %v4766 = vadd.f32 %v4765, %v4681
    %v4767 = vadd.f32 %v4766, %v4682
    %v4768 = vadd.f32 %v4767, %v4683
    %v4769 = vadd.f32 %v4768, %v4684
    %v4770 = vadd.f32 %v4769, %v4685
    %v4771 = vadd.f32 %v4770, %v4686
    %v4772 = vadd.f32 %v4771, %v4687
    %v4773 = vadd.f32 %v4772, %v4688
    %v4774 = vadd.f32 %v4773, %v4689
    %v4775 = vadd.f32 %v4774, %v4690
    %v4776 = vadd.f32 %v4775, %v4691
    %v4777 = vadd.f32 %v4776, %v4692
    %v4778 = vadd.f32 %v4777, %v4693
    %v4779 = vadd.f32 %v4778, %v4694
    %v4780 = vadd.f32 %v4779, %v4695
    %v4781 = vadd.f32 %v4780, %v4696
    %v4782 = vadd.f32 %v4781, %v4697
    %v4783 = vadd.f32 %v4782, %v4698
    %4784 = vadd.xlane.f32.xlu0 %v4783
    %v4785 = vpop.xlane.xlu0 %4784
    %v4786 = vrot.slane %v4785, 4
    %v4787 = vadd.f32 %v4785, %v4786
    %v4788 = vrot.slane %v4787, 2
    %v4789 = vadd.f32 %v4787, %v4788
    %v4790 = vrot.slane %v4789, 1
    %v4791 = vadd.f32 %v4789, %v4790
    %s4792 = vtos %v4791
    %s4793 = smul.f32 %s198, 4.0
    %v4794 = vstv %s4793
    %v4795 = vrcp.pop %v4794
    %v4796 = vmul.f32 %v4794, %v4795
    %v4797 = vsub.f32 1.0, %v4796
    %v4798 = vmul.f32 %v4795, %v4797
    %v4799 = vadd.f32 %v4795, %v4798
    %vm4800 = vweird.f32 %v4794
    %vm4801 = vweird.f32 %v4795
    %vm4802 = vmor %vm4800, %vm4801
    %v4803 = vsel %vm4802, %v4795, %v4799
    %v4804 = vand.u32 2147483647, %v4794
    %vm4805 = vcmp.eq.f32.partialorder %v4804, 8.507059e+37
    %v4806 = vand.u32 %v4794, 2147483648
    %v4807 = vor.u32 1.1754944e-38, %v4806
    %v4808 = vsel %vm4805, %v4807, %v4803
    %s4809 = vtos %v4808
    %s4810 = smul.f32 %s4792, %s4809
    %s4811 = smul.f32 %s4810, 50.0
    %s4812 = sadd.f32 %s3494, %s4811
    %s4813 = scalar_lea.smem [#allocation3], 0
    %4814 = sst [smem:[%s4813]] %s4812
    %s4815 = scalar_lea.smem [#allocation5], 0
    %4816 = sst [smem:[%s4815]] %s3494
    %s4817 = scalar_lea.smem [#allocation7], 0
    %4818 = sst [smem:[%s4817]] %s4810
    // Predicated region
    $region22: #{det_bench_train_forward.5} parent=1 // pred_check
      _
    $region23: #{det_bench_train_forward.5} parent=1 // pred_check_branch
      %4820 = sbr.rel (0) target = $region25
    $region24: #{det_bench_train_forward.5} parent=1 // pred_region
      %4822 = vsyncadd [#allocation4], 0
      %s4824 = sshll.u32 %s5, 4
      %s4825 = int_to_ptr.hbm [resolvable:$true] %s4824
      %4827 = dma.smem_to_hbm [#allocation3], 16, %s4825, [#allocation4]
    $region25: #{det_bench_train_forward.5} parent=1 // pred_fallthru
      _
    // Predicated region
    $region26: #{det_bench_train_forward.5} parent=1 // pred_check
      _
    $region27: #{det_bench_train_forward.5} parent=1 // pred_check_branch
      %4829 = sbr.rel (0) target = $region29
    $region28: #{det_bench_train_forward.5} parent=1 // pred_region
      %4831 = vsyncadd [#allocation6], 0
      %s4833 = sshll.u32 %s6, 4
      %s4834 = int_to_ptr.hbm [resolvable:$true] %s4833
      %4836 = dma.smem_to_hbm [#allocation5], 16, %s4834, [#allocation6]
    $region29: #{det_bench_train_forward.5} parent=1 // pred_fallthru
      _
    // Predicated region
    $region30: #{det_bench_train_forward.5} parent=1 // pred_check
      _
    $region31: #{det_bench_train_forward.5} parent=1 // pred_check_branch
      %4838 = sbr.rel (0) target = $region33
    $region32: #{det_bench_train_forward.5} parent=1 // pred_region
      %4840 = vsyncadd [#allocation6], 0
      %s4842 = sshll.u32 %s7, 4
      %s4843 = int_to_ptr.hbm [resolvable:$true] %s4842
      %4845 = dma.smem_to_hbm [#allocation7], 16, %s4843, [#allocation6]
    $region33: #{det_bench_train_forward.5} parent=1 // pred_fallthru
      _
    // Predicated region
    $region34: #{det_bench_train_forward.5} parent=1 // pred_check
      _
    $region35: #{det_bench_train_forward.5} parent=1 // pred_check_branch
      %4847 = sbr.rel (0) target = $region37
    $region36: #{det_bench_train_forward.5} parent=1 // pred_region
      %4849 = dma.done [#allocation4], 16
    $region37: #{det_bench_train_forward.5} parent=1 // pred_fallthru
      _
    // Predicated region
    $region38: #{det_bench_train_forward.5} parent=1 // pred_check
      _
    $region39: #{det_bench_train_forward.5} parent=1 // pred_check_branch
      %4851 = sbr.rel (0) target = $region41
    $region40: #{det_bench_train_forward.5} parent=1 // pred_region
      %4853 = dma.done [#allocation6], 16
    $region41: #{det_bench_train_forward.5} parent=1 // pred_fallthru
      _
    // Predicated region
    $region42: #{det_bench_train_forward.5} parent=1 // pred_check
      _
    $region43: #{det_bench_train_forward.5} parent=1 // pred_check_branch
      %4855 = sbr.rel (0) target = $region45
    $region44: #{det_bench_train_forward.5} parent=1 // pred_region
      %4857 = dma.done [#allocation6], 16
    $region45: #{det_bench_train_forward.5} parent=1 // pred_fallthru
      _
    %4858 = sfence
    %4859 = vsyncpa [#allocation4], 1
    %4860 = vsyncpa [#allocation6], 1

</llo_original>
